<compile_context>
chip_gen: v5e
topology: v5e:2x2
jax: 0.10.0
libtpu: 0.0.40
codegen_flags: <defaults>
</compile_context>

<pallas_src>
import jax
import jax.numpy as jnp
from jax import lax
from jax.experimental import pallas as pl
from jax.experimental.pallas import tpu as pltpu


# ----------------------------- module plumbing -----------------------------

def _check_dim(d):
    if d % 13 == 0:
        return d // 13, 13, (13 // 4) * 128
    elif d % 40 == 0:
        return d // 40, 40, (40 // 4) * 128
    raise ValueError("feature dim must be a multiple of 13 or 40, got %d" % d)


# ------------------------------ kernel helpers ------------------------------

def _conv3x3_relu(h, w_ref, b_ref, s_ref):
    """3x3 'same' conv + bias + ReLU via a T-padded, kx-folded tap scratch.

    h:      (Tn, Fn, Cin) float32 value
    w_ref:  (3, 3*Cin, Cout) ref, row index = kx*Cin + c (kx-folded weights)
    b_ref:  (1, Cout) float32 ref
    s_ref:  (Tn+2, Fn, 3*Cin) VMEM scratch with
            S[r, f, kx*Cin + c] = h_pad[r-1, f+kx-1, c]   (zeros outside).
    """
    Tn, Fn, Cin = h.shape
    Cout = w_ref.shape[2]
    dt = s_ref.dtype
    hb = h.astype(dt)

    # Zero the two T-padding rows (read by the ky=0 / ky=2 taps).
    s_ref[0:1, :, :] = jnp.zeros((1, Fn, 3 * Cin), dt)
    s_ref[Tn + 1:Tn + 2, :, :] = jnp.zeros((1, Fn, 3 * Cin), dt)

    # kx = 0 tap (f-1); boundary column f=0 is the conv's zero padding.
    s_ref[1:Tn + 1, 1:Fn, 0:Cin] = hb[:, 0:Fn - 1, :]
    s_ref[1:Tn + 1, 0:1, 0:Cin] = jnp.zeros((Tn, 1, Cin), dt)
    # kx = 1 tap (f).
    s_ref[1:Tn + 1, :, Cin:2 * Cin] = hb
    # kx = 2 tap (f+1); boundary column f=Fn-1 is the conv's zero padding.
    s_ref[1:Tn + 1, 0:Fn - 1, 2 * Cin:3 * Cin] = hb[:, 1:Fn, :]
    s_ref[1:Tn + 1, Fn - 1:Fn, 2 * Cin:3 * Cin] = jnp.zeros((Tn, 1, Cin), dt)

    acc = jnp.zeros((Tn, Fn, Cout), jnp.float32)
    for ky in range(3):
        tap = s_ref[ky:ky + Tn, :, :]          # (Tn, Fn, 3*Cin) -- read only
        wk = w_ref[ky]                         # (3*Cin, Cout)
        if Cin < 8:
            # Raw-feature conv (Cin in {1,2,3}): f32 VPU broadcast-FMA path.
            tapf = tap.astype(jnp.float32)
            wkf = wk.astype(jnp.float32)
            for j in range(3 * Cin):
                acc = acc + tapf[:, :, j:j + 1] * wkf[j:j + 1, :]
        else:
            # Native bf16 x bf16 -> f32 MXU matmul, K = 3*Cin.
            acc = acc + lax.dot_general(
                tap, wk,
                dimension_numbers=(((2,), (0,)), ((), ())),
                preferred_element_type=jnp.float32)

    acc = acc + b_ref[...]                     # (1, Cout) broadcasts
    return jnp.maximum(acc, 0.0)


def _maxpool2x2(h):
    """2x2 max pool, stride 2 (floor), on an NHWC value (T, F, C)."""
    Tn, Fn, C = h.shape
    T2, F2 = Tn // 2, Fn // 2
    h = h[: 2 * T2, : 2 * F2, :]
    # Pool over T (major dim): free reshape split + elementwise max.
    h = h.reshape(T2, 2, 2 * F2, C)
    h = jnp.maximum(h[:, 0], h[:, 1])          # (T2, 2*F2, C)
    # Pool over F: static loop over F2 (<= 20, independent of sequence length).
    cols = [jnp.maximum(h[:, 2 * j:2 * j + 1, :], h[:, 2 * j + 1:2 * j + 2, :])
            for j in range(F2)]
    return jnp.concatenate(cols, axis=1)       # (T2, F2, C)


# --------------------------------- kernel -----------------------------------

def _vgg_kernel(x_ref, w1, b1, w2, b2, w3, b3, w4, b4, o_ref,
                s1, s2, s3, s4):
    h = x_ref[0].astype(jnp.float32)          # (T,   F,   Cin)
    h = _conv3x3_relu(h, w1, b1, s1)          # (T,   F,   64)
    h = _conv3x3_relu(h, w2, b2, s2)          # (T,   F,   64)
    h = _maxpool2x2(h)                        # (T/2, F/2, 64)
    h = _conv3x3_relu(h, w3, b3, s3)          # (T/2, F/2, 128)
    h = _conv3x3_relu(h, w4, b4, s4)          # (T/2, F/2, 128)
    h = _maxpool2x2(h)                        # (T/4, F/4, 128)
    o_ref[0] = h.astype(o_ref.dtype)


# --------------------------------- wrapper ----------------------------------

def vgg_extractor_forward(feature, xlen, params):
    """feature: (B, T, D) float32 with D = in_channel * freq_dim.
    Returns (out of shape (B, T//4, out_dim), xlen // 4)."""
    B, T, D = feature.shape
    in_ch, freq, out_dim = _check_dim(D)
    xlen = jnp.asarray(xlen) // 4
    if T % 4 != 0:                                       # view_input crop
        feature = feature[:, : T - (T % 4), :]
        T = feature.shape[1]

    # PyTorch: (B,T,D) -> (B,T,Cin,F) -> NCHW.  Kernel wants NHWC (T, F, Cin).
    x = feature.reshape(B, T, in_ch, freq)
    x = jnp.transpose(x, (0, 1, 3, 2)).astype(jnp.float32)   # (B, T, F, Cin)

    # PyTorch conv weights (Cout, Cin, kH, kW) -> kx-folded (kH, kW*Cin, Cout).
    def prep_w(w, f32):
        cout, cin = w.shape[0], w.shape[1]
        wt = jnp.transpose(w, (2, 3, 1, 0)).reshape(3, 3 * cin, cout)
        return wt.astype(jnp.float32 if f32 else jnp.bfloat16)

    def prep_b(b):
        return b.reshape(1, -1).astype(jnp.float32)

    w1, b1 = prep_w(params["w1"], True), prep_b(params["b1"])   # f32 raw conv
    w2, b2 = prep_w(params["w2"], False), prep_b(params["b2"])
    w3, b3 = prep_w(params["w3"], False), prep_b(params["b3"])
    w4, b4 = prep_w(params["w4"], False), prep_b(params["b4"])

    T2, F2 = T // 2, freq // 2
    T4, F4 = T // 4, F2 // 2

    def full(shape):
        return pl.BlockSpec(shape, lambda b, _n=len(shape): (0,) * _n)

    out = pl.pallas_call(
        _vgg_kernel,
        out_shape=jax.ShapeDtypeStruct((B, T4, F4, 128), jnp.float32),
        grid=(B,),
        in_specs=[
            pl.BlockSpec((1, T, freq, in_ch), lambda b: (b, 0, 0, 0)),
            full(w1.shape), full(b1.shape),
            full(w2.shape), full(b2.shape),
            full(w3.shape), full(b3.shape),
            full(w4.shape), full(b4.shape),
        ],
        out_specs=pl.BlockSpec((1, T4, F4, 128), lambda b: (b, 0, 0, 0)),
        scratch_shapes=[
            pltpu.VMEM((T + 2, freq, 3 * in_ch), jnp.float32),   # conv1 taps
            pltpu.VMEM((T + 2, freq, 3 * 64), jnp.bfloat16),     # conv2 taps
            pltpu.VMEM((T2 + 2, F2, 3 * 64), jnp.bfloat16),      # conv3 taps
            pltpu.VMEM((T2 + 2, F2, 3 * 128), jnp.bfloat16),     # conv4 taps
        ],
        compiler_params=pltpu.CompilerParams(
            dimension_semantics=("parallel",),
            vmem_limit_bytes=48 * 1024 * 1024),
    )(x, w1, b1, w2, b2, w3, b3, w4, b4)

    # PyTorch epilogue: (B,128,T4,F4) -> transpose(1,2) -> view(B,T4,out_dim)
    out = jnp.transpose(out, (0, 1, 3, 2)).reshape(B, T4, out_dim)
    return out, xlen


# ------------------------------ pure-JAX reference ---------------------------

def reference_forward(feature, xlen, params):
    B, T, D = feature.shape
    in_ch, freq, out_dim = _check_dim(D)
    xlen = jnp.asarray(xlen) // 4
    if T % 4 != 0:
        feature = feature[:, : T - (T % 4), :]
        T = feature.shape[1]
    x = feature.reshape(B, T, in_ch, freq)
    x = jnp.transpose(x, (0, 2, 1, 3))                   # NCHW

    def conv(x, w, b):
        y = lax.conv_general_dilated(
            x, w, window_strides=(1, 1), padding="SAME",
            dimension_numbers=("NCHW", "OIHW", "NCHW"),
            precision=lax.Precision.HIGHEST)
        return jax.nn.relu(y + b.reshape(1, -1, 1, 1))

    def pool(x):
        return lax.reduce_window(x, -jnp.inf, lax.max,
                                 (1, 1, 2, 2), (1, 1, 2, 2), "VALID")

    x = conv(x, params["w1"], params["b1"])
    x = conv(x, params["w2"], params["b2"])
    x = pool(x)
    x = conv(x, params["w3"], params["b3"])
    x = conv(x, params["w4"], params["b4"])
    x = pool(x)
    x = jnp.transpose(x, (0, 2, 1, 3))
    return x.reshape(B, x.shape[1], out_dim), xlen


# ----------------------------------- main ------------------------------------

if __name__ == "__main__":
    B, T, D = 2, 10, 40          # D=40 -> in_channel=1, freq_dim=40, out_dim=1280
    in_ch, freq, out_dim = _check_dim(D)

    keys = jax.random.split(jax.random.PRNGKey(0), 9)
    feature = jax.random.normal(keys[0], (B, T, D), jnp.float32)
    xlen = jnp.array([10, 7], dtype=jnp.int32)

    def conv_init(kw, kb, cout, cin):
        scale = 1.0 / (cin * 9) ** 0.5
        w = jax.random.normal(kw, (cout, cin, 3, 3), jnp.float32) * scale
        b = jax.random.normal(kb, (cout,), jnp.float32) * 0.1
        return w, b

    w1, b1 = conv_init(keys[1], keys[2], 64, in_ch)
    w2, b2 = conv_init(keys[3], keys[4], 64, 64)
    w3, b3 = conv_init(keys[5], keys[6], 128, 64)
    w4, b4 = conv_init(keys[7], keys[8], 128, 128)
    params = dict(w1=w1, b1=b1, w2=w2, b2=b2, w3=w3, b3=b3, w4=w4, b4=b4)

    out, new_xlen = jax.jit(vgg_extractor_forward)(feature, xlen, params)
    out = jax.block_until_ready(out)

    ref_out, ref_xlen = reference_forward(feature, xlen, params)
    assert out.shape == ((B, (T - T % 4) // 4, out_dim)), out.shape
    assert jnp.array_equal(new_xlen, ref_xlen)
    max_err = float(jnp.max(jnp.abs(out - ref_out)))
    # conv2-4 run on native bf16 MXU operands (f32 accumulation), so allow a
    # bf16-level tolerance against the f32/HIGHEST reference.
    assert jnp.allclose(out, ref_out, atol=2e-2, rtol=2e-2), max_err
    print("KERNEL_OK")
</pallas_src>

<mosaic_0001>
module attributes {stable_mosaic.version = 11 : i64} {
  func.func @_vgg_kernel(%arg0: i32, %arg1: memref<1x8x40x1xf32, #tpu.memory_space<vmem>>, %arg2: memref<3x3x64xf32, #tpu.memory_space<vmem>>, %arg3: memref<1x64xf32, #tpu.memory_space<vmem>>, %arg4: memref<3x192x64xbf16, #tpu.memory_space<vmem>>, %arg5: memref<1x64xf32, #tpu.memory_space<vmem>>, %arg6: memref<3x192x128xbf16, #tpu.memory_space<vmem>>, %arg7: memref<1x128xf32, #tpu.memory_space<vmem>>, %arg8: memref<3x384x128xbf16, #tpu.memory_space<vmem>>, %arg9: memref<1x128xf32, #tpu.memory_space<vmem>>, %arg10: memref<1x2x10x128xf32, #tpu.memory_space<vmem>>, %arg11: memref<10x40x3xf32, #tpu.memory_space<vmem>>, %arg12: memref<10x40x192xbf16, #tpu.memory_space<vmem>>, %arg13: memref<6x20x192xbf16, #tpu.memory_space<vmem>>, %arg14: memref<6x20x384xbf16, #tpu.memory_space<vmem>>) attributes {dimension_semantics = [#tpu.dimension_semantics<parallel>], iteration_bounds = array<i64: 2>, scalar_prefetch = 0 : i64, scratch_operands = 4 : i64, tpu.core_type = #tpu.core_type<tc>, window_params = [{transform_indices = @transform_0, window_bounds = array<i64: 1, 8, 40, 1>}, {pipeline_mode = #tpu.pipeline_mode<synchronous>, transform_indices = @transform_1, window_bounds = array<i64: 3, 3, 64>}, {pipeline_mode = #tpu.pipeline_mode<synchronous>, transform_indices = @transform_2, window_bounds = array<i64: 1, 64>}, {pipeline_mode = #tpu.pipeline_mode<synchronous>, transform_indices = @transform_3, window_bounds = array<i64: 3, 192, 64>}, {pipeline_mode = #tpu.pipeline_mode<synchronous>, transform_indices = @transform_4, window_bounds = array<i64: 1, 64>}, {pipeline_mode = #tpu.pipeline_mode<synchronous>, transform_indices = @transform_5, window_bounds = array<i64: 3, 192, 128>}, {pipeline_mode = #tpu.pipeline_mode<synchronous>, transform_indices = @transform_6, window_bounds = array<i64: 1, 128>}, {pipeline_mode = #tpu.pipeline_mode<synchronous>, transform_indices = @transform_7, window_bounds = array<i64: 3, 384, 128>}, {pipeline_mode = #tpu.pipeline_mode<synchronous>, transform_indices = @transform_8, window_bounds = array<i64: 1, 128>}, {transform_indices = @transform_9, window_bounds = array<i64: 1, 2, 10, 128>}]} {
    %c0 = arith.constant 0 : index
    %c0_0 = arith.constant 0 : index
    %c0_1 = arith.constant 0 : index
    %c0_2 = arith.constant 0 : index
    %0 = vector.load %arg1[%c0, %c0_0, %c0_1, %c0_2] : memref<1x8x40x1xf32, #tpu.memory_space<vmem>>, vector<1x8x40x1xf32>
    %1 = vector.shape_cast %0 : vector<1x8x40x1xf32> to vector<8x40x1xf32>
    %cst = arith.constant 0.000000e+00 : f32
    %2 = vector.broadcast %cst : f32 to vector<1x40x3xf32>
    %c0_3 = arith.constant 0 : index
    %c0_4 = arith.constant 0 : index
    %c0_5 = arith.constant 0 : index
    %3 = vector.load %arg11[%c0_3, %c0_4, %c0_5] : memref<10x40x3xf32, #tpu.memory_space<vmem>>, vector<1x40x3xf32>
    tpu.vector_store %arg11[%c0_3, %c0_4, %c0_5], %2 {strides = array<i32>} : memref<10x40x3xf32, #tpu.memory_space<vmem>>, vector<1x40x3xf32>,
    %cst_6 = arith.constant 0.000000e+00 : f32
    %4 = vector.broadcast %cst_6 : f32 to vector<1x40x3xf32>
    %c9 = arith.constant 9 : index
    %c0_7 = arith.constant 0 : index
    %c0_8 = arith.constant 0 : index
    %5 = vector.load %arg11[%c9, %c0_7, %c0_8] : memref<10x40x3xf32, #tpu.memory_space<vmem>>, vector<1x40x3xf32>
    tpu.vector_store %arg11[%c9, %c0_7, %c0_8], %4 {strides = array<i32>} : memref<10x40x3xf32, #tpu.memory_space<vmem>>, vector<1x40x3xf32>,
    %6 = vector.extract_strided_slice %1 {offsets = [0, 0, 0], sizes = [8, 39, 1], strides = [1, 1, 1]} : vector<8x40x1xf32> to vector<8x39x1xf32>
    %c1 = arith.constant 1 : index
    %c1_9 = arith.constant 1 : index
    %c0_10 = arith.constant 0 : index
    %7 = vector.load %arg11[%c1, %c1_9, %c0_10] : memref<10x40x3xf32, #tpu.memory_space<vmem>>, vector<8x39x1xf32>
    tpu.vector_store %arg11[%c1, %c1_9, %c0_10], %6 {strides = array<i32>} : memref<10x40x3xf32, #tpu.memory_space<vmem>>, vector<8x39x1xf32>,
    %cst_11 = arith.constant 0.000000e+00 : f32
    %8 = vector.broadcast %cst_11 : f32 to vector<8x1x1xf32>
    %c1_12 = arith.constant 1 : index
    %c0_13 = arith.constant 0 : index
    %c0_14 = arith.constant 0 : index
    %9 = vector.load %arg11[%c1_12, %c0_13, %c0_14] : memref<10x40x3xf32, #tpu.memory_space<vmem>>, vector<8x1x1xf32>
    tpu.vector_store %arg11[%c1_12, %c0_13, %c0_14], %8 {strides = array<i32>} : memref<10x40x3xf32, #tpu.memory_space<vmem>>, vector<8x1x1xf32>,
    %c1_15 = arith.constant 1 : index
    %c0_16 = arith.constant 0 : index
    %c1_17 = arith.constant 1 : index
    %10 = vector.load %arg11[%c1_15, %c0_16, %c1_17] : memref<10x40x3xf32, #tpu.memory_space<vmem>>, vector<8x40x1xf32>
    tpu.vector_store %arg11[%c1_15, %c0_16, %c1_17], %1 {strides = array<i32>} : memref<10x40x3xf32, #tpu.memory_space<vmem>>, vector<8x40x1xf32>,
    %11 = vector.extract_strided_slice %1 {offsets = [0, 1, 0], sizes = [8, 39, 1], strides = [1, 1, 1]} : vector<8x40x1xf32> to vector<8x39x1xf32>
    %c1_18 = arith.constant 1 : index
    %c0_19 = arith.constant 0 : index
    %c2 = arith.constant 2 : index
    %12 = vector.load %arg11[%c1_18, %c0_19, %c2] : memref<10x40x3xf32, #tpu.memory_space<vmem>>, vector<8x39x1xf32>
    tpu.vector_store %arg11[%c1_18, %c0_19, %c2], %11 {strides = array<i32>} : memref<10x40x3xf32, #tpu.memory_space<vmem>>, vector<8x39x1xf32>,
    %cst_20 = arith.constant 0.000000e+00 : f32
    %13 = vector.broadcast %cst_20 : f32 to vector<8x1x1xf32>
    %c1_21 = arith.constant 1 : index
    %c39 = arith.constant 39 : index
    %c2_22 = arith.constant 2 : index
    %14 = vector.load %arg11[%c1_21, %c39, %c2_22] : memref<10x40x3xf32, #tpu.memory_space<vmem>>, vector<8x1x1xf32>
    tpu.vector_store %arg11[%c1_21, %c39, %c2_22], %13 {strides = array<i32>} : memref<10x40x3xf32, #tpu.memory_space<vmem>>, vector<8x1x1xf32>,
    %cst_23 = arith.constant 0.000000e+00 : f32
    %15 = vector.broadcast %cst_23 : f32 to vector<8x40x64xf32>
    %c0_24 = arith.constant 0 : index
    %c0_25 = arith.constant 0 : index
    %c0_26 = arith.constant 0 : index
    %16 = vector.load %arg11[%c0_24, %c0_25, %c0_26] : memref<10x40x3xf32, #tpu.memory_space<vmem>>, vector<8x40x3xf32>
    %c0_27 = arith.constant 0 : index
    %c0_28 = arith.constant 0 : index
    %c0_29 = arith.constant 0 : index
    %17 = vector.load %arg2[%c0_27, %c0_28, %c0_29] : memref<3x3x64xf32, #tpu.memory_space<vmem>>, vector<1x3x64xf32>
    %18 = vector.shape_cast %17 : vector<1x3x64xf32> to vector<3x64xf32>
    %19 = vector.extract_strided_slice %16 {offsets = [0, 0, 0], sizes = [8, 40, 1], strides = [1, 1, 1]} : vector<8x40x3xf32> to vector<8x40x1xf32>
    %20 = vector.extract_strided_slice %18 {offsets = [0, 0], sizes = [1, 64], strides = [1, 1]} : vector<3x64xf32> to vector<1x64xf32>
    %21 = vector.shape_cast %20 : vector<1x64xf32> to vector<1x1x64xf32>
    %22 = vector.broadcast %19 : vector<8x40x1xf32> to vector<8x40x64xf32>
    %23 = vector.broadcast %21 : vector<1x1x64xf32> to vector<8x40x64xf32>
    %24 = arith.mulf %22, %23 : vector<8x40x64xf32>
    %25 = arith.addf %15, %24 : vector<8x40x64xf32>
    %26 = vector.extract_strided_slice %16 {offsets = [0, 0, 1], sizes = [8, 40, 1], strides = [1, 1, 1]} : vector<8x40x3xf32> to vector<8x40x1xf32>
    %27 = vector.extract_strided_slice %18 {offsets = [1, 0], sizes = [1, 64], strides = [1, 1]} : vector<3x64xf32> to vector<1x64xf32>
    %28 = vector.shape_cast %27 : vector<1x64xf32> to vector<1x1x64xf32>
    %29 = vector.broadcast %26 : vector<8x40x1xf32> to vector<8x40x64xf32>
    %30 = vector.broadcast %28 : vector<1x1x64xf32> to vector<8x40x64xf32>
    %31 = arith.mulf %29, %30 : vector<8x40x64xf32>
    %32 = arith.addf %25, %31 : vector<8x40x64xf32>
    %33 = vector.extract_strided_slice %16 {offsets = [0, 0, 2], sizes = [8, 40, 1], strides = [1, 1, 1]} : vector<8x40x3xf32> to vector<8x40x1xf32>
    %34 = vector.extract_strided_slice %18 {offsets = [2, 0], sizes = [1, 64], strides = [1, 1]} : vector<3x64xf32> to vector<1x64xf32>
    %35 = vector.shape_cast %34 : vector<1x64xf32> to vector<1x1x64xf32>
    %36 = vector.broadcast %33 : vector<8x40x1xf32> to vector<8x40x64xf32>
    %37 = vector.broadcast %35 : vector<1x1x64xf32> to vector<8x40x64xf32>
    %38 = arith.mulf %36, %37 : vector<8x40x64xf32>
    %39 = arith.addf %32, %38 : vector<8x40x64xf32>
    %c1_30 = arith.constant 1 : index
    %c0_31 = arith.constant 0 : index
    %c0_32 = arith.constant 0 : index
    %40 = vector.load %arg11[%c1_30, %c0_31, %c0_32] : memref<10x40x3xf32, #tpu.memory_space<vmem>>, vector<8x40x3xf32>
    %c1_33 = arith.constant 1 : index
    %c0_34 = arith.constant 0 : index
    %c0_35 = arith.constant 0 : index
    %41 = vector.load %arg2[%c1_33, %c0_34, %c0_35] : memref<3x3x64xf32, #tpu.memory_space<vmem>>, vector<1x3x64xf32>
    %42 = vector.shape_cast %41 : vector<1x3x64xf32> to vector<3x64xf32>
    %43 = vector.extract_strided_slice %40 {offsets = [0, 0, 0], sizes = [8, 40, 1], strides = [1, 1, 1]} : vector<8x40x3xf32> to vector<8x40x1xf32>
    %44 = vector.extract_strided_slice %42 {offsets = [0, 0], sizes = [1, 64], strides = [1, 1]} : vector<3x64xf32> to vector<1x64xf32>
    %45 = vector.shape_cast %44 : vector<1x64xf32> to vector<1x1x64xf32>
    %46 = vector.broadcast %43 : vector<8x40x1xf32> to vector<8x40x64xf32>
    %47 = vector.broadcast %45 : vector<1x1x64xf32> to vector<8x40x64xf32>
    %48 = arith.mulf %46, %47 : vector<8x40x64xf32>
    %49 = arith.addf %39, %48 : vector<8x40x64xf32>
    %50 = vector.extract_strided_slice %40 {offsets = [0, 0, 1], sizes = [8, 40, 1], strides = [1, 1, 1]} : vector<8x40x3xf32> to vector<8x40x1xf32>
    %51 = vector.extract_strided_slice %42 {offsets = [1, 0], sizes = [1, 64], strides = [1, 1]} : vector<3x64xf32> to vector<1x64xf32>
    %52 = vector.shape_cast %51 : vector<1x64xf32> to vector<1x1x64xf32>
    %53 = vector.broadcast %50 : vector<8x40x1xf32> to vector<8x40x64xf32>
    %54 = vector.broadcast %52 : vector<1x1x64xf32> to vector<8x40x64xf32>
    %55 = arith.mulf %53, %54 : vector<8x40x64xf32>
    %56 = arith.addf %49, %55 : vector<8x40x64xf32>
    %57 = vector.extract_strided_slice %40 {offsets = [0, 0, 2], sizes = [8, 40, 1], strides = [1, 1, 1]} : vector<8x40x3xf32> to vector<8x40x1xf32>
    %58 = vector.extract_strided_slice %42 {offsets = [2, 0], sizes = [1, 64], strides = [1, 1]} : vector<3x64xf32> to vector<1x64xf32>
    %59 = vector.shape_cast %58 : vector<1x64xf32> to vector<1x1x64xf32>
    %60 = vector.broadcast %57 : vector<8x40x1xf32> to vector<8x40x64xf32>
    %61 = vector.broadcast %59 : vector<1x1x64xf32> to vector<8x40x64xf32>
    %62 = arith.mulf %60, %61 : vector<8x40x64xf32>
    %63 = arith.addf %56, %62 : vector<8x40x64xf32>
    %c2_36 = arith.constant 2 : index
    %c0_37 = arith.constant 0 : index
    %c0_38 = arith.constant 0 : index
    %64 = vector.load %arg11[%c2_36, %c0_37, %c0_38] : memref<10x40x3xf32, #tpu.memory_space<vmem>>, vector<8x40x3xf32>
    %c2_39 = arith.constant 2 : index
    %c0_40 = arith.constant 0 : index
    %c0_41 = arith.constant 0 : index
    %65 = vector.load %arg2[%c2_39, %c0_40, %c0_41] : memref<3x3x64xf32, #tpu.memory_space<vmem>>, vector<1x3x64xf32>
    %66 = vector.shape_cast %65 : vector<1x3x64xf32> to vector<3x64xf32>
    %67 = vector.extract_strided_slice %64 {offsets = [0, 0, 0], sizes = [8, 40, 1], strides = [1, 1, 1]} : vector<8x40x3xf32> to vector<8x40x1xf32>
    %68 = vector.extract_strided_slice %66 {offsets = [0, 0], sizes = [1, 64], strides = [1, 1]} : vector<3x64xf32> to vector<1x64xf32>
    %69 = vector.shape_cast %68 : vector<1x64xf32> to vector<1x1x64xf32>
    %70 = vector.broadcast %67 : vector<8x40x1xf32> to vector<8x40x64xf32>
    %71 = vector.broadcast %69 : vector<1x1x64xf32> to vector<8x40x64xf32>
    %72 = arith.mulf %70, %71 : vector<8x40x64xf32>
    %73 = arith.addf %63, %72 : vector<8x40x64xf32>
    %74 = vector.extract_strided_slice %64 {offsets = [0, 0, 1], sizes = [8, 40, 1], strides = [1, 1, 1]} : vector<8x40x3xf32> to vector<8x40x1xf32>
    %75 = vector.extract_strided_slice %66 {offsets = [1, 0], sizes = [1, 64], strides = [1, 1]} : vector<3x64xf32> to vector<1x64xf32>
    %76 = vector.shape_cast %75 : vector<1x64xf32> to vector<1x1x64xf32>
    %77 = vector.broadcast %74 : vector<8x40x1xf32> to vector<8x40x64xf32>
    %78 = vector.broadcast %76 : vector<1x1x64xf32> to vector<8x40x64xf32>
    %79 = arith.mulf %77, %78 : vector<8x40x64xf32>
    %80 = arith.addf %73, %79 : vector<8x40x64xf32>
    %81 = vector.extract_strided_slice %64 {offsets = [0, 0, 2], sizes = [8, 40, 1], strides = [1, 1, 1]} : vector<8x40x3xf32> to vector<8x40x1xf32>
    %82 = vector.extract_strided_slice %66 {offsets = [2, 0], sizes = [1, 64], strides = [1, 1]} : vector<3x64xf32> to vector<1x64xf32>
    %83 = vector.shape_cast %82 : vector<1x64xf32> to vector<1x1x64xf32>
    %84 = vector.broadcast %81 : vector<8x40x1xf32> to vector<8x40x64xf32>
    %85 = vector.broadcast %83 : vector<1x1x64xf32> to vector<8x40x64xf32>
    %86 = arith.mulf %84, %85 : vector<8x40x64xf32>
    %87 = arith.addf %80, %86 : vector<8x40x64xf32>
    %c0_42 = arith.constant 0 : index
    %c0_43 = arith.constant 0 : index
    %88 = vector.load %arg3[%c0_42, %c0_43] : memref<1x64xf32, #tpu.memory_space<vmem>>, vector<1x64xf32>
    %89 = vector.shape_cast %88 : vector<1x64xf32> to vector<1x1x64xf32>
    %90 = vector.broadcast %89 : vector<1x1x64xf32> to vector<8x40x64xf32>
    %91 = arith.addf %87, %90 : vector<8x40x64xf32>
    %cst_44 = arith.constant 0.000000e+00 : f32
    %92 = vector.broadcast %cst_44 : f32 to vector<8x40x64xf32>
    %93 = arith.maximumf %91, %92 : vector<8x40x64xf32>
    %94 = arith.truncf %93 : vector<8x40x64xf32> to vector<8x40x64xbf16>
    %cst_45 = arith.constant 0.000000e+00 : bf16
    %95 = vector.broadcast %cst_45 : bf16 to vector<1x40x192xbf16>
    %c0_46 = arith.constant 0 : index
    %c0_47 = arith.constant 0 : index
    %c0_48 = arith.constant 0 : index
    %96 = vector.load %arg12[%c0_46, %c0_47, %c0_48] : memref<10x40x192xbf16, #tpu.memory_space<vmem>>, vector<1x40x192xbf16>
    tpu.vector_store %arg12[%c0_46, %c0_47, %c0_48], %95 {strides = array<i32>} : memref<10x40x192xbf16, #tpu.memory_space<vmem>>, vector<1x40x192xbf16>,
    %cst_49 = arith.constant 0.000000e+00 : bf16
    %97 = vector.broadcast %cst_49 : bf16 to vector<1x40x192xbf16>
    %c9_50 = arith.constant 9 : index
    %c0_51 = arith.constant 0 : index
    %c0_52 = arith.constant 0 : index
    %98 = vector.load %arg12[%c9_50, %c0_51, %c0_52] : memref<10x40x192xbf16, #tpu.memory_space<vmem>>, vector<1x40x192xbf16>
    tpu.vector_store %arg12[%c9_50, %c0_51, %c0_52], %97 {strides = array<i32>} : memref<10x40x192xbf16, #tpu.memory_space<vmem>>, vector<1x40x192xbf16>,
    %99 = vector.extract_strided_slice %94 {offsets = [0, 0, 0], sizes = [8, 39, 64], strides = [1, 1, 1]} : vector<8x40x64xbf16> to vector<8x39x64xbf16>
    %c1_53 = arith.constant 1 : index
    %c1_54 = arith.constant 1 : index
    %c0_55 = arith.constant 0 : index
    %100 = vector.load %arg12[%c1_53, %c1_54, %c0_55] : memref<10x40x192xbf16, #tpu.memory_space<vmem>>, vector<8x39x64xbf16>
    tpu.vector_store %arg12[%c1_53, %c1_54, %c0_55], %99 {strides = array<i32>} : memref<10x40x192xbf16, #tpu.memory_space<vmem>>, vector<8x39x64xbf16>,
    %cst_56 = arith.constant 0.000000e+00 : bf16
    %101 = vector.broadcast %cst_56 : bf16 to vector<8x1x64xbf16>
    %c1_57 = arith.constant 1 : index
    %c0_58 = arith.constant 0 : index
    %c0_59 = arith.constant 0 : index
    %102 = vector.load %arg12[%c1_57, %c0_58, %c0_59] : memref<10x40x192xbf16, #tpu.memory_space<vmem>>, vector<8x1x64xbf16>
    tpu.vector_store %arg12[%c1_57, %c0_58, %c0_59], %101 {strides = array<i32>} : memref<10x40x192xbf16, #tpu.memory_space<vmem>>, vector<8x1x64xbf16>,
    %c1_60 = arith.constant 1 : index
    %c0_61 = arith.constant 0 : index
    %c64 = arith.constant 64 : index
    %103 = vector.load %arg12[%c1_60, %c0_61, %c64] : memref<10x40x192xbf16, #tpu.memory_space<vmem>>, vector<8x40x64xbf16>
    tpu.vector_store %arg12[%c1_60, %c0_61, %c64], %94 {strides = array<i32>} : memref<10x40x192xbf16, #tpu.memory_space<vmem>>, vector<8x40x64xbf16>,
    %104 = vector.extract_strided_slice %94 {offsets = [0, 1, 0], sizes = [8, 39, 64], strides = [1, 1, 1]} : vector<8x40x64xbf16> to vector<8x39x64xbf16>
    %c1_62 = arith.constant 1 : index
    %c0_63 = arith.constant 0 : index
    %c128 = arith.constant 128 : index
    %105 = vector.load %arg12[%c1_62, %c0_63, %c128] : memref<10x40x192xbf16, #tpu.memory_space<vmem>>, vector<8x39x64xbf16>
    tpu.vector_store %arg12[%c1_62, %c0_63, %c128], %104 {strides = array<i32>} : memref<10x40x192xbf16, #tpu.memory_space<vmem>>, vector<8x39x64xbf16>,
    %cst_64 = arith.constant 0.000000e+00 : bf16
    %106 = vector.broadcast %cst_64 : bf16 to vector<8x1x64xbf16>
    %c1_65 = arith.constant 1 : index
    %c39_66 = arith.constant 39 : index
    %c128_67 = arith.constant 128 : index
    %107 = vector.load %arg12[%c1_65, %c39_66, %c128_67] : memref<10x40x192xbf16, #tpu.memory_space<vmem>>, vector<8x1x64xbf16>
    tpu.vector_store %arg12[%c1_65, %c39_66, %c128_67], %106 {strides = array<i32>} : memref<10x40x192xbf16, #tpu.memory_space<vmem>>, vector<8x1x64xbf16>,
    %cst_68 = arith.constant 0.000000e+00 : f32
    %108 = vector.broadcast %cst_68 : f32 to vector<8x40x64xf32>
    %c0_69 = arith.constant 0 : index
    %c0_70 = arith.constant 0 : index
    %c0_71 = arith.constant 0 : index
    %109 = vector.load %arg12[%c0_69, %c0_70, %c0_71] : memref<10x40x192xbf16, #tpu.memory_space<vmem>>, vector<8x40x192xbf16>
    %c0_72 = arith.constant 0 : index
    %c0_73 = arith.constant 0 : index
    %c0_74 = arith.constant 0 : index
    %110 = vector.load %arg4[%c0_72, %c0_73, %c0_74] : memref<3x192x64xbf16, #tpu.memory_space<vmem>>, vector<1x192x64xbf16>
    %111 = vector.shape_cast %110 : vector<1x192x64xbf16> to vector<192x64xbf16>
    %cst_75 = arith.constant dense<0.000000e+00> : vector<8x40x64xf32>
    %112 = tpu.matmul %109, %111, %cst_75 {dimension_numbers = #tpu.dot_dimension_numbers<[2], [0], [0, 1], [1], [0, 0, 0, 1, 1, 1], [], []>} : vector<8x40x192xbf16>, vector<192x64xbf16>, vector<8x40x64xf32> -> vector<8x40x64xf32>
    %113 = arith.addf %108, %112 : vector<8x40x64xf32>
    %c1_76 = arith.constant 1 : index
    %c0_77 = arith.constant 0 : index
    %c0_78 = arith.constant 0 : index
    %114 = vector.load %arg12[%c1_76, %c0_77, %c0_78] : memref<10x40x192xbf16, #tpu.memory_space<vmem>>, vector<8x40x192xbf16>
    %c1_79 = arith.constant 1 : index
    %c0_80 = arith.constant 0 : index
    %c0_81 = arith.constant 0 : index
    %115 = vector.load %arg4[%c1_79, %c0_80, %c0_81] : memref<3x192x64xbf16, #tpu.memory_space<vmem>>, vector<1x192x64xbf16>
    %116 = vector.shape_cast %115 : vector<1x192x64xbf16> to vector<192x64xbf16>
    %cst_82 = arith.constant dense<0.000000e+00> : vector<8x40x64xf32>
    %117 = tpu.matmul %114, %116, %cst_82 {dimension_numbers = #tpu.dot_dimension_numbers<[2], [0], [0, 1], [1], [0, 0, 0, 1, 1, 1], [], []>} : vector<8x40x192xbf16>, vector<192x64xbf16>, vector<8x40x64xf32> -> vector<8x40x64xf32>
    %118 = arith.addf %113, %117 : vector<8x40x64xf32>
    %c2_83 = arith.constant 2 : index
    %c0_84 = arith.constant 0 : index
    %c0_85 = arith.constant 0 : index
    %119 = vector.load %arg12[%c2_83, %c0_84, %c0_85] : memref<10x40x192xbf16, #tpu.memory_space<vmem>>, vector<8x40x192xbf16>
    %c2_86 = arith.constant 2 : index
    %c0_87 = arith.constant 0 : index
    %c0_88 = arith.constant 0 : index
    %120 = vector.load %arg4[%c2_86, %c0_87, %c0_88] : memref<3x192x64xbf16, #tpu.memory_space<vmem>>, vector<1x192x64xbf16>
    %121 = vector.shape_cast %120 : vector<1x192x64xbf16> to vector<192x64xbf16>
    %cst_89 = arith.constant dense<0.000000e+00> : vector<8x40x64xf32>
    %122 = tpu.matmul %119, %121, %cst_89 {dimension_numbers = #tpu.dot_dimension_numbers<[2], [0], [0, 1], [1], [0, 0, 0, 1, 1, 1], [], []>} : vector<8x40x192xbf16>, vector<192x64xbf16>, vector<8x40x64xf32> -> vector<8x40x64xf32>
    %123 = arith.addf %118, %122 : vector<8x40x64xf32>
    %c0_90 = arith.constant 0 : index
    %c0_91 = arith.constant 0 : index
    %124 = vector.load %arg5[%c0_90, %c0_91] : memref<1x64xf32, #tpu.memory_space<vmem>>, vector<1x64xf32>
    %125 = vector.shape_cast %124 : vector<1x64xf32> to vector<1x1x64xf32>
    %126 = vector.broadcast %125 : vector<1x1x64xf32> to vector<8x40x64xf32>
    %127 = arith.addf %123, %126 : vector<8x40x64xf32>
    %cst_92 = arith.constant 0.000000e+00 : f32
    %128 = vector.broadcast %cst_92 : f32 to vector<8x40x64xf32>
    %129 = arith.maximumf %127, %128 : vector<8x40x64xf32>
    %130 = vector.shape_cast %129 : vector<8x40x64xf32> to vector<4x2x40x64xf32>
    %131 = vector.extract_strided_slice %130 {offsets = [0, 0, 0, 0], sizes = [4, 1, 40, 64], strides = [1, 1, 1, 1]} : vector<4x2x40x64xf32> to vector<4x1x40x64xf32>
    %132 = vector.shape_cast %131 : vector<4x1x40x64xf32> to vector<4x40x64xf32>
    %133 = vector.extract_strided_slice %130 {offsets = [0, 1, 0, 0], sizes = [4, 1, 40, 64], strides = [1, 1, 1, 1]} : vector<4x2x40x64xf32> to vector<4x1x40x64xf32>
    %134 = vector.shape_cast %133 : vector<4x1x40x64xf32> to vector<4x40x64xf32>
    %135 = arith.maximumf %132, %134 : vector<4x40x64xf32>
    %136 = vector.extract_strided_slice %135 {offsets = [0, 0, 0], sizes = [4, 1, 64], strides = [1, 1, 1]} : vector<4x40x64xf32> to vector<4x1x64xf32>
    %137 = vector.extract_strided_slice %135 {offsets = [0, 1, 0], sizes = [4, 1, 64], strides = [1, 1, 1]} : vector<4x40x64xf32> to vector<4x1x64xf32>
    %138 = arith.maximumf %136, %137 : vector<4x1x64xf32>
    %139 = vector.extract_strided_slice %135 {offsets = [0, 2, 0], sizes = [4, 1, 64], strides = [1, 1, 1]} : vector<4x40x64xf32> to vector<4x1x64xf32>
    %140 = vector.extract_strided_slice %135 {offsets = [0, 3, 0], sizes = [4, 1, 64], strides = [1, 1, 1]} : vector<4x40x64xf32> to vector<4x1x64xf32>
    %141 = arith.maximumf %139, %140 : vector<4x1x64xf32>
    %142 = vector.extract_strided_slice %135 {offsets = [0, 4, 0], sizes = [4, 1, 64], strides = [1, 1, 1]} : vector<4x40x64xf32> to vector<4x1x64xf32>
    %143 = vector.extract_strided_slice %135 {offsets = [0, 5, 0], sizes = [4, 1, 64], strides = [1, 1, 1]} : vector<4x40x64xf32> to vector<4x1x64xf32>
    %144 = arith.maximumf %142, %143 : vector<4x1x64xf32>
    %145 = vector.extract_strided_slice %135 {offsets = [0, 6, 0], sizes = [4, 1, 64], strides = [1, 1, 1]} : vector<4x40x64xf32> to vector<4x1x64xf32>
    %146 = vector.extract_strided_slice %135 {offsets = [0, 7, 0], sizes = [4, 1, 64], strides = [1, 1, 1]} : vector<4x40x64xf32> to vector<4x1x64xf32>
    %147 = arith.maximumf %145, %146 : vector<4x1x64xf32>
    %148 = vector.extract_strided_slice %135 {offsets = [0, 8, 0], sizes = [4, 1, 64], strides = [1, 1, 1]} : vector<4x40x64xf32> to vector<4x1x64xf32>
    %149 = vector.extract_strided_slice %135 {offsets = [0, 9, 0], sizes = [4, 1, 64], strides = [1, 1, 1]} : vector<4x40x64xf32> to vector<4x1x64xf32>
    %150 = arith.maximumf %148, %149 : vector<4x1x64xf32>
    %151 = vector.extract_strided_slice %135 {offsets = [0, 10, 0], sizes = [4, 1, 64], strides = [1, 1, 1]} : vector<4x40x64xf32> to vector<4x1x64xf32>
    %152 = vector.extract_strided_slice %135 {offsets = [0, 11, 0], sizes = [4, 1, 64], strides = [1, 1, 1]} : vector<4x40x64xf32> to vector<4x1x64xf32>
    %153 = arith.maximumf %151, %152 : vector<4x1x64xf32>
    %154 = vector.extract_strided_slice %135 {offsets = [0, 12, 0], sizes = [4, 1, 64], strides = [1, 1, 1]} : vector<4x40x64xf32> to vector<4x1x64xf32>
    %155 = vector.extract_strided_slice %135 {offsets = [0, 13, 0], sizes = [4, 1, 64], strides = [1, 1, 1]} : vector<4x40x64xf32> to vector<4x1x64xf32>
    %156 = arith.maximumf %154, %155 : vector<4x1x64xf32>
    %157 = vector.extract_strided_slice %135 {offsets = [0, 14, 0], sizes = [4, 1, 64], strides = [1, 1, 1]} : vector<4x40x64xf32> to vector<4x1x64xf32>
    %158 = vector.extract_strided_slice %135 {offsets = [0, 15, 0], sizes = [4, 1, 64], strides = [1, 1, 1]} : vector<4x40x64xf32> to vector<4x1x64xf32>
    %159 = arith.maximumf %157, %158 : vector<4x1x64xf32>
    %160 = vector.extract_strided_slice %135 {offsets = [0, 16, 0], sizes = [4, 1, 64], strides = [1, 1, 1]} : vector<4x40x64xf32> to vector<4x1x64xf32>
    %161 = vector.extract_strided_slice %135 {offsets = [0, 17, 0], sizes = [4, 1, 64], strides = [1, 1, 1]} : vector<4x40x64xf32> to vector<4x1x64xf32>
    %162 = arith.maximumf %160, %161 : vector<4x1x64xf32>
    %163 = vector.extract_strided_slice %135 {offsets = [0, 18, 0], sizes = [4, 1, 64], strides = [1, 1, 1]} : vector<4x40x64xf32> to vector<4x1x64xf32>
    %164 = vector.extract_strided_slice %135 {offsets = [0, 19, 0], sizes = [4, 1, 64], strides = [1, 1, 1]} : vector<4x40x64xf32> to vector<4x1x64xf32>
    %165 = arith.maximumf %163, %164 : vector<4x1x64xf32>
    %166 = vector.extract_strided_slice %135 {offsets = [0, 20, 0], sizes = [4, 1, 64], strides = [1, 1, 1]} : vector<4x40x64xf32> to vector<4x1x64xf32>
    %167 = vector.extract_strided_slice %135 {offsets = [0, 21, 0], sizes = [4, 1, 64], strides = [1, 1, 1]} : vector<4x40x64xf32> to vector<4x1x64xf32>
    %168 = arith.maximumf %166, %167 : vector<4x1x64xf32>
    %169 = vector.extract_strided_slice %135 {offsets = [0, 22, 0], sizes = [4, 1, 64], strides = [1, 1, 1]} : vector<4x40x64xf32> to vector<4x1x64xf32>
    %170 = vector.extract_strided_slice %135 {offsets = [0, 23, 0], sizes = [4, 1, 64], strides = [1, 1, 1]} : vector<4x40x64xf32> to vector<4x1x64xf32>
    %171 = arith.maximumf %169, %170 : vector<4x1x64xf32>
    %172 = vector.extract_strided_slice %135 {offsets = [0, 24, 0], sizes = [4, 1, 64], strides = [1, 1, 1]} : vector<4x40x64xf32> to vector<4x1x64xf32>
    %173 = vector.extract_strided_slice %135 {offsets = [0, 25, 0], sizes = [4, 1, 64], strides = [1, 1, 1]} : vector<4x40x64xf32> to vector<4x1x64xf32>
    %174 = arith.maximumf %172, %173 : vector<4x1x64xf32>
    %175 = vector.extract_strided_slice %135 {offsets = [0, 26, 0], sizes = [4, 1, 64], strides = [1, 1, 1]} : vector<4x40x64xf32> to vector<4x1x64xf32>
    %176 = vector.extract_strided_slice %135 {offsets = [0, 27, 0], sizes = [4, 1, 64], strides = [1, 1, 1]} : vector<4x40x64xf32> to vector<4x1x64xf32>
    %177 = arith.maximumf %175, %176 : vector<4x1x64xf32>
    %178 = vector.extract_strided_slice %135 {offsets = [0, 28, 0], sizes = [4, 1, 64], strides = [1, 1, 1]} : vector<4x40x64xf32> to vector<4x1x64xf32>
    %179 = vector.extract_strided_slice %135 {offsets = [0, 29, 0], sizes = [4, 1, 64], strides = [1, 1, 1]} : vector<4x40x64xf32> to vector<4x1x64xf32>
    %180 = arith.maximumf %178, %179 : vector<4x1x64xf32>
    %181 = vector.extract_strided_slice %135 {offsets = [0, 30, 0], sizes = [4, 1, 64], strides = [1, 1, 1]} : vector<4x40x64xf32> to vector<4x1x64xf32>
    %182 = vector.extract_strided_slice %135 {offsets = [0, 31, 0], sizes = [4, 1, 64], strides = [1, 1, 1]} : vector<4x40x64xf32> to vector<4x1x64xf32>
    %183 = arith.maximumf %181, %182 : vector<4x1x64xf32>
    %184 = vector.extract_strided_slice %135 {offsets = [0, 32, 0], sizes = [4, 1, 64], strides = [1, 1, 1]} : vector<4x40x64xf32> to vector<4x1x64xf32>
    %185 = vector.extract_strided_slice %135 {offsets = [0, 33, 0], sizes = [4, 1, 64], strides = [1, 1, 1]} : vector<4x40x64xf32> to vector<4x1x64xf32>
    %186 = arith.maximumf %184, %185 : vector<4x1x64xf32>
    %187 = vector.extract_strided_slice %135 {offsets = [0, 34, 0], sizes = [4, 1, 64], strides = [1, 1, 1]} : vector<4x40x64xf32> to vector<4x1x64xf32>
    %188 = vector.extract_strided_slice %135 {offsets = [0, 35, 0], sizes = [4, 1, 64], strides = [1, 1, 1]} : vector<4x40x64xf32> to vector<4x1x64xf32>
    %189 = arith.maximumf %187, %188 : vector<4x1x64xf32>
    %190 = vector.extract_strided_slice %135 {offsets = [0, 36, 0], sizes = [4, 1, 64], strides = [1, 1, 1]} : vector<4x40x64xf32> to vector<4x1x64xf32>
    %191 = vector.extract_strided_slice %135 {offsets = [0, 37, 0], sizes = [4, 1, 64], strides = [1, 1, 1]} : vector<4x40x64xf32> to vector<4x1x64xf32>
    %192 = arith.maximumf %190, %191 : vector<4x1x64xf32>
    %193 = vector.extract_strided_slice %135 {offsets = [0, 38, 0], sizes = [4, 1, 64], strides = [1, 1, 1]} : vector<4x40x64xf32> to vector<4x1x64xf32>
    %194 = vector.extract_strided_slice %135 {offsets = [0, 39, 0], sizes = [4, 1, 64], strides = [1, 1, 1]} : vector<4x40x64xf32> to vector<4x1x64xf32>
    %195 = arith.maximumf %193, %194 : vector<4x1x64xf32>
    %196 = tpu.concatenate %138, %141, %144, %147, %150, %153, %156, %159, %162, %165, %168, %171, %174, %177, %180, %183 in 1 : vector<4x1x64xf32>, vector<4x1x64xf32>, vector<4x1x64xf32>, vector<4x1x64xf32>, vector<4x1x64xf32>, vector<4x1x64xf32>, vector<4x1x64xf32>, vector<4x1x64xf32>, vector<4x1x64xf32>, vector<4x1x64xf32>, vector<4x1x64xf32>, vector<4x1x64xf32>, vector<4x1x64xf32>, vector<4x1x64xf32>, vector<4x1x64xf32>, vector<4x1x64xf32> -> vector<4x16x64xf32>
    %197 = tpu.concatenate %186, %189, %192, %195 in 1 : vector<4x1x64xf32>, vector<4x1x64xf32>, vector<4x1x64xf32>, vector<4x1x64xf32> -> vector<4x4x64xf32>
    %198 = tpu.concatenate %196, %197 in 1 : vector<4x16x64xf32>, vector<4x4x64xf32> -> vector<4x20x64xf32>
    %199 = arith.truncf %198 : vector<4x20x64xf32> to vector<4x20x64xbf16>
    %cst_93 = arith.constant 0.000000e+00 : bf16
    %200 = vector.broadcast %cst_93 : bf16 to vector<1x20x192xbf16>
    %c0_94 = arith.constant 0 : index
    %c0_95 = arith.constant 0 : index
    %c0_96 = arith.constant 0 : index
    %201 = vector.load %arg13[%c0_94, %c0_95, %c0_96] : memref<6x20x192xbf16, #tpu.memory_space<vmem>>, vector<1x20x192xbf16>
    tpu.vector_store %arg13[%c0_94, %c0_95, %c0_96], %200 {strides = array<i32>} : memref<6x20x192xbf16, #tpu.memory_space<vmem>>, vector<1x20x192xbf16>,
    %cst_97 = arith.constant 0.000000e+00 : bf16
    %202 = vector.broadcast %cst_97 : bf16 to vector<1x20x192xbf16>
    %c5 = arith.constant 5 : index
    %c0_98 = arith.constant 0 : index
    %c0_99 = arith.constant 0 : index
    %203 = vector.load %arg13[%c5, %c0_98, %c0_99] : memref<6x20x192xbf16, #tpu.memory_space<vmem>>, vector<1x20x192xbf16>
    tpu.vector_store %arg13[%c5, %c0_98, %c0_99], %202 {strides = array<i32>} : memref<6x20x192xbf16, #tpu.memory_space<vmem>>, vector<1x20x192xbf16>,
    %204 = vector.extract_strided_slice %199 {offsets = [0, 0, 0], sizes = [4, 19, 64], strides = [1, 1, 1]} : vector<4x20x64xbf16> to vector<4x19x64xbf16>
    %c1_100 = arith.constant 1 : index
    %c1_101 = arith.constant 1 : index
    %c0_102 = arith.constant 0 : index
    %205 = vector.load %arg13[%c1_100, %c1_101, %c0_102] : memref<6x20x192xbf16, #tpu.memory_space<vmem>>, vector<4x19x64xbf16>
    tpu.vector_store %arg13[%c1_100, %c1_101, %c0_102], %204 {strides = array<i32>} : memref<6x20x192xbf16, #tpu.memory_space<vmem>>, vector<4x19x64xbf16>,
    %cst_103 = arith.constant 0.000000e+00 : bf16
    %206 = vector.broadcast %cst_103 : bf16 to vector<4x1x64xbf16>
    %c1_104 = arith.constant 1 : index
    %c0_105 = arith.constant 0 : index
    %c0_106 = arith.constant 0 : index
    %207 = vector.load %arg13[%c1_104, %c0_105, %c0_106] : memref<6x20x192xbf16, #tpu.memory_space<vmem>>, vector<4x1x64xbf16>
    tpu.vector_store %arg13[%c1_104, %c0_105, %c0_106], %206 {strides = array<i32>} : memref<6x20x192xbf16, #tpu.memory_space<vmem>>, vector<4x1x64xbf16>,
    %c1_107 = arith.constant 1 : index
    %c0_108 = arith.constant 0 : index
    %c64_109 = arith.constant 64 : index
    %208 = vector.load %arg13[%c1_107, %c0_108, %c64_109] : memref<6x20x192xbf16, #tpu.memory_space<vmem>>, vector<4x20x64xbf16>
    tpu.vector_store %arg13[%c1_107, %c0_108, %c64_109], %199 {strides = array<i32>} : memref<6x20x192xbf16, #tpu.memory_space<vmem>>, vector<4x20x64xbf16>,
    %209 = vector.extract_strided_slice %199 {offsets = [0, 1, 0], sizes = [4, 19, 64], strides = [1, 1, 1]} : vector<4x20x64xbf16> to vector<4x19x64xbf16>
    %c1_110 = arith.constant 1 : index
    %c0_111 = arith.constant 0 : index
    %c128_112 = arith.constant 128 : index
    %210 = vector.load %arg13[%c1_110, %c0_111, %c128_112] : memref<6x20x192xbf16, #tpu.memory_space<vmem>>, vector<4x19x64xbf16>
    tpu.vector_store %arg13[%c1_110, %c0_111, %c128_112], %209 {strides = array<i32>} : memref<6x20x192xbf16, #tpu.memory_space<vmem>>, vector<4x19x64xbf16>,
    %cst_113 = arith.constant 0.000000e+00 : bf16
    %211 = vector.broadcast %cst_113 : bf16 to vector<4x1x64xbf16>
    %c1_114 = arith.constant 1 : index
    %c19 = arith.constant 19 : index
    %c128_115 = arith.constant 128 : index
    %212 = vector.load %arg13[%c1_114, %c19, %c128_115] : memref<6x20x192xbf16, #tpu.memory_space<vmem>>, vector<4x1x64xbf16>
    tpu.vector_store %arg13[%c1_114, %c19, %c128_115], %211 {strides = array<i32>} : memref<6x20x192xbf16, #tpu.memory_space<vmem>>, vector<4x1x64xbf16>,
    %cst_116 = arith.constant 0.000000e+00 : f32
    %213 = vector.broadcast %cst_116 : f32 to vector<4x20x128xf32>
    %c0_117 = arith.constant 0 : index
    %c0_118 = arith.constant 0 : index
    %c0_119 = arith.constant 0 : index
    %214 = vector.load %arg13[%c0_117, %c0_118, %c0_119] : memref<6x20x192xbf16, #tpu.memory_space<vmem>>, vector<4x20x192xbf16>
    %c0_120 = arith.constant 0 : index
    %c0_121 = arith.constant 0 : index
    %c0_122 = arith.constant 0 : index
    %215 = vector.load %arg6[%c0_120, %c0_121, %c0_122] : memref<3x192x128xbf16, #tpu.memory_space<vmem>>, vector<1x192x128xbf16>
    %216 = vector.shape_cast %215 : vector<1x192x128xbf16> to vector<192x128xbf16>
    %cst_123 = arith.constant dense<0.000000e+00> : vector<4x20x128xf32>
    %217 = tpu.matmul %214, %216, %cst_123 {dimension_numbers = #tpu.dot_dimension_numbers<[2], [0], [0, 1], [1], [0, 0, 0, 1, 1, 1], [], []>} : vector<4x20x192xbf16>, vector<192x128xbf16>, vector<4x20x128xf32> -> vector<4x20x128xf32>
    %218 = arith.addf %213, %217 : vector<4x20x128xf32>
    %c1_124 = arith.constant 1 : index
    %c0_125 = arith.constant 0 : index
    %c0_126 = arith.constant 0 : index
    %219 = vector.load %arg13[%c1_124, %c0_125, %c0_126] : memref<6x20x192xbf16, #tpu.memory_space<vmem>>, vector<4x20x192xbf16>
    %c1_127 = arith.constant 1 : index
    %c0_128 = arith.constant 0 : index
    %c0_129 = arith.constant 0 : index
    %220 = vector.load %arg6[%c1_127, %c0_128, %c0_129] : memref<3x192x128xbf16, #tpu.memory_space<vmem>>, vector<1x192x128xbf16>
    %221 = vector.shape_cast %220 : vector<1x192x128xbf16> to vector<192x128xbf16>
    %cst_130 = arith.constant dense<0.000000e+00> : vector<4x20x128xf32>
    %222 = tpu.matmul %219, %221, %cst_130 {dimension_numbers = #tpu.dot_dimension_numbers<[2], [0], [0, 1], [1], [0, 0, 0, 1, 1, 1], [], []>} : vector<4x20x192xbf16>, vector<192x128xbf16>, vector<4x20x128xf32> -> vector<4x20x128xf32>
    %223 = arith.addf %218, %222 : vector<4x20x128xf32>
    %c2_131 = arith.constant 2 : index
    %c0_132 = arith.constant 0 : index
    %c0_133 = arith.constant 0 : index
    %224 = vector.load %arg13[%c2_131, %c0_132, %c0_133] : memref<6x20x192xbf16, #tpu.memory_space<vmem>>, vector<4x20x192xbf16>
    %c2_134 = arith.constant 2 : index
    %c0_135 = arith.constant 0 : index
    %c0_136 = arith.constant 0 : index
    %225 = vector.load %arg6[%c2_134, %c0_135, %c0_136] : memref<3x192x128xbf16, #tpu.memory_space<vmem>>, vector<1x192x128xbf16>
    %226 = vector.shape_cast %225 : vector<1x192x128xbf16> to vector<192x128xbf16>
    %cst_137 = arith.constant dense<0.000000e+00> : vector<4x20x128xf32>
    %227 = tpu.matmul %224, %226, %cst_137 {dimension_numbers = #tpu.dot_dimension_numbers<[2], [0], [0, 1], [1], [0, 0, 0, 1, 1, 1], [], []>} : vector<4x20x192xbf16>, vector<192x128xbf16>, vector<4x20x128xf32> -> vector<4x20x128xf32>
    %228 = arith.addf %223, %227 : vector<4x20x128xf32>
    %c0_138 = arith.constant 0 : index
    %c0_139 = arith.constant 0 : index
    %229 = vector.load %arg7[%c0_138, %c0_139] : memref<1x128xf32, #tpu.memory_space<vmem>>, vector<1x128xf32>
    %230 = vector.shape_cast %229 : vector<1x128xf32> to vector<1x1x128xf32>
    %231 = vector.broadcast %230 : vector<1x1x128xf32> to vector<4x20x128xf32>
    %232 = arith.addf %228, %231 : vector<4x20x128xf32>
    %cst_140 = arith.constant 0.000000e+00 : f32
    %233 = vector.broadcast %cst_140 : f32 to vector<4x20x128xf32>
    %234 = arith.maximumf %232, %233 : vector<4x20x128xf32>
    %235 = arith.truncf %234 : vector<4x20x128xf32> to vector<4x20x128xbf16>
    %cst_141 = arith.constant 0.000000e+00 : bf16
    %236 = vector.broadcast %cst_141 : bf16 to vector<1x20x384xbf16>
    %c0_142 = arith.constant 0 : index
    %c0_143 = arith.constant 0 : index
    %c0_144 = arith.constant 0 : index
    %237 = vector.load %arg14[%c0_142, %c0_143, %c0_144] : memref<6x20x384xbf16, #tpu.memory_space<vmem>>, vector<1x20x384xbf16>
    tpu.vector_store %arg14[%c0_142, %c0_143, %c0_144], %236 {strides = array<i32>} : memref<6x20x384xbf16, #tpu.memory_space<vmem>>, vector<1x20x384xbf16>,
    %cst_145 = arith.constant 0.000000e+00 : bf16
    %238 = vector.broadcast %cst_145 : bf16 to vector<1x20x384xbf16>
    %c5_146 = arith.constant 5 : index
    %c0_147 = arith.constant 0 : index
    %c0_148 = arith.constant 0 : index
    %239 = vector.load %arg14[%c5_146, %c0_147, %c0_148] : memref<6x20x384xbf16, #tpu.memory_space<vmem>>, vector<1x20x384xbf16>
    tpu.vector_store %arg14[%c5_146, %c0_147, %c0_148], %238 {strides = array<i32>} : memref<6x20x384xbf16, #tpu.memory_space<vmem>>, vector<1x20x384xbf16>,
    %240 = vector.extract_strided_slice %235 {offsets = [0, 0, 0], sizes = [4, 19, 128], strides = [1, 1, 1]} : vector<4x20x128xbf16> to vector<4x19x128xbf16>
    %c1_149 = arith.constant 1 : index
    %c1_150 = arith.constant 1 : index
    %c0_151 = arith.constant 0 : index
    %241 = vector.load %arg14[%c1_149, %c1_150, %c0_151] : memref<6x20x384xbf16, #tpu.memory_space<vmem>>, vector<4x19x128xbf16>
    tpu.vector_store %arg14[%c1_149, %c1_150, %c0_151], %240 {strides = array<i32>} : memref<6x20x384xbf16, #tpu.memory_space<vmem>>, vector<4x19x128xbf16>,
    %cst_152 = arith.constant 0.000000e+00 : bf16
    %242 = vector.broadcast %cst_152 : bf16 to vector<4x1x128xbf16>
    %c1_153 = arith.constant 1 : index
    %c0_154 = arith.constant 0 : index
    %c0_155 = arith.constant 0 : index
    %243 = vector.load %arg14[%c1_153, %c0_154, %c0_155] : memref<6x20x384xbf16, #tpu.memory_space<vmem>>, vector<4x1x128xbf16>
    tpu.vector_store %arg14[%c1_153, %c0_154, %c0_155], %242 {strides = array<i32>} : memref<6x20x384xbf16, #tpu.memory_space<vmem>>, vector<4x1x128xbf16>,
    %c1_156 = arith.constant 1 : index
    %c0_157 = arith.constant 0 : index
    %c128_158 = arith.constant 128 : index
    %244 = vector.load %arg14[%c1_156, %c0_157, %c128_158] : memref<6x20x384xbf16, #tpu.memory_space<vmem>>, vector<4x20x128xbf16>
    tpu.vector_store %arg14[%c1_156, %c0_157, %c128_158], %235 {strides = array<i32>} : memref<6x20x384xbf16, #tpu.memory_space<vmem>>, vector<4x20x128xbf16>,
    %245 = vector.extract_strided_slice %235 {offsets = [0, 1, 0], sizes = [4, 19, 128], strides = [1, 1, 1]} : vector<4x20x128xbf16> to vector<4x19x128xbf16>
    %c1_159 = arith.constant 1 : index
    %c0_160 = arith.constant 0 : index
    %c256 = arith.constant 256 : index
    %246 = vector.load %arg14[%c1_159, %c0_160, %c256] : memref<6x20x384xbf16, #tpu.memory_space<vmem>>, vector<4x19x128xbf16>
    tpu.vector_store %arg14[%c1_159, %c0_160, %c256], %245 {strides = array<i32>} : memref<6x20x384xbf16, #tpu.memory_space<vmem>>, vector<4x19x128xbf16>,
    %cst_161 = arith.constant 0.000000e+00 : bf16
    %247 = vector.broadcast %cst_161 : bf16 to vector<4x1x128xbf16>
    %c1_162 = arith.constant 1 : index
    %c19_163 = arith.constant 19 : index
    %c256_164 = arith.constant 256 : index
    %248 = vector.load %arg14[%c1_162, %c19_163, %c256_164] : memref<6x20x384xbf16, #tpu.memory_space<vmem>>, vector<4x1x128xbf16>
    tpu.vector_store %arg14[%c1_162, %c19_163, %c256_164], %247 {strides = array<i32>} : memref<6x20x384xbf16, #tpu.memory_space<vmem>>, vector<4x1x128xbf16>,
    %cst_165 = arith.constant 0.000000e+00 : f32
    %249 = vector.broadcast %cst_165 : f32 to vector<4x20x128xf32>
    %c0_166 = arith.constant 0 : index
    %c0_167 = arith.constant 0 : index
    %c0_168 = arith.constant 0 : index
    %250 = vector.load %arg14[%c0_166, %c0_167, %c0_168] : memref<6x20x384xbf16, #tpu.memory_space<vmem>>, vector<4x20x384xbf16>
    %c0_169 = arith.constant 0 : index
    %c0_170 = arith.constant 0 : index
    %c0_171 = arith.constant 0 : index
    %251 = vector.load %arg8[%c0_169, %c0_170, %c0_171] : memref<3x384x128xbf16, #tpu.memory_space<vmem>>, vector<1x384x128xbf16>
    %252 = vector.shape_cast %251 : vector<1x384x128xbf16> to vector<384x128xbf16>
    %cst_172 = arith.constant dense<0.000000e+00> : vector<4x20x128xf32>
    %253 = tpu.matmul %250, %252, %cst_172 {dimension_numbers = #tpu.dot_dimension_numbers<[2], [0], [0, 1], [1], [0, 0, 0, 1, 1, 1], [], []>} : vector<4x20x384xbf16>, vector<384x128xbf16>, vector<4x20x128xf32> -> vector<4x20x128xf32>
    %254 = arith.addf %249, %253 : vector<4x20x128xf32>
    %c1_173 = arith.constant 1 : index
    %c0_174 = arith.constant 0 : index
    %c0_175 = arith.constant 0 : index
    %255 = vector.load %arg14[%c1_173, %c0_174, %c0_175] : memref<6x20x384xbf16, #tpu.memory_space<vmem>>, vector<4x20x384xbf16>
    %c1_176 = arith.constant 1 : index
    %c0_177 = arith.constant 0 : index
    %c0_178 = arith.constant 0 : index
    %256 = vector.load %arg8[%c1_176, %c0_177, %c0_178] : memref<3x384x128xbf16, #tpu.memory_space<vmem>>, vector<1x384x128xbf16>
    %257 = vector.shape_cast %256 : vector<1x384x128xbf16> to vector<384x128xbf16>
    %cst_179 = arith.constant dense<0.000000e+00> : vector<4x20x128xf32>
    %258 = tpu.matmul %255, %257, %cst_179 {dimension_numbers = #tpu.dot_dimension_numbers<[2], [0], [0, 1], [1], [0, 0, 0, 1, 1, 1], [], []>} : vector<4x20x384xbf16>, vector<384x128xbf16>, vector<4x20x128xf32> -> vector<4x20x128xf32>
    %259 = arith.addf %254, %258 : vector<4x20x128xf32>
    %c2_180 = arith.constant 2 : index
    %c0_181 = arith.constant 0 : index
    %c0_182 = arith.constant 0 : index
    %260 = vector.load %arg14[%c2_180, %c0_181, %c0_182] : memref<6x20x384xbf16, #tpu.memory_space<vmem>>, vector<4x20x384xbf16>
    %c2_183 = arith.constant 2 : index
    %c0_184 = arith.constant 0 : index
    %c0_185 = arith.constant 0 : index
    %261 = vector.load %arg8[%c2_183, %c0_184, %c0_185] : memref<3x384x128xbf16, #tpu.memory_space<vmem>>, vector<1x384x128xbf16>
    %262 = vector.shape_cast %261 : vector<1x384x128xbf16> to vector<384x128xbf16>
    %cst_186 = arith.constant dense<0.000000e+00> : vector<4x20x128xf32>
    %263 = tpu.matmul %260, %262, %cst_186 {dimension_numbers = #tpu.dot_dimension_numbers<[2], [0], [0, 1], [1], [0, 0, 0, 1, 1, 1], [], []>} : vector<4x20x384xbf16>, vector<384x128xbf16>, vector<4x20x128xf32> -> vector<4x20x128xf32>
    %264 = arith.addf %259, %263 : vector<4x20x128xf32>
    %c0_187 = arith.constant 0 : index
    %c0_188 = arith.constant 0 : index
    %265 = vector.load %arg9[%c0_187, %c0_188] : memref<1x128xf32, #tpu.memory_space<vmem>>, vector<1x128xf32>
    %266 = vector.shape_cast %265 : vector<1x128xf32> to vector<1x1x128xf32>
    %267 = vector.broadcast %266 : vector<1x1x128xf32> to vector<4x20x128xf32>
    %268 = arith.addf %264, %267 : vector<4x20x128xf32>
    %cst_189 = arith.constant 0.000000e+00 : f32
    %269 = vector.broadcast %cst_189 : f32 to vector<4x20x128xf32>
    %270 = arith.maximumf %268, %269 : vector<4x20x128xf32>
    %271 = vector.shape_cast %270 : vector<4x20x128xf32> to vector<2x2x20x128xf32>
    %272 = vector.extract_strided_slice %271 {offsets = [0, 0, 0, 0], sizes = [2, 1, 20, 128], strides = [1, 1, 1, 1]} : vector<2x2x20x128xf32> to vector<2x1x20x128xf32>
    %273 = vector.shape_cast %272 : vector<2x1x20x128xf32> to vector<2x20x128xf32>
    %274 = vector.extract_strided_slice %271 {offsets = [0, 1, 0, 0], sizes = [2, 1, 20, 128], strides = [1, 1, 1, 1]} : vector<2x2x20x128xf32> to vector<2x1x20x128xf32>
    %275 = vector.shape_cast %274 : vector<2x1x20x128xf32> to vector<2x20x128xf32>
    %276 = arith.maximumf %273, %275 : vector<2x20x128xf32>
    %277 = vector.extract_strided_slice %276 {offsets = [0, 0, 0], sizes = [2, 1, 128], strides = [1, 1, 1]} : vector<2x20x128xf32> to vector<2x1x128xf32>
    %278 = vector.extract_strided_slice %276 {offsets = [0, 1, 0], sizes = [2, 1, 128], strides = [1, 1, 1]} : vector<2x20x128xf32> to vector<2x1x128xf32>
    %279 = arith.maximumf %277, %278 : vector<2x1x128xf32>
    %280 = vector.extract_strided_slice %276 {offsets = [0, 2, 0], sizes = [2, 1, 128], strides = [1, 1, 1]} : vector<2x20x128xf32> to vector<2x1x128xf32>
    %281 = vector.extract_strided_slice %276 {offsets = [0, 3, 0], sizes = [2, 1, 128], strides = [1, 1, 1]} : vector<2x20x128xf32> to vector<2x1x128xf32>
    %282 = arith.maximumf %280, %281 : vector<2x1x128xf32>
    %283 = vector.extract_strided_slice %276 {offsets = [0, 4, 0], sizes = [2, 1, 128], strides = [1, 1, 1]} : vector<2x20x128xf32> to vector<2x1x128xf32>
    %284 = vector.extract_strided_slice %276 {offsets = [0, 5, 0], sizes = [2, 1, 128], strides = [1, 1, 1]} : vector<2x20x128xf32> to vector<2x1x128xf32>
    %285 = arith.maximumf %283, %284 : vector<2x1x128xf32>
    %286 = vector.extract_strided_slice %276 {offsets = [0, 6, 0], sizes = [2, 1, 128], strides = [1, 1, 1]} : vector<2x20x128xf32> to vector<2x1x128xf32>
    %287 = vector.extract_strided_slice %276 {offsets = [0, 7, 0], sizes = [2, 1, 128], strides = [1, 1, 1]} : vector<2x20x128xf32> to vector<2x1x128xf32>
    %288 = arith.maximumf %286, %287 : vector<2x1x128xf32>
    %289 = vector.extract_strided_slice %276 {offsets = [0, 8, 0], sizes = [2, 1, 128], strides = [1, 1, 1]} : vector<2x20x128xf32> to vector<2x1x128xf32>
    %290 = vector.extract_strided_slice %276 {offsets = [0, 9, 0], sizes = [2, 1, 128], strides = [1, 1, 1]} : vector<2x20x128xf32> to vector<2x1x128xf32>
    %291 = arith.maximumf %289, %290 : vector<2x1x128xf32>
    %292 = vector.extract_strided_slice %276 {offsets = [0, 10, 0], sizes = [2, 1, 128], strides = [1, 1, 1]} : vector<2x20x128xf32> to vector<2x1x128xf32>
    %293 = vector.extract_strided_slice %276 {offsets = [0, 11, 0], sizes = [2, 1, 128], strides = [1, 1, 1]} : vector<2x20x128xf32> to vector<2x1x128xf32>
    %294 = arith.maximumf %292, %293 : vector<2x1x128xf32>
    %295 = vector.extract_strided_slice %276 {offsets = [0, 12, 0], sizes = [2, 1, 128], strides = [1, 1, 1]} : vector<2x20x128xf32> to vector<2x1x128xf32>
    %296 = vector.extract_strided_slice %276 {offsets = [0, 13, 0], sizes = [2, 1, 128], strides = [1, 1, 1]} : vector<2x20x128xf32> to vector<2x1x128xf32>
    %297 = arith.maximumf %295, %296 : vector<2x1x128xf32>
    %298 = vector.extract_strided_slice %276 {offsets = [0, 14, 0], sizes = [2, 1, 128], strides = [1, 1, 1]} : vector<2x20x128xf32> to vector<2x1x128xf32>
    %299 = vector.extract_strided_slice %276 {offsets = [0, 15, 0], sizes = [2, 1, 128], strides = [1, 1, 1]} : vector<2x20x128xf32> to vector<2x1x128xf32>
    %300 = arith.maximumf %298, %299 : vector<2x1x128xf32>
    %301 = vector.extract_strided_slice %276 {offsets = [0, 16, 0], sizes = [2, 1, 128], strides = [1, 1, 1]} : vector<2x20x128xf32> to vector<2x1x128xf32>
    %302 = vector.extract_strided_slice %276 {offsets = [0, 17, 0], sizes = [2, 1, 128], strides = [1, 1, 1]} : vector<2x20x128xf32> to vector<2x1x128xf32>
    %303 = arith.maximumf %301, %302 : vector<2x1x128xf32>
    %304 = vector.extract_strided_slice %276 {offsets = [0, 18, 0], sizes = [2, 1, 128], strides = [1, 1, 1]} : vector<2x20x128xf32> to vector<2x1x128xf32>
    %305 = vector.extract_strided_slice %276 {offsets = [0, 19, 0], sizes = [2, 1, 128], strides = [1, 1, 1]} : vector<2x20x128xf32> to vector<2x1x128xf32>
    %306 = arith.maximumf %304, %305 : vector<2x1x128xf32>
    %307 = tpu.concatenate %279, %282, %285, %288, %291, %294, %297, %300, %303, %306 in 1 : vector<2x1x128xf32>, vector<2x1x128xf32>, vector<2x1x128xf32>, vector<2x1x128xf32>, vector<2x1x128xf32>, vector<2x1x128xf32>, vector<2x1x128xf32>, vector<2x1x128xf32>, vector<2x1x128xf32>, vector<2x1x128xf32> -> vector<2x10x128xf32>
    %c0_190 = arith.constant 0 : index
    %c0_191 = arith.constant 0 : index
    %c0_192 = arith.constant 0 : index
    %c0_193 = arith.constant 0 : index
    %308 = vector.load %arg10[%c0_190, %c0_191, %c0_192, %c0_193] : memref<1x2x10x128xf32, #tpu.memory_space<vmem>>, vector<1x2x10x128xf32>
    %309 = vector.shape_cast %308 : vector<1x2x10x128xf32> to vector<2x10x128xf32>
    %310 = vector.shape_cast %307 : vector<2x10x128xf32> to vector<1x2x10x128xf32>
    tpu.vector_store %arg10[%c0_190, %c0_191, %c0_192, %c0_193], %310 {strides = array<i32>} : memref<1x2x10x128xf32, #tpu.memory_space<vmem>>, vector<1x2x10x128xf32>,
    return
  }
  func.func @transform_0(%arg0: i32) -> (i32, i32, i32, i32) {
    %c0_i32 = arith.constant 0 : i32
    %c0_i32_0 = arith.constant 0 : i32
    %c0_i32_1 = arith.constant 0 : i32
    %c0_i32_2 = arith.constant 0 : i32
    return %arg0, %c0_i32, %c0_i32_0, %c0_i32_1 : i32, i32, i32, i32
  }
  func.func @transform_1(%arg0: i32) -> (i32, i32, i32) {
    %c0_i32 = arith.constant 0 : i32
    %c0_i32_0 = arith.constant 0 : i32
    %c0_i32_1 = arith.constant 0 : i32
    %c0_i32_2 = arith.constant 0 : i32
    return %c0_i32, %c0_i32_0, %c0_i32_1 : i32, i32, i32
  }
  func.func @transform_2(%arg0: i32) -> (i32, i32) {
    %c0_i32 = arith.constant 0 : i32
    %c0_i32_0 = arith.constant 0 : i32
    %c0_i32_1 = arith.constant 0 : i32
    return %c0_i32, %c0_i32_0 : i32, i32
  }
  func.func @transform_3(%arg0: i32) -> (i32, i32, i32) {
    %c0_i32 = arith.constant 0 : i32
    %c0_i32_0 = arith.constant 0 : i32
    %c0_i32_1 = arith.constant 0 : i32
    %c0_i32_2 = arith.constant 0 : i32
    return %c0_i32, %c0_i32_0, %c0_i32_1 : i32, i32, i32
  }
  func.func @transform_4(%arg0: i32) -> (i32, i32) {
    %c0_i32 = arith.constant 0 : i32
    %c0_i32_0 = arith.constant 0 : i32
    %c0_i32_1 = arith.constant 0 : i32
    return %c0_i32, %c0_i32_0 : i32, i32
  }
  func.func @transform_5(%arg0: i32) -> (i32, i32, i32) {
    %c0_i32 = arith.constant 0 : i32
    %c0_i32_0 = arith.constant 0 : i32
    %c0_i32_1 = arith.constant 0 : i32
    %c0_i32_2 = arith.constant 0 : i32
    return %c0_i32, %c0_i32_0, %c0_i32_1 : i32, i32, i32
  }
  func.func @transform_6(%arg0: i32) -> (i32, i32) {
    %c0_i32 = arith.constant 0 : i32
    %c0_i32_0 = arith.constant 0 : i32
    %c0_i32_1 = arith.constant 0 : i32
    return %c0_i32, %c0_i32_0 : i32, i32
  }
  func.func @transform_7(%arg0: i32) -> (i32, i32, i32) {
    %c0_i32 = arith.constant 0 : i32
    %c0_i32_0 = arith.constant 0 : i32
    %c0_i32_1 = arith.constant 0 : i32
    %c0_i32_2 = arith.constant 0 : i32
    return %c0_i32, %c0_i32_0, %c0_i32_1 : i32, i32, i32
  }
  func.func @transform_8(%arg0: i32) -> (i32, i32) {
    %c0_i32 = arith.constant 0 : i32
    %c0_i32_0 = arith.constant 0 : i32
    %c0_i32_1 = arith.constant 0 : i32
    return %c0_i32, %c0_i32_0 : i32, i32
  }
  func.func @transform_9(%arg0: i32) -> (i32, i32, i32, i32) {
    %c0_i32 = arith.constant 0 : i32
    %c0_i32_0 = arith.constant 0 : i32
    %c0_i32_1 = arith.constant 0 : i32
    %c0_i32_2 = arith.constant 0 : i32
    return %arg0, %c0_i32, %c0_i32_0, %c0_i32_1 : i32, i32, i32, i32
  }
}

</mosaic_0001>

<llo_original>
// kernel: vgg_extractor_forward.1
$region0: #{vgg_extractor_forward.1}
  #allocation0 [shape = 'u32[]', space=smem, size = 0x4, offset = 0x4, fixed_abs, tag = 'smem constant byte address 0x4 - core index']
  #allocation1 [shape = 'u32[72,128]{1,0:T(1,128)}', space=vmem, size = 0x9000, scoped, tag = 'internal scratch']
  #allocation2 [shape = 'f32[10,40,3]{2,1,0:T(8,128)}', space=vmem, size = 0x32000, scoped, tag = 'scratch operand']
  #allocation3 [shape = 'bf16[10,40,192]{2,1,0:T(8,128)(2,1)}', space=vmem, size = 0x32000, scoped, tag = 'scratch operand']
  #allocation4 [shape = 'bf16[6,20,192]{2,1,0:T(8,128)(2,1)}', space=vmem, size = 0x12000, scoped, tag = 'scratch operand']
  #allocation5 [shape = 'bf16[6,20,384]{2,1,0:T(8,128)(2,1)}', space=vmem, size = 0x1b000, scoped, tag = 'scratch operand']
  %s0 = inlined_call_operand.vmem [shape: f32[2,8,40,1], index: 0, kind: input, shape index: {}]
  %s1 = inlined_call_operand.vmem [shape: f32[3,3,64], index: 1, kind: input, shape index: {}]
  %s2 = inlined_call_operand.vmem [shape: f32[1,64], index: 2, kind: input, shape index: {}]
  %s3 = inlined_call_operand.vmem [shape: bf16[3,192,64], index: 3, kind: input, shape index: {}]
  %s4 = inlined_call_operand.vmem [shape: f32[1,64], index: 4, kind: input, shape index: {}]
  %s5 = inlined_call_operand.vmem [shape: bf16[3,192,128], index: 5, kind: input, shape index: {}]
  %s6 = inlined_call_operand.vmem [shape: f32[1,128], index: 6, kind: input, shape index: {}]
  %s7 = inlined_call_operand.vmem [shape: bf16[3,384,128], index: 7, kind: input, shape index: {}]
  %s8 = inlined_call_operand.vmem [shape: f32[1,128], index: 8, kind: input, shape index: {}]
  %s9 = inlined_call_operand.vmem [shape: f32[2,2,10,128], index: 9, kind: output, shape index: {}]
  %s10 = sld [smem:[#allocation0]]
  $region69: #{vgg_extractor_forward.1} parent=0
    _
  %s12 = ssub.s32 1, %s10
  %s13 = scalar_select 0, %s12, %s10
  loop: start=0, step=1, limit=4
  $region2: #{vgg_extractor_forward.1} parent=0 // loop_pre_header
    _
  $region3: #{vgg_extractor_forward.1} parent=0 // loop_header
    %s15 = sphi 0, %s19
    %p16 = scmp.ge.s32.totalorder %s15, 4
    %s25 = sphi 0, %s27
    %s28 = sphi 0, %s25
    %s29 = sphi 0, %s28
    %s45 = sphi 0, %s29
    %s49 = sphi 0, %s49
    %s51 = sphi 0, %s49
    %s52 = sphi 0, %s51
    %s66 = sphi 0, %s52
    %s70 = sphi 0, %s70
    %s72 = sphi 0, %s70
    %s73 = sphi 0, %s72
    %s87 = sphi 0, %s73
    %s91 = sphi 0, %s91
    %s93 = sphi 0, %s91
    %s94 = sphi 0, %s93
    %s108 = sphi 0, %s94
    %s112 = sphi 0, %s112
    %s114 = sphi 0, %s112
    %s115 = sphi 0, %s114
    %s129 = sphi 0, %s115
    %s133 = sphi 0, %s133
    %s135 = sphi 0, %s133
    %s136 = sphi 0, %s135
    %s150 = sphi 0, %s136
    %s154 = sphi 0, %s154
    %s156 = sphi 0, %s154
    %s157 = sphi 0, %s156
    %s171 = sphi 0, %s157
    %s175 = sphi 0, %s175
    %s177 = sphi 0, %s175
    %s178 = sphi 0, %s177
    %s192 = sphi 0, %s178
    %s196 = sphi 0, %s196
    %s198 = sphi 0, %s196
    %s199 = sphi 0, %s198
    %s213 = sphi 0, %s199
    %s219 = sphi 0, %s221
    %s222 = sphi 0, %s219
    %s223 = sphi 0, %s222
    %s239 = sphi 0, %s223
  $region4: #{vgg_extractor_forward.1} parent=0 // loop_header_branch
    %18 = sbr.rel (%p16) target = $region8
  $region5: #{vgg_extractor_forward.1} parent=0 // loop_body
    %s20 = ssub.s32 %s15, 1
    %s21 = ssub.s32 %s15, 2
    %s22 = sadd.s32 %s15, 1
    %s23 = ssub.s32 %s15, %s22
    %p24 = scmp.eq.s32.totalorder %s23, 0
    %s26 = sadd.s32 %s25, 1
    %s27 = scalar_select %p24, %s25, %s26
    %p30 = pneg %p24
    %p31 = scmp.eq.s32.totalorder %s15, 1
    %p32 = por %p30, %p31
    %p33 = scmp.ne.s32.totalorder %s25, %s28
    %p34 = scmp.eq.s32.totalorder %s15, 0
    %p35 = por %p33, %p34
    %p36 = scmp.ne.s32.totalorder %s25, %s28
    %p37 = scmp.eq.s32.totalorder %s20, 1
    %p38 = por %p36, %p37
    %p39 = scmp.ne.s32.totalorder %s28, %s29
    %p40 = scmp.eq.s32.totalorder %s20, 0
    %p41 = por %p39, %p40
    %p42 = scmp.ne.s32.totalorder %s28, %s29
    %p43 = scmp.eq.s32.totalorder %s21, 1
    %p44 = por %p42, %p43
    %p46 = scmp.ne.s32.totalorder %s29, %s45
    %p47 = scmp.eq.s32.totalorder %s21, 0
    %p48 = por %p46, %p47
    %s50 = sadd.s32 %s49, 1
    %p53 = scmp.eq.s32.totalorder %s15, 1
    %p54 = scmp.ne.s32.totalorder %s49, %s51
    %p55 = scmp.eq.s32.totalorder %s15, 0
    %p56 = por %p54, %p55
    %p57 = scmp.ne.s32.totalorder %s49, %s51
    %p58 = scmp.eq.s32.totalorder %s20, 1
    %p59 = por %p57, %p58
    %p60 = scmp.ne.s32.totalorder %s51, %s52
    %p61 = scmp.eq.s32.totalorder %s20, 0
    %p62 = por %p60, %p61
    %p63 = scmp.ne.s32.totalorder %s51, %s52
    %p64 = scmp.eq.s32.totalorder %s21, 1
    %p65 = por %p63, %p64
    %p67 = scmp.ne.s32.totalorder %s52, %s66
    %p68 = scmp.eq.s32.totalorder %s21, 0
    %p69 = por %p67, %p68
    %s71 = sadd.s32 %s70, 1
    %p74 = scmp.eq.s32.totalorder %s15, 1
    %p75 = scmp.ne.s32.totalorder %s70, %s72
    %p76 = scmp.eq.s32.totalorder %s15, 0
    %p77 = por %p75, %p76
    %p78 = scmp.ne.s32.totalorder %s70, %s72
    %p79 = scmp.eq.s32.totalorder %s20, 1
    %p80 = por %p78, %p79
    %p81 = scmp.ne.s32.totalorder %s72, %s73
    %p82 = scmp.eq.s32.totalorder %s20, 0
    %p83 = por %p81, %p82
    %p84 = scmp.ne.s32.totalorder %s72, %s73
    %p85 = scmp.eq.s32.totalorder %s21, 1
    %p86 = por %p84, %p85
    %p88 = scmp.ne.s32.totalorder %s73, %s87
    %p89 = scmp.eq.s32.totalorder %s21, 0
    %p90 = por %p88, %p89
    %s92 = sadd.s32 %s91, 1
    %p95 = scmp.eq.s32.totalorder %s15, 1
    %p96 = scmp.ne.s32.totalorder %s91, %s93
    %p97 = scmp.eq.s32.totalorder %s15, 0
    %p98 = por %p96, %p97
    %p99 = scmp.ne.s32.totalorder %s91, %s93
    %p100 = scmp.eq.s32.totalorder %s20, 1
    %p101 = por %p99, %p100
    %p102 = scmp.ne.s32.totalorder %s93, %s94
    %p103 = scmp.eq.s32.totalorder %s20, 0
    %p104 = por %p102, %p103
    %p105 = scmp.ne.s32.totalorder %s93, %s94
    %p106 = scmp.eq.s32.totalorder %s21, 1
    %p107 = por %p105, %p106
    %p109 = scmp.ne.s32.totalorder %s94, %s108
    %p110 = scmp.eq.s32.totalorder %s21, 0
    %p111 = por %p109, %p110
    %s113 = sadd.s32 %s112, 1
    %p116 = scmp.eq.s32.totalorder %s15, 1
    %p117 = scmp.ne.s32.totalorder %s112, %s114
    %p118 = scmp.eq.s32.totalorder %s15, 0
    %p119 = por %p117, %p118
    %p120 = scmp.ne.s32.totalorder %s112, %s114
    %p121 = scmp.eq.s32.totalorder %s20, 1
    %p122 = por %p120, %p121
    %p123 = scmp.ne.s32.totalorder %s114, %s115
    %p124 = scmp.eq.s32.totalorder %s20, 0
    %p125 = por %p123, %p124
    %p126 = scmp.ne.s32.totalorder %s114, %s115
    %p127 = scmp.eq.s32.totalorder %s21, 1
    %p128 = por %p126, %p127
    %p130 = scmp.ne.s32.totalorder %s115, %s129
    %p131 = scmp.eq.s32.totalorder %s21, 0
    %p132 = por %p130, %p131
    %s134 = sadd.s32 %s133, 1
    %p137 = scmp.eq.s32.totalorder %s15, 1
    %p138 = scmp.ne.s32.totalorder %s133, %s135
    %p139 = scmp.eq.s32.totalorder %s15, 0
    %p140 = por %p138, %p139
    %p141 = scmp.ne.s32.totalorder %s133, %s135
    %p142 = scmp.eq.s32.totalorder %s20, 1
    %p143 = por %p141, %p142
    %p144 = scmp.ne.s32.totalorder %s135, %s136
    %p145 = scmp.eq.s32.totalorder %s20, 0
    %p146 = por %p144, %p145
    %p147 = scmp.ne.s32.totalorder %s135, %s136
    %p148 = scmp.eq.s32.totalorder %s21, 1
    %p149 = por %p147, %p148
    %p151 = scmp.ne.s32.totalorder %s136, %s150
    %p152 = scmp.eq.s32.totalorder %s21, 0
    %p153 = por %p151, %p152
    %s155 = sadd.s32 %s154, 1
    %p158 = scmp.eq.s32.totalorder %s15, 1
    %p159 = scmp.ne.s32.totalorder %s154, %s156
    %p160 = scmp.eq.s32.totalorder %s15, 0
    %p161 = por %p159, %p160
    %p162 = scmp.ne.s32.totalorder %s154, %s156
    %p163 = scmp.eq.s32.totalorder %s20, 1
    %p164 = por %p162, %p163
    %p165 = scmp.ne.s32.totalorder %s156, %s157
    %p166 = scmp.eq.s32.totalorder %s20, 0
    %p167 = por %p165, %p166
    %p168 = scmp.ne.s32.totalorder %s156, %s157
    %p169 = scmp.eq.s32.totalorder %s21, 1
    %p170 = por %p168, %p169
    %p172 = scmp.ne.s32.totalorder %s157, %s171
    %p173 = scmp.eq.s32.totalorder %s21, 0
    %p174 = por %p172, %p173
    %s176 = sadd.s32 %s175, 1
    %p179 = scmp.eq.s32.totalorder %s15, 1
    %p180 = scmp.ne.s32.totalorder %s175, %s177
    %p181 = scmp.eq.s32.totalorder %s15, 0
    %p182 = por %p180, %p181
    %p183 = scmp.ne.s32.totalorder %s175, %s177
    %p184 = scmp.eq.s32.totalorder %s20, 1
    %p185 = por %p183, %p184
    %p186 = scmp.ne.s32.totalorder %s177, %s178
    %p187 = scmp.eq.s32.totalorder %s20, 0
    %p188 = por %p186, %p187
    %p189 = scmp.ne.s32.totalorder %s177, %s178
    %p190 = scmp.eq.s32.totalorder %s21, 1
    %p191 = por %p189, %p190
    %p193 = scmp.ne.s32.totalorder %s178, %s192
    %p194 = scmp.eq.s32.totalorder %s21, 0
    %p195 = por %p193, %p194
    %s197 = sadd.s32 %s196, 1
    %p200 = scmp.eq.s32.totalorder %s15, 1
    %p201 = scmp.ne.s32.totalorder %s196, %s198
    %p202 = scmp.eq.s32.totalorder %s15, 0
    %p203 = por %p201, %p202
    %p204 = scmp.ne.s32.totalorder %s196, %s198
    %p205 = scmp.eq.s32.totalorder %s20, 1
    %p206 = por %p204, %p205
    %p207 = scmp.ne.s32.totalorder %s198, %s199
    %p208 = scmp.eq.s32.totalorder %s20, 0
    %p209 = por %p207, %p208
    %p210 = scmp.ne.s32.totalorder %s198, %s199
    %p211 = scmp.eq.s32.totalorder %s21, 1
    %p212 = por %p210, %p211
    %p214 = scmp.ne.s32.totalorder %s199, %s213
    %p215 = scmp.eq.s32.totalorder %s21, 0
    %p216 = por %p214, %p215
    %s217 = ssub.s32 %s15, %s22
    %p218 = scmp.eq.s32.totalorder %s217, 0
    %s220 = sadd.s32 %s219, 1
    %s221 = scalar_select %p218, %s219, %s220
    %p224 = pneg %p218
    %p225 = scmp.eq.s32.totalorder %s15, 1
    %p226 = por %p224, %p225
    %p227 = scmp.ne.s32.totalorder %s219, %s222
    %p228 = scmp.eq.s32.totalorder %s15, 0
    %p229 = por %p227, %p228
    %p230 = scmp.ne.s32.totalorder %s219, %s222
    %p231 = scmp.eq.s32.totalorder %s20, 1
    %p232 = por %p230, %p231
    %p233 = scmp.ne.s32.totalorder %s222, %s223
    %p234 = scmp.eq.s32.totalorder %s20, 0
    %p235 = por %p233, %p234
    %p236 = scmp.ne.s32.totalorder %s222, %s223
    %p237 = scmp.eq.s32.totalorder %s21, 1
    %p238 = por %p236, %p237
    %p240 = scmp.ne.s32.totalorder %s223, %s239
    %p241 = scmp.eq.s32.totalorder %s21, 0
    %p242 = por %p240, %p241
    %p243 = scmp.le.s32.totalorder 1, %s15
    %p244 = scmp.lt.s32.totalorder %s15, 3
    %p245 = pnand %p243, %p244
    %p246 = pneg %p245
    // Predicated region
    $region9: #{vgg_extractor_forward.1} parent=5 // pred_check
      _
    $region10: #{vgg_extractor_forward.1} parent=5 // pred_check_branch
      %248 = sbr.rel (%p245) target = $region12
    $region11: #{vgg_extractor_forward.1} parent=5 // pred_region
      %s249 = ssub.s32 %s15, 1
      // Predicated region
      $region13: #{vgg_extractor_forward.1} parent=11 // pred_check
        %p250 = pneg %p62
      $region14: #{vgg_extractor_forward.1} parent=11 // pred_check_branch
        %252 = sbr.rel (%p250) target = $region16
      $region15: #{vgg_extractor_forward.1} parent=11 // pred_region
        _
      $region16: #{vgg_extractor_forward.1} parent=11 // pred_fallthru
        _
      // Predicated region
      $region17: #{vgg_extractor_forward.1} parent=11 // pred_check
        %p253 = pneg %p83
      $region18: #{vgg_extractor_forward.1} parent=11 // pred_check_branch
        %255 = sbr.rel (%p253) target = $region20
      $region19: #{vgg_extractor_forward.1} parent=11 // pred_region
        _
      $region20: #{vgg_extractor_forward.1} parent=11 // pred_fallthru
        _
      // Predicated region
      $region21: #{vgg_extractor_forward.1} parent=11 // pred_check
        %p256 = pneg %p104
      $region22: #{vgg_extractor_forward.1} parent=11 // pred_check_branch
        %258 = sbr.rel (%p256) target = $region24
      $region23: #{vgg_extractor_forward.1} parent=11 // pred_region
        _
      $region24: #{vgg_extractor_forward.1} parent=11 // pred_fallthru
        _
      // Predicated region
      $region25: #{vgg_extractor_forward.1} parent=11 // pred_check
        %p259 = pneg %p125
      $region26: #{vgg_extractor_forward.1} parent=11 // pred_check_branch
        %261 = sbr.rel (%p259) target = $region28
      $region27: #{vgg_extractor_forward.1} parent=11 // pred_region
        _
      $region28: #{vgg_extractor_forward.1} parent=11 // pred_fallthru
        _
      // Predicated region
      $region29: #{vgg_extractor_forward.1} parent=11 // pred_check
        %p262 = pneg %p146
      $region30: #{vgg_extractor_forward.1} parent=11 // pred_check_branch
        %264 = sbr.rel (%p262) target = $region32
      $region31: #{vgg_extractor_forward.1} parent=11 // pred_region
        _
      $region32: #{vgg_extractor_forward.1} parent=11 // pred_fallthru
        _
      // Predicated region
      $region33: #{vgg_extractor_forward.1} parent=11 // pred_check
        %p265 = pneg %p167
      $region34: #{vgg_extractor_forward.1} parent=11 // pred_check_branch
        %267 = sbr.rel (%p265) target = $region36
      $region35: #{vgg_extractor_forward.1} parent=11 // pred_region
        _
      $region36: #{vgg_extractor_forward.1} parent=11 // pred_fallthru
        _
      // Predicated region
      $region37: #{vgg_extractor_forward.1} parent=11 // pred_check
        %p268 = pneg %p188
      $region38: #{vgg_extractor_forward.1} parent=11 // pred_check_branch
        %270 = sbr.rel (%p268) target = $region40
      $region39: #{vgg_extractor_forward.1} parent=11 // pred_region
        _
      $region40: #{vgg_extractor_forward.1} parent=11 // pred_fallthru
        _
      // Predicated region
      $region41: #{vgg_extractor_forward.1} parent=11 // pred_check
        %p271 = pneg %p209
      $region42: #{vgg_extractor_forward.1} parent=11 // pred_check_branch
        %273 = sbr.rel (%p271) target = $region44
      $region43: #{vgg_extractor_forward.1} parent=11 // pred_region
        _
      $region44: #{vgg_extractor_forward.1} parent=11 // pred_fallthru
        _
    $region12: #{vgg_extractor_forward.1} parent=5 // pred_fallthru
      _
    %p274 = scmp.lt.s32.totalorder %s15, 2
    // Predicated region
    $region45: #{vgg_extractor_forward.1} parent=5 // pred_check
      %p275 = pneg %p274
    $region46: #{vgg_extractor_forward.1} parent=5 // pred_check_branch
      %277 = sbr.rel (%p275) target = $region48
    $region47: #{vgg_extractor_forward.1} parent=5 // pred_region
      // Predicated region
      $region49: #{vgg_extractor_forward.1} parent=47 // pred_check
        %p278 = pneg %p35
      $region50: #{vgg_extractor_forward.1} parent=47 // pred_check_branch
        %280 = sbr.rel (%p278) target = $region52
      $region51: #{vgg_extractor_forward.1} parent=47 // pred_region
        %p281 = scmp.lt.s32.totalorder %s15, 1
        %s282 = scalar_select %p281, %s15, 1
        %s283 = smul.addr %s282, 40
        %s284 = smul.addr %s283, 8
        %s285 = scalar_lea.vmem %s0, %s284
      $region52: #{vgg_extractor_forward.1} parent=47 // pred_fallthru
        _
    $region48: #{vgg_extractor_forward.1} parent=5 // pred_fallthru
      _
    %p286 = scmp.le.s32.totalorder 1, %s15
    %p287 = scmp.lt.s32.totalorder %s15, 3
    %p288 = pnand %p286, %p287
    %p289 = pneg %p288
    // Predicated region
    $region53: #{vgg_extractor_forward.1} parent=5 // pred_check
      _
    $region54: #{vgg_extractor_forward.1} parent=5 // pred_check_branch
      %291 = sbr.rel (%p288) target = $region56
    $region55: #{vgg_extractor_forward.1} parent=5 // pred_region
      %s292 = ssub.s32 %s15, 1
      %p293 = scmp.lt.s32.totalorder %s20, 1
      %s294 = scalar_select %p293, %s20, 1
      %s295 = smul.addr %s294, 40
      %s296 = smul.addr %s295, 8
      %s297 = scalar_lea.vmem %s0, %s296
      %p298 = pneg %p41
      %p299 = pneg %p38
      %p300 = pneg %p62
      %p301 = pneg %p59
      %p302 = pneg %p83
      %p303 = pneg %p80
      %p304 = pneg %p104
      %p305 = pneg %p101
      %p306 = pneg %p125
      %p307 = pneg %p122
      %p308 = pneg %p146
      %p309 = pneg %p143
      %p310 = pneg %p167
      %p311 = pneg %p164
      %p312 = pneg %p188
      %p313 = pneg %p185
      %p314 = pneg %p209
      %p315 = pneg %p206
      %p316 = pneg %p235
      %p317 = pneg %p232
      %p318 = scmp.lt.s32.totalorder %s20, 1
      %s319 = scalar_select %p318, %s20, 1
      %s320 = smul.addr %s319, 4
      %s321 = smul.addr %s320, 8
      %s322 = scalar_lea.vmem %s9, %s321
      %p323 = scmp.lt.s32.totalorder %s20, 1
      %s324 = scalar_select %p323, %s20, 1
      %s325 = smul.addr %s324, 40
      %s326 = smul.addr %s325, 8
      %s327 = scalar_lea.vmem %s0, %s326
      %p328 = scmp.lt.s32.totalorder %s20, 1
      %s329 = scalar_select %p328, %s20, 1
      %s330 = smul.addr %s329, 4
      %s331 = smul.addr %s330, 8
      %s332 = scalar_lea.vmem %s9, %s331
      %v334 = vld [vmem:[%s327] sm:$0xff]
      %v335 = vld [vmem:[%s327 + $0x8] sm:$0xff]
      %v336 = vld [vmem:[%s327 + $0x10] sm:$0xff]
      %v337 = vld [vmem:[%s327 + $0x18] sm:$0xff]
      %v338 = vld [vmem:[%s327 + $0x20] sm:$0xff]
      %v339 = vld [vmem:[%s327 + $0x28] sm:$0xff]
      %v340 = vld [vmem:[%s327 + $0x30] sm:$0xff]
      %v341 = vld [vmem:[%s327 + $0x38] sm:$0xff]
      %v342 = vld [vmem:[%s327 + $0x40] sm:$0xff]
      %v343 = vld [vmem:[%s327 + $0x48] sm:$0xff]
      %v344 = vld [vmem:[%s327 + $0x50] sm:$0xff]
      %v345 = vld [vmem:[%s327 + $0x58] sm:$0xff]
      %v346 = vld [vmem:[%s327 + $0x60] sm:$0xff]
      %v347 = vld [vmem:[%s327 + $0x68] sm:$0xff]
      %v348 = vld [vmem:[%s327 + $0x70] sm:$0xff]
      %v349 = vld [vmem:[%s327 + $0x78] sm:$0xff]
      %v350 = vld [vmem:[%s327 + $0x80] sm:$0xff]
      %v351 = vld [vmem:[%s327 + $0x88] sm:$0xff]
      %v352 = vld [vmem:[%s327 + $0x90] sm:$0xff]
      %v353 = vld [vmem:[%s327 + $0x98] sm:$0xff]
      %v354 = vld [vmem:[%s327 + $0xa0] sm:$0xff]
      %v355 = vld [vmem:[%s327 + $0xa8] sm:$0xff]
      %v356 = vld [vmem:[%s327 + $0xb0] sm:$0xff]
      %v357 = vld [vmem:[%s327 + $0xb8] sm:$0xff]
      %v358 = vld [vmem:[%s327 + $0xc0] sm:$0xff]
      %v359 = vld [vmem:[%s327 + $0xc8] sm:$0xff]
      %v360 = vld [vmem:[%s327 + $0xd0] sm:$0xff]
      %v361 = vld [vmem:[%s327 + $0xd8] sm:$0xff]
      %v362 = vld [vmem:[%s327 + $0xe0] sm:$0xff]
      %v363 = vld [vmem:[%s327 + $0xe8] sm:$0xff]
      %v364 = vld [vmem:[%s327 + $0xf0] sm:$0xff]
      %v365 = vld [vmem:[%s327 + $0xf8] sm:$0xff]
      %v366 = vld [vmem:[%s327 + $0x100] sm:$0xff]
      %v367 = vld [vmem:[%s327 + $0x108] sm:$0xff]
      %v368 = vld [vmem:[%s327 + $0x110] sm:$0xff]
      %v369 = vld [vmem:[%s327 + $0x118] sm:$0xff]
      %v370 = vld [vmem:[%s327 + $0x120] sm:$0xff]
      %v371 = vld [vmem:[%s327 + $0x128] sm:$0xff]
      %v372 = vld [vmem:[%s327 + $0x130] sm:$0xff]
      %v373 = vld [vmem:[%s327 + $0x138] sm:$0xff]
      %vm374 = vcmask 23552
      %375 = vst.msk [vmem:[#allocation2] sm:$0xff] %vm374, 0.0
      %376 = vst.msk [vmem:[#allocation2 + $0x8] sm:$0xff] %vm374, 0.0
      %377 = vst.msk [vmem:[#allocation2 + $0x10] sm:$0xff] %vm374, 0.0
      %378 = vst.msk [vmem:[#allocation2 + $0x18] sm:$0xff] %vm374, 0.0
      %379 = vst.msk [vmem:[#allocation2 + $0x20] sm:$0xff] %vm374, 0.0
      %s380 = scalar_lea.vmem [#allocation2], 360
      %381 = vst.msk [vmem:[%s380] sm:$0xff] %vm374, 0.0
      %382 = vst.msk [vmem:[%s380 + $0x8] sm:$0xff] %vm374, 0.0
      %383 = vst.msk [vmem:[%s380 + $0x10] sm:$0xff] %vm374, 0.0
      %384 = vst.msk [vmem:[%s380 + $0x18] sm:$0xff] %vm374, 0.0
      %385 = vst.msk [vmem:[%s380 + $0x20] sm:$0xff] %vm374, 0.0
      %s386 = scalar_lea.vmem [#allocation2], 40
      %vm387 = vcmask 7168
      %388 = vst.msk [vmem:[%s386 + $0x1] sm:$0xff] %vm387, %v334
      %389 = vst.msk [vmem:[%s386 + $0x9] sm:$0xff] %vm387, %v335
      %390 = vst.msk [vmem:[%s386 + $0x11] sm:$0xff] %vm387, %v336
      %391 = vst.msk [vmem:[%s386 + $0x19] sm:$0xff] %vm387, %v337
      %vm392 = vcmask 6144
      %393 = vst.msk [vmem:[%s386 + $0x21] sm:$0x7f] %vm392, %v338
      %394 = vst.msk [vmem:[%s386 + $0x29] sm:$0xff] %vm387, %v339
      %395 = vst.msk [vmem:[%s386 + $0x31] sm:$0xff] %vm387, %v340
      %396 = vst.msk [vmem:[%s386 + $0x39] sm:$0xff] %vm387, %v341
      %397 = vst.msk [vmem:[%s386 + $0x41] sm:$0xff] %vm387, %v342
      %398 = vst.msk [vmem:[%s386 + $0x49] sm:$0x7f] %vm392, %v343
      %399 = vst.msk [vmem:[%s386 + $0x51] sm:$0xff] %vm387, %v344
      %400 = vst.msk [vmem:[%s386 + $0x59] sm:$0xff] %vm387, %v345
      %401 = vst.msk [vmem:[%s386 + $0x61] sm:$0xff] %vm387, %v346
      %402 = vst.msk [vmem:[%s386 + $0x69] sm:$0xff] %vm387, %v347
      %403 = vst.msk [vmem:[%s386 + $0x71] sm:$0x7f] %vm392, %v348
      %404 = vst.msk [vmem:[%s386 + $0x79] sm:$0xff] %vm387, %v349
      %405 = vst.msk [vmem:[%s386 + $0x81] sm:$0xff] %vm387, %v350
      %406 = vst.msk [vmem:[%s386 + $0x89] sm:$0xff] %vm387, %v351
      %407 = vst.msk [vmem:[%s386 + $0x91] sm:$0xff] %vm387, %v352
      %408 = vst.msk [vmem:[%s386 + $0x99] sm:$0x7f] %vm392, %v353
      %409 = vst.msk [vmem:[%s386 + $0xa1] sm:$0xff] %vm387, %v354
      %410 = vst.msk [vmem:[%s386 + $0xa9] sm:$0xff] %vm387, %v355
      %411 = vst.msk [vmem:[%s386 + $0xb1] sm:$0xff] %vm387, %v356
      %412 = vst.msk [vmem:[%s386 + $0xb9] sm:$0xff] %vm387, %v357
      %413 = vst.msk [vmem:[%s386 + $0xc1] sm:$0x7f] %vm392, %v358
      %414 = vst.msk [vmem:[%s386 + $0xc9] sm:$0xff] %vm387, %v359
      %415 = vst.msk [vmem:[%s386 + $0xd1] sm:$0xff] %vm387, %v360
      %416 = vst.msk [vmem:[%s386 + $0xd9] sm:$0xff] %vm387, %v361
      %417 = vst.msk [vmem:[%s386 + $0xe1] sm:$0xff] %vm387, %v362
      %418 = vst.msk [vmem:[%s386 + $0xe9] sm:$0x7f] %vm392, %v363
      %419 = vst.msk [vmem:[%s386 + $0xf1] sm:$0xff] %vm387, %v364
      %420 = vst.msk [vmem:[%s386 + $0xf9] sm:$0xff] %vm387, %v365
      %421 = vst.msk [vmem:[%s386 + $0x101] sm:$0xff] %vm387, %v366
      %422 = vst.msk [vmem:[%s386 + $0x109] sm:$0xff] %vm387, %v367
      %423 = vst.msk [vmem:[%s386 + $0x111] sm:$0x7f] %vm392, %v368
      %424 = vst.msk [vmem:[%s386 + $0x119] sm:$0xff] %vm387, %v369
      %425 = vst.msk [vmem:[%s386 + $0x121] sm:$0xff] %vm387, %v370
      %426 = vst.msk [vmem:[%s386 + $0x129] sm:$0xff] %vm387, %v371
      %427 = vst.msk [vmem:[%s386 + $0x131] sm:$0xff] %vm387, %v372
      %428 = vst.msk [vmem:[%s386 + $0x139] sm:$0x7f] %vm392, %v373
      %vm429 = vcmask 0
      %430 = vst.msk [vmem:[%s386] sm:$0x1] %vm429, 0.0
      %431 = vst.msk [vmem:[%s386 + $0x28] sm:$0x1] %vm429, 0.0
      %432 = vst.msk [vmem:[%s386 + $0x50] sm:$0x1] %vm429, 0.0
      %433 = vst.msk [vmem:[%s386 + $0x78] sm:$0x1] %vm429, 0.0
      %434 = vst.msk [vmem:[%s386 + $0xa0] sm:$0x1] %vm429, 0.0
      %435 = vst.msk [vmem:[%s386 + $0xc8] sm:$0x1] %vm429, 0.0
      %436 = vst.msk [vmem:[%s386 + $0xf0] sm:$0x1] %vm429, 0.0
      %437 = vst.msk [vmem:[%s386 + $0x118] sm:$0x1] %vm429, 0.0
      %478 = vrot.lane.b32.xlu0 %v334, 1
      %v479 = vpop.permute.xlu0 %478
      %480 = vrot.lane.b32.xlu0 %v335, 1
      %v481 = vpop.permute.xlu0 %480
      %482 = vrot.lane.b32.xlu0 %v336, 1
      %v483 = vpop.permute.xlu0 %482
      %484 = vrot.lane.b32.xlu0 %v337, 1
      %v485 = vpop.permute.xlu0 %484
      %486 = vrot.lane.b32.xlu0 %v338, 1
      %v487 = vpop.permute.xlu0 %486
      %488 = vrot.lane.b32.xlu0 %v339, 1
      %v489 = vpop.permute.xlu0 %488
      %490 = vrot.lane.b32.xlu0 %v340, 1
      %v491 = vpop.permute.xlu0 %490
      %492 = vrot.lane.b32.xlu0 %v341, 1
      %v493 = vpop.permute.xlu0 %492
      %494 = vrot.lane.b32.xlu0 %v342, 1
      %v495 = vpop.permute.xlu0 %494
      %496 = vrot.lane.b32.xlu0 %v343, 1
      %v497 = vpop.permute.xlu0 %496
      %498 = vrot.lane.b32.xlu0 %v344, 1
      %v499 = vpop.permute.xlu0 %498
      %500 = vrot.lane.b32.xlu0 %v345, 1
      %v501 = vpop.permute.xlu0 %500
      %502 = vrot.lane.b32.xlu0 %v346, 1
      %v503 = vpop.permute.xlu0 %502
      %504 = vrot.lane.b32.xlu0 %v347, 1
      %v505 = vpop.permute.xlu0 %504
      %506 = vrot.lane.b32.xlu0 %v348, 1
      %v507 = vpop.permute.xlu0 %506
      %508 = vrot.lane.b32.xlu0 %v349, 1
      %v509 = vpop.permute.xlu0 %508
      %510 = vrot.lane.b32.xlu0 %v350, 1
      %v511 = vpop.permute.xlu0 %510
      %512 = vrot.lane.b32.xlu0 %v351, 1
      %v513 = vpop.permute.xlu0 %512
      %514 = vrot.lane.b32.xlu0 %v352, 1
      %v515 = vpop.permute.xlu0 %514
      %516 = vrot.lane.b32.xlu0 %v353, 1
      %v517 = vpop.permute.xlu0 %516
      %518 = vrot.lane.b32.xlu0 %v354, 1
      %v519 = vpop.permute.xlu0 %518
      %520 = vrot.lane.b32.xlu0 %v355, 1
      %v521 = vpop.permute.xlu0 %520
      %522 = vrot.lane.b32.xlu0 %v356, 1
      %v523 = vpop.permute.xlu0 %522
      %524 = vrot.lane.b32.xlu0 %v357, 1
      %v525 = vpop.permute.xlu0 %524
      %526 = vrot.lane.b32.xlu0 %v358, 1
      %v527 = vpop.permute.xlu0 %526
      %528 = vrot.lane.b32.xlu0 %v359, 1
      %v529 = vpop.permute.xlu0 %528
      %530 = vrot.lane.b32.xlu0 %v360, 1
      %v531 = vpop.permute.xlu0 %530
      %532 = vrot.lane.b32.xlu0 %v361, 1
      %v533 = vpop.permute.xlu0 %532
      %534 = vrot.lane.b32.xlu0 %v362, 1
      %v535 = vpop.permute.xlu0 %534
      %536 = vrot.lane.b32.xlu0 %v363, 1
      %v537 = vpop.permute.xlu0 %536
      %538 = vrot.lane.b32.xlu0 %v364, 1
      %v539 = vpop.permute.xlu0 %538
      %540 = vrot.lane.b32.xlu0 %v365, 1
      %v541 = vpop.permute.xlu0 %540
      %542 = vrot.lane.b32.xlu0 %v366, 1
      %v543 = vpop.permute.xlu0 %542
      %544 = vrot.lane.b32.xlu0 %v367, 1
      %v545 = vpop.permute.xlu0 %544
      %546 = vrot.lane.b32.xlu0 %v368, 1
      %v547 = vpop.permute.xlu0 %546
      %548 = vrot.lane.b32.xlu0 %v369, 1
      %v549 = vpop.permute.xlu0 %548
      %550 = vrot.lane.b32.xlu0 %v370, 1
      %v551 = vpop.permute.xlu0 %550
      %552 = vrot.lane.b32.xlu0 %v371, 1
      %v553 = vpop.permute.xlu0 %552
      %554 = vrot.lane.b32.xlu0 %v372, 1
      %v555 = vpop.permute.xlu0 %554
      %556 = vrot.lane.b32.xlu0 %v373, 1
      %v557 = vpop.permute.xlu0 %556
      %vm598 = vcmask 15368
      %599 = vst.msk [vmem:[%s386] sm:$0xff] %vm598, %v479
      %600 = vst.msk [vmem:[%s386 + $0x8] sm:$0xff] %vm598, %v481
      %601 = vst.msk [vmem:[%s386 + $0x10] sm:$0xff] %vm598, %v483
      %602 = vst.msk [vmem:[%s386 + $0x18] sm:$0xff] %vm598, %v485
      %603 = vst.msk [vmem:[%s386 + $0x20] sm:$0xff] %vm598, %v487
      %604 = vst.msk [vmem:[%s386 + $0x28] sm:$0xff] %vm598, %v489
      %605 = vst.msk [vmem:[%s386 + $0x30] sm:$0xff] %vm598, %v491
      %606 = vst.msk [vmem:[%s386 + $0x38] sm:$0xff] %vm598, %v493
      %607 = vst.msk [vmem:[%s386 + $0x40] sm:$0xff] %vm598, %v495
      %608 = vst.msk [vmem:[%s386 + $0x48] sm:$0xff] %vm598, %v497
      %609 = vst.msk [vmem:[%s386 + $0x50] sm:$0xff] %vm598, %v499
      %610 = vst.msk [vmem:[%s386 + $0x58] sm:$0xff] %vm598, %v501
      %611 = vst.msk [vmem:[%s386 + $0x60] sm:$0xff] %vm598, %v503
      %612 = vst.msk [vmem:[%s386 + $0x68] sm:$0xff] %vm598, %v505
      %613 = vst.msk [vmem:[%s386 + $0x70] sm:$0xff] %vm598, %v507
      %614 = vst.msk [vmem:[%s386 + $0x78] sm:$0xff] %vm598, %v509
      %615 = vst.msk [vmem:[%s386 + $0x80] sm:$0xff] %vm598, %v511
      %616 = vst.msk [vmem:[%s386 + $0x88] sm:$0xff] %vm598, %v513
      %617 = vst.msk [vmem:[%s386 + $0x90] sm:$0xff] %vm598, %v515
      %618 = vst.msk [vmem:[%s386 + $0x98] sm:$0xff] %vm598, %v517
      %619 = vst.msk [vmem:[%s386 + $0xa0] sm:$0xff] %vm598, %v519
      %620 = vst.msk [vmem:[%s386 + $0xa8] sm:$0xff] %vm598, %v521
      %621 = vst.msk [vmem:[%s386 + $0xb0] sm:$0xff] %vm598, %v523
      %622 = vst.msk [vmem:[%s386 + $0xb8] sm:$0xff] %vm598, %v525
      %623 = vst.msk [vmem:[%s386 + $0xc0] sm:$0xff] %vm598, %v527
      %624 = vst.msk [vmem:[%s386 + $0xc8] sm:$0xff] %vm598, %v529
      %625 = vst.msk [vmem:[%s386 + $0xd0] sm:$0xff] %vm598, %v531
      %626 = vst.msk [vmem:[%s386 + $0xd8] sm:$0xff] %vm598, %v533
      %627 = vst.msk [vmem:[%s386 + $0xe0] sm:$0xff] %vm598, %v535
      %628 = vst.msk [vmem:[%s386 + $0xe8] sm:$0xff] %vm598, %v537
      %629 = vst.msk [vmem:[%s386 + $0xf0] sm:$0xff] %vm598, %v539
      %630 = vst.msk [vmem:[%s386 + $0xf8] sm:$0xff] %vm598, %v541
      %631 = vst.msk [vmem:[%s386 + $0x100] sm:$0xff] %vm598, %v543
      %632 = vst.msk [vmem:[%s386 + $0x108] sm:$0xff] %vm598, %v545
      %633 = vst.msk [vmem:[%s386 + $0x110] sm:$0xff] %vm598, %v547
      %634 = vst.msk [vmem:[%s386 + $0x118] sm:$0xff] %vm598, %v549
      %635 = vst.msk [vmem:[%s386 + $0x120] sm:$0xff] %vm598, %v551
      %636 = vst.msk [vmem:[%s386 + $0x128] sm:$0xff] %vm598, %v553
      %637 = vst.msk [vmem:[%s386 + $0x130] sm:$0xff] %vm598, %v555
      %638 = vst.msk [vmem:[%s386 + $0x138] sm:$0xff] %vm598, %v557
      %639 = vrot.lane.b32.xlu0 %v334, 2
      %v640 = vpop.permute.xlu0 %639
      %641 = vrot.lane.b32.xlu0 %v335, 2
      %v642 = vpop.permute.xlu0 %641
      %643 = vrot.lane.b32.xlu0 %v336, 2
      %v644 = vpop.permute.xlu0 %643
      %645 = vrot.lane.b32.xlu0 %v337, 2
      %v646 = vpop.permute.xlu0 %645
      %647 = vrot.lane.b32.xlu0 %v338, 2
      %v648 = vpop.permute.xlu0 %647
      %649 = vrot.lane.b32.xlu0 %v339, 2
      %v650 = vpop.permute.xlu0 %649
      %651 = vrot.lane.b32.xlu0 %v340, 2
      %v652 = vpop.permute.xlu0 %651
      %653 = vrot.lane.b32.xlu0 %v341, 2
      %v654 = vpop.permute.xlu0 %653
      %655 = vrot.lane.b32.xlu0 %v342, 2
      %v656 = vpop.permute.xlu0 %655
      %657 = vrot.lane.b32.xlu0 %v343, 2
      %v658 = vpop.permute.xlu0 %657
      %659 = vrot.lane.b32.xlu0 %v344, 2
      %v660 = vpop.permute.xlu0 %659
      %661 = vrot.lane.b32.xlu0 %v345, 2
      %v662 = vpop.permute.xlu0 %661
      %663 = vrot.lane.b32.xlu0 %v346, 2
      %v664 = vpop.permute.xlu0 %663
      %665 = vrot.lane.b32.xlu0 %v347, 2
      %v666 = vpop.permute.xlu0 %665
      %667 = vrot.lane.b32.xlu0 %v348, 2
      %v668 = vpop.permute.xlu0 %667
      %669 = vrot.lane.b32.xlu0 %v349, 2
      %v670 = vpop.permute.xlu0 %669
      %671 = vrot.lane.b32.xlu0 %v350, 2
      %v672 = vpop.permute.xlu0 %671
      %673 = vrot.lane.b32.xlu0 %v351, 2
      %v674 = vpop.permute.xlu0 %673
      %675 = vrot.lane.b32.xlu0 %v352, 2
      %v676 = vpop.permute.xlu0 %675
      %677 = vrot.lane.b32.xlu0 %v353, 2
      %v678 = vpop.permute.xlu0 %677
      %679 = vrot.lane.b32.xlu0 %v354, 2
      %v680 = vpop.permute.xlu0 %679
      %681 = vrot.lane.b32.xlu0 %v355, 2
      %v682 = vpop.permute.xlu0 %681
      %683 = vrot.lane.b32.xlu0 %v356, 2
      %v684 = vpop.permute.xlu0 %683
      %685 = vrot.lane.b32.xlu0 %v357, 2
      %v686 = vpop.permute.xlu0 %685
      %687 = vrot.lane.b32.xlu0 %v358, 2
      %v688 = vpop.permute.xlu0 %687
      %689 = vrot.lane.b32.xlu0 %v359, 2
      %v690 = vpop.permute.xlu0 %689
      %691 = vrot.lane.b32.xlu0 %v360, 2
      %v692 = vpop.permute.xlu0 %691
      %693 = vrot.lane.b32.xlu0 %v361, 2
      %v694 = vpop.permute.xlu0 %693
      %695 = vrot.lane.b32.xlu0 %v362, 2
      %v696 = vpop.permute.xlu0 %695
      %697 = vrot.lane.b32.xlu0 %v363, 2
      %v698 = vpop.permute.xlu0 %697
      %699 = vrot.lane.b32.xlu0 %v364, 2
      %v700 = vpop.permute.xlu0 %699
      %701 = vrot.lane.b32.xlu0 %v365, 2
      %v702 = vpop.permute.xlu0 %701
      %703 = vrot.lane.b32.xlu0 %v366, 2
      %v704 = vpop.permute.xlu0 %703
      %705 = vrot.lane.b32.xlu0 %v367, 2
      %v706 = vpop.permute.xlu0 %705
      %707 = vrot.lane.b32.xlu0 %v368, 2
      %v708 = vpop.permute.xlu0 %707
      %709 = vrot.lane.b32.xlu0 %v369, 2
      %v710 = vpop.permute.xlu0 %709
      %711 = vrot.lane.b32.xlu0 %v370, 2
      %v712 = vpop.permute.xlu0 %711
      %713 = vrot.lane.b32.xlu0 %v371, 2
      %v714 = vpop.permute.xlu0 %713
      %715 = vrot.lane.b32.xlu0 %v372, 2
      %v716 = vpop.permute.xlu0 %715
      %717 = vrot.lane.b32.xlu0 %v373, 2
      %v718 = vpop.permute.xlu0 %717
      %vm759 = vcmask 23569
      %760 = vst.msk [vmem:[%s386 - $0x1] sm:$0xfe] %vm759, %v640
      %vm761 = vcmask 23568
      %762 = vst.msk [vmem:[%s386 + $0x7] sm:$0xff] %vm761, %v642
      %763 = vst.msk [vmem:[%s386 + $0xf] sm:$0xff] %vm761, %v644
      %764 = vst.msk [vmem:[%s386 + $0x17] sm:$0xff] %vm761, %v646
      %765 = vst.msk [vmem:[%s386 + $0x1f] sm:$0xff] %vm761, %v648
      %766 = vst.msk [vmem:[%s386 + $0x27] sm:$0xfe] %vm759, %v650
      %767 = vst.msk [vmem:[%s386 + $0x2f] sm:$0xff] %vm761, %v652
      %768 = vst.msk [vmem:[%s386 + $0x37] sm:$0xff] %vm761, %v654
      %769 = vst.msk [vmem:[%s386 + $0x3f] sm:$0xff] %vm761, %v656
      %770 = vst.msk [vmem:[%s386 + $0x47] sm:$0xff] %vm761, %v658
      %771 = vst.msk [vmem:[%s386 + $0x4f] sm:$0xfe] %vm759, %v660
      %772 = vst.msk [vmem:[%s386 + $0x57] sm:$0xff] %vm761, %v662
      %773 = vst.msk [vmem:[%s386 + $0x5f] sm:$0xff] %vm761, %v664
      %774 = vst.msk [vmem:[%s386 + $0x67] sm:$0xff] %vm761, %v666
      %775 = vst.msk [vmem:[%s386 + $0x6f] sm:$0xff] %vm761, %v668
      %776 = vst.msk [vmem:[%s386 + $0x77] sm:$0xfe] %vm759, %v670
      %777 = vst.msk [vmem:[%s386 + $0x7f] sm:$0xff] %vm761, %v672
      %778 = vst.msk [vmem:[%s386 + $0x87] sm:$0xff] %vm761, %v674
      %779 = vst.msk [vmem:[%s386 + $0x8f] sm:$0xff] %vm761, %v676
      %780 = vst.msk [vmem:[%s386 + $0x97] sm:$0xff] %vm761, %v678
      %781 = vst.msk [vmem:[%s386 + $0x9f] sm:$0xfe] %vm759, %v680
      %782 = vst.msk [vmem:[%s386 + $0xa7] sm:$0xff] %vm761, %v682
      %783 = vst.msk [vmem:[%s386 + $0xaf] sm:$0xff] %vm761, %v684
      %784 = vst.msk [vmem:[%s386 + $0xb7] sm:$0xff] %vm761, %v686
      %785 = vst.msk [vmem:[%s386 + $0xbf] sm:$0xff] %vm761, %v688
      %786 = vst.msk [vmem:[%s386 + $0xc7] sm:$0xfe] %vm759, %v690
      %787 = vst.msk [vmem:[%s386 + $0xcf] sm:$0xff] %vm761, %v692
      %788 = vst.msk [vmem:[%s386 + $0xd7] sm:$0xff] %vm761, %v694
      %789 = vst.msk [vmem:[%s386 + $0xdf] sm:$0xff] %vm761, %v696
      %790 = vst.msk [vmem:[%s386 + $0xe7] sm:$0xff] %vm761, %v698
      %791 = vst.msk [vmem:[%s386 + $0xef] sm:$0xfe] %vm759, %v700
      %792 = vst.msk [vmem:[%s386 + $0xf7] sm:$0xff] %vm761, %v702
      %793 = vst.msk [vmem:[%s386 + $0xff] sm:$0xff] %vm761, %v704
      %794 = vst.msk [vmem:[%s386 + $0x107] sm:$0xff] %vm761, %v706
      %795 = vst.msk [vmem:[%s386 + $0x10f] sm:$0xff] %vm761, %v708
      %796 = vst.msk [vmem:[%s386 + $0x117] sm:$0xfe] %vm759, %v710
      %797 = vst.msk [vmem:[%s386 + $0x11f] sm:$0xff] %vm761, %v712
      %798 = vst.msk [vmem:[%s386 + $0x127] sm:$0xff] %vm761, %v714
      %799 = vst.msk [vmem:[%s386 + $0x12f] sm:$0xff] %vm761, %v716
      %800 = vst.msk [vmem:[%s386 + $0x137] sm:$0xff] %vm761, %v718
      %vm801 = vcmask 16400
      %802 = vst.msk [vmem:[%s386 + $0x27] sm:$0x1] %vm801, 0.0
      %803 = vst.msk [vmem:[%s386 + $0x4f] sm:$0x1] %vm801, 0.0
      %804 = vst.msk [vmem:[%s386 + $0x77] sm:$0x1] %vm801, 0.0
      %805 = vst.msk [vmem:[%s386 + $0x9f] sm:$0x1] %vm801, 0.0
      %806 = vst.msk [vmem:[%s386 + $0xc7] sm:$0x1] %vm801, 0.0
      %807 = vst.msk [vmem:[%s386 + $0xef] sm:$0x1] %vm801, 0.0
      %808 = vst.msk [vmem:[%s386 + $0x117] sm:$0x1] %vm801, 0.0
      %809 = vst.msk [vmem:[%s386 + $0x13f] sm:$0x1] %vm801, 0.0
      %v810 = vld [vmem:[#allocation2] sm:$0xff]
      %v811 = vld [vmem:[#allocation2 + $0x8] sm:$0xff]
      %v812 = vld [vmem:[#allocation2 + $0x10] sm:$0xff]
      %v813 = vld [vmem:[#allocation2 + $0x18] sm:$0xff]
      %v814 = vld [vmem:[#allocation2 + $0x20] sm:$0xff]
      %v815 = vld [vmem:[#allocation2 + $0x28] sm:$0xff]
      %v816 = vld [vmem:[#allocation2 + $0x30] sm:$0xff]
      %v817 = vld [vmem:[#allocation2 + $0x38] sm:$0xff]
      %v818 = vld [vmem:[#allocation2 + $0x40] sm:$0xff]
      %v819 = vld [vmem:[#allocation2 + $0x48] sm:$0xff]
      %v820 = vld [vmem:[#allocation2 + $0x50] sm:$0xff]
      %v821 = vld [vmem:[#allocation2 + $0x58] sm:$0xff]
      %v822 = vld [vmem:[#allocation2 + $0x60] sm:$0xff]
      %v823 = vld [vmem:[#allocation2 + $0x68] sm:$0xff]
      %v824 = vld [vmem:[#allocation2 + $0x70] sm:$0xff]
      %v825 = vld [vmem:[#allocation2 + $0x78] sm:$0xff]
      %v826 = vld [vmem:[#allocation2 + $0x80] sm:$0xff]
      %v827 = vld [vmem:[#allocation2 + $0x88] sm:$0xff]
      %v828 = vld [vmem:[#allocation2 + $0x90] sm:$0xff]
      %v829 = vld [vmem:[#allocation2 + $0x98] sm:$0xff]
      %v830 = vld [vmem:[#allocation2 + $0xa0] sm:$0xff]
      %v831 = vld [vmem:[#allocation2 + $0xa8] sm:$0xff]
      %v832 = vld [vmem:[#allocation2 + $0xb0] sm:$0xff]
      %v833 = vld [vmem:[#allocation2 + $0xb8] sm:$0xff]
      %v834 = vld [vmem:[#allocation2 + $0xc0] sm:$0xff]
      %v835 = vld [vmem:[#allocation2 + $0xc8] sm:$0xff]
      %v836 = vld [vmem:[#allocation2 + $0xd0] sm:$0xff]
      %v837 = vld [vmem:[#allocation2 + $0xd8] sm:$0xff]
      %v838 = vld [vmem:[#allocation2 + $0xe0] sm:$0xff]
      %v839 = vld [vmem:[#allocation2 + $0xe8] sm:$0xff]
      %v840 = vld [vmem:[#allocation2 + $0xf0] sm:$0xff]
      %v841 = vld [vmem:[#allocation2 + $0xf8] sm:$0xff]
      %v842 = vld [vmem:[#allocation2 + $0x100] sm:$0xff]
      %v843 = vld [vmem:[#allocation2 + $0x108] sm:$0xff]
      %v844 = vld [vmem:[#allocation2 + $0x110] sm:$0xff]
      %v845 = vld [vmem:[#allocation2 + $0x118] sm:$0xff]
      %v846 = vld [vmem:[#allocation2 + $0x120] sm:$0xff]
      %v847 = vld [vmem:[#allocation2 + $0x128] sm:$0xff]
      %v848 = vld [vmem:[#allocation2 + $0x130] sm:$0xff]
      %v849 = vld [vmem:[#allocation2 + $0x138] sm:$0xff]
      %v850 = vld [vmem:[%s1] sm:$0x7]
      %852 = vset.pattern.permute.xlu0 0
      %853 = vperm.xlu0 %852, %v810
      %v854 = vpop.permute.xlu0 %853
      %857 = vset.pattern.permute.xlu0 0
      %858 = vperm.xlu0 %857, %v811
      %v859 = vpop.permute.xlu0 %858
      %862 = vset.pattern.permute.xlu0 0
      %863 = vperm.xlu0 %862, %v812
      %v864 = vpop.permute.xlu0 %863
      %867 = vset.pattern.permute.xlu0 0
      %868 = vperm.xlu0 %867, %v813
      %v869 = vpop.permute.xlu0 %868
      %872 = vset.pattern.permute.xlu0 0
      %873 = vperm.xlu0 %872, %v814
      %v874 = vpop.permute.xlu0 %873
      %877 = vset.pattern.permute.xlu0 0
      %878 = vperm.xlu0 %877, %v815
      %v879 = vpop.permute.xlu0 %878
      %882 = vset.pattern.permute.xlu0 0
      %883 = vperm.xlu0 %882, %v816
      %v884 = vpop.permute.xlu0 %883
      %887 = vset.pattern.permute.xlu0 0
      %888 = vperm.xlu0 %887, %v817
      %v889 = vpop.permute.xlu0 %888
      %892 = vset.pattern.permute.xlu0 0
      %893 = vperm.xlu0 %892, %v818
      %v894 = vpop.permute.xlu0 %893
      %897 = vset.pattern.permute.xlu0 0
      %898 = vperm.xlu0 %897, %v819
      %v899 = vpop.permute.xlu0 %898
      %902 = vset.pattern.permute.xlu0 0
      %903 = vperm.xlu0 %902, %v820
      %v904 = vpop.permute.xlu0 %903
      %907 = vset.pattern.permute.xlu0 0
      %908 = vperm.xlu0 %907, %v821
      %v909 = vpop.permute.xlu0 %908
      %912 = vset.pattern.permute.xlu0 0
      %913 = vperm.xlu0 %912, %v822
      %v914 = vpop.permute.xlu0 %913
      %917 = vset.pattern.permute.xlu0 0
      %918 = vperm.xlu0 %917, %v823
      %v919 = vpop.permute.xlu0 %918
      %922 = vset.pattern.permute.xlu0 0
      %923 = vperm.xlu0 %922, %v824
      %v924 = vpop.permute.xlu0 %923
      %927 = vset.pattern.permute.xlu0 0
      %928 = vperm.xlu0 %927, %v825
      %v929 = vpop.permute.xlu0 %928
      %932 = vset.pattern.permute.xlu0 0
      %933 = vperm.xlu0 %932, %v826
      %v934 = vpop.permute.xlu0 %933
      %937 = vset.pattern.permute.xlu0 0
      %938 = vperm.xlu0 %937, %v827
      %v939 = vpop.permute.xlu0 %938
      %942 = vset.pattern.permute.xlu0 0
      %943 = vperm.xlu0 %942, %v828
      %v944 = vpop.permute.xlu0 %943
      %947 = vset.pattern.permute.xlu0 0
      %948 = vperm.xlu0 %947, %v829
      %v949 = vpop.permute.xlu0 %948
      %952 = vset.pattern.permute.xlu0 0
      %953 = vperm.xlu0 %952, %v830
      %v954 = vpop.permute.xlu0 %953
      %957 = vset.pattern.permute.xlu0 0
      %958 = vperm.xlu0 %957, %v831
      %v959 = vpop.permute.xlu0 %958
      %962 = vset.pattern.permute.xlu0 0
      %963 = vperm.xlu0 %962, %v832
      %v964 = vpop.permute.xlu0 %963
      %967 = vset.pattern.permute.xlu0 0
      %968 = vperm.xlu0 %967, %v833
      %v969 = vpop.permute.xlu0 %968
      %972 = vset.pattern.permute.xlu0 0
      %973 = vperm.xlu0 %972, %v834
      %v974 = vpop.permute.xlu0 %973
      %977 = vset.pattern.permute.xlu0 0
      %978 = vperm.xlu0 %977, %v835
      %v979 = vpop.permute.xlu0 %978
      %982 = vset.pattern.permute.xlu0 0
      %983 = vperm.xlu0 %982, %v836
      %v984 = vpop.permute.xlu0 %983
      %987 = vset.pattern.permute.xlu0 0
      %988 = vperm.xlu0 %987, %v837
      %v989 = vpop.permute.xlu0 %988
      %992 = vset.pattern.permute.xlu0 0
      %993 = vperm.xlu0 %992, %v838
      %v994 = vpop.permute.xlu0 %993
      %997 = vset.pattern.permute.xlu0 0
      %998 = vperm.xlu0 %997, %v839
      %v999 = vpop.permute.xlu0 %998
      %1002 = vset.pattern.permute.xlu0 0
      %1003 = vperm.xlu0 %1002, %v840
      %v1004 = vpop.permute.xlu0 %1003
      %1007 = vset.pattern.permute.xlu0 0
      %1008 = vperm.xlu0 %1007, %v841
      %v1009 = vpop.permute.xlu0 %1008
      %1012 = vset.pattern.permute.xlu0 0
      %1013 = vperm.xlu0 %1012, %v842
      %v1014 = vpop.permute.xlu0 %1013
      %1017 = vset.pattern.permute.xlu0 0
      %1018 = vperm.xlu0 %1017, %v843
      %v1019 = vpop.permute.xlu0 %1018
      %1022 = vset.pattern.permute.xlu0 0
      %1023 = vperm.xlu0 %1022, %v844
      %v1024 = vpop.permute.xlu0 %1023
      %1027 = vset.pattern.permute.xlu0 0
      %1028 = vperm.xlu0 %1027, %v845
      %v1029 = vpop.permute.xlu0 %1028
      %1032 = vset.pattern.permute.xlu0 0
      %1033 = vperm.xlu0 %1032, %v846
      %v1034 = vpop.permute.xlu0 %1033
      %1037 = vset.pattern.permute.xlu0 0
      %1038 = vperm.xlu0 %1037, %v847
      %v1039 = vpop.permute.xlu0 %1038
      %1042 = vset.pattern.permute.xlu0 0
      %1043 = vperm.xlu0 %1042, %v848
      %v1044 = vpop.permute.xlu0 %1043
      %1047 = vset.pattern.permute.xlu0 0
      %1048 = vperm.xlu0 %1047, %v849
      %v1049 = vpop.permute.xlu0 %1048
      %v1051 = vperm.slane %v850, 0
      %v1052 = vmul.f32 %v854, %v1051
      %v1053 = vmul.f32 %v859, %v1051
      %v1054 = vmul.f32 %v864, %v1051
      %v1055 = vmul.f32 %v869, %v1051
      %v1056 = vmul.f32 %v874, %v1051
      %v1057 = vmul.f32 %v879, %v1051
      %v1058 = vmul.f32 %v884, %v1051
      %v1059 = vmul.f32 %v889, %v1051
      %v1060 = vmul.f32 %v894, %v1051
      %v1061 = vmul.f32 %v899, %v1051
      %v1062 = vmul.f32 %v904, %v1051
      %v1063 = vmul.f32 %v909, %v1051
      %v1064 = vmul.f32 %v914, %v1051
      %v1065 = vmul.f32 %v919, %v1051
      %v1066 = vmul.f32 %v924, %v1051
      %v1067 = vmul.f32 %v929, %v1051
      %v1068 = vmul.f32 %v934, %v1051
      %v1069 = vmul.f32 %v939, %v1051
      %v1070 = vmul.f32 %v944, %v1051
      %v1071 = vmul.f32 %v949, %v1051
      %v1072 = vmul.f32 %v954, %v1051
      %v1073 = vmul.f32 %v959, %v1051
      %v1074 = vmul.f32 %v964, %v1051
      %v1075 = vmul.f32 %v969, %v1051
      %v1076 = vmul.f32 %v974, %v1051
      %v1077 = vmul.f32 %v979, %v1051
      %v1078 = vmul.f32 %v984, %v1051
      %v1079 = vmul.f32 %v989, %v1051
      %v1080 = vmul.f32 %v994, %v1051
      %v1081 = vmul.f32 %v999, %v1051
      %v1082 = vmul.f32 %v1004, %v1051
      %v1083 = vmul.f32 %v1009, %v1051
      %v1084 = vmul.f32 %v1014, %v1051
      %v1085 = vmul.f32 %v1019, %v1051
      %v1086 = vmul.f32 %v1024, %v1051
      %v1087 = vmul.f32 %v1029, %v1051
      %v1088 = vmul.f32 %v1034, %v1051
      %v1089 = vmul.f32 %v1039, %v1051
      %v1090 = vmul.f32 %v1044, %v1051
      %v1091 = vmul.f32 %v1049, %v1051
      %v1092 = vadd.f32 %v1052, 0.0
      %v1093 = vadd.f32 %v1053, 0.0
      %v1094 = vadd.f32 %v1054, 0.0
      %v1095 = vadd.f32 %v1055, 0.0
      %v1096 = vadd.f32 %v1056, 0.0
      %v1097 = vadd.f32 %v1057, 0.0
      %v1098 = vadd.f32 %v1058, 0.0
      %v1099 = vadd.f32 %v1059, 0.0
      %v1100 = vadd.f32 %v1060, 0.0
      %v1101 = vadd.f32 %v1061, 0.0
      %v1102 = vadd.f32 %v1062, 0.0
      %v1103 = vadd.f32 %v1063, 0.0
      %v1104 = vadd.f32 %v1064, 0.0
      %v1105 = vadd.f32 %v1065, 0.0
      %v1106 = vadd.f32 %v1066, 0.0
      %v1107 = vadd.f32 %v1067, 0.0
      %v1108 = vadd.f32 %v1068, 0.0
      %v1109 = vadd.f32 %v1069, 0.0
      %v1110 = vadd.f32 %v1070, 0.0
      %v1111 = vadd.f32 %v1071, 0.0
      %v1112 = vadd.f32 %v1072, 0.0
      %v1113 = vadd.f32 %v1073, 0.0
      %v1114 = vadd.f32 %v1074, 0.0
      %v1115 = vadd.f32 %v1075, 0.0
      %v1116 = vadd.f32 %v1076, 0.0
      %v1117 = vadd.f32 %v1077, 0.0
      %v1118 = vadd.f32 %v1078, 0.0
      %v1119 = vadd.f32 %v1079, 0.0
      %v1120 = vadd.f32 %v1080, 0.0
      %v1121 = vadd.f32 %v1081, 0.0
      %v1122 = vadd.f32 %v1082, 0.0
      %v1123 = vadd.f32 %v1083, 0.0
      %v1124 = vadd.f32 %v1084, 0.0
      %v1125 = vadd.f32 %v1085, 0.0
      %v1126 = vadd.f32 %v1086, 0.0
      %v1127 = vadd.f32 %v1087, 0.0
      %v1128 = vadd.f32 %v1088, 0.0
      %v1129 = vadd.f32 %v1089, 0.0
      %v1130 = vadd.f32 %v1090, 0.0
      %v1131 = vadd.f32 %v1091, 0.0
      %1132 = vset.pattern.permute.xlu0 1
      %1133 = vperm.xlu0 %1132, %v810
      %v1134 = vpop.permute.xlu0 %1133
      %1136 = vset.pattern.permute.xlu0 1
      %1137 = vperm.xlu0 %1136, %v811
      %v1138 = vpop.permute.xlu0 %1137
      %1140 = vset.pattern.permute.xlu0 1
      %1141 = vperm.xlu0 %1140, %v812
      %v1142 = vpop.permute.xlu0 %1141
      %1144 = vset.pattern.permute.xlu0 1
      %1145 = vperm.xlu0 %1144, %v813
      %v1146 = vpop.permute.xlu0 %1145
      %1148 = vset.pattern.permute.xlu0 1
      %1149 = vperm.xlu0 %1148, %v814
      %v1150 = vpop.permute.xlu0 %1149
      %1152 = vset.pattern.permute.xlu0 1
      %1153 = vperm.xlu0 %1152, %v815
      %v1154 = vpop.permute.xlu0 %1153
      %1156 = vset.pattern.permute.xlu0 1
      %1157 = vperm.xlu0 %1156, %v816
      %v1158 = vpop.permute.xlu0 %1157
      %1160 = vset.pattern.permute.xlu0 1
      %1161 = vperm.xlu0 %1160, %v817
      %v1162 = vpop.permute.xlu0 %1161
      %1164 = vset.pattern.permute.xlu0 1
      %1165 = vperm.xlu0 %1164, %v818
      %v1166 = vpop.permute.xlu0 %1165
      %1168 = vset.pattern.permute.xlu0 1
      %1169 = vperm.xlu0 %1168, %v819
      %v1170 = vpop.permute.xlu0 %1169
      %1172 = vset.pattern.permute.xlu0 1
      %1173 = vperm.xlu0 %1172, %v820
      %v1174 = vpop.permute.xlu0 %1173
      %1176 = vset.pattern.permute.xlu0 1
      %1177 = vperm.xlu0 %1176, %v821
      %v1178 = vpop.permute.xlu0 %1177
      %1180 = vset.pattern.permute.xlu0 1
      %1181 = vperm.xlu0 %1180, %v822
      %v1182 = vpop.permute.xlu0 %1181
      %1184 = vset.pattern.permute.xlu0 1
      %1185 = vperm.xlu0 %1184, %v823
      %v1186 = vpop.permute.xlu0 %1185
      %1188 = vset.pattern.permute.xlu0 1
      %1189 = vperm.xlu0 %1188, %v824
      %v1190 = vpop.permute.xlu0 %1189
      %1192 = vset.pattern.permute.xlu0 1
      %1193 = vperm.xlu0 %1192, %v825
      %v1194 = vpop.permute.xlu0 %1193
      %1196 = vset.pattern.permute.xlu0 1
      %1197 = vperm.xlu0 %1196, %v826
      %v1198 = vpop.permute.xlu0 %1197
      %1200 = vset.pattern.permute.xlu0 1
      %1201 = vperm.xlu0 %1200, %v827
      %v1202 = vpop.permute.xlu0 %1201
      %1204 = vset.pattern.permute.xlu0 1
      %1205 = vperm.xlu0 %1204, %v828
      %v1206 = vpop.permute.xlu0 %1205
      %1208 = vset.pattern.permute.xlu0 1
      %1209 = vperm.xlu0 %1208, %v829
      %v1210 = vpop.permute.xlu0 %1209
      %1212 = vset.pattern.permute.xlu0 1
      %1213 = vperm.xlu0 %1212, %v830
      %v1214 = vpop.permute.xlu0 %1213
      %1216 = vset.pattern.permute.xlu0 1
      %1217 = vperm.xlu0 %1216, %v831
      %v1218 = vpop.permute.xlu0 %1217
      %1220 = vset.pattern.permute.xlu0 1
      %1221 = vperm.xlu0 %1220, %v832
      %v1222 = vpop.permute.xlu0 %1221
      %1224 = vset.pattern.permute.xlu0 1
      %1225 = vperm.xlu0 %1224, %v833
      %v1226 = vpop.permute.xlu0 %1225
      %1228 = vset.pattern.permute.xlu0 1
      %1229 = vperm.xlu0 %1228, %v834
      %v1230 = vpop.permute.xlu0 %1229
      %1232 = vset.pattern.permute.xlu0 1
      %1233 = vperm.xlu0 %1232, %v835
      %v1234 = vpop.permute.xlu0 %1233
      %1236 = vset.pattern.permute.xlu0 1
      %1237 = vperm.xlu0 %1236, %v836
      %v1238 = vpop.permute.xlu0 %1237
      %1240 = vset.pattern.permute.xlu0 1
      %1241 = vperm.xlu0 %1240, %v837
      %v1242 = vpop.permute.xlu0 %1241
      %1244 = vset.pattern.permute.xlu0 1
      %1245 = vperm.xlu0 %1244, %v838
      %v1246 = vpop.permute.xlu0 %1245
      %1248 = vset.pattern.permute.xlu0 1
      %1249 = vperm.xlu0 %1248, %v839
      %v1250 = vpop.permute.xlu0 %1249
      %1252 = vset.pattern.permute.xlu0 1
      %1253 = vperm.xlu0 %1252, %v840
      %v1254 = vpop.permute.xlu0 %1253
      %1256 = vset.pattern.permute.xlu0 1
      %1257 = vperm.xlu0 %1256, %v841
      %v1258 = vpop.permute.xlu0 %1257
      %1260 = vset.pattern.permute.xlu0 1
      %1261 = vperm.xlu0 %1260, %v842
      %v1262 = vpop.permute.xlu0 %1261
      %1264 = vset.pattern.permute.xlu0 1
      %1265 = vperm.xlu0 %1264, %v843
      %v1266 = vpop.permute.xlu0 %1265
      %1268 = vset.pattern.permute.xlu0 1
      %1269 = vperm.xlu0 %1268, %v844
      %v1270 = vpop.permute.xlu0 %1269
      %1272 = vset.pattern.permute.xlu0 1
      %1273 = vperm.xlu0 %1272, %v845
      %v1274 = vpop.permute.xlu0 %1273
      %1276 = vset.pattern.permute.xlu0 1
      %1277 = vperm.xlu0 %1276, %v846
      %v1278 = vpop.permute.xlu0 %1277
      %1280 = vset.pattern.permute.xlu0 1
      %1281 = vperm.xlu0 %1280, %v847
      %v1282 = vpop.permute.xlu0 %1281
      %1284 = vset.pattern.permute.xlu0 1
      %1285 = vperm.xlu0 %1284, %v848
      %v1286 = vpop.permute.xlu0 %1285
      %1288 = vset.pattern.permute.xlu0 1
      %1289 = vperm.xlu0 %1288, %v849
      %v1290 = vpop.permute.xlu0 %1289
      %v1292 = vperm.slane %v850, 1
      %v1293 = vmul.f32 %v1134, %v1292
      %v1294 = vmul.f32 %v1138, %v1292
      %v1295 = vmul.f32 %v1142, %v1292
      %v1296 = vmul.f32 %v1146, %v1292
      %v1297 = vmul.f32 %v1150, %v1292
      %v1298 = vmul.f32 %v1154, %v1292
      %v1299 = vmul.f32 %v1158, %v1292
      %v1300 = vmul.f32 %v1162, %v1292
      %v1301 = vmul.f32 %v1166, %v1292
      %v1302 = vmul.f32 %v1170, %v1292
      %v1303 = vmul.f32 %v1174, %v1292
      %v1304 = vmul.f32 %v1178, %v1292
      %v1305 = vmul.f32 %v1182, %v1292
      %v1306 = vmul.f32 %v1186, %v1292
      %v1307 = vmul.f32 %v1190, %v1292
      %v1308 = vmul.f32 %v1194, %v1292
      %v1309 = vmul.f32 %v1198, %v1292
      %v1310 = vmul.f32 %v1202, %v1292
      %v1311 = vmul.f32 %v1206, %v1292
      %v1312 = vmul.f32 %v1210, %v1292
      %v1313 = vmul.f32 %v1214, %v1292
      %v1314 = vmul.f32 %v1218, %v1292
      %v1315 = vmul.f32 %v1222, %v1292
      %v1316 = vmul.f32 %v1226, %v1292
      %v1317 = vmul.f32 %v1230, %v1292
      %v1318 = vmul.f32 %v1234, %v1292
      %v1319 = vmul.f32 %v1238, %v1292
      %v1320 = vmul.f32 %v1242, %v1292
      %v1321 = vmul.f32 %v1246, %v1292
      %v1322 = vmul.f32 %v1250, %v1292
      %v1323 = vmul.f32 %v1254, %v1292
      %v1324 = vmul.f32 %v1258, %v1292
      %v1325 = vmul.f32 %v1262, %v1292
      %v1326 = vmul.f32 %v1266, %v1292
      %v1327 = vmul.f32 %v1270, %v1292
      %v1328 = vmul.f32 %v1274, %v1292
      %v1329 = vmul.f32 %v1278, %v1292
      %v1330 = vmul.f32 %v1282, %v1292
      %v1331 = vmul.f32 %v1286, %v1292
      %v1332 = vmul.f32 %v1290, %v1292
      %v1333 = vadd.f32 %v1092, %v1293
      %v1334 = vadd.f32 %v1093, %v1294
      %v1335 = vadd.f32 %v1094, %v1295
      %v1336 = vadd.f32 %v1095, %v1296
      %v1337 = vadd.f32 %v1096, %v1297
      %v1338 = vadd.f32 %v1097, %v1298
      %v1339 = vadd.f32 %v1098, %v1299
      %v1340 = vadd.f32 %v1099, %v1300
      %v1341 = vadd.f32 %v1100, %v1301
      %v1342 = vadd.f32 %v1101, %v1302
      %v1343 = vadd.f32 %v1102, %v1303
      %v1344 = vadd.f32 %v1103, %v1304
      %v1345 = vadd.f32 %v1104, %v1305
      %v1346 = vadd.f32 %v1105, %v1306
      %v1347 = vadd.f32 %v1106, %v1307
      %v1348 = vadd.f32 %v1107, %v1308
      %v1349 = vadd.f32 %v1108, %v1309
      %v1350 = vadd.f32 %v1109, %v1310
      %v1351 = vadd.f32 %v1110, %v1311
      %v1352 = vadd.f32 %v1111, %v1312
      %v1353 = vadd.f32 %v1112, %v1313
      %v1354 = vadd.f32 %v1113, %v1314
      %v1355 = vadd.f32 %v1114, %v1315
      %v1356 = vadd.f32 %v1115, %v1316
      %v1357 = vadd.f32 %v1116, %v1317
      %v1358 = vadd.f32 %v1117, %v1318
      %v1359 = vadd.f32 %v1118, %v1319
      %v1360 = vadd.f32 %v1119, %v1320
      %v1361 = vadd.f32 %v1120, %v1321
      %v1362 = vadd.f32 %v1121, %v1322
      %v1363 = vadd.f32 %v1122, %v1323
      %v1364 = vadd.f32 %v1123, %v1324
      %v1365 = vadd.f32 %v1124, %v1325
      %v1366 = vadd.f32 %v1125, %v1326
      %v1367 = vadd.f32 %v1126, %v1327
      %v1368 = vadd.f32 %v1127, %v1328
      %v1369 = vadd.f32 %v1128, %v1329
      %v1370 = vadd.f32 %v1129, %v1330
      %v1371 = vadd.f32 %v1130, %v1331
      %v1372 = vadd.f32 %v1131, %v1332
      %1373 = vset.pattern.permute.xlu0 2
      %1374 = vperm.xlu0 %1373, %v810
      %v1375 = vpop.permute.xlu0 %1374
      %1377 = vset.pattern.permute.xlu0 2
      %1378 = vperm.xlu0 %1377, %v811
      %v1379 = vpop.permute.xlu0 %1378
      %1381 = vset.pattern.permute.xlu0 2
      %1382 = vperm.xlu0 %1381, %v812
      %v1383 = vpop.permute.xlu0 %1382
      %1385 = vset.pattern.permute.xlu0 2
      %1386 = vperm.xlu0 %1385, %v813
      %v1387 = vpop.permute.xlu0 %1386
      %1389 = vset.pattern.permute.xlu0 2
      %1390 = vperm.xlu0 %1389, %v814
      %v1391 = vpop.permute.xlu0 %1390
      %1393 = vset.pattern.permute.xlu0 2
      %1394 = vperm.xlu0 %1393, %v815
      %v1395 = vpop.permute.xlu0 %1394
      %1397 = vset.pattern.permute.xlu0 2
      %1398 = vperm.xlu0 %1397, %v816
      %v1399 = vpop.permute.xlu0 %1398
      %1401 = vset.pattern.permute.xlu0 2
      %1402 = vperm.xlu0 %1401, %v817
      %v1403 = vpop.permute.xlu0 %1402
      %1405 = vset.pattern.permute.xlu0 2
      %1406 = vperm.xlu0 %1405, %v818
      %v1407 = vpop.permute.xlu0 %1406
      %1409 = vset.pattern.permute.xlu0 2
      %1410 = vperm.xlu0 %1409, %v819
      %v1411 = vpop.permute.xlu0 %1410
      %1413 = vset.pattern.permute.xlu0 2
      %1414 = vperm.xlu0 %1413, %v820
      %v1415 = vpop.permute.xlu0 %1414
      %1417 = vset.pattern.permute.xlu0 2
      %1418 = vperm.xlu0 %1417, %v821
      %v1419 = vpop.permute.xlu0 %1418
      %1421 = vset.pattern.permute.xlu0 2
      %1422 = vperm.xlu0 %1421, %v822
      %v1423 = vpop.permute.xlu0 %1422
      %1425 = vset.pattern.permute.xlu0 2
      %1426 = vperm.xlu0 %1425, %v823
      %v1427 = vpop.permute.xlu0 %1426
      %1429 = vset.pattern.permute.xlu0 2
      %1430 = vperm.xlu0 %1429, %v824
      %v1431 = vpop.permute.xlu0 %1430
      %1433 = vset.pattern.permute.xlu0 2
      %1434 = vperm.xlu0 %1433, %v825
      %v1435 = vpop.permute.xlu0 %1434
      %1437 = vset.pattern.permute.xlu0 2
      %1438 = vperm.xlu0 %1437, %v826
      %v1439 = vpop.permute.xlu0 %1438
      %1441 = vset.pattern.permute.xlu0 2
      %1442 = vperm.xlu0 %1441, %v827
      %v1443 = vpop.permute.xlu0 %1442
      %1445 = vset.pattern.permute.xlu0 2
      %1446 = vperm.xlu0 %1445, %v828
      %v1447 = vpop.permute.xlu0 %1446
      %1449 = vset.pattern.permute.xlu0 2
      %1450 = vperm.xlu0 %1449, %v829
      %v1451 = vpop.permute.xlu0 %1450
      %1453 = vset.pattern.permute.xlu0 2
      %1454 = vperm.xlu0 %1453, %v830
      %v1455 = vpop.permute.xlu0 %1454
      %1457 = vset.pattern.permute.xlu0 2
      %1458 = vperm.xlu0 %1457, %v831
      %v1459 = vpop.permute.xlu0 %1458
      %1461 = vset.pattern.permute.xlu0 2
      %1462 = vperm.xlu0 %1461, %v832
      %v1463 = vpop.permute.xlu0 %1462
      %1465 = vset.pattern.permute.xlu0 2
      %1466 = vperm.xlu0 %1465, %v833
      %v1467 = vpop.permute.xlu0 %1466
      %1469 = vset.pattern.permute.xlu0 2
      %1470 = vperm.xlu0 %1469, %v834
      %v1471 = vpop.permute.xlu0 %1470
      %1473 = vset.pattern.permute.xlu0 2
      %1474 = vperm.xlu0 %1473, %v835
      %v1475 = vpop.permute.xlu0 %1474
      %1477 = vset.pattern.permute.xlu0 2
      %1478 = vperm.xlu0 %1477, %v836
      %v1479 = vpop.permute.xlu0 %1478
      %1481 = vset.pattern.permute.xlu0 2
      %1482 = vperm.xlu0 %1481, %v837
      %v1483 = vpop.permute.xlu0 %1482
      %1485 = vset.pattern.permute.xlu0 2
      %1486 = vperm.xlu0 %1485, %v838
      %v1487 = vpop.permute.xlu0 %1486
      %1489 = vset.pattern.permute.xlu0 2
      %1490 = vperm.xlu0 %1489, %v839
      %v1491 = vpop.permute.xlu0 %1490
      %1493 = vset.pattern.permute.xlu0 2
      %1494 = vperm.xlu0 %1493, %v840
      %v1495 = vpop.permute.xlu0 %1494
      %1497 = vset.pattern.permute.xlu0 2
      %1498 = vperm.xlu0 %1497, %v841
      %v1499 = vpop.permute.xlu0 %1498
      %1501 = vset.pattern.permute.xlu0 2
      %1502 = vperm.xlu0 %1501, %v842
      %v1503 = vpop.permute.xlu0 %1502
      %1505 = vset.pattern.permute.xlu0 2
      %1506 = vperm.xlu0 %1505, %v843
      %v1507 = vpop.permute.xlu0 %1506
      %1509 = vset.pattern.permute.xlu0 2
      %1510 = vperm.xlu0 %1509, %v844
      %v1511 = vpop.permute.xlu0 %1510
      %1513 = vset.pattern.permute.xlu0 2
      %1514 = vperm.xlu0 %1513, %v845
      %v1515 = vpop.permute.xlu0 %1514
      %1517 = vset.pattern.permute.xlu0 2
      %1518 = vperm.xlu0 %1517, %v846
      %v1519 = vpop.permute.xlu0 %1518
      %1521 = vset.pattern.permute.xlu0 2
      %1522 = vperm.xlu0 %1521, %v847
      %v1523 = vpop.permute.xlu0 %1522
      %1525 = vset.pattern.permute.xlu0 2
      %1526 = vperm.xlu0 %1525, %v848
      %v1527 = vpop.permute.xlu0 %1526
      %1529 = vset.pattern.permute.xlu0 2
      %1530 = vperm.xlu0 %1529, %v849
      %v1531 = vpop.permute.xlu0 %1530
      %v1533 = vperm.slane %v850, 2
      %v1534 = vmul.f32 %v1375, %v1533
      %v1535 = vmul.f32 %v1379, %v1533
      %v1536 = vmul.f32 %v1383, %v1533
      %v1537 = vmul.f32 %v1387, %v1533
      %v1538 = vmul.f32 %v1391, %v1533
      %v1539 = vmul.f32 %v1395, %v1533
      %v1540 = vmul.f32 %v1399, %v1533
      %v1541 = vmul.f32 %v1403, %v1533
      %v1542 = vmul.f32 %v1407, %v1533
      %v1543 = vmul.f32 %v1411, %v1533
      %v1544 = vmul.f32 %v1415, %v1533
      %v1545 = vmul.f32 %v1419, %v1533
      %v1546 = vmul.f32 %v1423, %v1533
      %v1547 = vmul.f32 %v1427, %v1533
      %v1548 = vmul.f32 %v1431, %v1533
      %v1549 = vmul.f32 %v1435, %v1533
      %v1550 = vmul.f32 %v1439, %v1533
      %v1551 = vmul.f32 %v1443, %v1533
      %v1552 = vmul.f32 %v1447, %v1533
      %v1553 = vmul.f32 %v1451, %v1533
      %v1554 = vmul.f32 %v1455, %v1533
      %v1555 = vmul.f32 %v1459, %v1533
      %v1556 = vmul.f32 %v1463, %v1533
      %v1557 = vmul.f32 %v1467, %v1533
      %v1558 = vmul.f32 %v1471, %v1533
      %v1559 = vmul.f32 %v1475, %v1533
      %v1560 = vmul.f32 %v1479, %v1533
      %v1561 = vmul.f32 %v1483, %v1533
      %v1562 = vmul.f32 %v1487, %v1533
      %v1563 = vmul.f32 %v1491, %v1533
      %v1564 = vmul.f32 %v1495, %v1533
      %v1565 = vmul.f32 %v1499, %v1533
      %v1566 = vmul.f32 %v1503, %v1533
      %v1567 = vmul.f32 %v1507, %v1533
      %v1568 = vmul.f32 %v1511, %v1533
      %v1569 = vmul.f32 %v1515, %v1533
      %v1570 = vmul.f32 %v1519, %v1533
      %v1571 = vmul.f32 %v1523, %v1533
      %v1572 = vmul.f32 %v1527, %v1533
      %v1573 = vmul.f32 %v1531, %v1533
      %v1574 = vadd.f32 %v1333, %v1534
      %v1575 = vadd.f32 %v1334, %v1535
      %v1576 = vadd.f32 %v1335, %v1536
      %v1577 = vadd.f32 %v1336, %v1537
      %v1578 = vadd.f32 %v1337, %v1538
      %v1579 = vadd.f32 %v1338, %v1539
      %v1580 = vadd.f32 %v1339, %v1540
      %v1581 = vadd.f32 %v1340, %v1541
      %v1582 = vadd.f32 %v1341, %v1542
      %v1583 = vadd.f32 %v1342, %v1543
      %v1584 = vadd.f32 %v1343, %v1544
      %v1585 = vadd.f32 %v1344, %v1545
      %v1586 = vadd.f32 %v1345, %v1546
      %v1587 = vadd.f32 %v1346, %v1547
      %v1588 = vadd.f32 %v1347, %v1548
      %v1589 = vadd.f32 %v1348, %v1549
      %v1590 = vadd.f32 %v1349, %v1550
      %v1591 = vadd.f32 %v1350, %v1551
      %v1592 = vadd.f32 %v1351, %v1552
      %v1593 = vadd.f32 %v1352, %v1553
      %v1594 = vadd.f32 %v1353, %v1554
      %v1595 = vadd.f32 %v1354, %v1555
      %v1596 = vadd.f32 %v1355, %v1556
      %v1597 = vadd.f32 %v1356, %v1557
      %v1598 = vadd.f32 %v1357, %v1558
      %v1599 = vadd.f32 %v1358, %v1559
      %v1600 = vadd.f32 %v1359, %v1560
      %v1601 = vadd.f32 %v1360, %v1561
      %v1602 = vadd.f32 %v1361, %v1562
      %v1603 = vadd.f32 %v1362, %v1563
      %v1604 = vadd.f32 %v1363, %v1564
      %v1605 = vadd.f32 %v1364, %v1565
      %v1606 = vadd.f32 %v1365, %v1566
      %v1607 = vadd.f32 %v1366, %v1567
      %v1608 = vadd.f32 %v1367, %v1568
      %v1609 = vadd.f32 %v1368, %v1569
      %v1610 = vadd.f32 %v1369, %v1570
      %v1611 = vadd.f32 %v1370, %v1571
      %v1612 = vadd.f32 %v1371, %v1572
      %v1613 = vadd.f32 %v1372, %v1573
      %v1614 = vld [vmem:[%s386] sm:$0xff]
      %v1615 = vld [vmem:[%s386 + $0x8] sm:$0xff]
      %v1616 = vld [vmem:[%s386 + $0x10] sm:$0xff]
      %v1617 = vld [vmem:[%s386 + $0x18] sm:$0xff]
      %v1618 = vld [vmem:[%s386 + $0x20] sm:$0xff]
      %v1619 = vld [vmem:[%s386 + $0x28] sm:$0xff]
      %v1620 = vld [vmem:[%s386 + $0x30] sm:$0xff]
      %v1621 = vld [vmem:[%s386 + $0x38] sm:$0xff]
      %v1622 = vld [vmem:[%s386 + $0x40] sm:$0xff]
      %v1623 = vld [vmem:[%s386 + $0x48] sm:$0xff]
      %v1624 = vld [vmem:[%s386 + $0x50] sm:$0xff]
      %v1625 = vld [vmem:[%s386 + $0x58] sm:$0xff]
      %v1626 = vld [vmem:[%s386 + $0x60] sm:$0xff]
      %v1627 = vld [vmem:[%s386 + $0x68] sm:$0xff]
      %v1628 = vld [vmem:[%s386 + $0x70] sm:$0xff]
      %v1629 = vld [vmem:[%s386 + $0x78] sm:$0xff]
      %v1630 = vld [vmem:[%s386 + $0x80] sm:$0xff]
      %v1631 = vld [vmem:[%s386 + $0x88] sm:$0xff]
      %v1632 = vld [vmem:[%s386 + $0x90] sm:$0xff]
      %v1633 = vld [vmem:[%s386 + $0x98] sm:$0xff]
      %v1634 = vld [vmem:[%s386 + $0xa0] sm:$0xff]
      %v1635 = vld [vmem:[%s386 + $0xa8] sm:$0xff]
      %v1636 = vld [vmem:[%s386 + $0xb0] sm:$0xff]
      %v1637 = vld [vmem:[%s386 + $0xb8] sm:$0xff]
      %v1638 = vld [vmem:[%s386 + $0xc0] sm:$0xff]
      %v1639 = vld [vmem:[%s386 + $0xc8] sm:$0xff]
      %v1640 = vld [vmem:[%s386 + $0xd0] sm:$0xff]
      %v1641 = vld [vmem:[%s386 + $0xd8] sm:$0xff]
      %v1642 = vld [vmem:[%s386 + $0xe0] sm:$0xff]
      %v1643 = vld [vmem:[%s386 + $0xe8] sm:$0xff]
      %v1644 = vld [vmem:[%s386 + $0xf0] sm:$0xff]
      %v1645 = vld [vmem:[%s386 + $0xf8] sm:$0xff]
      %v1646 = vld [vmem:[%s386 + $0x100] sm:$0xff]
      %v1647 = vld [vmem:[%s386 + $0x108] sm:$0xff]
      %v1648 = vld [vmem:[%s386 + $0x110] sm:$0xff]
      %v1649 = vld [vmem:[%s386 + $0x118] sm:$0xff]
      %v1650 = vld [vmem:[%s386 + $0x120] sm:$0xff]
      %v1651 = vld [vmem:[%s386 + $0x128] sm:$0xff]
      %v1652 = vld [vmem:[%s386 + $0x130] sm:$0xff]
      %v1653 = vld [vmem:[%s386 + $0x138] sm:$0xff]
      %s1654 = scalar_lea.vmem %s1, 4
      %v1655 = vld [vmem:[%s1654] sm:$0x7]
      %1657 = vset.pattern.permute.xlu0 0
      %1658 = vperm.xlu0 %1657, %v1614
      %v1659 = vpop.permute.xlu0 %1658
      %1662 = vset.pattern.permute.xlu0 0
      %1663 = vperm.xlu0 %1662, %v1615
      %v1664 = vpop.permute.xlu0 %1663
      %1667 = vset.pattern.permute.xlu0 0
      %1668 = vperm.xlu0 %1667, %v1616
      %v1669 = vpop.permute.xlu0 %1668
      %1672 = vset.pattern.permute.xlu0 0
      %1673 = vperm.xlu0 %1672, %v1617
      %v1674 = vpop.permute.xlu0 %1673
      %1677 = vset.pattern.permute.xlu0 0
      %1678 = vperm.xlu0 %1677, %v1618
      %v1679 = vpop.permute.xlu0 %1678
      %1682 = vset.pattern.permute.xlu0 0
      %1683 = vperm.xlu0 %1682, %v1619
      %v1684 = vpop.permute.xlu0 %1683
      %1687 = vset.pattern.permute.xlu0 0
      %1688 = vperm.xlu0 %1687, %v1620
      %v1689 = vpop.permute.xlu0 %1688
      %1692 = vset.pattern.permute.xlu0 0
      %1693 = vperm.xlu0 %1692, %v1621
      %v1694 = vpop.permute.xlu0 %1693
      %1697 = vset.pattern.permute.xlu0 0
      %1698 = vperm.xlu0 %1697, %v1622
      %v1699 = vpop.permute.xlu0 %1698
      %1702 = vset.pattern.permute.xlu0 0
      %1703 = vperm.xlu0 %1702, %v1623
      %v1704 = vpop.permute.xlu0 %1703
      %1707 = vset.pattern.permute.xlu0 0
      %1708 = vperm.xlu0 %1707, %v1624
      %v1709 = vpop.permute.xlu0 %1708
      %1712 = vset.pattern.permute.xlu0 0
      %1713 = vperm.xlu0 %1712, %v1625
      %v1714 = vpop.permute.xlu0 %1713
      %1717 = vset.pattern.permute.xlu0 0
      %1718 = vperm.xlu0 %1717, %v1626
      %v1719 = vpop.permute.xlu0 %1718
      %1722 = vset.pattern.permute.xlu0 0
      %1723 = vperm.xlu0 %1722, %v1627
      %v1724 = vpop.permute.xlu0 %1723
      %1727 = vset.pattern.permute.xlu0 0
      %1728 = vperm.xlu0 %1727, %v1628
      %v1729 = vpop.permute.xlu0 %1728
      %1732 = vset.pattern.permute.xlu0 0
      %1733 = vperm.xlu0 %1732, %v1629
      %v1734 = vpop.permute.xlu0 %1733
      %1737 = vset.pattern.permute.xlu0 0
      %1738 = vperm.xlu0 %1737, %v1630
      %v1739 = vpop.permute.xlu0 %1738
      %1742 = vset.pattern.permute.xlu0 0
      %1743 = vperm.xlu0 %1742, %v1631
      %v1744 = vpop.permute.xlu0 %1743
      %1747 = vset.pattern.permute.xlu0 0
      %1748 = vperm.xlu0 %1747, %v1632
      %v1749 = vpop.permute.xlu0 %1748
      %1752 = vset.pattern.permute.xlu0 0
      %1753 = vperm.xlu0 %1752, %v1633
      %v1754 = vpop.permute.xlu0 %1753
      %1757 = vset.pattern.permute.xlu0 0
      %1758 = vperm.xlu0 %1757, %v1634
      %v1759 = vpop.permute.xlu0 %1758
      %1762 = vset.pattern.permute.xlu0 0
      %1763 = vperm.xlu0 %1762, %v1635
      %v1764 = vpop.permute.xlu0 %1763
      %1767 = vset.pattern.permute.xlu0 0
      %1768 = vperm.xlu0 %1767, %v1636
      %v1769 = vpop.permute.xlu0 %1768
      %1772 = vset.pattern.permute.xlu0 0
      %1773 = vperm.xlu0 %1772, %v1637
      %v1774 = vpop.permute.xlu0 %1773
      %1777 = vset.pattern.permute.xlu0 0
      %1778 = vperm.xlu0 %1777, %v1638
      %v1779 = vpop.permute.xlu0 %1778
      %1782 = vset.pattern.permute.xlu0 0
      %1783 = vperm.xlu0 %1782, %v1639
      %v1784 = vpop.permute.xlu0 %1783
      %1787 = vset.pattern.permute.xlu0 0
      %1788 = vperm.xlu0 %1787, %v1640
      %v1789 = vpop.permute.xlu0 %1788
      %1792 = vset.pattern.permute.xlu0 0
      %1793 = vperm.xlu0 %1792, %v1641
      %v1794 = vpop.permute.xlu0 %1793
      %1797 = vset.pattern.permute.xlu0 0
      %1798 = vperm.xlu0 %1797, %v1642
      %v1799 = vpop.permute.xlu0 %1798
      %1802 = vset.pattern.permute.xlu0 0
      %1803 = vperm.xlu0 %1802, %v1643
      %v1804 = vpop.permute.xlu0 %1803
      %1807 = vset.pattern.permute.xlu0 0
      %1808 = vperm.xlu0 %1807, %v1644
      %v1809 = vpop.permute.xlu0 %1808
      %1812 = vset.pattern.permute.xlu0 0
      %1813 = vperm.xlu0 %1812, %v1645
      %v1814 = vpop.permute.xlu0 %1813
      %1817 = vset.pattern.permute.xlu0 0
      %1818 = vperm.xlu0 %1817, %v1646
      %v1819 = vpop.permute.xlu0 %1818
      %1822 = vset.pattern.permute.xlu0 0
      %1823 = vperm.xlu0 %1822, %v1647
      %v1824 = vpop.permute.xlu0 %1823
      %1827 = vset.pattern.permute.xlu0 0
      %1828 = vperm.xlu0 %1827, %v1648
      %v1829 = vpop.permute.xlu0 %1828
      %1832 = vset.pattern.permute.xlu0 0
      %1833 = vperm.xlu0 %1832, %v1649
      %v1834 = vpop.permute.xlu0 %1833
      %1837 = vset.pattern.permute.xlu0 0
      %1838 = vperm.xlu0 %1837, %v1650
      %v1839 = vpop.permute.xlu0 %1838
      %1842 = vset.pattern.permute.xlu0 0
      %1843 = vperm.xlu0 %1842, %v1651
      %v1844 = vpop.permute.xlu0 %1843
      %1847 = vset.pattern.permute.xlu0 0
      %1848 = vperm.xlu0 %1847, %v1652
      %v1849 = vpop.permute.xlu0 %1848
      %1852 = vset.pattern.permute.xlu0 0
      %1853 = vperm.xlu0 %1852, %v1653
      %v1854 = vpop.permute.xlu0 %1853
      %v1856 = vperm.slane %v1655, 0
      %v1857 = vmul.f32 %v1659, %v1856
      %v1858 = vmul.f32 %v1664, %v1856
      %v1859 = vmul.f32 %v1669, %v1856
      %v1860 = vmul.f32 %v1674, %v1856
      %v1861 = vmul.f32 %v1679, %v1856
      %v1862 = vmul.f32 %v1684, %v1856
      %v1863 = vmul.f32 %v1689, %v1856
      %v1864 = vmul.f32 %v1694, %v1856
      %v1865 = vmul.f32 %v1699, %v1856
      %v1866 = vmul.f32 %v1704, %v1856
      %v1867 = vmul.f32 %v1709, %v1856
      %v1868 = vmul.f32 %v1714, %v1856
      %v1869 = vmul.f32 %v1719, %v1856
      %v1870 = vmul.f32 %v1724, %v1856
      %v1871 = vmul.f32 %v1729, %v1856
      %v1872 = vmul.f32 %v1734, %v1856
      %v1873 = vmul.f32 %v1739, %v1856
      %v1874 = vmul.f32 %v1744, %v1856
      %v1875 = vmul.f32 %v1749, %v1856
      %v1876 = vmul.f32 %v1754, %v1856
      %v1877 = vmul.f32 %v1759, %v1856
      %v1878 = vmul.f32 %v1764, %v1856
      %v1879 = vmul.f32 %v1769, %v1856
      %v1880 = vmul.f32 %v1774, %v1856
      %v1881 = vmul.f32 %v1779, %v1856
      %v1882 = vmul.f32 %v1784, %v1856
      %v1883 = vmul.f32 %v1789, %v1856
      %v1884 = vmul.f32 %v1794, %v1856
      %v1885 = vmul.f32 %v1799, %v1856
      %v1886 = vmul.f32 %v1804, %v1856
      %v1887 = vmul.f32 %v1809, %v1856
      %v1888 = vmul.f32 %v1814, %v1856
      %v1889 = vmul.f32 %v1819, %v1856
      %v1890 = vmul.f32 %v1824, %v1856
      %v1891 = vmul.f32 %v1829, %v1856
      %v1892 = vmul.f32 %v1834, %v1856
      %v1893 = vmul.f32 %v1839, %v1856
      %v1894 = vmul.f32 %v1844, %v1856
      %v1895 = vmul.f32 %v1849, %v1856
      %v1896 = vmul.f32 %v1854, %v1856
      %v1897 = vadd.f32 %v1574, %v1857
      %v1898 = vadd.f32 %v1575, %v1858
      %v1899 = vadd.f32 %v1576, %v1859
      %v1900 = vadd.f32 %v1577, %v1860
      %v1901 = vadd.f32 %v1578, %v1861
      %v1902 = vadd.f32 %v1579, %v1862
      %v1903 = vadd.f32 %v1580, %v1863
      %v1904 = vadd.f32 %v1581, %v1864
      %v1905 = vadd.f32 %v1582, %v1865
      %v1906 = vadd.f32 %v1583, %v1866
      %v1907 = vadd.f32 %v1584, %v1867
      %v1908 = vadd.f32 %v1585, %v1868
      %v1909 = vadd.f32 %v1586, %v1869
      %v1910 = vadd.f32 %v1587, %v1870
      %v1911 = vadd.f32 %v1588, %v1871
      %v1912 = vadd.f32 %v1589, %v1872
      %v1913 = vadd.f32 %v1590, %v1873
      %v1914 = vadd.f32 %v1591, %v1874
      %v1915 = vadd.f32 %v1592, %v1875
      %v1916 = vadd.f32 %v1593, %v1876
      %v1917 = vadd.f32 %v1594, %v1877
      %v1918 = vadd.f32 %v1595, %v1878
      %v1919 = vadd.f32 %v1596, %v1879
      %v1920 = vadd.f32 %v1597, %v1880
      %v1921 = vadd.f32 %v1598, %v1881
      %v1922 = vadd.f32 %v1599, %v1882
      %v1923 = vadd.f32 %v1600, %v1883
      %v1924 = vadd.f32 %v1601, %v1884
      %v1925 = vadd.f32 %v1602, %v1885
      %v1926 = vadd.f32 %v1603, %v1886
      %v1927 = vadd.f32 %v1604, %v1887
      %v1928 = vadd.f32 %v1605, %v1888
      %v1929 = vadd.f32 %v1606, %v1889
      %v1930 = vadd.f32 %v1607, %v1890
      %v1931 = vadd.f32 %v1608, %v1891
      %v1932 = vadd.f32 %v1609, %v1892
      %v1933 = vadd.f32 %v1610, %v1893
      %v1934 = vadd.f32 %v1611, %v1894
      %v1935 = vadd.f32 %v1612, %v1895
      %v1936 = vadd.f32 %v1613, %v1896
      %1937 = vset.pattern.permute.xlu0 1
      %1938 = vperm.xlu0 %1937, %v1614
      %v1939 = vpop.permute.xlu0 %1938
      %1941 = vset.pattern.permute.xlu0 1
      %1942 = vperm.xlu0 %1941, %v1615
      %v1943 = vpop.permute.xlu0 %1942
      %1945 = vset.pattern.permute.xlu0 1
      %1946 = vperm.xlu0 %1945, %v1616
      %v1947 = vpop.permute.xlu0 %1946
      %1949 = vset.pattern.permute.xlu0 1
      %1950 = vperm.xlu0 %1949, %v1617
      %v1951 = vpop.permute.xlu0 %1950
      %1953 = vset.pattern.permute.xlu0 1
      %1954 = vperm.xlu0 %1953, %v1618
      %v1955 = vpop.permute.xlu0 %1954
      %1957 = vset.pattern.permute.xlu0 1
      %1958 = vperm.xlu0 %1957, %v1619
      %v1959 = vpop.permute.xlu0 %1958
      %1961 = vset.pattern.permute.xlu0 1
      %1962 = vperm.xlu0 %1961, %v1620
      %v1963 = vpop.permute.xlu0 %1962
      %1965 = vset.pattern.permute.xlu0 1
      %1966 = vperm.xlu0 %1965, %v1621
      %v1967 = vpop.permute.xlu0 %1966
      %1969 = vset.pattern.permute.xlu0 1
      %1970 = vperm.xlu0 %1969, %v1622
      %v1971 = vpop.permute.xlu0 %1970
      %1973 = vset.pattern.permute.xlu0 1
      %1974 = vperm.xlu0 %1973, %v1623
      %v1975 = vpop.permute.xlu0 %1974
      %1977 = vset.pattern.permute.xlu0 1
      %1978 = vperm.xlu0 %1977, %v1624
      %v1979 = vpop.permute.xlu0 %1978
      %1981 = vset.pattern.permute.xlu0 1
      %1982 = vperm.xlu0 %1981, %v1625
      %v1983 = vpop.permute.xlu0 %1982
      %1985 = vset.pattern.permute.xlu0 1
      %1986 = vperm.xlu0 %1985, %v1626
      %v1987 = vpop.permute.xlu0 %1986
      %1989 = vset.pattern.permute.xlu0 1
      %1990 = vperm.xlu0 %1989, %v1627
      %v1991 = vpop.permute.xlu0 %1990
      %1993 = vset.pattern.permute.xlu0 1
      %1994 = vperm.xlu0 %1993, %v1628
      %v1995 = vpop.permute.xlu0 %1994
      %1997 = vset.pattern.permute.xlu0 1
      %1998 = vperm.xlu0 %1997, %v1629
      %v1999 = vpop.permute.xlu0 %1998
      %2001 = vset.pattern.permute.xlu0 1
      %2002 = vperm.xlu0 %2001, %v1630
      %v2003 = vpop.permute.xlu0 %2002
      %2005 = vset.pattern.permute.xlu0 1
      %2006 = vperm.xlu0 %2005, %v1631
      %v2007 = vpop.permute.xlu0 %2006
      %2009 = vset.pattern.permute.xlu0 1
      %2010 = vperm.xlu0 %2009, %v1632
      %v2011 = vpop.permute.xlu0 %2010
      %2013 = vset.pattern.permute.xlu0 1
      %2014 = vperm.xlu0 %2013, %v1633
      %v2015 = vpop.permute.xlu0 %2014
      %2017 = vset.pattern.permute.xlu0 1
      %2018 = vperm.xlu0 %2017, %v1634
      %v2019 = vpop.permute.xlu0 %2018
      %2021 = vset.pattern.permute.xlu0 1
      %2022 = vperm.xlu0 %2021, %v1635
      %v2023 = vpop.permute.xlu0 %2022
      %2025 = vset.pattern.permute.xlu0 1
      %2026 = vperm.xlu0 %2025, %v1636
      %v2027 = vpop.permute.xlu0 %2026
      %2029 = vset.pattern.permute.xlu0 1
      %2030 = vperm.xlu0 %2029, %v1637
      %v2031 = vpop.permute.xlu0 %2030
      %2033 = vset.pattern.permute.xlu0 1
      %2034 = vperm.xlu0 %2033, %v1638
      %v2035 = vpop.permute.xlu0 %2034
      %2037 = vset.pattern.permute.xlu0 1
      %2038 = vperm.xlu0 %2037, %v1639
      %v2039 = vpop.permute.xlu0 %2038
      %2041 = vset.pattern.permute.xlu0 1
      %2042 = vperm.xlu0 %2041, %v1640
      %v2043 = vpop.permute.xlu0 %2042
      %2045 = vset.pattern.permute.xlu0 1
      %2046 = vperm.xlu0 %2045, %v1641
      %v2047 = vpop.permute.xlu0 %2046
      %2049 = vset.pattern.permute.xlu0 1
      %2050 = vperm.xlu0 %2049, %v1642
      %v2051 = vpop.permute.xlu0 %2050
      %2053 = vset.pattern.permute.xlu0 1
      %2054 = vperm.xlu0 %2053, %v1643
      %v2055 = vpop.permute.xlu0 %2054
      %2057 = vset.pattern.permute.xlu0 1
      %2058 = vperm.xlu0 %2057, %v1644
      %v2059 = vpop.permute.xlu0 %2058
      %2061 = vset.pattern.permute.xlu0 1
      %2062 = vperm.xlu0 %2061, %v1645
      %v2063 = vpop.permute.xlu0 %2062
      %2065 = vset.pattern.permute.xlu0 1
      %2066 = vperm.xlu0 %2065, %v1646
      %v2067 = vpop.permute.xlu0 %2066
      %2069 = vset.pattern.permute.xlu0 1
      %2070 = vperm.xlu0 %2069, %v1647
      %v2071 = vpop.permute.xlu0 %2070
      %2073 = vset.pattern.permute.xlu0 1
      %2074 = vperm.xlu0 %2073, %v1648
      %v2075 = vpop.permute.xlu0 %2074
      %2077 = vset.pattern.permute.xlu0 1
      %2078 = vperm.xlu0 %2077, %v1649
      %v2079 = vpop.permute.xlu0 %2078
      %2081 = vset.pattern.permute.xlu0 1
      %2082 = vperm.xlu0 %2081, %v1650
      %v2083 = vpop.permute.xlu0 %2082
      %2085 = vset.pattern.permute.xlu0 1
      %2086 = vperm.xlu0 %2085, %v1651
      %v2087 = vpop.permute.xlu0 %2086
      %2089 = vset.pattern.permute.xlu0 1
      %2090 = vperm.xlu0 %2089, %v1652
      %v2091 = vpop.permute.xlu0 %2090
      %2093 = vset.pattern.permute.xlu0 1
      %2094 = vperm.xlu0 %2093, %v1653
      %v2095 = vpop.permute.xlu0 %2094
      %v2097 = vperm.slane %v1655, 1
      %v2098 = vmul.f32 %v1939, %v2097
      %v2099 = vmul.f32 %v1943, %v2097
      %v2100 = vmul.f32 %v1947, %v2097
      %v2101 = vmul.f32 %v1951, %v2097
      %v2102 = vmul.f32 %v1955, %v2097
      %v2103 = vmul.f32 %v1959, %v2097
      %v2104 = vmul.f32 %v1963, %v2097
      %v2105 = vmul.f32 %v1967, %v2097
      %v2106 = vmul.f32 %v1971, %v2097
      %v2107 = vmul.f32 %v1975, %v2097
      %v2108 = vmul.f32 %v1979, %v2097
      %v2109 = vmul.f32 %v1983, %v2097
      %v2110 = vmul.f32 %v1987, %v2097
      %v2111 = vmul.f32 %v1991, %v2097
      %v2112 = vmul.f32 %v1995, %v2097
      %v2113 = vmul.f32 %v1999, %v2097
      %v2114 = vmul.f32 %v2003, %v2097
      %v2115 = vmul.f32 %v2007, %v2097
      %v2116 = vmul.f32 %v2011, %v2097
      %v2117 = vmul.f32 %v2015, %v2097
      %v2118 = vmul.f32 %v2019, %v2097
      %v2119 = vmul.f32 %v2023, %v2097
      %v2120 = vmul.f32 %v2027, %v2097
      %v2121 = vmul.f32 %v2031, %v2097
      %v2122 = vmul.f32 %v2035, %v2097
      %v2123 = vmul.f32 %v2039, %v2097
      %v2124 = vmul.f32 %v2043, %v2097
      %v2125 = vmul.f32 %v2047, %v2097
      %v2126 = vmul.f32 %v2051, %v2097
      %v2127 = vmul.f32 %v2055, %v2097
      %v2128 = vmul.f32 %v2059, %v2097
      %v2129 = vmul.f32 %v2063, %v2097
      %v2130 = vmul.f32 %v2067, %v2097
      %v2131 = vmul.f32 %v2071, %v2097
      %v2132 = vmul.f32 %v2075, %v2097
      %v2133 = vmul.f32 %v2079, %v2097
      %v2134 = vmul.f32 %v2083, %v2097
      %v2135 = vmul.f32 %v2087, %v2097
      %v2136 = vmul.f32 %v2091, %v2097
      %v2137 = vmul.f32 %v2095, %v2097
      %v2138 = vadd.f32 %v1897, %v2098
      %v2139 = vadd.f32 %v1898, %v2099
      %v2140 = vadd.f32 %v1899, %v2100
      %v2141 = vadd.f32 %v1900, %v2101
      %v2142 = vadd.f32 %v1901, %v2102
      %v2143 = vadd.f32 %v1902, %v2103
      %v2144 = vadd.f32 %v1903, %v2104
      %v2145 = vadd.f32 %v1904, %v2105
      %v2146 = vadd.f32 %v1905, %v2106
      %v2147 = vadd.f32 %v1906, %v2107
      %v2148 = vadd.f32 %v1907, %v2108
      %v2149 = vadd.f32 %v1908, %v2109
      %v2150 = vadd.f32 %v1909, %v2110
      %v2151 = vadd.f32 %v1910, %v2111
      %v2152 = vadd.f32 %v1911, %v2112
      %v2153 = vadd.f32 %v1912, %v2113
      %v2154 = vadd.f32 %v1913, %v2114
      %v2155 = vadd.f32 %v1914, %v2115
      %v2156 = vadd.f32 %v1915, %v2116
      %v2157 = vadd.f32 %v1916, %v2117
      %v2158 = vadd.f32 %v1917, %v2118
      %v2159 = vadd.f32 %v1918, %v2119
      %v2160 = vadd.f32 %v1919, %v2120
      %v2161 = vadd.f32 %v1920, %v2121
      %v2162 = vadd.f32 %v1921, %v2122
      %v2163 = vadd.f32 %v1922, %v2123
      %v2164 = vadd.f32 %v1923, %v2124
      %v2165 = vadd.f32 %v1924, %v2125
      %v2166 = vadd.f32 %v1925, %v2126
      %v2167 = vadd.f32 %v1926, %v2127
      %v2168 = vadd.f32 %v1927, %v2128
      %v2169 = vadd.f32 %v1928, %v2129
      %v2170 = vadd.f32 %v1929, %v2130
      %v2171 = vadd.f32 %v1930, %v2131
      %v2172 = vadd.f32 %v1931, %v2132
      %v2173 = vadd.f32 %v1932, %v2133
      %v2174 = vadd.f32 %v1933, %v2134
      %v2175 = vadd.f32 %v1934, %v2135
      %v2176 = vadd.f32 %v1935, %v2136
      %v2177 = vadd.f32 %v1936, %v2137
      %2178 = vset.pattern.permute.xlu0 2
      %2179 = vperm.xlu0 %2178, %v1614
      %v2180 = vpop.permute.xlu0 %2179
      %2182 = vset.pattern.permute.xlu0 2
      %2183 = vperm.xlu0 %2182, %v1615
      %v2184 = vpop.permute.xlu0 %2183
      %2186 = vset.pattern.permute.xlu0 2
      %2187 = vperm.xlu0 %2186, %v1616
      %v2188 = vpop.permute.xlu0 %2187
      %2190 = vset.pattern.permute.xlu0 2
      %2191 = vperm.xlu0 %2190, %v1617
      %v2192 = vpop.permute.xlu0 %2191
      %2194 = vset.pattern.permute.xlu0 2
      %2195 = vperm.xlu0 %2194, %v1618
      %v2196 = vpop.permute.xlu0 %2195
      %2198 = vset.pattern.permute.xlu0 2
      %2199 = vperm.xlu0 %2198, %v1619
      %v2200 = vpop.permute.xlu0 %2199
      %2202 = vset.pattern.permute.xlu0 2
      %2203 = vperm.xlu0 %2202, %v1620
      %v2204 = vpop.permute.xlu0 %2203
      %2206 = vset.pattern.permute.xlu0 2
      %2207 = vperm.xlu0 %2206, %v1621
      %v2208 = vpop.permute.xlu0 %2207
      %2210 = vset.pattern.permute.xlu0 2
      %2211 = vperm.xlu0 %2210, %v1622
      %v2212 = vpop.permute.xlu0 %2211
      %2214 = vset.pattern.permute.xlu0 2
      %2215 = vperm.xlu0 %2214, %v1623
      %v2216 = vpop.permute.xlu0 %2215
      %2218 = vset.pattern.permute.xlu0 2
      %2219 = vperm.xlu0 %2218, %v1624
      %v2220 = vpop.permute.xlu0 %2219
      %2222 = vset.pattern.permute.xlu0 2
      %2223 = vperm.xlu0 %2222, %v1625
      %v2224 = vpop.permute.xlu0 %2223
      %2226 = vset.pattern.permute.xlu0 2
      %2227 = vperm.xlu0 %2226, %v1626
      %v2228 = vpop.permute.xlu0 %2227
      %2230 = vset.pattern.permute.xlu0 2
      %2231 = vperm.xlu0 %2230, %v1627
      %v2232 = vpop.permute.xlu0 %2231
      %2234 = vset.pattern.permute.xlu0 2
      %2235 = vperm.xlu0 %2234, %v1628
      %v2236 = vpop.permute.xlu0 %2235
      %2238 = vset.pattern.permute.xlu0 2
      %2239 = vperm.xlu0 %2238, %v1629
      %v2240 = vpop.permute.xlu0 %2239
      %2242 = vset.pattern.permute.xlu0 2
      %2243 = vperm.xlu0 %2242, %v1630
      %v2244 = vpop.permute.xlu0 %2243
      %2246 = vset.pattern.permute.xlu0 2
      %2247 = vperm.xlu0 %2246, %v1631
      %v2248 = vpop.permute.xlu0 %2247
      %2250 = vset.pattern.permute.xlu0 2
      %2251 = vperm.xlu0 %2250, %v1632
      %v2252 = vpop.permute.xlu0 %2251
      %2254 = vset.pattern.permute.xlu0 2
      %2255 = vperm.xlu0 %2254, %v1633
      %v2256 = vpop.permute.xlu0 %2255
      %2258 = vset.pattern.permute.xlu0 2
      %2259 = vperm.xlu0 %2258, %v1634
      %v2260 = vpop.permute.xlu0 %2259
      %2262 = vset.pattern.permute.xlu0 2
      %2263 = vperm.xlu0 %2262, %v1635
      %v2264 = vpop.permute.xlu0 %2263
      %2266 = vset.pattern.permute.xlu0 2
      %2267 = vperm.xlu0 %2266, %v1636
      %v2268 = vpop.permute.xlu0 %2267
      %2270 = vset.pattern.permute.xlu0 2
      %2271 = vperm.xlu0 %2270, %v1637
      %v2272 = vpop.permute.xlu0 %2271
      %2274 = vset.pattern.permute.xlu0 2
      %2275 = vperm.xlu0 %2274, %v1638
      %v2276 = vpop.permute.xlu0 %2275
      %2278 = vset.pattern.permute.xlu0 2
      %2279 = vperm.xlu0 %2278, %v1639
      %v2280 = vpop.permute.xlu0 %2279
      %2282 = vset.pattern.permute.xlu0 2
      %2283 = vperm.xlu0 %2282, %v1640
      %v2284 = vpop.permute.xlu0 %2283
      %2286 = vset.pattern.permute.xlu0 2
      %2287 = vperm.xlu0 %2286, %v1641
      %v2288 = vpop.permute.xlu0 %2287
      %2290 = vset.pattern.permute.xlu0 2
      %2291 = vperm.xlu0 %2290, %v1642
      %v2292 = vpop.permute.xlu0 %2291
      %2294 = vset.pattern.permute.xlu0 2
      %2295 = vperm.xlu0 %2294, %v1643
      %v2296 = vpop.permute.xlu0 %2295
      %2298 = vset.pattern.permute.xlu0 2
      %2299 = vperm.xlu0 %2298, %v1644
      %v2300 = vpop.permute.xlu0 %2299
      %2302 = vset.pattern.permute.xlu0 2
      %2303 = vperm.xlu0 %2302, %v1645
      %v2304 = vpop.permute.xlu0 %2303
      %2306 = vset.pattern.permute.xlu0 2
      %2307 = vperm.xlu0 %2306, %v1646
      %v2308 = vpop.permute.xlu0 %2307
      %2310 = vset.pattern.permute.xlu0 2
      %2311 = vperm.xlu0 %2310, %v1647
      %v2312 = vpop.permute.xlu0 %2311
      %2314 = vset.pattern.permute.xlu0 2
      %2315 = vperm.xlu0 %2314, %v1648
      %v2316 = vpop.permute.xlu0 %2315
      %2318 = vset.pattern.permute.xlu0 2
      %2319 = vperm.xlu0 %2318, %v1649
      %v2320 = vpop.permute.xlu0 %2319
      %2322 = vset.pattern.permute.xlu0 2
      %2323 = vperm.xlu0 %2322, %v1650
      %v2324 = vpop.permute.xlu0 %2323
      %2326 = vset.pattern.permute.xlu0 2
      %2327 = vperm.xlu0 %2326, %v1651
      %v2328 = vpop.permute.xlu0 %2327
      %2330 = vset.pattern.permute.xlu0 2
      %2331 = vperm.xlu0 %2330, %v1652
      %v2332 = vpop.permute.xlu0 %2331
      %2334 = vset.pattern.permute.xlu0 2
      %2335 = vperm.xlu0 %2334, %v1653
      %v2336 = vpop.permute.xlu0 %2335
      %v2338 = vperm.slane %v1655, 2
      %v2339 = vmul.f32 %v2180, %v2338
      %v2340 = vmul.f32 %v2184, %v2338
      %v2341 = vmul.f32 %v2188, %v2338
      %v2342 = vmul.f32 %v2192, %v2338
      %v2343 = vmul.f32 %v2196, %v2338
      %v2344 = vmul.f32 %v2200, %v2338
      %v2345 = vmul.f32 %v2204, %v2338
      %v2346 = vmul.f32 %v2208, %v2338
      %v2347 = vmul.f32 %v2212, %v2338
      %v2348 = vmul.f32 %v2216, %v2338
      %v2349 = vmul.f32 %v2220, %v2338
      %v2350 = vmul.f32 %v2224, %v2338
      %v2351 = vmul.f32 %v2228, %v2338
      %v2352 = vmul.f32 %v2232, %v2338
      %v2353 = vmul.f32 %v2236, %v2338
      %v2354 = vmul.f32 %v2240, %v2338
      %v2355 = vmul.f32 %v2244, %v2338
      %v2356 = vmul.f32 %v2248, %v2338
      %v2357 = vmul.f32 %v2252, %v2338
      %v2358 = vmul.f32 %v2256, %v2338
      %v2359 = vmul.f32 %v2260, %v2338
      %v2360 = vmul.f32 %v2264, %v2338
      %v2361 = vmul.f32 %v2268, %v2338
      %v2362 = vmul.f32 %v2272, %v2338
      %v2363 = vmul.f32 %v2276, %v2338
      %v2364 = vmul.f32 %v2280, %v2338
      %v2365 = vmul.f32 %v2284, %v2338
      %v2366 = vmul.f32 %v2288, %v2338
      %v2367 = vmul.f32 %v2292, %v2338
      %v2368 = vmul.f32 %v2296, %v2338
      %v2369 = vmul.f32 %v2300, %v2338
      %v2370 = vmul.f32 %v2304, %v2338
      %v2371 = vmul.f32 %v2308, %v2338
      %v2372 = vmul.f32 %v2312, %v2338
      %v2373 = vmul.f32 %v2316, %v2338
      %v2374 = vmul.f32 %v2320, %v2338
      %v2375 = vmul.f32 %v2324, %v2338
      %v2376 = vmul.f32 %v2328, %v2338
      %v2377 = vmul.f32 %v2332, %v2338
      %v2378 = vmul.f32 %v2336, %v2338
      %v2379 = vadd.f32 %v2138, %v2339
      %v2380 = vadd.f32 %v2139, %v2340
      %v2381 = vadd.f32 %v2140, %v2341
      %v2382 = vadd.f32 %v2141, %v2342
      %v2383 = vadd.f32 %v2142, %v2343
      %v2384 = vadd.f32 %v2143, %v2344
      %v2385 = vadd.f32 %v2144, %v2345
      %v2386 = vadd.f32 %v2145, %v2346
      %v2387 = vadd.f32 %v2146, %v2347
      %v2388 = vadd.f32 %v2147, %v2348
      %v2389 = vadd.f32 %v2148, %v2349
      %v2390 = vadd.f32 %v2149, %v2350
      %v2391 = vadd.f32 %v2150, %v2351
      %v2392 = vadd.f32 %v2151, %v2352
      %v2393 = vadd.f32 %v2152, %v2353
      %v2394 = vadd.f32 %v2153, %v2354
      %v2395 = vadd.f32 %v2154, %v2355
      %v2396 = vadd.f32 %v2155, %v2356
      %v2397 = vadd.f32 %v2156, %v2357
      %v2398 = vadd.f32 %v2157, %v2358
      %v2399 = vadd.f32 %v2158, %v2359
      %v2400 = vadd.f32 %v2159, %v2360
      %v2401 = vadd.f32 %v2160, %v2361
      %v2402 = vadd.f32 %v2161, %v2362
      %v2403 = vadd.f32 %v2162, %v2363
      %v2404 = vadd.f32 %v2163, %v2364
      %v2405 = vadd.f32 %v2164, %v2365
      %v2406 = vadd.f32 %v2165, %v2366
      %v2407 = vadd.f32 %v2166, %v2367
      %v2408 = vadd.f32 %v2167, %v2368
      %v2409 = vadd.f32 %v2168, %v2369
      %v2410 = vadd.f32 %v2169, %v2370
      %v2411 = vadd.f32 %v2170, %v2371
      %v2412 = vadd.f32 %v2171, %v2372
      %v2413 = vadd.f32 %v2172, %v2373
      %v2414 = vadd.f32 %v2173, %v2374
      %v2415 = vadd.f32 %v2174, %v2375
      %v2416 = vadd.f32 %v2175, %v2376
      %v2417 = vadd.f32 %v2176, %v2377
      %v2418 = vadd.f32 %v2177, %v2378
      %s2419 = scalar_lea.vmem [#allocation2], 80
      %v2420 = vld [vmem:[%s2419] sm:$0xff]
      %v2421 = vld [vmem:[%s2419 + $0x8] sm:$0xff]
      %v2422 = vld [vmem:[%s2419 + $0x10] sm:$0xff]
      %v2423 = vld [vmem:[%s2419 + $0x18] sm:$0xff]
      %v2424 = vld [vmem:[%s2419 + $0x20] sm:$0xff]
      %v2425 = vld [vmem:[%s2419 + $0x28] sm:$0xff]
      %v2426 = vld [vmem:[%s2419 + $0x30] sm:$0xff]
      %v2427 = vld [vmem:[%s2419 + $0x38] sm:$0xff]
      %v2428 = vld [vmem:[%s2419 + $0x40] sm:$0xff]
      %v2429 = vld [vmem:[%s2419 + $0x48] sm:$0xff]
      %v2430 = vld [vmem:[%s2419 + $0x50] sm:$0xff]
      %v2431 = vld [vmem:[%s2419 + $0x58] sm:$0xff]
      %v2432 = vld [vmem:[%s2419 + $0x60] sm:$0xff]
      %v2433 = vld [vmem:[%s2419 + $0x68] sm:$0xff]
      %v2434 = vld [vmem:[%s2419 + $0x70] sm:$0xff]
      %v2435 = vld [vmem:[%s2419 + $0x78] sm:$0xff]
      %v2436 = vld [vmem:[%s2419 + $0x80] sm:$0xff]
      %v2437 = vld [vmem:[%s2419 + $0x88] sm:$0xff]
      %v2438 = vld [vmem:[%s2419 + $0x90] sm:$0xff]
      %v2439 = vld [vmem:[%s2419 + $0x98] sm:$0xff]
      %v2440 = vld [vmem:[%s2419 + $0xa0] sm:$0xff]
      %v2441 = vld [vmem:[%s2419 + $0xa8] sm:$0xff]
      %v2442 = vld [vmem:[%s2419 + $0xb0] sm:$0xff]
      %v2443 = vld [vmem:[%s2419 + $0xb8] sm:$0xff]
      %v2444 = vld [vmem:[%s2419 + $0xc0] sm:$0xff]
      %v2445 = vld [vmem:[%s2419 + $0xc8] sm:$0xff]
      %v2446 = vld [vmem:[%s2419 + $0xd0] sm:$0xff]
      %v2447 = vld [vmem:[%s2419 + $0xd8] sm:$0xff]
      %v2448 = vld [vmem:[%s2419 + $0xe0] sm:$0xff]
      %v2449 = vld [vmem:[%s2419 + $0xe8] sm:$0xff]
      %v2450 = vld [vmem:[%s2419 + $0xf0] sm:$0xff]
      %v2451 = vld [vmem:[%s2419 + $0xf8] sm:$0xff]
      %v2452 = vld [vmem:[%s2419 + $0x100] sm:$0xff]
      %v2453 = vld [vmem:[%s2419 + $0x108] sm:$0xff]
      %v2454 = vld [vmem:[%s2419 + $0x110] sm:$0xff]
      %v2455 = vld [vmem:[%s2419 + $0x118] sm:$0xff]
      %v2456 = vld [vmem:[%s2419 + $0x120] sm:$0xff]
      %v2457 = vld [vmem:[%s2419 + $0x128] sm:$0xff]
      %v2458 = vld [vmem:[%s2419 + $0x130] sm:$0xff]
      %v2459 = vld [vmem:[%s2419 + $0x138] sm:$0xff]
      %s2460 = scalar_lea.vmem %s1, 8
      %v2461 = vld [vmem:[%s2460] sm:$0x7]
      %2463 = vset.pattern.permute.xlu0 0
      %2464 = vperm.xlu0 %2463, %v2420
      %v2465 = vpop.permute.xlu0 %2464
      %2468 = vset.pattern.permute.xlu0 0
      %2469 = vperm.xlu0 %2468, %v2421
      %v2470 = vpop.permute.xlu0 %2469
      %2473 = vset.pattern.permute.xlu0 0
      %2474 = vperm.xlu0 %2473, %v2422
      %v2475 = vpop.permute.xlu0 %2474
      %2478 = vset.pattern.permute.xlu0 0
      %2479 = vperm.xlu0 %2478, %v2423
      %v2480 = vpop.permute.xlu0 %2479
      %2483 = vset.pattern.permute.xlu0 0
      %2484 = vperm.xlu0 %2483, %v2424
      %v2485 = vpop.permute.xlu0 %2484
      %2488 = vset.pattern.permute.xlu0 0
      %2489 = vperm.xlu0 %2488, %v2425
      %v2490 = vpop.permute.xlu0 %2489
      %2493 = vset.pattern.permute.xlu0 0
      %2494 = vperm.xlu0 %2493, %v2426
      %v2495 = vpop.permute.xlu0 %2494
      %2498 = vset.pattern.permute.xlu0 0
      %2499 = vperm.xlu0 %2498, %v2427
      %v2500 = vpop.permute.xlu0 %2499
      %2503 = vset.pattern.permute.xlu0 0
      %2504 = vperm.xlu0 %2503, %v2428
      %v2505 = vpop.permute.xlu0 %2504
      %2508 = vset.pattern.permute.xlu0 0
      %2509 = vperm.xlu0 %2508, %v2429
      %v2510 = vpop.permute.xlu0 %2509
      %2513 = vset.pattern.permute.xlu0 0
      %2514 = vperm.xlu0 %2513, %v2430
      %v2515 = vpop.permute.xlu0 %2514
      %2518 = vset.pattern.permute.xlu0 0
      %2519 = vperm.xlu0 %2518, %v2431
      %v2520 = vpop.permute.xlu0 %2519
      %2523 = vset.pattern.permute.xlu0 0
      %2524 = vperm.xlu0 %2523, %v2432
      %v2525 = vpop.permute.xlu0 %2524
      %2528 = vset.pattern.permute.xlu0 0
      %2529 = vperm.xlu0 %2528, %v2433
      %v2530 = vpop.permute.xlu0 %2529
      %2533 = vset.pattern.permute.xlu0 0
      %2534 = vperm.xlu0 %2533, %v2434
      %v2535 = vpop.permute.xlu0 %2534
      %2538 = vset.pattern.permute.xlu0 0
      %2539 = vperm.xlu0 %2538, %v2435
      %v2540 = vpop.permute.xlu0 %2539
      %2543 = vset.pattern.permute.xlu0 0
      %2544 = vperm.xlu0 %2543, %v2436
      %v2545 = vpop.permute.xlu0 %2544
      %2548 = vset.pattern.permute.xlu0 0
      %2549 = vperm.xlu0 %2548, %v2437
      %v2550 = vpop.permute.xlu0 %2549
      %2553 = vset.pattern.permute.xlu0 0
      %2554 = vperm.xlu0 %2553, %v2438
      %v2555 = vpop.permute.xlu0 %2554
      %2558 = vset.pattern.permute.xlu0 0
      %2559 = vperm.xlu0 %2558, %v2439
      %v2560 = vpop.permute.xlu0 %2559
      %2563 = vset.pattern.permute.xlu0 0
      %2564 = vperm.xlu0 %2563, %v2440
      %v2565 = vpop.permute.xlu0 %2564
      %2568 = vset.pattern.permute.xlu0 0
      %2569 = vperm.xlu0 %2568, %v2441
      %v2570 = vpop.permute.xlu0 %2569
      %2573 = vset.pattern.permute.xlu0 0
      %2574 = vperm.xlu0 %2573, %v2442
      %v2575 = vpop.permute.xlu0 %2574
      %2578 = vset.pattern.permute.xlu0 0
      %2579 = vperm.xlu0 %2578, %v2443
      %v2580 = vpop.permute.xlu0 %2579
      %2583 = vset.pattern.permute.xlu0 0
      %2584 = vperm.xlu0 %2583, %v2444
      %v2585 = vpop.permute.xlu0 %2584
      %2588 = vset.pattern.permute.xlu0 0
      %2589 = vperm.xlu0 %2588, %v2445
      %v2590 = vpop.permute.xlu0 %2589
      %2593 = vset.pattern.permute.xlu0 0
      %2594 = vperm.xlu0 %2593, %v2446
      %v2595 = vpop.permute.xlu0 %2594
      %2598 = vset.pattern.permute.xlu0 0
      %2599 = vperm.xlu0 %2598, %v2447
      %v2600 = vpop.permute.xlu0 %2599
      %2603 = vset.pattern.permute.xlu0 0
      %2604 = vperm.xlu0 %2603, %v2448
      %v2605 = vpop.permute.xlu0 %2604
      %2608 = vset.pattern.permute.xlu0 0
      %2609 = vperm.xlu0 %2608, %v2449
      %v2610 = vpop.permute.xlu0 %2609
      %2613 = vset.pattern.permute.xlu0 0
      %2614 = vperm.xlu0 %2613, %v2450
      %v2615 = vpop.permute.xlu0 %2614
      %2618 = vset.pattern.permute.xlu0 0
      %2619 = vperm.xlu0 %2618, %v2451
      %v2620 = vpop.permute.xlu0 %2619
      %2623 = vset.pattern.permute.xlu0 0
      %2624 = vperm.xlu0 %2623, %v2452
      %v2625 = vpop.permute.xlu0 %2624
      %2628 = vset.pattern.permute.xlu0 0
      %2629 = vperm.xlu0 %2628, %v2453
      %v2630 = vpop.permute.xlu0 %2629
      %2633 = vset.pattern.permute.xlu0 0
      %2634 = vperm.xlu0 %2633, %v2454
      %v2635 = vpop.permute.xlu0 %2634
      %2638 = vset.pattern.permute.xlu0 0
      %2639 = vperm.xlu0 %2638, %v2455
      %v2640 = vpop.permute.xlu0 %2639
      %2643 = vset.pattern.permute.xlu0 0
      %2644 = vperm.xlu0 %2643, %v2456
      %v2645 = vpop.permute.xlu0 %2644
      %2648 = vset.pattern.permute.xlu0 0
      %2649 = vperm.xlu0 %2648, %v2457
      %v2650 = vpop.permute.xlu0 %2649
      %2653 = vset.pattern.permute.xlu0 0
      %2654 = vperm.xlu0 %2653, %v2458
      %v2655 = vpop.permute.xlu0 %2654
      %2658 = vset.pattern.permute.xlu0 0
      %2659 = vperm.xlu0 %2658, %v2459
      %v2660 = vpop.permute.xlu0 %2659
      %v2662 = vperm.slane %v2461, 0
      %v2663 = vmul.f32 %v2465, %v2662
      %v2664 = vmul.f32 %v2470, %v2662
      %v2665 = vmul.f32 %v2475, %v2662
      %v2666 = vmul.f32 %v2480, %v2662
      %v2667 = vmul.f32 %v2485, %v2662
      %v2668 = vmul.f32 %v2490, %v2662
      %v2669 = vmul.f32 %v2495, %v2662
      %v2670 = vmul.f32 %v2500, %v2662
      %v2671 = vmul.f32 %v2505, %v2662
      %v2672 = vmul.f32 %v2510, %v2662
      %v2673 = vmul.f32 %v2515, %v2662
      %v2674 = vmul.f32 %v2520, %v2662
      %v2675 = vmul.f32 %v2525, %v2662
      %v2676 = vmul.f32 %v2530, %v2662
      %v2677 = vmul.f32 %v2535, %v2662
      %v2678 = vmul.f32 %v2540, %v2662
      %v2679 = vmul.f32 %v2545, %v2662
      %v2680 = vmul.f32 %v2550, %v2662
      %v2681 = vmul.f32 %v2555, %v2662
      %v2682 = vmul.f32 %v2560, %v2662
      %v2683 = vmul.f32 %v2565, %v2662
      %v2684 = vmul.f32 %v2570, %v2662
      %v2685 = vmul.f32 %v2575, %v2662
      %v2686 = vmul.f32 %v2580, %v2662
      %v2687 = vmul.f32 %v2585, %v2662
      %v2688 = vmul.f32 %v2590, %v2662
      %v2689 = vmul.f32 %v2595, %v2662
      %v2690 = vmul.f32 %v2600, %v2662
      %v2691 = vmul.f32 %v2605, %v2662
      %v2692 = vmul.f32 %v2610, %v2662
      %v2693 = vmul.f32 %v2615, %v2662
      %v2694 = vmul.f32 %v2620, %v2662
      %v2695 = vmul.f32 %v2625, %v2662
      %v2696 = vmul.f32 %v2630, %v2662
      %v2697 = vmul.f32 %v2635, %v2662
      %v2698 = vmul.f32 %v2640, %v2662
      %v2699 = vmul.f32 %v2645, %v2662
      %v2700 = vmul.f32 %v2650, %v2662
      %v2701 = vmul.f32 %v2655, %v2662
      %v2702 = vmul.f32 %v2660, %v2662
      %v2703 = vadd.f32 %v2379, %v2663
      %v2704 = vadd.f32 %v2380, %v2664
      %v2705 = vadd.f32 %v2381, %v2665
      %v2706 = vadd.f32 %v2382, %v2666
      %v2707 = vadd.f32 %v2383, %v2667
      %v2708 = vadd.f32 %v2384, %v2668
      %v2709 = vadd.f32 %v2385, %v2669
      %v2710 = vadd.f32 %v2386, %v2670
      %v2711 = vadd.f32 %v2387, %v2671
      %v2712 = vadd.f32 %v2388, %v2672
      %v2713 = vadd.f32 %v2389, %v2673
      %v2714 = vadd.f32 %v2390, %v2674
      %v2715 = vadd.f32 %v2391, %v2675
      %v2716 = vadd.f32 %v2392, %v2676
      %v2717 = vadd.f32 %v2393, %v2677
      %v2718 = vadd.f32 %v2394, %v2678
      %v2719 = vadd.f32 %v2395, %v2679
      %v2720 = vadd.f32 %v2396, %v2680
      %v2721 = vadd.f32 %v2397, %v2681
      %v2722 = vadd.f32 %v2398, %v2682
      %v2723 = vadd.f32 %v2399, %v2683
      %v2724 = vadd.f32 %v2400, %v2684
      %v2725 = vadd.f32 %v2401, %v2685
      %v2726 = vadd.f32 %v2402, %v2686
      %v2727 = vadd.f32 %v2403, %v2687
      %v2728 = vadd.f32 %v2404, %v2688
      %v2729 = vadd.f32 %v2405, %v2689
      %v2730 = vadd.f32 %v2406, %v2690
      %v2731 = vadd.f32 %v2407, %v2691
      %v2732 = vadd.f32 %v2408, %v2692
      %v2733 = vadd.f32 %v2409, %v2693
      %v2734 = vadd.f32 %v2410, %v2694
      %v2735 = vadd.f32 %v2411, %v2695
      %v2736 = vadd.f32 %v2412, %v2696
      %v2737 = vadd.f32 %v2413, %v2697
      %v2738 = vadd.f32 %v2414, %v2698
      %v2739 = vadd.f32 %v2415, %v2699
      %v2740 = vadd.f32 %v2416, %v2700
      %v2741 = vadd.f32 %v2417, %v2701
      %v2742 = vadd.f32 %v2418, %v2702
      %2743 = vset.pattern.permute.xlu0 1
      %2744 = vperm.xlu0 %2743, %v2420
      %v2745 = vpop.permute.xlu0 %2744
      %2747 = vset.pattern.permute.xlu0 1
      %2748 = vperm.xlu0 %2747, %v2421
      %v2749 = vpop.permute.xlu0 %2748
      %2751 = vset.pattern.permute.xlu0 1
      %2752 = vperm.xlu0 %2751, %v2422
      %v2753 = vpop.permute.xlu0 %2752
      %2755 = vset.pattern.permute.xlu0 1
      %2756 = vperm.xlu0 %2755, %v2423
      %v2757 = vpop.permute.xlu0 %2756
      %2759 = vset.pattern.permute.xlu0 1
      %2760 = vperm.xlu0 %2759, %v2424
      %v2761 = vpop.permute.xlu0 %2760
      %2763 = vset.pattern.permute.xlu0 1
      %2764 = vperm.xlu0 %2763, %v2425
      %v2765 = vpop.permute.xlu0 %2764
      %2767 = vset.pattern.permute.xlu0 1
      %2768 = vperm.xlu0 %2767, %v2426
      %v2769 = vpop.permute.xlu0 %2768
      %2771 = vset.pattern.permute.xlu0 1
      %2772 = vperm.xlu0 %2771, %v2427
      %v2773 = vpop.permute.xlu0 %2772
      %2775 = vset.pattern.permute.xlu0 1
      %2776 = vperm.xlu0 %2775, %v2428
      %v2777 = vpop.permute.xlu0 %2776
      %2779 = vset.pattern.permute.xlu0 1
      %2780 = vperm.xlu0 %2779, %v2429
      %v2781 = vpop.permute.xlu0 %2780
      %2783 = vset.pattern.permute.xlu0 1
      %2784 = vperm.xlu0 %2783, %v2430
      %v2785 = vpop.permute.xlu0 %2784
      %2787 = vset.pattern.permute.xlu0 1
      %2788 = vperm.xlu0 %2787, %v2431
      %v2789 = vpop.permute.xlu0 %2788
      %2791 = vset.pattern.permute.xlu0 1
      %2792 = vperm.xlu0 %2791, %v2432
      %v2793 = vpop.permute.xlu0 %2792
      %2795 = vset.pattern.permute.xlu0 1
      %2796 = vperm.xlu0 %2795, %v2433
      %v2797 = vpop.permute.xlu0 %2796
      %2799 = vset.pattern.permute.xlu0 1
      %2800 = vperm.xlu0 %2799, %v2434
      %v2801 = vpop.permute.xlu0 %2800
      %2803 = vset.pattern.permute.xlu0 1
      %2804 = vperm.xlu0 %2803, %v2435
      %v2805 = vpop.permute.xlu0 %2804
      %2807 = vset.pattern.permute.xlu0 1
      %2808 = vperm.xlu0 %2807, %v2436
      %v2809 = vpop.permute.xlu0 %2808
      %2811 = vset.pattern.permute.xlu0 1
      %2812 = vperm.xlu0 %2811, %v2437
      %v2813 = vpop.permute.xlu0 %2812
      %2815 = vset.pattern.permute.xlu0 1
      %2816 = vperm.xlu0 %2815, %v2438
      %v2817 = vpop.permute.xlu0 %2816
      %2819 = vset.pattern.permute.xlu0 1
      %2820 = vperm.xlu0 %2819, %v2439
      %v2821 = vpop.permute.xlu0 %2820
      %2823 = vset.pattern.permute.xlu0 1
      %2824 = vperm.xlu0 %2823, %v2440
      %v2825 = vpop.permute.xlu0 %2824
      %2827 = vset.pattern.permute.xlu0 1
      %2828 = vperm.xlu0 %2827, %v2441
      %v2829 = vpop.permute.xlu0 %2828
      %2831 = vset.pattern.permute.xlu0 1
      %2832 = vperm.xlu0 %2831, %v2442
      %v2833 = vpop.permute.xlu0 %2832
      %2835 = vset.pattern.permute.xlu0 1
      %2836 = vperm.xlu0 %2835, %v2443
      %v2837 = vpop.permute.xlu0 %2836
      %2839 = vset.pattern.permute.xlu0 1
      %2840 = vperm.xlu0 %2839, %v2444
      %v2841 = vpop.permute.xlu0 %2840
      %2843 = vset.pattern.permute.xlu0 1
      %2844 = vperm.xlu0 %2843, %v2445
      %v2845 = vpop.permute.xlu0 %2844
      %2847 = vset.pattern.permute.xlu0 1
      %2848 = vperm.xlu0 %2847, %v2446
      %v2849 = vpop.permute.xlu0 %2848
      %2851 = vset.pattern.permute.xlu0 1
      %2852 = vperm.xlu0 %2851, %v2447
      %v2853 = vpop.permute.xlu0 %2852
      %2855 = vset.pattern.permute.xlu0 1
      %2856 = vperm.xlu0 %2855, %v2448
      %v2857 = vpop.permute.xlu0 %2856
      %2859 = vset.pattern.permute.xlu0 1
      %2860 = vperm.xlu0 %2859, %v2449
      %v2861 = vpop.permute.xlu0 %2860
      %2863 = vset.pattern.permute.xlu0 1
      %2864 = vperm.xlu0 %2863, %v2450
      %v2865 = vpop.permute.xlu0 %2864
      %2867 = vset.pattern.permute.xlu0 1
      %2868 = vperm.xlu0 %2867, %v2451
      %v2869 = vpop.permute.xlu0 %2868
      %2871 = vset.pattern.permute.xlu0 1
      %2872 = vperm.xlu0 %2871, %v2452
      %v2873 = vpop.permute.xlu0 %2872
      %2875 = vset.pattern.permute.xlu0 1
      %2876 = vperm.xlu0 %2875, %v2453
      %v2877 = vpop.permute.xlu0 %2876
      %2879 = vset.pattern.permute.xlu0 1
      %2880 = vperm.xlu0 %2879, %v2454
      %v2881 = vpop.permute.xlu0 %2880
      %2883 = vset.pattern.permute.xlu0 1
      %2884 = vperm.xlu0 %2883, %v2455
      %v2885 = vpop.permute.xlu0 %2884
      %2887 = vset.pattern.permute.xlu0 1
      %2888 = vperm.xlu0 %2887, %v2456
      %v2889 = vpop.permute.xlu0 %2888
      %2891 = vset.pattern.permute.xlu0 1
      %2892 = vperm.xlu0 %2891, %v2457
      %v2893 = vpop.permute.xlu0 %2892
      %2895 = vset.pattern.permute.xlu0 1
      %2896 = vperm.xlu0 %2895, %v2458
      %v2897 = vpop.permute.xlu0 %2896
      %2899 = vset.pattern.permute.xlu0 1
      %2900 = vperm.xlu0 %2899, %v2459
      %v2901 = vpop.permute.xlu0 %2900
      %v2903 = vperm.slane %v2461, 1
      %v2904 = vmul.f32 %v2745, %v2903
      %v2905 = vmul.f32 %v2749, %v2903
      %v2906 = vmul.f32 %v2753, %v2903
      %v2907 = vmul.f32 %v2757, %v2903
      %v2908 = vmul.f32 %v2761, %v2903
      %v2909 = vmul.f32 %v2765, %v2903
      %v2910 = vmul.f32 %v2769, %v2903
      %v2911 = vmul.f32 %v2773, %v2903
      %v2912 = vmul.f32 %v2777, %v2903
      %v2913 = vmul.f32 %v2781, %v2903
      %v2914 = vmul.f32 %v2785, %v2903
      %v2915 = vmul.f32 %v2789, %v2903
      %v2916 = vmul.f32 %v2793, %v2903
      %v2917 = vmul.f32 %v2797, %v2903
      %v2918 = vmul.f32 %v2801, %v2903
      %v2919 = vmul.f32 %v2805, %v2903
      %v2920 = vmul.f32 %v2809, %v2903
      %v2921 = vmul.f32 %v2813, %v2903
      %v2922 = vmul.f32 %v2817, %v2903
      %v2923 = vmul.f32 %v2821, %v2903
      %v2924 = vmul.f32 %v2825, %v2903
      %v2925 = vmul.f32 %v2829, %v2903
      %v2926 = vmul.f32 %v2833, %v2903
      %v2927 = vmul.f32 %v2837, %v2903
      %v2928 = vmul.f32 %v2841, %v2903
      %v2929 = vmul.f32 %v2845, %v2903
      %v2930 = vmul.f32 %v2849, %v2903
      %v2931 = vmul.f32 %v2853, %v2903
      %v2932 = vmul.f32 %v2857, %v2903
      %v2933 = vmul.f32 %v2861, %v2903
      %v2934 = vmul.f32 %v2865, %v2903
      %v2935 = vmul.f32 %v2869, %v2903
      %v2936 = vmul.f32 %v2873, %v2903
      %v2937 = vmul.f32 %v2877, %v2903
      %v2938 = vmul.f32 %v2881, %v2903
      %v2939 = vmul.f32 %v2885, %v2903
      %v2940 = vmul.f32 %v2889, %v2903
      %v2941 = vmul.f32 %v2893, %v2903
      %v2942 = vmul.f32 %v2897, %v2903
      %v2943 = vmul.f32 %v2901, %v2903
      %v2944 = vadd.f32 %v2703, %v2904
      %v2945 = vadd.f32 %v2704, %v2905
      %v2946 = vadd.f32 %v2705, %v2906
      %v2947 = vadd.f32 %v2706, %v2907
      %v2948 = vadd.f32 %v2707, %v2908
      %v2949 = vadd.f32 %v2708, %v2909
      %v2950 = vadd.f32 %v2709, %v2910
      %v2951 = vadd.f32 %v2710, %v2911
      %v2952 = vadd.f32 %v2711, %v2912
      %v2953 = vadd.f32 %v2712, %v2913
      %v2954 = vadd.f32 %v2713, %v2914
      %v2955 = vadd.f32 %v2714, %v2915
      %v2956 = vadd.f32 %v2715, %v2916
      %v2957 = vadd.f32 %v2716, %v2917
      %v2958 = vadd.f32 %v2717, %v2918
      %v2959 = vadd.f32 %v2718, %v2919
      %v2960 = vadd.f32 %v2719, %v2920
      %v2961 = vadd.f32 %v2720, %v2921
      %v2962 = vadd.f32 %v2721, %v2922
      %v2963 = vadd.f32 %v2722, %v2923
      %v2964 = vadd.f32 %v2723, %v2924
      %v2965 = vadd.f32 %v2724, %v2925
      %v2966 = vadd.f32 %v2725, %v2926
      %v2967 = vadd.f32 %v2726, %v2927
      %v2968 = vadd.f32 %v2727, %v2928
      %v2969 = vadd.f32 %v2728, %v2929
      %v2970 = vadd.f32 %v2729, %v2930
      %v2971 = vadd.f32 %v2730, %v2931
      %v2972 = vadd.f32 %v2731, %v2932
      %v2973 = vadd.f32 %v2732, %v2933
      %v2974 = vadd.f32 %v2733, %v2934
      %v2975 = vadd.f32 %v2734, %v2935
      %v2976 = vadd.f32 %v2735, %v2936
      %v2977 = vadd.f32 %v2736, %v2937
      %v2978 = vadd.f32 %v2737, %v2938
      %v2979 = vadd.f32 %v2738, %v2939
      %v2980 = vadd.f32 %v2739, %v2940
      %v2981 = vadd.f32 %v2740, %v2941
      %v2982 = vadd.f32 %v2741, %v2942
      %v2983 = vadd.f32 %v2742, %v2943
      %2984 = vset.pattern.permute.xlu0 2
      %2985 = vperm.xlu0 %2984, %v2420
      %v2986 = vpop.permute.xlu0 %2985
      %2988 = vset.pattern.permute.xlu0 2
      %2989 = vperm.xlu0 %2988, %v2421
      %v2990 = vpop.permute.xlu0 %2989
      %2992 = vset.pattern.permute.xlu0 2
      %2993 = vperm.xlu0 %2992, %v2422
      %v2994 = vpop.permute.xlu0 %2993
      %2996 = vset.pattern.permute.xlu0 2
      %2997 = vperm.xlu0 %2996, %v2423
      %v2998 = vpop.permute.xlu0 %2997
      %3000 = vset.pattern.permute.xlu0 2
      %3001 = vperm.xlu0 %3000, %v2424
      %v3002 = vpop.permute.xlu0 %3001
      %3004 = vset.pattern.permute.xlu0 2
      %3005 = vperm.xlu0 %3004, %v2425
      %v3006 = vpop.permute.xlu0 %3005
      %3008 = vset.pattern.permute.xlu0 2
      %3009 = vperm.xlu0 %3008, %v2426
      %v3010 = vpop.permute.xlu0 %3009
      %3012 = vset.pattern.permute.xlu0 2
      %3013 = vperm.xlu0 %3012, %v2427
      %v3014 = vpop.permute.xlu0 %3013
      %3016 = vset.pattern.permute.xlu0 2
      %3017 = vperm.xlu0 %3016, %v2428
      %v3018 = vpop.permute.xlu0 %3017
      %3020 = vset.pattern.permute.xlu0 2
      %3021 = vperm.xlu0 %3020, %v2429
      %v3022 = vpop.permute.xlu0 %3021
      %3024 = vset.pattern.permute.xlu0 2
      %3025 = vperm.xlu0 %3024, %v2430
      %v3026 = vpop.permute.xlu0 %3025
      %3028 = vset.pattern.permute.xlu0 2
      %3029 = vperm.xlu0 %3028, %v2431
      %v3030 = vpop.permute.xlu0 %3029
      %3032 = vset.pattern.permute.xlu0 2
      %3033 = vperm.xlu0 %3032, %v2432
      %v3034 = vpop.permute.xlu0 %3033
      %3036 = vset.pattern.permute.xlu0 2
      %3037 = vperm.xlu0 %3036, %v2433
      %v3038 = vpop.permute.xlu0 %3037
      %3040 = vset.pattern.permute.xlu0 2
      %3041 = vperm.xlu0 %3040, %v2434
      %v3042 = vpop.permute.xlu0 %3041
      %3044 = vset.pattern.permute.xlu0 2
      %3045 = vperm.xlu0 %3044, %v2435
      %v3046 = vpop.permute.xlu0 %3045
      %3048 = vset.pattern.permute.xlu0 2
      %3049 = vperm.xlu0 %3048, %v2436
      %v3050 = vpop.permute.xlu0 %3049
      %3052 = vset.pattern.permute.xlu0 2
      %3053 = vperm.xlu0 %3052, %v2437
      %v3054 = vpop.permute.xlu0 %3053
      %3056 = vset.pattern.permute.xlu0 2
      %3057 = vperm.xlu0 %3056, %v2438
      %v3058 = vpop.permute.xlu0 %3057
      %3060 = vset.pattern.permute.xlu0 2
      %3061 = vperm.xlu0 %3060, %v2439
      %v3062 = vpop.permute.xlu0 %3061
      %3064 = vset.pattern.permute.xlu0 2
      %3065 = vperm.xlu0 %3064, %v2440
      %v3066 = vpop.permute.xlu0 %3065
      %3068 = vset.pattern.permute.xlu0 2
      %3069 = vperm.xlu0 %3068, %v2441
      %v3070 = vpop.permute.xlu0 %3069
      %3072 = vset.pattern.permute.xlu0 2
      %3073 = vperm.xlu0 %3072, %v2442
      %v3074 = vpop.permute.xlu0 %3073
      %3076 = vset.pattern.permute.xlu0 2
      %3077 = vperm.xlu0 %3076, %v2443
      %v3078 = vpop.permute.xlu0 %3077
      %3080 = vset.pattern.permute.xlu0 2
      %3081 = vperm.xlu0 %3080, %v2444
      %v3082 = vpop.permute.xlu0 %3081
      %3084 = vset.pattern.permute.xlu0 2
      %3085 = vperm.xlu0 %3084, %v2445
      %v3086 = vpop.permute.xlu0 %3085
      %3088 = vset.pattern.permute.xlu0 2
      %3089 = vperm.xlu0 %3088, %v2446
      %v3090 = vpop.permute.xlu0 %3089
      %3092 = vset.pattern.permute.xlu0 2
      %3093 = vperm.xlu0 %3092, %v2447
      %v3094 = vpop.permute.xlu0 %3093
      %3096 = vset.pattern.permute.xlu0 2
      %3097 = vperm.xlu0 %3096, %v2448
      %v3098 = vpop.permute.xlu0 %3097
      %3100 = vset.pattern.permute.xlu0 2
      %3101 = vperm.xlu0 %3100, %v2449
      %v3102 = vpop.permute.xlu0 %3101
      %3104 = vset.pattern.permute.xlu0 2
      %3105 = vperm.xlu0 %3104, %v2450
      %v3106 = vpop.permute.xlu0 %3105
      %3108 = vset.pattern.permute.xlu0 2
      %3109 = vperm.xlu0 %3108, %v2451
      %v3110 = vpop.permute.xlu0 %3109
      %3112 = vset.pattern.permute.xlu0 2
      %3113 = vperm.xlu0 %3112, %v2452
      %v3114 = vpop.permute.xlu0 %3113
      %3116 = vset.pattern.permute.xlu0 2
      %3117 = vperm.xlu0 %3116, %v2453
      %v3118 = vpop.permute.xlu0 %3117
      %3120 = vset.pattern.permute.xlu0 2
      %3121 = vperm.xlu0 %3120, %v2454
      %v3122 = vpop.permute.xlu0 %3121
      %3124 = vset.pattern.permute.xlu0 2
      %3125 = vperm.xlu0 %3124, %v2455
      %v3126 = vpop.permute.xlu0 %3125
      %3128 = vset.pattern.permute.xlu0 2
      %3129 = vperm.xlu0 %3128, %v2456
      %v3130 = vpop.permute.xlu0 %3129
      %3132 = vset.pattern.permute.xlu0 2
      %3133 = vperm.xlu0 %3132, %v2457
      %v3134 = vpop.permute.xlu0 %3133
      %3136 = vset.pattern.permute.xlu0 2
      %3137 = vperm.xlu0 %3136, %v2458
      %v3138 = vpop.permute.xlu0 %3137
      %3140 = vset.pattern.permute.xlu0 2
      %3141 = vperm.xlu0 %3140, %v2459
      %v3142 = vpop.permute.xlu0 %3141
      %v3144 = vperm.slane %v2461, 2
      %v3145 = vmul.f32 %v2986, %v3144
      %v3146 = vmul.f32 %v2990, %v3144
      %v3147 = vmul.f32 %v2994, %v3144
      %v3148 = vmul.f32 %v2998, %v3144
      %v3149 = vmul.f32 %v3002, %v3144
      %v3150 = vmul.f32 %v3006, %v3144
      %v3151 = vmul.f32 %v3010, %v3144
      %v3152 = vmul.f32 %v3014, %v3144
      %v3153 = vmul.f32 %v3018, %v3144
      %v3154 = vmul.f32 %v3022, %v3144
      %v3155 = vmul.f32 %v3026, %v3144
      %v3156 = vmul.f32 %v3030, %v3144
      %v3157 = vmul.f32 %v3034, %v3144
      %v3158 = vmul.f32 %v3038, %v3144
      %v3159 = vmul.f32 %v3042, %v3144
      %v3160 = vmul.f32 %v3046, %v3144
      %v3161 = vmul.f32 %v3050, %v3144
      %v3162 = vmul.f32 %v3054, %v3144
      %v3163 = vmul.f32 %v3058, %v3144
      %v3164 = vmul.f32 %v3062, %v3144
      %v3165 = vmul.f32 %v3066, %v3144
      %v3166 = vmul.f32 %v3070, %v3144
      %v3167 = vmul.f32 %v3074, %v3144
      %v3168 = vmul.f32 %v3078, %v3144
      %v3169 = vmul.f32 %v3082, %v3144
      %v3170 = vmul.f32 %v3086, %v3144
      %v3171 = vmul.f32 %v3090, %v3144
      %v3172 = vmul.f32 %v3094, %v3144
      %v3173 = vmul.f32 %v3098, %v3144
      %v3174 = vmul.f32 %v3102, %v3144
      %v3175 = vmul.f32 %v3106, %v3144
      %v3176 = vmul.f32 %v3110, %v3144
      %v3177 = vmul.f32 %v3114, %v3144
      %v3178 = vmul.f32 %v3118, %v3144
      %v3179 = vmul.f32 %v3122, %v3144
      %v3180 = vmul.f32 %v3126, %v3144
      %v3181 = vmul.f32 %v3130, %v3144
      %v3182 = vmul.f32 %v3134, %v3144
      %v3183 = vmul.f32 %v3138, %v3144
      %v3184 = vmul.f32 %v3142, %v3144
      %v3185 = vadd.f32 %v2944, %v3145
      %v3186 = vadd.f32 %v2945, %v3146
      %v3187 = vadd.f32 %v2946, %v3147
      %v3188 = vadd.f32 %v2947, %v3148
      %v3189 = vadd.f32 %v2948, %v3149
      %v3190 = vadd.f32 %v2949, %v3150
      %v3191 = vadd.f32 %v2950, %v3151
      %v3192 = vadd.f32 %v2951, %v3152
      %v3193 = vadd.f32 %v2952, %v3153
      %v3194 = vadd.f32 %v2953, %v3154
      %v3195 = vadd.f32 %v2954, %v3155
      %v3196 = vadd.f32 %v2955, %v3156
      %v3197 = vadd.f32 %v2956, %v3157
      %v3198 = vadd.f32 %v2957, %v3158
      %v3199 = vadd.f32 %v2958, %v3159
      %v3200 = vadd.f32 %v2959, %v3160
      %v3201 = vadd.f32 %v2960, %v3161
      %v3202 = vadd.f32 %v2961, %v3162
      %v3203 = vadd.f32 %v2962, %v3163
      %v3204 = vadd.f32 %v2963, %v3164
      %v3205 = vadd.f32 %v2964, %v3165
      %v3206 = vadd.f32 %v2965, %v3166
      %v3207 = vadd.f32 %v2966, %v3167
      %v3208 = vadd.f32 %v2967, %v3168
      %v3209 = vadd.f32 %v2968, %v3169
      %v3210 = vadd.f32 %v2969, %v3170
      %v3211 = vadd.f32 %v2970, %v3171
      %v3212 = vadd.f32 %v2971, %v3172
      %v3213 = vadd.f32 %v2972, %v3173
      %v3214 = vadd.f32 %v2973, %v3174
      %v3215 = vadd.f32 %v2974, %v3175
      %v3216 = vadd.f32 %v2975, %v3176
      %v3217 = vadd.f32 %v2976, %v3177
      %v3218 = vadd.f32 %v2977, %v3178
      %v3219 = vadd.f32 %v2978, %v3179
      %v3220 = vadd.f32 %v2979, %v3180
      %v3221 = vadd.f32 %v2980, %v3181
      %v3222 = vadd.f32 %v2981, %v3182
      %v3223 = vadd.f32 %v2982, %v3183
      %v3224 = vadd.f32 %v2983, %v3184
      %v3225 = vld [vmem:[%s2] sm:$0x1]
      %v3227 = vperm.slane %v3225, 0
      %v3229 = vadd.f32 %v3185, %v3227
      %v3230 = vadd.f32 %v3186, %v3227
      %v3231 = vadd.f32 %v3187, %v3227
      %v3232 = vadd.f32 %v3188, %v3227
      %v3233 = vadd.f32 %v3189, %v3227
      %v3234 = vadd.f32 %v3190, %v3227
      %v3235 = vadd.f32 %v3191, %v3227
      %v3236 = vadd.f32 %v3192, %v3227
      %v3237 = vadd.f32 %v3193, %v3227
      %v3238 = vadd.f32 %v3194, %v3227
      %v3239 = vadd.f32 %v3195, %v3227
      %v3240 = vadd.f32 %v3196, %v3227
      %v3241 = vadd.f32 %v3197, %v3227
      %v3242 = vadd.f32 %v3198, %v3227
      %v3243 = vadd.f32 %v3199, %v3227
      %v3244 = vadd.f32 %v3200, %v3227
      %v3245 = vadd.f32 %v3201, %v3227
      %v3246 = vadd.f32 %v3202, %v3227
      %v3247 = vadd.f32 %v3203, %v3227
      %v3248 = vadd.f32 %v3204, %v3227
      %v3249 = vadd.f32 %v3205, %v3227
      %v3250 = vadd.f32 %v3206, %v3227
      %v3251 = vadd.f32 %v3207, %v3227
      %v3252 = vadd.f32 %v3208, %v3227
      %v3253 = vadd.f32 %v3209, %v3227
      %v3254 = vadd.f32 %v3210, %v3227
      %v3255 = vadd.f32 %v3211, %v3227
      %v3256 = vadd.f32 %v3212, %v3227
      %v3257 = vadd.f32 %v3213, %v3227
      %v3258 = vadd.f32 %v3214, %v3227
      %v3259 = vadd.f32 %v3215, %v3227
      %v3260 = vadd.f32 %v3216, %v3227
      %v3261 = vadd.f32 %v3217, %v3227
      %v3262 = vadd.f32 %v3218, %v3227
      %v3263 = vadd.f32 %v3219, %v3227
      %v3264 = vadd.f32 %v3220, %v3227
      %v3265 = vadd.f32 %v3221, %v3227
      %v3266 = vadd.f32 %v3222, %v3227
      %v3267 = vadd.f32 %v3223, %v3227
      %v3268 = vadd.f32 %v3224, %v3227
      %v3269 = vmax.f32 %v3229, 0.0
      %v3270 = vmax.f32 %v3230, 0.0
      %v3271 = vmax.f32 %v3231, 0.0
      %v3272 = vmax.f32 %v3232, 0.0
      %v3273 = vmax.f32 %v3233, 0.0
      %v3274 = vmax.f32 %v3234, 0.0
      %v3275 = vmax.f32 %v3235, 0.0
      %v3276 = vmax.f32 %v3236, 0.0
      %v3277 = vmax.f32 %v3237, 0.0
      %v3278 = vmax.f32 %v3238, 0.0
      %v3279 = vmax.f32 %v3239, 0.0
      %v3280 = vmax.f32 %v3240, 0.0
      %v3281 = vmax.f32 %v3241, 0.0
      %v3282 = vmax.f32 %v3242, 0.0
      %v3283 = vmax.f32 %v3243, 0.0
      %v3284 = vmax.f32 %v3244, 0.0
      %v3285 = vmax.f32 %v3245, 0.0
      %v3286 = vmax.f32 %v3246, 0.0
      %v3287 = vmax.f32 %v3247, 0.0
      %v3288 = vmax.f32 %v3248, 0.0
      %v3289 = vmax.f32 %v3249, 0.0
      %v3290 = vmax.f32 %v3250, 0.0
      %v3291 = vmax.f32 %v3251, 0.0
      %v3292 = vmax.f32 %v3252, 0.0
      %v3293 = vmax.f32 %v3253, 0.0
      %v3294 = vmax.f32 %v3254, 0.0
      %v3295 = vmax.f32 %v3255, 0.0
      %v3296 = vmax.f32 %v3256, 0.0
      %v3297 = vmax.f32 %v3257, 0.0
      %v3298 = vmax.f32 %v3258, 0.0
      %v3299 = vmax.f32 %v3259, 0.0
      %v3300 = vmax.f32 %v3260, 0.0
      %v3301 = vmax.f32 %v3261, 0.0
      %v3302 = vmax.f32 %v3262, 0.0
      %v3303 = vmax.f32 %v3263, 0.0
      %v3304 = vmax.f32 %v3264, 0.0
      %v3305 = vmax.f32 %v3265, 0.0
      %v3306 = vmax.f32 %v3266, 0.0
      %v3307 = vmax.f32 %v3267, 0.0
      %v3308 = vmax.f32 %v3268, 0.0
      %v3309 = vpack.c.bf16 %v3269, %v3269
      %v3310 = vpack.c.bf16 %v3270, %v3270
      %v3311 = vpack.c.bf16 %v3271, %v3271
      %v3312 = vpack.c.bf16 %v3272, %v3272
      %v3313 = vpack.c.bf16 %v3273, %v3273
      %v3314 = vpack.c.bf16 %v3274, %v3274
      %v3315 = vpack.c.bf16 %v3275, %v3275
      %v3316 = vpack.c.bf16 %v3276, %v3276
      %v3317 = vpack.c.bf16 %v3277, %v3277
      %v3318 = vpack.c.bf16 %v3278, %v3278
      %v3319 = vpack.c.bf16 %v3279, %v3279
      %v3320 = vpack.c.bf16 %v3280, %v3280
      %v3321 = vpack.c.bf16 %v3281, %v3281
      %v3322 = vpack.c.bf16 %v3282, %v3282
      %v3323 = vpack.c.bf16 %v3283, %v3283
      %v3324 = vpack.c.bf16 %v3284, %v3284
      %v3325 = vpack.c.bf16 %v3285, %v3285
      %v3326 = vpack.c.bf16 %v3286, %v3286
      %v3327 = vpack.c.bf16 %v3287, %v3287
      %v3328 = vpack.c.bf16 %v3288, %v3288
      %v3329 = vpack.c.bf16 %v3289, %v3289
      %v3330 = vpack.c.bf16 %v3290, %v3290
      %v3331 = vpack.c.bf16 %v3291, %v3291
      %v3332 = vpack.c.bf16 %v3292, %v3292
      %v3333 = vpack.c.bf16 %v3293, %v3293
      %v3334 = vpack.c.bf16 %v3294, %v3294
      %v3335 = vpack.c.bf16 %v3295, %v3295
      %v3336 = vpack.c.bf16 %v3296, %v3296
      %v3337 = vpack.c.bf16 %v3297, %v3297
      %v3338 = vpack.c.bf16 %v3298, %v3298
      %v3339 = vpack.c.bf16 %v3299, %v3299
      %v3340 = vpack.c.bf16 %v3300, %v3300
      %v3341 = vpack.c.bf16 %v3301, %v3301
      %v3342 = vpack.c.bf16 %v3302, %v3302
      %v3343 = vpack.c.bf16 %v3303, %v3303
      %v3344 = vpack.c.bf16 %v3304, %v3304
      %v3345 = vpack.c.bf16 %v3305, %v3305
      %v3346 = vpack.c.bf16 %v3306, %v3306
      %v3347 = vpack.c.bf16 %v3307, %v3307
      %v3348 = vpack.c.bf16 %v3308, %v3308
      %vm3349 = vcmask 1043456
      %vm3350 = vcmask 523268
      %vm3351 = vmor %vm3350, %vm3349
      %3352 = vst.msk [vmem:[#allocation3] sm:$0xff] %vm3351, 0
      %3353 = vst.msk [vmem:[#allocation3 + $0x8] sm:$0xff] %vm3351, 0
      %3354 = vst.msk [vmem:[#allocation3 + $0x10] sm:$0xff] %vm3351, 0
      %3355 = vst.msk [vmem:[#allocation3 + $0x18] sm:$0xff] %vm3351, 0
      %3356 = vst.msk [vmem:[#allocation3 + $0x20] sm:$0xff] %vm3351, 0
      %s3357 = scalar_lea.vmem [#allocation3], 360
      %3358 = vst.msk [vmem:[%s3357] sm:$0xff] %vm3351, 0
      %3359 = vst.msk [vmem:[%s3357 + $0x8] sm:$0xff] %vm3351, 0
      %3360 = vst.msk [vmem:[%s3357 + $0x10] sm:$0xff] %vm3351, 0
      %3361 = vst.msk [vmem:[%s3357 + $0x18] sm:$0xff] %vm3351, 0
      %3362 = vst.msk [vmem:[%s3357 + $0x20] sm:$0xff] %vm3351, 0
      %vm3363 = vsmask.f32 256
      %vm3364 = vsmask.f32 4368
      %vm3365 = vmor %vm3363, %vm3364
      %v3367 = vshrl.u32 %v3309, 16
      %v3369 = vrot.slane %v3367, 7
      %v3370 = vshll.u32 %v3309, 16
      %v3372 = vor.u32 %v3369, %v3370
      %v3373 = vrot.slane %v3369, 4
      %v3375 = vshrl.u32 %v3310, 16
      %v3377 = vrot.slane %v3375, 7
      %v3378 = vshll.u32 %v3310, 16
      %v3380 = vor.u32 %v3377, %v3378
      %v3381 = vsel %vm3365, %v3373, %v3380
      %v3382 = vrot.slane %v3377, 4
      %v3384 = vshrl.u32 %v3311, 16
      %v3386 = vrot.slane %v3384, 7
      %v3387 = vshll.u32 %v3311, 16
      %v3389 = vor.u32 %v3386, %v3387
      %v3390 = vsel %vm3365, %v3382, %v3389
      %v3391 = vrot.slane %v3386, 4
      %v3393 = vshrl.u32 %v3312, 16
      %v3395 = vrot.slane %v3393, 7
      %v3396 = vshll.u32 %v3312, 16
      %v3398 = vor.u32 %v3395, %v3396
      %v3399 = vsel %vm3365, %v3391, %v3398
      %v3400 = vrot.slane %v3395, 4
      %v3402 = vshrl.u32 %v3313, 16
      %v3404 = vrot.slane %v3402, 7
      %v3405 = vshll.u32 %v3313, 16
      %v3407 = vor.u32 %v3404, %v3405
      %v3408 = vsel %vm3365, %v3400, %v3407
      %v3410 = vshrl.u32 %v3314, 16
      %v3412 = vrot.slane %v3410, 7
      %v3413 = vshll.u32 %v3314, 16
      %v3415 = vor.u32 %v3412, %v3413
      %v3416 = vrot.slane %v3412, 4
      %v3418 = vshrl.u32 %v3315, 16
      %v3420 = vrot.slane %v3418, 7
      %v3421 = vshll.u32 %v3315, 16
      %v3423 = vor.u32 %v3420, %v3421
      %v3424 = vsel %vm3365, %v3416, %v3423
      %v3425 = vrot.slane %v3420, 4
      %v3427 = vshrl.u32 %v3316, 16
      %v3429 = vrot.slane %v3427, 7
      %v3430 = vshll.u32 %v3316, 16
      %v3432 = vor.u32 %v3429, %v3430
      %v3433 = vsel %vm3365, %v3425, %v3432
      %v3434 = vrot.slane %v3429, 4
      %v3436 = vshrl.u32 %v3317, 16
      %v3438 = vrot.slane %v3436, 7
      %v3439 = vshll.u32 %v3317, 16
      %v3441 = vor.u32 %v3438, %v3439
      %v3442 = vsel %vm3365, %v3434, %v3441
      %v3443 = vrot.slane %v3438, 4
      %v3445 = vshrl.u32 %v3318, 16
      %v3447 = vrot.slane %v3445, 7
      %v3448 = vshll.u32 %v3318, 16
      %v3450 = vor.u32 %v3447, %v3448
      %v3451 = vsel %vm3365, %v3443, %v3450
      %v3453 = vshrl.u32 %v3319, 16
      %v3455 = vrot.slane %v3453, 7
      %v3456 = vshll.u32 %v3319, 16
      %v3458 = vor.u32 %v3455, %v3456
      %v3459 = vrot.slane %v3455, 4
      %v3461 = vshrl.u32 %v3320, 16
      %v3463 = vrot.slane %v3461, 7
      %v3464 = vshll.u32 %v3320, 16
      %v3466 = vor.u32 %v3463, %v3464
      %v3467 = vsel %vm3365, %v3459, %v3466
      %v3468 = vrot.slane %v3463, 4
      %v3470 = vshrl.u32 %v3321, 16
      %v3472 = vrot.slane %v3470, 7
      %v3473 = vshll.u32 %v3321, 16
      %v3475 = vor.u32 %v3472, %v3473
      %v3476 = vsel %vm3365, %v3468, %v3475
      %v3477 = vrot.slane %v3472, 4
      %v3479 = vshrl.u32 %v3322, 16
      %v3481 = vrot.slane %v3479, 7
      %v3482 = vshll.u32 %v3322, 16
      %v3484 = vor.u32 %v3481, %v3482
      %v3485 = vsel %vm3365, %v3477, %v3484
      %v3486 = vrot.slane %v3481, 4
      %v3488 = vshrl.u32 %v3323, 16
      %v3490 = vrot.slane %v3488, 7
      %v3491 = vshll.u32 %v3323, 16
      %v3493 = vor.u32 %v3490, %v3491
      %v3494 = vsel %vm3365, %v3486, %v3493
      %v3496 = vshrl.u32 %v3324, 16
      %v3498 = vrot.slane %v3496, 7
      %v3499 = vshll.u32 %v3324, 16
      %v3501 = vor.u32 %v3498, %v3499
      %v3502 = vrot.slane %v3498, 4
      %v3504 = vshrl.u32 %v3325, 16
      %v3506 = vrot.slane %v3504, 7
      %v3507 = vshll.u32 %v3325, 16
      %v3509 = vor.u32 %v3506, %v3507
      %v3510 = vsel %vm3365, %v3502, %v3509
      %v3511 = vrot.slane %v3506, 4
      %v3513 = vshrl.u32 %v3326, 16
      %v3515 = vrot.slane %v3513, 7
      %v3516 = vshll.u32 %v3326, 16
      %v3518 = vor.u32 %v3515, %v3516
      %v3519 = vsel %vm3365, %v3511, %v3518
      %v3520 = vrot.slane %v3515, 4
      %v3522 = vshrl.u32 %v3327, 16
      %v3524 = vrot.slane %v3522, 7
      %v3525 = vshll.u32 %v3327, 16
      %v3527 = vor.u32 %v3524, %v3525
      %v3528 = vsel %vm3365, %v3520, %v3527
      %v3529 = vrot.slane %v3524, 4
      %v3531 = vshrl.u32 %v3328, 16
      %v3533 = vrot.slane %v3531, 7
      %v3534 = vshll.u32 %v3328, 16
      %v3536 = vor.u32 %v3533, %v3534
      %v3537 = vsel %vm3365, %v3529, %v3536
      %v3539 = vshrl.u32 %v3329, 16
      %v3541 = vrot.slane %v3539, 7
      %v3542 = vshll.u32 %v3329, 16
      %v3544 = vor.u32 %v3541, %v3542
      %v3545 = vrot.slane %v3541, 4
      %v3547 = vshrl.u32 %v3330, 16
      %v3549 = vrot.slane %v3547, 7
      %v3550 = vshll.u32 %v3330, 16
      %v3552 = vor.u32 %v3549, %v3550
      %v3553 = vsel %vm3365, %v3545, %v3552
      %v3554 = vrot.slane %v3549, 4
      %v3556 = vshrl.u32 %v3331, 16
      %v3558 = vrot.slane %v3556, 7
      %v3559 = vshll.u32 %v3331, 16
      %v3561 = vor.u32 %v3558, %v3559
      %v3562 = vsel %vm3365, %v3554, %v3561
      %v3563 = vrot.slane %v3558, 4
      %v3565 = vshrl.u32 %v3332, 16
      %v3567 = vrot.slane %v3565, 7
      %v3568 = vshll.u32 %v3332, 16
      %v3570 = vor.u32 %v3567, %v3568
      %v3571 = vsel %vm3365, %v3563, %v3570
      %v3572 = vrot.slane %v3567, 4
      %v3574 = vshrl.u32 %v3333, 16
      %v3576 = vrot.slane %v3574, 7
      %v3577 = vshll.u32 %v3333, 16
      %v3579 = vor.u32 %v3576, %v3577
      %v3580 = vsel %vm3365, %v3572, %v3579
      %v3582 = vshrl.u32 %v3334, 16
      %v3584 = vrot.slane %v3582, 7
      %v3585 = vshll.u32 %v3334, 16
      %v3587 = vor.u32 %v3584, %v3585
      %v3588 = vrot.slane %v3584, 4
      %v3590 = vshrl.u32 %v3335, 16
      %v3592 = vrot.slane %v3590, 7
      %v3593 = vshll.u32 %v3335, 16
      %v3595 = vor.u32 %v3592, %v3593
      %v3596 = vsel %vm3365, %v3588, %v3595
      %v3597 = vrot.slane %v3592, 4
      %v3599 = vshrl.u32 %v3336, 16
      %v3601 = vrot.slane %v3599, 7
      %v3602 = vshll.u32 %v3336, 16
      %v3604 = vor.u32 %v3601, %v3602
      %v3605 = vsel %vm3365, %v3597, %v3604
      %v3606 = vrot.slane %v3601, 4
      %v3608 = vshrl.u32 %v3337, 16
      %v3610 = vrot.slane %v3608, 7
      %v3611 = vshll.u32 %v3337, 16
      %v3613 = vor.u32 %v3610, %v3611
      %v3614 = vsel %vm3365, %v3606, %v3613
      %v3615 = vrot.slane %v3610, 4
      %v3617 = vshrl.u32 %v3338, 16
      %v3619 = vrot.slane %v3617, 7
      %v3620 = vshll.u32 %v3338, 16
      %v3622 = vor.u32 %v3619, %v3620
      %v3623 = vsel %vm3365, %v3615, %v3622
      %v3625 = vshrl.u32 %v3339, 16
      %v3627 = vrot.slane %v3625, 7
      %v3628 = vshll.u32 %v3339, 16
      %v3630 = vor.u32 %v3627, %v3628
      %v3631 = vrot.slane %v3627, 4
      %v3633 = vshrl.u32 %v3340, 16
      %v3635 = vrot.slane %v3633, 7
      %v3636 = vshll.u32 %v3340, 16
      %v3638 = vor.u32 %v3635, %v3636
      %v3639 = vsel %vm3365, %v3631, %v3638
      %v3640 = vrot.slane %v3635, 4
      %v3642 = vshrl.u32 %v3341, 16
      %v3644 = vrot.slane %v3642, 7
      %v3645 = vshll.u32 %v3341, 16
      %v3647 = vor.u32 %v3644, %v3645
      %v3648 = vsel %vm3365, %v3640, %v3647
      %v3649 = vrot.slane %v3644, 4
      %v3651 = vshrl.u32 %v3342, 16
      %v3653 = vrot.slane %v3651, 7
      %v3654 = vshll.u32 %v3342, 16
      %v3656 = vor.u32 %v3653, %v3654
      %v3657 = vsel %vm3365, %v3649, %v3656
      %v3658 = vrot.slane %v3653, 4
      %v3660 = vshrl.u32 %v3343, 16
      %v3662 = vrot.slane %v3660, 7
      %v3663 = vshll.u32 %v3343, 16
      %v3665 = vor.u32 %v3662, %v3663
      %v3666 = vsel %vm3365, %v3658, %v3665
      %v3668 = vshrl.u32 %v3344, 16
      %v3670 = vrot.slane %v3668, 7
      %v3671 = vshll.u32 %v3344, 16
      %v3673 = vor.u32 %v3670, %v3671
      %v3674 = vrot.slane %v3670, 4
      %v3676 = vshrl.u32 %v3345, 16
      %v3678 = vrot.slane %v3676, 7
      %v3679 = vshll.u32 %v3345, 16
      %v3681 = vor.u32 %v3678, %v3679
      %v3682 = vsel %vm3365, %v3674, %v3681
      %v3683 = vrot.slane %v3678, 4
      %v3685 = vshrl.u32 %v3346, 16
      %v3687 = vrot.slane %v3685, 7
      %v3688 = vshll.u32 %v3346, 16
      %v3690 = vor.u32 %v3687, %v3688
      %v3691 = vsel %vm3365, %v3683, %v3690
      %v3692 = vrot.slane %v3687, 4
      %v3694 = vshrl.u32 %v3347, 16
      %v3696 = vrot.slane %v3694, 7
      %v3697 = vshll.u32 %v3347, 16
      %v3699 = vor.u32 %v3696, %v3697
      %v3700 = vsel %vm3365, %v3692, %v3699
      %v3701 = vrot.slane %v3696, 4
      %v3703 = vshrl.u32 %v3348, 16
      %v3705 = vrot.slane %v3703, 7
      %v3706 = vshll.u32 %v3348, 16
      %v3708 = vor.u32 %v3705, %v3706
      %v3709 = vsel %vm3365, %v3701, %v3708
      %s3750 = scalar_lea.vmem [#allocation3], 40
      %vm3751 = vcmask 519168
      %vm3752 = vsmask.f32 7938
      %vm3753 = vmand %vm3751, %vm3752
      %v3754 = vld [vmem:[%s3750] sm:$0xf]
      %v3755 = vsel %vm3753, %v3372, %v3754
      %3756 = vst [vmem:[%s3750] sm:$0xf] %v3755
      %vm3757 = vcmask 519168
      %3758 = vst.msk [vmem:[%s3750 + $0x8] sm:$0xf] %vm3757, %v3381
      %3759 = vst.msk [vmem:[%s3750 + $0x10] sm:$0xf] %vm3757, %v3390
      %3760 = vst.msk [vmem:[%s3750 + $0x18] sm:$0xf] %vm3757, %v3399
      %3761 = vst.msk [vmem:[%s3750 + $0x20] sm:$0xf] %vm3757, %v3408
      %v3762 = vld [vmem:[%s3750 + $0x28] sm:$0xf]
      %v3763 = vsel %vm3753, %v3415, %v3762
      %3764 = vst [vmem:[%s3750 + $0x28] sm:$0xf] %v3763
      %3765 = vst.msk [vmem:[%s3750 + $0x30] sm:$0xf] %vm3757, %v3424
      %3766 = vst.msk [vmem:[%s3750 + $0x38] sm:$0xf] %vm3757, %v3433
      %3767 = vst.msk [vmem:[%s3750 + $0x40] sm:$0xf] %vm3757, %v3442
      %3768 = vst.msk [vmem:[%s3750 + $0x48] sm:$0xf] %vm3757, %v3451
      %v3769 = vld [vmem:[%s3750 + $0x50] sm:$0xf]
      %v3770 = vsel %vm3753, %v3458, %v3769
      %3771 = vst [vmem:[%s3750 + $0x50] sm:$0xf] %v3770
      %3772 = vst.msk [vmem:[%s3750 + $0x58] sm:$0xf] %vm3757, %v3467
      %3773 = vst.msk [vmem:[%s3750 + $0x60] sm:$0xf] %vm3757, %v3476
      %3774 = vst.msk [vmem:[%s3750 + $0x68] sm:$0xf] %vm3757, %v3485
      %3775 = vst.msk [vmem:[%s3750 + $0x70] sm:$0xf] %vm3757, %v3494
      %v3776 = vld [vmem:[%s3750 + $0x78] sm:$0xf]
      %v3777 = vsel %vm3753, %v3501, %v3776
      %3778 = vst [vmem:[%s3750 + $0x78] sm:$0xf] %v3777
      %3779 = vst.msk [vmem:[%s3750 + $0x80] sm:$0xf] %vm3757, %v3510
      %3780 = vst.msk [vmem:[%s3750 + $0x88] sm:$0xf] %vm3757, %v3519
      %3781 = vst.msk [vmem:[%s3750 + $0x90] sm:$0xf] %vm3757, %v3528
      %3782 = vst.msk [vmem:[%s3750 + $0x98] sm:$0xf] %vm3757, %v3537
      %v3783 = vld [vmem:[%s3750 + $0xa0] sm:$0xf]
      %v3784 = vsel %vm3753, %v3544, %v3783
      %3785 = vst [vmem:[%s3750 + $0xa0] sm:$0xf] %v3784
      %3786 = vst.msk [vmem:[%s3750 + $0xa8] sm:$0xf] %vm3757, %v3553
      %3787 = vst.msk [vmem:[%s3750 + $0xb0] sm:$0xf] %vm3757, %v3562
      %3788 = vst.msk [vmem:[%s3750 + $0xb8] sm:$0xf] %vm3757, %v3571
      %3789 = vst.msk [vmem:[%s3750 + $0xc0] sm:$0xf] %vm3757, %v3580
      %v3790 = vld [vmem:[%s3750 + $0xc8] sm:$0xf]
      %v3791 = vsel %vm3753, %v3587, %v3790
      %3792 = vst [vmem:[%s3750 + $0xc8] sm:$0xf] %v3791
      %3793 = vst.msk [vmem:[%s3750 + $0xd0] sm:$0xf] %vm3757, %v3596
      %3794 = vst.msk [vmem:[%s3750 + $0xd8] sm:$0xf] %vm3757, %v3605
      %3795 = vst.msk [vmem:[%s3750 + $0xe0] sm:$0xf] %vm3757, %v3614
      %3796 = vst.msk [vmem:[%s3750 + $0xe8] sm:$0xf] %vm3757, %v3623
      %v3797 = vld [vmem:[%s3750 + $0xf0] sm:$0xf]
      %v3798 = vsel %vm3753, %v3630, %v3797
      %3799 = vst [vmem:[%s3750 + $0xf0] sm:$0xf] %v3798
      %3800 = vst.msk [vmem:[%s3750 + $0xf8] sm:$0xf] %vm3757, %v3639
      %3801 = vst.msk [vmem:[%s3750 + $0x100] sm:$0xf] %vm3757, %v3648
      %3802 = vst.msk [vmem:[%s3750 + $0x108] sm:$0xf] %vm3757, %v3657
      %3803 = vst.msk [vmem:[%s3750 + $0x110] sm:$0xf] %vm3757, %v3666
      %v3804 = vld [vmem:[%s3750 + $0x118] sm:$0xf]
      %v3805 = vsel %vm3753, %v3673, %v3804
      %3806 = vst [vmem:[%s3750 + $0x118] sm:$0xf] %v3805
      %3807 = vst.msk [vmem:[%s3750 + $0x120] sm:$0xf] %vm3757, %v3682
      %3808 = vst.msk [vmem:[%s3750 + $0x128] sm:$0xf] %vm3757, %v3691
      %3809 = vst.msk [vmem:[%s3750 + $0x130] sm:$0xf] %vm3757, %v3700
      %3810 = vst.msk [vmem:[%s3750 + $0x138] sm:$0xf] %vm3757, %v3709
      %vm3811 = vcmask 516096
      %vm3812 = vmand %vm3811, %vm3363
      %v3813 = vld [vmem:[%s3750] sm:$0x1]
      %v3814 = vsel %vm3812, 0, %v3813
      %3815 = vst [vmem:[%s3750] sm:$0x1] %v3814
      %v3816 = vld [vmem:[%s3750 + $0x28] sm:$0x1]
      %v3817 = vsel %vm3812, 0, %v3816
      %3818 = vst [vmem:[%s3750 + $0x28] sm:$0x1] %v3817
      %v3819 = vld [vmem:[%s3750 + $0x50] sm:$0x1]
      %v3820 = vsel %vm3812, 0, %v3819
      %3821 = vst [vmem:[%s3750 + $0x50] sm:$0x1] %v3820
      %v3822 = vld [vmem:[%s3750 + $0x78] sm:$0x1]
      %v3823 = vsel %vm3812, 0, %v3822
      %3824 = vst [vmem:[%s3750 + $0x78] sm:$0x1] %v3823
      %v3825 = vld [vmem:[%s3750 + $0xa0] sm:$0x1]
      %v3826 = vsel %vm3812, 0, %v3825
      %3827 = vst [vmem:[%s3750 + $0xa0] sm:$0x1] %v3826
      %v3828 = vld [vmem:[%s3750 + $0xc8] sm:$0x1]
      %v3829 = vsel %vm3812, 0, %v3828
      %3830 = vst [vmem:[%s3750 + $0xc8] sm:$0x1] %v3829
      %v3831 = vld [vmem:[%s3750 + $0xf0] sm:$0x1]
      %v3832 = vsel %vm3812, 0, %v3831
      %3833 = vst [vmem:[%s3750 + $0xf0] sm:$0x1] %v3832
      %v3834 = vld [vmem:[%s3750 + $0x118] sm:$0x1]
      %v3835 = vsel %vm3812, 0, %v3834
      %3836 = vst [vmem:[%s3750 + $0x118] sm:$0x1] %v3835
      %3877 = vrot.lane.b32.xlu0 %v3309, 64
      %v3878 = vpop.permute.xlu0 %3877
      %3879 = vrot.lane.b32.xlu0 %v3310, 64
      %v3880 = vpop.permute.xlu0 %3879
      %3881 = vrot.lane.b32.xlu0 %v3311, 64
      %v3882 = vpop.permute.xlu0 %3881
      %3883 = vrot.lane.b32.xlu0 %v3312, 64
      %v3884 = vpop.permute.xlu0 %3883
      %3885 = vrot.lane.b32.xlu0 %v3313, 64
      %v3886 = vpop.permute.xlu0 %3885
      %3887 = vrot.lane.b32.xlu0 %v3314, 64
      %v3888 = vpop.permute.xlu0 %3887
      %3889 = vrot.lane.b32.xlu0 %v3315, 64
      %v3890 = vpop.permute.xlu0 %3889
      %3891 = vrot.lane.b32.xlu0 %v3316, 64
      %v3892 = vpop.permute.xlu0 %3891
      %3893 = vrot.lane.b32.xlu0 %v3317, 64
      %v3894 = vpop.permute.xlu0 %3893
      %3895 = vrot.lane.b32.xlu0 %v3318, 64
      %v3896 = vpop.permute.xlu0 %3895
      %3897 = vrot.lane.b32.xlu0 %v3319, 64
      %v3898 = vpop.permute.xlu0 %3897
      %3899 = vrot.lane.b32.xlu0 %v3320, 64
      %v3900 = vpop.permute.xlu0 %3899
      %3901 = vrot.lane.b32.xlu0 %v3321, 64
      %v3902 = vpop.permute.xlu0 %3901
      %3903 = vrot.lane.b32.xlu0 %v3322, 64
      %v3904 = vpop.permute.xlu0 %3903
      %3905 = vrot.lane.b32.xlu0 %v3323, 64
      %v3906 = vpop.permute.xlu0 %3905
      %3907 = vrot.lane.b32.xlu0 %v3324, 64
      %v3908 = vpop.permute.xlu0 %3907
      %3909 = vrot.lane.b32.xlu0 %v3325, 64
      %v3910 = vpop.permute.xlu0 %3909
      %3911 = vrot.lane.b32.xlu0 %v3326, 64
      %v3912 = vpop.permute.xlu0 %3911
      %3913 = vrot.lane.b32.xlu0 %v3327, 64
      %v3914 = vpop.permute.xlu0 %3913
      %3915 = vrot.lane.b32.xlu0 %v3328, 64
      %v3916 = vpop.permute.xlu0 %3915
      %3917 = vrot.lane.b32.xlu0 %v3329, 64
      %v3918 = vpop.permute.xlu0 %3917
      %3919 = vrot.lane.b32.xlu0 %v3330, 64
      %v3920 = vpop.permute.xlu0 %3919
      %3921 = vrot.lane.b32.xlu0 %v3331, 64
      %v3922 = vpop.permute.xlu0 %3921
      %3923 = vrot.lane.b32.xlu0 %v3332, 64
      %v3924 = vpop.permute.xlu0 %3923
      %3925 = vrot.lane.b32.xlu0 %v3333, 64
      %v3926 = vpop.permute.xlu0 %3925
      %3927 = vrot.lane.b32.xlu0 %v3334, 64
      %v3928 = vpop.permute.xlu0 %3927
      %3929 = vrot.lane.b32.xlu0 %v3335, 64
      %v3930 = vpop.permute.xlu0 %3929
      %3931 = vrot.lane.b32.xlu0 %v3336, 64
      %v3932 = vpop.permute.xlu0 %3931
      %3933 = vrot.lane.b32.xlu0 %v3337, 64
      %v3934 = vpop.permute.xlu0 %3933
      %3935 = vrot.lane.b32.xlu0 %v3338, 64
      %v3936 = vpop.permute.xlu0 %3935
      %3937 = vrot.lane.b32.xlu0 %v3339, 64
      %v3938 = vpop.permute.xlu0 %3937
      %3939 = vrot.lane.b32.xlu0 %v3340, 64
      %v3940 = vpop.permute.xlu0 %3939
      %3941 = vrot.lane.b32.xlu0 %v3341, 64
      %v3942 = vpop.permute.xlu0 %3941
      %3943 = vrot.lane.b32.xlu0 %v3342, 64
      %v3944 = vpop.permute.xlu0 %3943
      %3945 = vrot.lane.b32.xlu0 %v3343, 64
      %v3946 = vpop.permute.xlu0 %3945
      %3947 = vrot.lane.b32.xlu0 %v3344, 64
      %v3948 = vpop.permute.xlu0 %3947
      %3949 = vrot.lane.b32.xlu0 %v3345, 64
      %v3950 = vpop.permute.xlu0 %3949
      %3951 = vrot.lane.b32.xlu0 %v3346, 64
      %v3952 = vpop.permute.xlu0 %3951
      %3953 = vrot.lane.b32.xlu0 %v3347, 64
      %v3954 = vpop.permute.xlu0 %3953
      %3955 = vrot.lane.b32.xlu0 %v3348, 64
      %v3956 = vpop.permute.xlu0 %3955
      %vm3997 = vcmask 1043968
      %3998 = vst.msk [vmem:[%s3750] sm:$0xf] %vm3997, %v3878
      %3999 = vst.msk [vmem:[%s3750 + $0x8] sm:$0xf] %vm3997, %v3880
      %4000 = vst.msk [vmem:[%s3750 + $0x10] sm:$0xf] %vm3997, %v3882
      %4001 = vst.msk [vmem:[%s3750 + $0x18] sm:$0xf] %vm3997, %v3884
      %4002 = vst.msk [vmem:[%s3750 + $0x20] sm:$0xf] %vm3997, %v3886
      %4003 = vst.msk [vmem:[%s3750 + $0x28] sm:$0xf] %vm3997, %v3888
      %4004 = vst.msk [vmem:[%s3750 + $0x30] sm:$0xf] %vm3997, %v3890
      %4005 = vst.msk [vmem:[%s3750 + $0x38] sm:$0xf] %vm3997, %v3892
      %4006 = vst.msk [vmem:[%s3750 + $0x40] sm:$0xf] %vm3997, %v3894
      %4007 = vst.msk [vmem:[%s3750 + $0x48] sm:$0xf] %vm3997, %v3896
      %4008 = vst.msk [vmem:[%s3750 + $0x50] sm:$0xf] %vm3997, %v3898
      %4009 = vst.msk [vmem:[%s3750 + $0x58] sm:$0xf] %vm3997, %v3900
      %4010 = vst.msk [vmem:[%s3750 + $0x60] sm:$0xf] %vm3997, %v3902
      %4011 = vst.msk [vmem:[%s3750 + $0x68] sm:$0xf] %vm3997, %v3904
      %4012 = vst.msk [vmem:[%s3750 + $0x70] sm:$0xf] %vm3997, %v3906
      %4013 = vst.msk [vmem:[%s3750 + $0x78] sm:$0xf] %vm3997, %v3908
      %4014 = vst.msk [vmem:[%s3750 + $0x80] sm:$0xf] %vm3997, %v3910
      %4015 = vst.msk [vmem:[%s3750 + $0x88] sm:$0xf] %vm3997, %v3912
      %4016 = vst.msk [vmem:[%s3750 + $0x90] sm:$0xf] %vm3997, %v3914
      %4017 = vst.msk [vmem:[%s3750 + $0x98] sm:$0xf] %vm3997, %v3916
      %4018 = vst.msk [vmem:[%s3750 + $0xa0] sm:$0xf] %vm3997, %v3918
      %4019 = vst.msk [vmem:[%s3750 + $0xa8] sm:$0xf] %vm3997, %v3920
      %4020 = vst.msk [vmem:[%s3750 + $0xb0] sm:$0xf] %vm3997, %v3922
      %4021 = vst.msk [vmem:[%s3750 + $0xb8] sm:$0xf] %vm3997, %v3924
      %4022 = vst.msk [vmem:[%s3750 + $0xc0] sm:$0xf] %vm3997, %v3926
      %4023 = vst.msk [vmem:[%s3750 + $0xc8] sm:$0xf] %vm3997, %v3928
      %4024 = vst.msk [vmem:[%s3750 + $0xd0] sm:$0xf] %vm3997, %v3930
      %4025 = vst.msk [vmem:[%s3750 + $0xd8] sm:$0xf] %vm3997, %v3932
      %4026 = vst.msk [vmem:[%s3750 + $0xe0] sm:$0xf] %vm3997, %v3934
      %4027 = vst.msk [vmem:[%s3750 + $0xe8] sm:$0xf] %vm3997, %v3936
      %4028 = vst.msk [vmem:[%s3750 + $0xf0] sm:$0xf] %vm3997, %v3938
      %4029 = vst.msk [vmem:[%s3750 + $0xf8] sm:$0xf] %vm3997, %v3940
      %4030 = vst.msk [vmem:[%s3750 + $0x100] sm:$0xf] %vm3997, %v3942
      %4031 = vst.msk [vmem:[%s3750 + $0x108] sm:$0xf] %vm3997, %v3944
      %4032 = vst.msk [vmem:[%s3750 + $0x110] sm:$0xf] %vm3997, %v3946
      %4033 = vst.msk [vmem:[%s3750 + $0x118] sm:$0xf] %vm3997, %v3948
      %4034 = vst.msk [vmem:[%s3750 + $0x120] sm:$0xf] %vm3997, %v3950
      %4035 = vst.msk [vmem:[%s3750 + $0x128] sm:$0xf] %vm3997, %v3952
      %4036 = vst.msk [vmem:[%s3750 + $0x130] sm:$0xf] %vm3997, %v3954
      %4037 = vst.msk [vmem:[%s3750 + $0x138] sm:$0xf] %vm3997, %v3956
      %vm4038 = vsmask.f32 3328
      %vm4039 = vsmask.f32 7440
      %vm4040 = vmor %vm4038, %vm4039
      %v4041 = vrot.slane %v3367, 4
      %v4042 = vrot.slane %v3370, 5
      %v4043 = vor.u32 %v4041, %v4042
      %v4044 = vrot.slane %v4043, 4
      %v4045 = vrot.slane %v3378, 5
      %v4046 = vsel %vm4040, %v4044, %v4045
      %v4047 = vrot.slane %v3375, 4
      %v4048 = vor.u32 %v4047, %v4045
      %v4049 = vrot.slane %v4048, 4
      %v4050 = vrot.slane %v3387, 5
      %v4051 = vsel %vm4040, %v4049, %v4050
      %v4052 = vrot.slane %v3384, 4
      %v4053 = vor.u32 %v4052, %v4050
      %v4054 = vrot.slane %v4053, 4
      %v4055 = vrot.slane %v3396, 5
      %v4056 = vsel %vm4040, %v4054, %v4055
      %v4057 = vrot.slane %v3393, 4
      %v4058 = vor.u32 %v4057, %v4055
      %v4059 = vrot.slane %v4058, 4
      %v4060 = vrot.slane %v3405, 5
      %v4061 = vsel %vm4040, %v4059, %v4060
      %v4062 = vrot.slane %v3402, 4
      %v4063 = vor.u32 %v4062, %v4060
      %v4064 = vrot.slane %v4063, 4
      %v4065 = vrot.slane %v3410, 4
      %v4066 = vrot.slane %v3413, 5
      %v4067 = vor.u32 %v4065, %v4066
      %v4068 = vrot.slane %v4067, 4
      %v4069 = vrot.slane %v3421, 5
      %v4070 = vsel %vm4040, %v4068, %v4069
      %v4071 = vrot.slane %v3418, 4
      %v4072 = vor.u32 %v4071, %v4069
      %v4073 = vrot.slane %v4072, 4
      %v4074 = vrot.slane %v3430, 5
      %v4075 = vsel %vm4040, %v4073, %v4074
      %v4076 = vrot.slane %v3427, 4
      %v4077 = vor.u32 %v4076, %v4074
      %v4078 = vrot.slane %v4077, 4
      %v4079 = vrot.slane %v3439, 5
      %v4080 = vsel %vm4040, %v4078, %v4079
      %v4081 = vrot.slane %v3436, 4
      %v4082 = vor.u32 %v4081, %v4079
      %v4083 = vrot.slane %v4082, 4
      %v4084 = vrot.slane %v3448, 5
      %v4085 = vsel %vm4040, %v4083, %v4084
      %v4086 = vrot.slane %v3445, 4
      %v4087 = vor.u32 %v4086, %v4084
      %v4088 = vrot.slane %v4087, 4
      %v4089 = vrot.slane %v3453, 4
      %v4090 = vrot.slane %v3456, 5
      %v4091 = vor.u32 %v4089, %v4090
      %v4092 = vrot.slane %v4091, 4
      %v4093 = vrot.slane %v3464, 5
      %v4094 = vsel %vm4040, %v4092, %v4093
      %v4095 = vrot.slane %v3461, 4
      %v4096 = vor.u32 %v4095, %v4093
      %v4097 = vrot.slane %v4096, 4
      %v4098 = vrot.slane %v3473, 5
      %v4099 = vsel %vm4040, %v4097, %v4098
      %v4100 = vrot.slane %v3470, 4
      %v4101 = vor.u32 %v4100, %v4098
      %v4102 = vrot.slane %v4101, 4
      %v4103 = vrot.slane %v3482, 5
      %v4104 = vsel %vm4040, %v4102, %v4103
      %v4105 = vrot.slane %v3479, 4
      %v4106 = vor.u32 %v4105, %v4103
      %v4107 = vrot.slane %v4106, 4
      %v4108 = vrot.slane %v3491, 5
      %v4109 = vsel %vm4040, %v4107, %v4108
      %v4110 = vrot.slane %v3488, 4
      %v4111 = vor.u32 %v4110, %v4108
      %v4112 = vrot.slane %v4111, 4
      %v4113 = vrot.slane %v3496, 4
      %v4114 = vrot.slane %v3499, 5
      %v4115 = vor.u32 %v4113, %v4114
      %v4116 = vrot.slane %v4115, 4
      %v4117 = vrot.slane %v3507, 5
      %v4118 = vsel %vm4040, %v4116, %v4117
      %v4119 = vrot.slane %v3504, 4
      %v4120 = vor.u32 %v4119, %v4117
      %v4121 = vrot.slane %v4120, 4
      %v4122 = vrot.slane %v3516, 5
      %v4123 = vsel %vm4040, %v4121, %v4122
      %v4124 = vrot.slane %v3513, 4
      %v4125 = vor.u32 %v4124, %v4122
      %v4126 = vrot.slane %v4125, 4
      %v4127 = vrot.slane %v3525, 5
      %v4128 = vsel %vm4040, %v4126, %v4127
      %v4129 = vrot.slane %v3522, 4
      %v4130 = vor.u32 %v4129, %v4127
      %v4131 = vrot.slane %v4130, 4
      %v4132 = vrot.slane %v3534, 5
      %v4133 = vsel %vm4040, %v4131, %v4132
      %v4134 = vrot.slane %v3531, 4
      %v4135 = vor.u32 %v4134, %v4132
      %v4136 = vrot.slane %v4135, 4
      %v4137 = vrot.slane %v3539, 4
      %v4138 = vrot.slane %v3542, 5
      %v4139 = vor.u32 %v4137, %v4138
      %v4140 = vrot.slane %v4139, 4
      %v4141 = vrot.slane %v3550, 5
      %v4142 = vsel %vm4040, %v4140, %v4141
      %v4143 = vrot.slane %v3547, 4
      %v4144 = vor.u32 %v4143, %v4141
      %v4145 = vrot.slane %v4144, 4
      %v4146 = vrot.slane %v3559, 5
      %v4147 = vsel %vm4040, %v4145, %v4146
      %v4148 = vrot.slane %v3556, 4
      %v4149 = vor.u32 %v4148, %v4146
      %v4150 = vrot.slane %v4149, 4
      %v4151 = vrot.slane %v3568, 5
      %v4152 = vsel %vm4040, %v4150, %v4151
      %v4153 = vrot.slane %v3565, 4
      %v4154 = vor.u32 %v4153, %v4151
      %v4155 = vrot.slane %v4154, 4
      %v4156 = vrot.slane %v3577, 5
      %v4157 = vsel %vm4040, %v4155, %v4156
      %v4158 = vrot.slane %v3574, 4
      %v4159 = vor.u32 %v4158, %v4156
      %v4160 = vrot.slane %v4159, 4
      %v4161 = vrot.slane %v3582, 4
      %v4162 = vrot.slane %v3585, 5
      %v4163 = vor.u32 %v4161, %v4162
      %v4164 = vrot.slane %v4163, 4
      %v4165 = vrot.slane %v3593, 5
      %v4166 = vsel %vm4040, %v4164, %v4165
      %v4167 = vrot.slane %v3590, 4
      %v4168 = vor.u32 %v4167, %v4165
      %v4169 = vrot.slane %v4168, 4
      %v4170 = vrot.slane %v3602, 5
      %v4171 = vsel %vm4040, %v4169, %v4170
      %v4172 = vrot.slane %v3599, 4
      %v4173 = vor.u32 %v4172, %v4170
      %v4174 = vrot.slane %v4173, 4
      %v4175 = vrot.slane %v3611, 5
      %v4176 = vsel %vm4040, %v4174, %v4175
      %v4177 = vrot.slane %v3608, 4
      %v4178 = vor.u32 %v4177, %v4175
      %v4179 = vrot.slane %v4178, 4
      %v4180 = vrot.slane %v3620, 5
      %v4181 = vsel %vm4040, %v4179, %v4180
      %v4182 = vrot.slane %v3617, 4
      %v4183 = vor.u32 %v4182, %v4180
      %v4184 = vrot.slane %v4183, 4
      %v4185 = vrot.slane %v3625, 4
      %v4186 = vrot.slane %v3628, 5
      %v4187 = vor.u32 %v4185, %v4186
      %v4188 = vrot.slane %v4187, 4
      %v4189 = vrot.slane %v3636, 5
      %v4190 = vsel %vm4040, %v4188, %v4189
      %v4191 = vrot.slane %v3633, 4
      %v4192 = vor.u32 %v4191, %v4189
      %v4193 = vrot.slane %v4192, 4
      %v4194 = vrot.slane %v3645, 5
      %v4195 = vsel %vm4040, %v4193, %v4194
      %v4196 = vrot.slane %v3642, 4
      %v4197 = vor.u32 %v4196, %v4194
      %v4198 = vrot.slane %v4197, 4
      %v4199 = vrot.slane %v3654, 5
      %v4200 = vsel %vm4040, %v4198, %v4199
      %v4201 = vrot.slane %v3651, 4
      %v4202 = vor.u32 %v4201, %v4199
      %v4203 = vrot.slane %v4202, 4
      %v4204 = vrot.slane %v3663, 5
      %v4205 = vsel %vm4040, %v4203, %v4204
      %v4206 = vrot.slane %v3660, 4
      %v4207 = vor.u32 %v4206, %v4204
      %v4208 = vrot.slane %v4207, 4
      %v4209 = vrot.slane %v3668, 4
      %v4210 = vrot.slane %v3671, 5
      %v4211 = vor.u32 %v4209, %v4210
      %v4212 = vrot.slane %v4211, 4
      %v4213 = vrot.slane %v3679, 5
      %v4214 = vsel %vm4040, %v4212, %v4213
      %v4215 = vrot.slane %v3676, 4
      %v4216 = vor.u32 %v4215, %v4213
      %v4217 = vrot.slane %v4216, 4
      %v4218 = vrot.slane %v3688, 5
      %v4219 = vsel %vm4040, %v4217, %v4218
      %v4220 = vrot.slane %v3685, 4
      %v4221 = vor.u32 %v4220, %v4218
      %v4222 = vrot.slane %v4221, 4
      %v4223 = vrot.slane %v3697, 5
      %v4224 = vsel %vm4040, %v4222, %v4223
      %v4225 = vrot.slane %v3694, 4
      %v4226 = vor.u32 %v4225, %v4223
      %v4227 = vrot.slane %v4226, 4
      %v4228 = vrot.slane %v3706, 5
      %v4229 = vsel %vm4040, %v4227, %v4228
      %v4230 = vrot.slane %v3703, 4
      %v4231 = vor.u32 %v4230, %v4228
      %v4232 = vrot.slane %v4231, 4
      %4273 = vst.msk [vmem:[%s3750 + $0x4] sm:$0xf] %vm3757, %v4046
      %4274 = vst.msk [vmem:[%s3750 + $0xc] sm:$0xf] %vm3757, %v4051
      %4275 = vst.msk [vmem:[%s3750 + $0x14] sm:$0xf] %vm3757, %v4056
      %4276 = vst.msk [vmem:[%s3750 + $0x1c] sm:$0xf] %vm3757, %v4061
      %vm4277 = vmand %vm3751, %vm4038
      %v4278 = vld [vmem:[%s3750 + $0x24] sm:$0xf]
      %v4279 = vsel %vm4277, %v4064, %v4278
      %4280 = vst [vmem:[%s3750 + $0x24] sm:$0xf] %v4279
      %4281 = vst.msk [vmem:[%s3750 + $0x2c] sm:$0xf] %vm3757, %v4070
      %4282 = vst.msk [vmem:[%s3750 + $0x34] sm:$0xf] %vm3757, %v4075
      %4283 = vst.msk [vmem:[%s3750 + $0x3c] sm:$0xf] %vm3757, %v4080
      %4284 = vst.msk [vmem:[%s3750 + $0x44] sm:$0xf] %vm3757, %v4085
      %v4285 = vld [vmem:[%s3750 + $0x4c] sm:$0xf]
      %v4286 = vsel %vm4277, %v4088, %v4285
      %4287 = vst [vmem:[%s3750 + $0x4c] sm:$0xf] %v4286
      %4288 = vst.msk [vmem:[%s3750 + $0x54] sm:$0xf] %vm3757, %v4094
      %4289 = vst.msk [vmem:[%s3750 + $0x5c] sm:$0xf] %vm3757, %v4099
      %4290 = vst.msk [vmem:[%s3750 + $0x64] sm:$0xf] %vm3757, %v4104
      %4291 = vst.msk [vmem:[%s3750 + $0x6c] sm:$0xf] %vm3757, %v4109
      %v4292 = vld [vmem:[%s3750 + $0x74] sm:$0xf]
      %v4293 = vsel %vm4277, %v4112, %v4292
      %4294 = vst [vmem:[%s3750 + $0x74] sm:$0xf] %v4293
      %4295 = vst.msk [vmem:[%s3750 + $0x7c] sm:$0xf] %vm3757, %v4118
      %4296 = vst.msk [vmem:[%s3750 + $0x84] sm:$0xf] %vm3757, %v4123
      %4297 = vst.msk [vmem:[%s3750 + $0x8c] sm:$0xf] %vm3757, %v4128
      %4298 = vst.msk [vmem:[%s3750 + $0x94] sm:$0xf] %vm3757, %v4133
      %v4299 = vld [vmem:[%s3750 + $0x9c] sm:$0xf]
      %v4300 = vsel %vm4277, %v4136, %v4299
      %4301 = vst [vmem:[%s3750 + $0x9c] sm:$0xf] %v4300
      %4302 = vst.msk [vmem:[%s3750 + $0xa4] sm:$0xf] %vm3757, %v4142
      %4303 = vst.msk [vmem:[%s3750 + $0xac] sm:$0xf] %vm3757, %v4147
      %4304 = vst.msk [vmem:[%s3750 + $0xb4] sm:$0xf] %vm3757, %v4152
      %4305 = vst.msk [vmem:[%s3750 + $0xbc] sm:$0xf] %vm3757, %v4157
      %v4306 = vld [vmem:[%s3750 + $0xc4] sm:$0xf]
      %v4307 = vsel %vm4277, %v4160, %v4306
      %4308 = vst [vmem:[%s3750 + $0xc4] sm:$0xf] %v4307
      %4309 = vst.msk [vmem:[%s3750 + $0xcc] sm:$0xf] %vm3757, %v4166
      %4310 = vst.msk [vmem:[%s3750 + $0xd4] sm:$0xf] %vm3757, %v4171
      %4311 = vst.msk [vmem:[%s3750 + $0xdc] sm:$0xf] %vm3757, %v4176
      %4312 = vst.msk [vmem:[%s3750 + $0xe4] sm:$0xf] %vm3757, %v4181
      %v4313 = vld [vmem:[%s3750 + $0xec] sm:$0xf]
      %v4314 = vsel %vm4277, %v4184, %v4313
      %4315 = vst [vmem:[%s3750 + $0xec] sm:$0xf] %v4314
      %4316 = vst.msk [vmem:[%s3750 + $0xf4] sm:$0xf] %vm3757, %v4190
      %4317 = vst.msk [vmem:[%s3750 + $0xfc] sm:$0xf] %vm3757, %v4195
      %4318 = vst.msk [vmem:[%s3750 + $0x104] sm:$0xf] %vm3757, %v4200
      %4319 = vst.msk [vmem:[%s3750 + $0x10c] sm:$0xf] %vm3757, %v4205
      %v4320 = vld [vmem:[%s3750 + $0x114] sm:$0xf]
      %v4321 = vsel %vm4277, %v4208, %v4320
      %4322 = vst [vmem:[%s3750 + $0x114] sm:$0xf] %v4321
      %4323 = vst.msk [vmem:[%s3750 + $0x11c] sm:$0xf] %vm3757, %v4214
      %4324 = vst.msk [vmem:[%s3750 + $0x124] sm:$0xf] %vm3757, %v4219
      %4325 = vst.msk [vmem:[%s3750 + $0x12c] sm:$0xf] %vm3757, %v4224
      %4326 = vst.msk [vmem:[%s3750 + $0x134] sm:$0xf] %vm3757, %v4229
      %v4327 = vld [vmem:[%s3750 + $0x13c] sm:$0xf]
      %v4328 = vsel %vm4277, %v4232, %v4327
      %4329 = vst [vmem:[%s3750 + $0x13c] sm:$0xf] %v4328
      %vm4330 = vcmask 519171
      %vm4331 = vsmask.f32 7950
      %vm4332 = vmand %vm4330, %vm4331
      %v4333 = vld [vmem:[%s3750 + $0x24] sm:$0x8]
      %v4334 = vsel %vm4332, 0, %v4333
      %4335 = vst [vmem:[%s3750 + $0x24] sm:$0x8] %v4334
      %v4336 = vld [vmem:[%s3750 + $0x4c] sm:$0x8]
      %v4337 = vsel %vm4332, 0, %v4336
      %4338 = vst [vmem:[%s3750 + $0x4c] sm:$0x8] %v4337
      %v4339 = vld [vmem:[%s3750 + $0x74] sm:$0x8]
      %v4340 = vsel %vm4332, 0, %v4339
      %4341 = vst [vmem:[%s3750 + $0x74] sm:$0x8] %v4340
      %v4342 = vld [vmem:[%s3750 + $0x9c] sm:$0x8]
      %v4343 = vsel %vm4332, 0, %v4342
      %4344 = vst [vmem:[%s3750 + $0x9c] sm:$0x8] %v4343
      %v4345 = vld [vmem:[%s3750 + $0xc4] sm:$0x8]
      %v4346 = vsel %vm4332, 0, %v4345
      %4347 = vst [vmem:[%s3750 + $0xc4] sm:$0x8] %v4346
      %v4348 = vld [vmem:[%s3750 + $0xec] sm:$0x8]
      %v4349 = vsel %vm4332, 0, %v4348
      %4350 = vst [vmem:[%s3750 + $0xec] sm:$0x8] %v4349
      %v4351 = vld [vmem:[%s3750 + $0x114] sm:$0x8]
      %v4352 = vsel %vm4332, 0, %v4351
      %4353 = vst [vmem:[%s3750 + $0x114] sm:$0x8] %v4352
      %v4354 = vld [vmem:[%s3750 + $0x13c] sm:$0x8]
      %v4355 = vsel %vm4332, 0, %v4354
      %4356 = vst [vmem:[%s3750 + $0x13c] sm:$0x8] %v4355
      %v4357 = vld [vmem:[#allocation3] sm:$0xff]
      %v4358 = vld [vmem:[#allocation3 + $0x8] sm:$0xff]
      %v4359 = vld [vmem:[#allocation3 + $0x10] sm:$0xff]
      %v4360 = vld [vmem:[#allocation3 + $0x18] sm:$0xff]
      %v4361 = vld [vmem:[#allocation3 + $0x20] sm:$0xff]
      %v4362 = vld [vmem:[#allocation3 + $0x28] sm:$0xff]
      %v4363 = vld [vmem:[#allocation3 + $0x30] sm:$0xff]
      %v4364 = vld [vmem:[#allocation3 + $0x38] sm:$0xff]
      %v4365 = vld [vmem:[#allocation3 + $0x40] sm:$0xff]
      %v4366 = vld [vmem:[#allocation3 + $0x48] sm:$0xff]
      %v4367 = vld [vmem:[#allocation3 + $0x50] sm:$0xff]
      %v4368 = vld [vmem:[#allocation3 + $0x58] sm:$0xff]
      %v4369 = vld [vmem:[#allocation3 + $0x60] sm:$0xff]
      %v4370 = vld [vmem:[#allocation3 + $0x68] sm:$0xff]
      %v4371 = vld [vmem:[#allocation3 + $0x70] sm:$0xff]
      %v4372 = vld [vmem:[#allocation3 + $0x78] sm:$0xff]
      %v4373 = vld [vmem:[#allocation3 + $0x80] sm:$0xff]
      %v4374 = vld [vmem:[#allocation3 + $0x88] sm:$0xff]
      %v4375 = vld [vmem:[#allocation3 + $0x90] sm:$0xff]
      %v4376 = vld [vmem:[#allocation3 + $0x98] sm:$0xff]
      %v4377 = vld [vmem:[#allocation3 + $0xa0] sm:$0xff]
      %v4378 = vld [vmem:[#allocation3 + $0xa8] sm:$0xff]
      %v4379 = vld [vmem:[#allocation3 + $0xb0] sm:$0xff]
      %v4380 = vld [vmem:[#allocation3 + $0xb8] sm:$0xff]
      %v4381 = vld [vmem:[#allocation3 + $0xc0] sm:$0xff]
      %v4382 = vld [vmem:[#allocation3 + $0xc8] sm:$0xff]
      %v4383 = vld [vmem:[#allocation3 + $0xd0] sm:$0xff]
      %v4384 = vld [vmem:[#allocation3 + $0xd8] sm:$0xff]
      %v4385 = vld [vmem:[#allocation3 + $0xe0] sm:$0xff]
      %v4386 = vld [vmem:[#allocation3 + $0xe8] sm:$0xff]
      %v4387 = vld [vmem:[#allocation3 + $0xf0] sm:$0xff]
      %v4388 = vld [vmem:[#allocation3 + $0xf8] sm:$0xff]
      %v4389 = vld [vmem:[#allocation3 + $0x100] sm:$0xff]
      %v4390 = vld [vmem:[#allocation3 + $0x108] sm:$0xff]
      %v4391 = vld [vmem:[#allocation3 + $0x110] sm:$0xff]
      %v4392 = vld [vmem:[#allocation3 + $0x118] sm:$0xff]
      %v4393 = vld [vmem:[#allocation3 + $0x120] sm:$0xff]
      %v4394 = vld [vmem:[#allocation3 + $0x128] sm:$0xff]
      %v4395 = vld [vmem:[#allocation3 + $0x130] sm:$0xff]
      %v4396 = vld [vmem:[#allocation3 + $0x138] sm:$0xff]
      %v4397 = vld [vmem:[%s3] sm:$0xf]
      %v4398 = vld [vmem:[%s3 + $0x4] sm:$0xf]
      %v4399 = vld [vmem:[%s3 + $0x8] sm:$0xf]
      %v4400 = vld [vmem:[%s3 + $0xc] sm:$0xf]
      %v4401 = vld [vmem:[%s3 + $0x10] sm:$0xf]
      %v4402 = vld [vmem:[%s3 + $0x14] sm:$0xf]
      %v4403 = vld [vmem:[%s3 + $0x18] sm:$0xf]
      %v4404 = vld [vmem:[%s3 + $0x1c] sm:$0xf]
      %v4405 = vld [vmem:[%s3 + $0x20] sm:$0xf]
      %v4406 = vld [vmem:[%s3 + $0x24] sm:$0xf]
      %v4407 = vld [vmem:[%s3 + $0x28] sm:$0xf]
      %v4408 = vld [vmem:[%s3 + $0x2c] sm:$0xf]
      %v4409 = vld [vmem:[%s3 + $0x30] sm:$0xf]
      %v4410 = vld [vmem:[%s3 + $0x34] sm:$0xf]
      %v4411 = vld [vmem:[%s3 + $0x38] sm:$0xf]
      %v4412 = vld [vmem:[%s3 + $0x3c] sm:$0xf]
      %v4413 = vld [vmem:[%s3 + $0x40] sm:$0xf]
      %v4414 = vld [vmem:[%s3 + $0x44] sm:$0xf]
      %v4415 = vld [vmem:[%s3 + $0x48] sm:$0xf]
      %v4416 = vld [vmem:[%s3 + $0x4c] sm:$0xf]
      %v4417 = vld [vmem:[%s3 + $0x50] sm:$0xf]
      %v4418 = vld [vmem:[%s3 + $0x54] sm:$0xf]
      %v4419 = vld [vmem:[%s3 + $0x58] sm:$0xf]
      %v4420 = vld [vmem:[%s3 + $0x5c] sm:$0xf]
      %v4421 = vld [vmem:[%s3750] sm:$0xff]
      %v4422 = vld [vmem:[%s3750 + $0x8] sm:$0xff]
      %v4423 = vld [vmem:[%s3750 + $0x10] sm:$0xff]
      %v4424 = vld [vmem:[%s3750 + $0x18] sm:$0xff]
      %v4425 = vld [vmem:[%s3750 + $0x20] sm:$0xff]
      %v4426 = vld [vmem:[%s3750 + $0x28] sm:$0xff]
      %v4427 = vld [vmem:[%s3750 + $0x30] sm:$0xff]
      %v4428 = vld [vmem:[%s3750 + $0x38] sm:$0xff]
      %v4429 = vld [vmem:[%s3750 + $0x40] sm:$0xff]
      %v4430 = vld [vmem:[%s3750 + $0x48] sm:$0xff]
      %v4431 = vld [vmem:[%s3750 + $0x50] sm:$0xff]
      %v4432 = vld [vmem:[%s3750 + $0x58] sm:$0xff]
      %v4433 = vld [vmem:[%s3750 + $0x60] sm:$0xff]
      %v4434 = vld [vmem:[%s3750 + $0x68] sm:$0xff]
      %v4435 = vld [vmem:[%s3750 + $0x70] sm:$0xff]
      %v4436 = vld [vmem:[%s3750 + $0x78] sm:$0xff]
      %v4437 = vld [vmem:[%s3750 + $0x80] sm:$0xff]
      %v4438 = vld [vmem:[%s3750 + $0x88] sm:$0xff]
      %v4439 = vld [vmem:[%s3750 + $0x90] sm:$0xff]
      %v4440 = vld [vmem:[%s3750 + $0x98] sm:$0xff]
      %v4441 = vld [vmem:[%s3750 + $0xa0] sm:$0xff]
      %v4442 = vld [vmem:[%s3750 + $0xa8] sm:$0xff]
      %v4443 = vld [vmem:[%s3750 + $0xb0] sm:$0xff]
      %v4444 = vld [vmem:[%s3750 + $0xb8] sm:$0xff]
      %v4445 = vld [vmem:[%s3750 + $0xc0] sm:$0xff]
      %v4446 = vld [vmem:[%s3750 + $0xc8] sm:$0xff]
      %v4447 = vld [vmem:[%s3750 + $0xd0] sm:$0xff]
      %v4448 = vld [vmem:[%s3750 + $0xd8] sm:$0xff]
      %v4449 = vld [vmem:[%s3750 + $0xe0] sm:$0xff]
      %v4450 = vld [vmem:[%s3750 + $0xe8] sm:$0xff]
      %v4451 = vld [vmem:[%s3750 + $0xf0] sm:$0xff]
      %v4452 = vld [vmem:[%s3750 + $0xf8] sm:$0xff]
      %v4453 = vld [vmem:[%s3750 + $0x100] sm:$0xff]
      %v4454 = vld [vmem:[%s3750 + $0x108] sm:$0xff]
      %v4455 = vld [vmem:[%s3750 + $0x110] sm:$0xff]
      %v4456 = vld [vmem:[%s3750 + $0x118] sm:$0xff]
      %v4457 = vld [vmem:[%s3750 + $0x120] sm:$0xff]
      %v4458 = vld [vmem:[%s3750 + $0x128] sm:$0xff]
      %v4459 = vld [vmem:[%s3750 + $0x130] sm:$0xff]
      %v4460 = vld [vmem:[%s3750 + $0x138] sm:$0xff]
      %s4461 = scalar_lea.vmem %s3, 96
      %v4462 = vld [vmem:[%s4461] sm:$0xf]
      %v4463 = vld [vmem:[%s4461 + $0x4] sm:$0xf]
      %v4464 = vld [vmem:[%s4461 + $0x8] sm:$0xf]
      %v4465 = vld [vmem:[%s4461 + $0xc] sm:$0xf]
      %v4466 = vld [vmem:[%s4461 + $0x10] sm:$0xf]
      %v4467 = vld [vmem:[%s4461 + $0x14] sm:$0xf]
      %v4468 = vld [vmem:[%s4461 + $0x18] sm:$0xf]
      %v4469 = vld [vmem:[%s4461 + $0x1c] sm:$0xf]
      %v4470 = vld [vmem:[%s4461 + $0x20] sm:$0xf]
      %v4471 = vld [vmem:[%s4461 + $0x24] sm:$0xf]
      %v4472 = vld [vmem:[%s4461 + $0x28] sm:$0xf]
      %v4473 = vld [vmem:[%s4461 + $0x2c] sm:$0xf]
      %v4474 = vld [vmem:[%s4461 + $0x30] sm:$0xf]
      %v4475 = vld [vmem:[%s4461 + $0x34] sm:$0xf]
      %v4476 = vld [vmem:[%s4461 + $0x38] sm:$0xf]
      %v4477 = vld [vmem:[%s4461 + $0x3c] sm:$0xf]
      %v4478 = vld [vmem:[%s4461 + $0x40] sm:$0xf]
      %v4479 = vld [vmem:[%s4461 + $0x44] sm:$0xf]
      %v4480 = vld [vmem:[%s4461 + $0x48] sm:$0xf]
      %v4481 = vld [vmem:[%s4461 + $0x4c] sm:$0xf]
      %v4482 = vld [vmem:[%s4461 + $0x50] sm:$0xf]
      %v4483 = vld [vmem:[%s4461 + $0x54] sm:$0xf]
      %v4484 = vld [vmem:[%s4461 + $0x58] sm:$0xf]
      %v4485 = vld [vmem:[%s4461 + $0x5c] sm:$0xf]
      %v4526 = vunpack.c.l.b16 %v4421
      %v4527 = vunpack.c.h.b16 %v4421
      %v4528 = vunpack.c.l.b16 %v4422
      %v4529 = vunpack.c.h.b16 %v4422
      %v4530 = vunpack.c.l.b16 %v4423
      %v4531 = vunpack.c.h.b16 %v4423
      %v4532 = vunpack.c.l.b16 %v4424
      %v4533 = vunpack.c.h.b16 %v4424
      %v4534 = vunpack.c.l.b16 %v4425
      %v4535 = vunpack.c.h.b16 %v4425
      %v4536 = vunpack.c.l.b16 %v4426
      %v4537 = vunpack.c.h.b16 %v4426
      %v4538 = vunpack.c.l.b16 %v4427
      %v4539 = vunpack.c.h.b16 %v4427
      %v4540 = vunpack.c.l.b16 %v4428
      %v4541 = vunpack.c.h.b16 %v4428
      %v4542 = vunpack.c.l.b16 %v4429
      %v4543 = vunpack.c.h.b16 %v4429
      %v4544 = vunpack.c.l.b16 %v4430
      %v4545 = vunpack.c.h.b16 %v4430
      %v4546 = vunpack.c.l.b16 %v4431
      %v4547 = vunpack.c.h.b16 %v4431
      %v4548 = vunpack.c.l.b16 %v4432
      %v4549 = vunpack.c.h.b16 %v4432
      %v4550 = vunpack.c.l.b16 %v4433
      %v4551 = vunpack.c.h.b16 %v4433
      %v4552 = vunpack.c.l.b16 %v4434
      %v4553 = vunpack.c.h.b16 %v4434
      %v4554 = vunpack.c.l.b16 %v4435
      %v4555 = vunpack.c.h.b16 %v4435
      %v4556 = vunpack.c.l.b16 %v4436
      %v4557 = vunpack.c.h.b16 %v4436
      %v4558 = vunpack.c.l.b16 %v4437
      %v4559 = vunpack.c.h.b16 %v4437
      %v4560 = vunpack.c.l.b16 %v4438
      %v4561 = vunpack.c.h.b16 %v4438
      %v4562 = vunpack.c.l.b16 %v4439
      %v4563 = vunpack.c.h.b16 %v4439
      %v4564 = vunpack.c.l.b16 %v4440
      %v4565 = vunpack.c.h.b16 %v4440
      %v4566 = vunpack.c.l.b16 %v4441
      %v4567 = vunpack.c.h.b16 %v4441
      %v4568 = vunpack.c.l.b16 %v4442
      %v4569 = vunpack.c.h.b16 %v4442
      %v4570 = vunpack.c.l.b16 %v4443
      %v4571 = vunpack.c.h.b16 %v4443
      %v4572 = vunpack.c.l.b16 %v4444
      %v4573 = vunpack.c.h.b16 %v4444
      %v4574 = vunpack.c.l.b16 %v4445
      %v4575 = vunpack.c.h.b16 %v4445
      %v4576 = vunpack.c.l.b16 %v4446
      %v4577 = vunpack.c.h.b16 %v4446
      %v4578 = vunpack.c.l.b16 %v4447
      %v4579 = vunpack.c.h.b16 %v4447
      %v4580 = vunpack.c.l.b16 %v4448
      %v4581 = vunpack.c.h.b16 %v4448
      %v4582 = vunpack.c.l.b16 %v4449
      %v4583 = vunpack.c.h.b16 %v4449
      %v4584 = vunpack.c.l.b16 %v4450
      %v4585 = vunpack.c.h.b16 %v4450
      %v4586 = vunpack.c.l.b16 %v4451
      %v4587 = vunpack.c.h.b16 %v4451
      %v4588 = vunpack.c.l.b16 %v4452
      %v4589 = vunpack.c.h.b16 %v4452
      %v4590 = vunpack.c.l.b16 %v4453
      %v4591 = vunpack.c.h.b16 %v4453
      %v4592 = vunpack.c.l.b16 %v4454
      %v4593 = vunpack.c.h.b16 %v4454
      %v4594 = vunpack.c.l.b16 %v4455
      %v4595 = vunpack.c.h.b16 %v4455
      %v4596 = vunpack.c.l.b16 %v4456
      %v4597 = vunpack.c.h.b16 %v4456
      %v4598 = vunpack.c.l.b16 %v4457
      %v4599 = vunpack.c.h.b16 %v4457
      %v4600 = vunpack.c.l.b16 %v4458
      %v4601 = vunpack.c.h.b16 %v4458
      %v4602 = vunpack.c.l.b16 %v4459
      %v4603 = vunpack.c.h.b16 %v4459
      %v4604 = vunpack.c.l.b16 %v4460
      %v4605 = vunpack.c.h.b16 %v4460
      %v4606 = vpack.c.b16 %v4528, %v4526
      %v4607 = vpack.c.b16 %v4529, %v4527
      %v4608 = vpack.c.b16 %v4532, %v4530
      %v4609 = vpack.c.b16 %v4533, %v4531
      %v4610 = vpack.c.b16 %v4536, %v4534
      %v4611 = vpack.c.b16 %v4537, %v4535
      %v4612 = vpack.c.b16 %v4540, %v4538
      %v4613 = vpack.c.b16 %v4541, %v4539
      %v4614 = vpack.c.b16 %v4544, %v4542
      %v4615 = vpack.c.b16 %v4545, %v4543
      %v4616 = vpack.c.b16 %v4548, %v4546
      %v4617 = vpack.c.b16 %v4549, %v4547
      %v4618 = vpack.c.b16 %v4552, %v4550
      %v4619 = vpack.c.b16 %v4553, %v4551
      %v4620 = vpack.c.b16 %v4556, %v4554
      %v4621 = vpack.c.b16 %v4557, %v4555
      %v4622 = vpack.c.b16 %v4560, %v4558
      %v4623 = vpack.c.b16 %v4561, %v4559
      %v4624 = vpack.c.b16 %v4564, %v4562
      %v4625 = vpack.c.b16 %v4565, %v4563
      %v4626 = vpack.c.b16 %v4568, %v4566
      %v4627 = vpack.c.b16 %v4569, %v4567
      %v4628 = vpack.c.b16 %v4572, %v4570
      %v4629 = vpack.c.b16 %v4573, %v4571
      %v4630 = vpack.c.b16 %v4576, %v4574
      %v4631 = vpack.c.b16 %v4577, %v4575
      %v4632 = vpack.c.b16 %v4580, %v4578
      %v4633 = vpack.c.b16 %v4581, %v4579
      %v4634 = vpack.c.b16 %v4584, %v4582
      %v4635 = vpack.c.b16 %v4585, %v4583
      %v4636 = vpack.c.b16 %v4588, %v4586
      %v4637 = vpack.c.b16 %v4589, %v4587
      %v4638 = vpack.c.b16 %v4592, %v4590
      %v4639 = vpack.c.b16 %v4593, %v4591
      %v4640 = vpack.c.b16 %v4596, %v4594
      %v4641 = vpack.c.b16 %v4597, %v4595
      %v4642 = vpack.c.b16 %v4600, %v4598
      %v4643 = vpack.c.b16 %v4601, %v4599
      %v4644 = vpack.c.b16 %v4604, %v4602
      %v4645 = vpack.c.b16 %v4605, %v4603
      %v4690 = vunpack.c.l.b16 %v4462
      %v4691 = vunpack.c.l.b16 %v4463
      %v4692 = vunpack.c.l.b16 %v4464
      %v4693 = vunpack.c.l.b16 %v4465
      %v4694 = vunpack.c.l.b16 %v4466
      %v4695 = vunpack.c.l.b16 %v4467
      %v4696 = vunpack.c.l.b16 %v4468
      %v4697 = vunpack.c.l.b16 %v4469
      %v4698 = vunpack.c.l.b16 %v4470
      %v4699 = vunpack.c.l.b16 %v4471
      %v4700 = vunpack.c.l.b16 %v4472
      %v4701 = vunpack.c.l.b16 %v4473
      %v4702 = vunpack.c.l.b16 %v4474
      %v4703 = vunpack.c.l.b16 %v4475
      %v4704 = vunpack.c.l.b16 %v4476
      %v4705 = vunpack.c.l.b16 %v4477
      %v4706 = vunpack.c.l.b16 %v4478
      %v4707 = vunpack.c.l.b16 %v4479
      %v4708 = vunpack.c.l.b16 %v4480
      %v4709 = vunpack.c.l.b16 %v4481
      %v4710 = vunpack.c.l.b16 %v4482
      %v4711 = vunpack.c.l.b16 %v4483
      %v4712 = vunpack.c.l.b16 %v4484
      %v4713 = vunpack.c.l.b16 %v4485
      %v4714 = vpack.c.b16 %v4691, %v4690
      %v4715 = vpack.c.b16 %v4693, %v4692
      %v4716 = vpack.c.b16 %v4695, %v4694
      %v4717 = vpack.c.b16 %v4697, %v4696
      %v4718 = vpack.c.b16 %v4699, %v4698
      %v4719 = vpack.c.b16 %v4701, %v4700
      %v4720 = vpack.c.b16 %v4703, %v4702
      %v4721 = vpack.c.b16 %v4705, %v4704
      %v4722 = vpack.c.b16 %v4707, %v4706
      %v4723 = vpack.c.b16 %v4709, %v4708
      %v4724 = vpack.c.b16 %v4711, %v4710
      %v4725 = vpack.c.b16 %v4713, %v4712
      %vm4738 = vcmask 523264
      %v4740 = vsel %vm4738, %v4607, 0
      %v4743 = vsel %vm4738, %v4609, 0
      %v4746 = vsel %vm4738, %v4611, 0
      %v4749 = vsel %vm4738, %v4613, 0
      %v4752 = vsel %vm4738, %v4615, 0
      %v4755 = vsel %vm4738, %v4617, 0
      %v4758 = vsel %vm4738, %v4619, 0
      %v4761 = vsel %vm4738, %v4621, 0
      %v4764 = vsel %vm4738, %v4623, 0
      %v4767 = vsel %vm4738, %v4625, 0
      %v4770 = vsel %vm4738, %v4627, 0
      %v4773 = vsel %vm4738, %v4629, 0
      %v4776 = vsel %vm4738, %v4631, 0
      %v4779 = vsel %vm4738, %v4633, 0
      %v4782 = vsel %vm4738, %v4635, 0
      %v4785 = vsel %vm4738, %v4637, 0
      %v4788 = vsel %vm4738, %v4639, 0
      %v4791 = vsel %vm4738, %v4641, 0
      %v4794 = vsel %vm4738, %v4643, 0
      %v4797 = vsel %vm4738, %v4645, 0
      %4799 = vmatpush.bf16.msra.mxu0 %v4721
      %4800 = vmatpush.bf16.msra.mxu0 %v4720
      %4801 = vmatpush.bf16.msra.mxu0 %v4719
      %4802 = vmatpush.bf16.msra.mxu0 %v4718
      %4803 = vmatpush.bf16.msra.mxu0 %v4717
      %4804 = vmatpush.bf16.msra.mxu0 %v4716
      %4805 = vmatpush.bf16.msra.mxu0 %v4715
      %4806 = vmatpush.bf16.msra.mxu0 %v4714
      %4807 = vmatmul.bf16.gmra.mxu0 %v4606
      %v4808 = vpop.f32.mrf.mxu0
      %v4809 = vadd.f32 0.0, %v4808
      %v4810 = vpop.f32.mrf.mxu0
      %v4811 = vadd.f32 0.0, %v4810
      %4812 = vmatmul.bf16.gmra.mxu0 %v4608
      %v4813 = vpop.f32.mrf.mxu0
      %v4814 = vadd.f32 0.0, %v4813
      %v4815 = vpop.f32.mrf.mxu0
      %v4816 = vadd.f32 0.0, %v4815
      %4817 = vmatmul.bf16.gmra.mxu0 %v4610
      %v4818 = vpop.f32.mrf.mxu0
      %v4819 = vadd.f32 0.0, %v4818
      %v4820 = vpop.f32.mrf.mxu0
      %v4821 = vadd.f32 0.0, %v4820
      %4822 = vmatmul.bf16.gmra.mxu0 %v4612
      %v4823 = vpop.f32.mrf.mxu0
      %v4824 = vadd.f32 0.0, %v4823
      %v4825 = vpop.f32.mrf.mxu0
      %v4826 = vadd.f32 0.0, %v4825
      %4827 = vmatmul.bf16.gmra.mxu0 %v4614
      %v4828 = vpop.f32.mrf.mxu0
      %v4829 = vadd.f32 0.0, %v4828
      %v4830 = vpop.f32.mrf.mxu0
      %v4831 = vadd.f32 0.0, %v4830
      %4832 = vmatmul.bf16.gmra.mxu0 %v4616
      %v4833 = vpop.f32.mrf.mxu0
      %v4834 = vadd.f32 0.0, %v4833
      %v4835 = vpop.f32.mrf.mxu0
      %v4836 = vadd.f32 0.0, %v4835
      %4837 = vmatmul.bf16.gmra.mxu0 %v4618
      %v4838 = vpop.f32.mrf.mxu0
      %v4839 = vadd.f32 0.0, %v4838
      %v4840 = vpop.f32.mrf.mxu0
      %v4841 = vadd.f32 0.0, %v4840
      %4842 = vmatmul.bf16.gmra.mxu0 %v4620
      %v4843 = vpop.f32.mrf.mxu0
      %v4844 = vadd.f32 0.0, %v4843
      %v4845 = vpop.f32.mrf.mxu0
      %v4846 = vadd.f32 0.0, %v4845
      %4847 = vmatmul.bf16.gmra.mxu0 %v4622
      %v4848 = vpop.f32.mrf.mxu0
      %v4849 = vadd.f32 0.0, %v4848
      %v4850 = vpop.f32.mrf.mxu0
      %v4851 = vadd.f32 0.0, %v4850
      %4852 = vmatmul.bf16.gmra.mxu0 %v4624
      %v4853 = vpop.f32.mrf.mxu0
      %v4854 = vadd.f32 0.0, %v4853
      %v4855 = vpop.f32.mrf.mxu0
      %v4856 = vadd.f32 0.0, %v4855
      %4857 = vmatmul.bf16.gmra.mxu0 %v4626
      %v4858 = vpop.f32.mrf.mxu0
      %v4859 = vadd.f32 0.0, %v4858
      %v4860 = vpop.f32.mrf.mxu0
      %v4861 = vadd.f32 0.0, %v4860
      %4862 = vmatmul.bf16.gmra.mxu0 %v4628
      %v4863 = vpop.f32.mrf.mxu0
      %v4864 = vadd.f32 0.0, %v4863
      %v4865 = vpop.f32.mrf.mxu0
      %v4866 = vadd.f32 0.0, %v4865
      %4867 = vmatmul.bf16.gmra.mxu0 %v4630
      %v4868 = vpop.f32.mrf.mxu0
      %v4869 = vadd.f32 0.0, %v4868
      %v4870 = vpop.f32.mrf.mxu0
      %v4871 = vadd.f32 0.0, %v4870
      %4872 = vmatmul.bf16.gmra.mxu0 %v4632
      %v4873 = vpop.f32.mrf.mxu0
      %v4874 = vadd.f32 0.0, %v4873
      %v4875 = vpop.f32.mrf.mxu0
      %v4876 = vadd.f32 0.0, %v4875
      %4877 = vmatmul.bf16.gmra.mxu0 %v4634
      %v4878 = vpop.f32.mrf.mxu0
      %v4879 = vadd.f32 0.0, %v4878
      %v4880 = vpop.f32.mrf.mxu0
      %v4881 = vadd.f32 0.0, %v4880
      %4882 = vmatmul.bf16.gmra.mxu0 %v4636
      %v4883 = vpop.f32.mrf.mxu0
      %v4884 = vadd.f32 0.0, %v4883
      %v4885 = vpop.f32.mrf.mxu0
      %v4886 = vadd.f32 0.0, %v4885
      %4887 = vmatmul.bf16.gmra.mxu0 %v4638
      %v4888 = vpop.f32.mrf.mxu0
      %v4889 = vadd.f32 0.0, %v4888
      %v4890 = vpop.f32.mrf.mxu0
      %v4891 = vadd.f32 0.0, %v4890
      %4892 = vmatmul.bf16.gmra.mxu0 %v4640
      %v4893 = vpop.f32.mrf.mxu0
      %v4894 = vadd.f32 0.0, %v4893
      %v4895 = vpop.f32.mrf.mxu0
      %v4896 = vadd.f32 0.0, %v4895
      %4897 = vmatmul.bf16.gmra.mxu0 %v4642
      %v4898 = vpop.f32.mrf.mxu0
      %v4899 = vadd.f32 0.0, %v4898
      %v4900 = vpop.f32.mrf.mxu0
      %v4901 = vadd.f32 0.0, %v4900
      %4902 = vmatmul.bf16.gmra.mxu0 %v4644
      %v4903 = vpop.f32.mrf.mxu0
      %v4904 = vadd.f32 0.0, %v4903
      %v4905 = vpop.f32.mrf.mxu0
      %v4906 = vadd.f32 0.0, %v4905
      %4907 = vdwg.mxu0
      %4908 = vmatpush.bf16.msra.mxu0 0
      %4909 = vmatpush.bf16.msra.mxu0 0
      %4910 = vmatpush.bf16.msra.mxu0 0
      %4911 = vmatpush.bf16.msra.mxu0 0
      %4912 = vmatpush.bf16.msra.mxu0 %v4725
      %4913 = vmatpush.bf16.msra.mxu0 %v4724
      %4914 = vmatpush.bf16.msra.mxu0 %v4723
      %4915 = vmatpush.bf16.msra.mxu0 %v4722
      %4916 = vmatmul.bf16.gmra.mxu0 %v4740
      %v4917 = vpop.f32.mrf.mxu0
      %v4918 = vadd.f32 %v4809, %v4917
      %v4919 = vpop.f32.mrf.mxu0
      %v4920 = vadd.f32 %v4811, %v4919
      %4921 = vmatmul.bf16.gmra.mxu0 %v4743
      %v4922 = vpop.f32.mrf.mxu0
      %v4923 = vadd.f32 %v4814, %v4922
      %v4924 = vpop.f32.mrf.mxu0
      %v4925 = vadd.f32 %v4816, %v4924
      %4926 = vmatmul.bf16.gmra.mxu0 %v4746
      %v4927 = vpop.f32.mrf.mxu0
      %v4928 = vadd.f32 %v4819, %v4927
      %v4929 = vpop.f32.mrf.mxu0
      %v4930 = vadd.f32 %v4821, %v4929
      %4931 = vmatmul.bf16.gmra.mxu0 %v4749
      %v4932 = vpop.f32.mrf.mxu0
      %v4933 = vadd.f32 %v4824, %v4932
      %v4934 = vpop.f32.mrf.mxu0
      %v4935 = vadd.f32 %v4826, %v4934
      %4936 = vmatmul.bf16.gmra.mxu0 %v4752
      %v4937 = vpop.f32.mrf.mxu0
      %v4938 = vadd.f32 %v4829, %v4937
      %v4939 = vpop.f32.mrf.mxu0
      %v4940 = vadd.f32 %v4831, %v4939
      %4941 = vmatmul.bf16.gmra.mxu0 %v4755
      %v4942 = vpop.f32.mrf.mxu0
      %v4943 = vadd.f32 %v4834, %v4942
      %v4944 = vpop.f32.mrf.mxu0
      %v4945 = vadd.f32 %v4836, %v4944
      %4946 = vmatmul.bf16.gmra.mxu0 %v4758
      %v4947 = vpop.f32.mrf.mxu0
      %v4948 = vadd.f32 %v4839, %v4947
      %v4949 = vpop.f32.mrf.mxu0
      %v4950 = vadd.f32 %v4841, %v4949
      %4951 = vmatmul.bf16.gmra.mxu0 %v4761
      %v4952 = vpop.f32.mrf.mxu0
      %v4953 = vadd.f32 %v4844, %v4952
      %v4954 = vpop.f32.mrf.mxu0
      %v4955 = vadd.f32 %v4846, %v4954
      %4956 = vmatmul.bf16.gmra.mxu0 %v4764
      %v4957 = vpop.f32.mrf.mxu0
      %v4958 = vadd.f32 %v4849, %v4957
      %v4959 = vpop.f32.mrf.mxu0
      %v4960 = vadd.f32 %v4851, %v4959
      %4961 = vmatmul.bf16.gmra.mxu0 %v4767
      %v4962 = vpop.f32.mrf.mxu0
      %v4963 = vadd.f32 %v4854, %v4962
      %v4964 = vpop.f32.mrf.mxu0
      %v4965 = vadd.f32 %v4856, %v4964
      %4966 = vmatmul.bf16.gmra.mxu0 %v4770
      %v4967 = vpop.f32.mrf.mxu0
      %v4968 = vadd.f32 %v4859, %v4967
      %v4969 = vpop.f32.mrf.mxu0
      %v4970 = vadd.f32 %v4861, %v4969
      %4971 = vmatmul.bf16.gmra.mxu0 %v4773
      %v4972 = vpop.f32.mrf.mxu0
      %v4973 = vadd.f32 %v4864, %v4972
      %v4974 = vpop.f32.mrf.mxu0
      %v4975 = vadd.f32 %v4866, %v4974
      %4976 = vmatmul.bf16.gmra.mxu0 %v4776
      %v4977 = vpop.f32.mrf.mxu0
      %v4978 = vadd.f32 %v4869, %v4977
      %v4979 = vpop.f32.mrf.mxu0
      %v4980 = vadd.f32 %v4871, %v4979
      %4981 = vmatmul.bf16.gmra.mxu0 %v4779
      %v4982 = vpop.f32.mrf.mxu0
      %v4983 = vadd.f32 %v4874, %v4982
      %v4984 = vpop.f32.mrf.mxu0
      %v4985 = vadd.f32 %v4876, %v4984
      %4986 = vmatmul.bf16.gmra.mxu0 %v4782
      %v4987 = vpop.f32.mrf.mxu0
      %v4988 = vadd.f32 %v4879, %v4987
      %v4989 = vpop.f32.mrf.mxu0
      %v4990 = vadd.f32 %v4881, %v4989
      %4991 = vmatmul.bf16.gmra.mxu0 %v4785
      %v4992 = vpop.f32.mrf.mxu0
      %v4993 = vadd.f32 %v4884, %v4992
      %v4994 = vpop.f32.mrf.mxu0
      %v4995 = vadd.f32 %v4886, %v4994
      %4996 = vmatmul.bf16.gmra.mxu0 %v4788
      %v4997 = vpop.f32.mrf.mxu0
      %v4998 = vadd.f32 %v4889, %v4997
      %v4999 = vpop.f32.mrf.mxu0
      %v5000 = vadd.f32 %v4891, %v4999
      %5001 = vmatmul.bf16.gmra.mxu0 %v4791
      %v5002 = vpop.f32.mrf.mxu0
      %v5003 = vadd.f32 %v4894, %v5002
      %v5004 = vpop.f32.mrf.mxu0
      %v5005 = vadd.f32 %v4896, %v5004
      %5006 = vmatmul.bf16.gmra.mxu0 %v4794
      %v5007 = vpop.f32.mrf.mxu0
      %v5008 = vadd.f32 %v4899, %v5007
      %v5009 = vpop.f32.mrf.mxu0
      %v5010 = vadd.f32 %v4901, %v5009
      %5011 = vmatmul.bf16.gmra.mxu0 %v4797
      %v5012 = vpop.f32.mrf.mxu0
      %v5013 = vadd.f32 %v4904, %v5012
      %v5014 = vpop.f32.mrf.mxu0
      %v5015 = vadd.f32 %v4906, %v5014
      %5016 = vdwg.mxu0
      %v5057 = vunpack.c.l.b16 %v4357
      %v5058 = vunpack.c.h.b16 %v4357
      %v5059 = vunpack.c.l.b16 %v4358
      %v5060 = vunpack.c.h.b16 %v4358
      %v5061 = vunpack.c.l.b16 %v4359
      %v5062 = vunpack.c.h.b16 %v4359
      %v5063 = vunpack.c.l.b16 %v4360
      %v5064 = vunpack.c.h.b16 %v4360
      %v5065 = vunpack.c.l.b16 %v4361
      %v5066 = vunpack.c.h.b16 %v4361
      %v5067 = vunpack.c.l.b16 %v4362
      %v5068 = vunpack.c.h.b16 %v4362
      %v5069 = vunpack.c.l.b16 %v4363
      %v5070 = vunpack.c.h.b16 %v4363
      %v5071 = vunpack.c.l.b16 %v4364
      %v5072 = vunpack.c.h.b16 %v4364
      %v5073 = vunpack.c.l.b16 %v4365
      %v5074 = vunpack.c.h.b16 %v4365
      %v5075 = vunpack.c.l.b16 %v4366
      %v5076 = vunpack.c.h.b16 %v4366
      %v5077 = vunpack.c.l.b16 %v4367
      %v5078 = vunpack.c.h.b16 %v4367
      %v5079 = vunpack.c.l.b16 %v4368
      %v5080 = vunpack.c.h.b16 %v4368
      %v5081 = vunpack.c.l.b16 %v4369
      %v5082 = vunpack.c.h.b16 %v4369
      %v5083 = vunpack.c.l.b16 %v4370
      %v5084 = vunpack.c.h.b16 %v4370
      %v5085 = vunpack.c.l.b16 %v4371
      %v5086 = vunpack.c.h.b16 %v4371
      %v5087 = vunpack.c.l.b16 %v4372
      %v5088 = vunpack.c.h.b16 %v4372
      %v5089 = vunpack.c.l.b16 %v4373
      %v5090 = vunpack.c.h.b16 %v4373
      %v5091 = vunpack.c.l.b16 %v4374
      %v5092 = vunpack.c.h.b16 %v4374
      %v5093 = vunpack.c.l.b16 %v4375
      %v5094 = vunpack.c.h.b16 %v4375
      %v5095 = vunpack.c.l.b16 %v4376
      %v5096 = vunpack.c.h.b16 %v4376
      %v5097 = vunpack.c.l.b16 %v4377
      %v5098 = vunpack.c.h.b16 %v4377
      %v5099 = vunpack.c.l.b16 %v4378
      %v5100 = vunpack.c.h.b16 %v4378
      %v5101 = vunpack.c.l.b16 %v4379
      %v5102 = vunpack.c.h.b16 %v4379
      %v5103 = vunpack.c.l.b16 %v4380
      %v5104 = vunpack.c.h.b16 %v4380
      %v5105 = vunpack.c.l.b16 %v4381
      %v5106 = vunpack.c.h.b16 %v4381
      %v5107 = vunpack.c.l.b16 %v4382
      %v5108 = vunpack.c.h.b16 %v4382
      %v5109 = vunpack.c.l.b16 %v4383
      %v5110 = vunpack.c.h.b16 %v4383
      %v5111 = vunpack.c.l.b16 %v4384
      %v5112 = vunpack.c.h.b16 %v4384
      %v5113 = vunpack.c.l.b16 %v4385
      %v5114 = vunpack.c.h.b16 %v4385
      %v5115 = vunpack.c.l.b16 %v4386
      %v5116 = vunpack.c.h.b16 %v4386
      %v5117 = vunpack.c.l.b16 %v4387
      %v5118 = vunpack.c.h.b16 %v4387
      %v5119 = vunpack.c.l.b16 %v4388
      %v5120 = vunpack.c.h.b16 %v4388
      %v5121 = vunpack.c.l.b16 %v4389
      %v5122 = vunpack.c.h.b16 %v4389
      %v5123 = vunpack.c.l.b16 %v4390
      %v5124 = vunpack.c.h.b16 %v4390
      %v5125 = vunpack.c.l.b16 %v4391
      %v5126 = vunpack.c.h.b16 %v4391
      %v5127 = vunpack.c.l.b16 %v4392
      %v5128 = vunpack.c.h.b16 %v4392
      %v5129 = vunpack.c.l.b16 %v4393
      %v5130 = vunpack.c.h.b16 %v4393
      %v5131 = vunpack.c.l.b16 %v4394
      %v5132 = vunpack.c.h.b16 %v4394
      %v5133 = vunpack.c.l.b16 %v4395
      %v5134 = vunpack.c.h.b16 %v4395
      %v5135 = vunpack.c.l.b16 %v4396
      %v5136 = vunpack.c.h.b16 %v4396
      %v5137 = vpack.c.b16 %v5059, %v5057
      %v5138 = vpack.c.b16 %v5060, %v5058
      %v5139 = vpack.c.b16 %v5063, %v5061
      %v5140 = vpack.c.b16 %v5064, %v5062
      %v5141 = vpack.c.b16 %v5067, %v5065
      %v5142 = vpack.c.b16 %v5068, %v5066
      %v5143 = vpack.c.b16 %v5071, %v5069
      %v5144 = vpack.c.b16 %v5072, %v5070
      %v5145 = vpack.c.b16 %v5075, %v5073
      %v5146 = vpack.c.b16 %v5076, %v5074
      %v5147 = vpack.c.b16 %v5079, %v5077
      %v5148 = vpack.c.b16 %v5080, %v5078
      %v5149 = vpack.c.b16 %v5083, %v5081
      %v5150 = vpack.c.b16 %v5084, %v5082
      %v5151 = vpack.c.b16 %v5087, %v5085
      %v5152 = vpack.c.b16 %v5088, %v5086
      %v5153 = vpack.c.b16 %v5091, %v5089
      %v5154 = vpack.c.b16 %v5092, %v5090
      %v5155 = vpack.c.b16 %v5095, %v5093
      %v5156 = vpack.c.b16 %v5096, %v5094
      %v5157 = vpack.c.b16 %v5099, %v5097
      %v5158 = vpack.c.b16 %v5100, %v5098
      %v5159 = vpack.c.b16 %v5103, %v5101
      %v5160 = vpack.c.b16 %v5104, %v5102
      %v5161 = vpack.c.b16 %v5107, %v5105
      %v5162 = vpack.c.b16 %v5108, %v5106
      %v5163 = vpack.c.b16 %v5111, %v5109
      %v5164 = vpack.c.b16 %v5112, %v5110
      %v5165 = vpack.c.b16 %v5115, %v5113
      %v5166 = vpack.c.b16 %v5116, %v5114
      %v5167 = vpack.c.b16 %v5119, %v5117
      %v5168 = vpack.c.b16 %v5120, %v5118
      %v5169 = vpack.c.b16 %v5123, %v5121
      %v5170 = vpack.c.b16 %v5124, %v5122
      %v5171 = vpack.c.b16 %v5127, %v5125
      %v5172 = vpack.c.b16 %v5128, %v5126
      %v5173 = vpack.c.b16 %v5131, %v5129
      %v5174 = vpack.c.b16 %v5132, %v5130
      %v5175 = vpack.c.b16 %v5135, %v5133
      %v5176 = vpack.c.b16 %v5136, %v5134
      %v5221 = vunpack.c.l.b16 %v4397
      %v5222 = vunpack.c.l.b16 %v4398
      %v5223 = vunpack.c.l.b16 %v4399
      %v5224 = vunpack.c.l.b16 %v4400
      %v5225 = vunpack.c.l.b16 %v4401
      %v5226 = vunpack.c.l.b16 %v4402
      %v5227 = vunpack.c.l.b16 %v4403
      %v5228 = vunpack.c.l.b16 %v4404
      %v5229 = vunpack.c.l.b16 %v4405
      %v5230 = vunpack.c.l.b16 %v4406
      %v5231 = vunpack.c.l.b16 %v4407
      %v5232 = vunpack.c.l.b16 %v4408
      %v5233 = vunpack.c.l.b16 %v4409
      %v5234 = vunpack.c.l.b16 %v4410
      %v5235 = vunpack.c.l.b16 %v4411
      %v5236 = vunpack.c.l.b16 %v4412
      %v5237 = vunpack.c.l.b16 %v4413
      %v5238 = vunpack.c.l.b16 %v4414
      %v5239 = vunpack.c.l.b16 %v4415
      %v5240 = vunpack.c.l.b16 %v4416
      %v5241 = vunpack.c.l.b16 %v4417
      %v5242 = vunpack.c.l.b16 %v4418
      %v5243 = vunpack.c.l.b16 %v4419
      %v5244 = vunpack.c.l.b16 %v4420
      %v5245 = vpack.c.b16 %v5222, %v5221
      %v5246 = vpack.c.b16 %v5224, %v5223
      %v5247 = vpack.c.b16 %v5226, %v5225
      %v5248 = vpack.c.b16 %v5228, %v5227
      %v5249 = vpack.c.b16 %v5230, %v5229
      %v5250 = vpack.c.b16 %v5232, %v5231
      %v5251 = vpack.c.b16 %v5234, %v5233
      %v5252 = vpack.c.b16 %v5236, %v5235
      %v5253 = vpack.c.b16 %v5238, %v5237
      %v5254 = vpack.c.b16 %v5240, %v5239
      %v5255 = vpack.c.b16 %v5242, %v5241
      %v5256 = vpack.c.b16 %v5244, %v5243
      %v5270 = vsel %vm4738, %v5138, 0
      %v5273 = vsel %vm4738, %v5140, 0
      %v5276 = vsel %vm4738, %v5142, 0
      %v5279 = vsel %vm4738, %v5144, 0
      %v5282 = vsel %vm4738, %v5146, 0
      %v5285 = vsel %vm4738, %v5148, 0
      %v5288 = vsel %vm4738, %v5150, 0
      %v5291 = vsel %vm4738, %v5152, 0
      %v5294 = vsel %vm4738, %v5154, 0
      %v5297 = vsel %vm4738, %v5156, 0
      %v5300 = vsel %vm4738, %v5158, 0
      %v5303 = vsel %vm4738, %v5160, 0
      %v5306 = vsel %vm4738, %v5162, 0
      %v5309 = vsel %vm4738, %v5164, 0
      %v5312 = vsel %vm4738, %v5166, 0
      %v5315 = vsel %vm4738, %v5168, 0
      %v5318 = vsel %vm4738, %v5170, 0
      %v5321 = vsel %vm4738, %v5172, 0
      %v5324 = vsel %vm4738, %v5174, 0
      %v5327 = vsel %vm4738, %v5176, 0
      %5329 = vmatpush.bf16.msra.mxu0 %v5252
      %5330 = vmatpush.bf16.msra.mxu0 %v5251
      %5331 = vmatpush.bf16.msra.mxu0 %v5250
      %5332 = vmatpush.bf16.msra.mxu0 %v5249
      %5333 = vmatpush.bf16.msra.mxu0 %v5248
      %5334 = vmatpush.bf16.msra.mxu0 %v5247
      %5335 = vmatpush.bf16.msra.mxu0 %v5246
      %5336 = vmatpush.bf16.msra.mxu0 %v5245
      %5337 = vmatmul.bf16.gmra.mxu0 %v5137
      %v5338 = vpop.f32.mrf.mxu0
      %v5339 = vadd.f32 %v4918, %v5338
      %v5340 = vpop.f32.mrf.mxu0
      %v5341 = vadd.f32 %v4920, %v5340
      %5342 = vmatmul.bf16.gmra.mxu0 %v5139
      %v5343 = vpop.f32.mrf.mxu0
      %v5344 = vadd.f32 %v4923, %v5343
      %v5345 = vpop.f32.mrf.mxu0
      %v5346 = vadd.f32 %v4925, %v5345
      %5347 = vmatmul.bf16.gmra.mxu0 %v5141
      %v5348 = vpop.f32.mrf.mxu0
      %v5349 = vadd.f32 %v4928, %v5348
      %v5350 = vpop.f32.mrf.mxu0
      %v5351 = vadd.f32 %v4930, %v5350
      %5352 = vmatmul.bf16.gmra.mxu0 %v5143
      %v5353 = vpop.f32.mrf.mxu0
      %v5354 = vadd.f32 %v4933, %v5353
      %v5355 = vpop.f32.mrf.mxu0
      %v5356 = vadd.f32 %v4935, %v5355
      %5357 = vmatmul.bf16.gmra.mxu0 %v5145
      %v5358 = vpop.f32.mrf.mxu0
      %v5359 = vadd.f32 %v4938, %v5358
      %v5360 = vpop.f32.mrf.mxu0
      %v5361 = vadd.f32 %v4940, %v5360
      %5362 = vmatmul.bf16.gmra.mxu0 %v5147
      %v5363 = vpop.f32.mrf.mxu0
      %v5364 = vadd.f32 %v4943, %v5363
      %v5365 = vpop.f32.mrf.mxu0
      %v5366 = vadd.f32 %v4945, %v5365
      %5367 = vmatmul.bf16.gmra.mxu0 %v5149
      %v5368 = vpop.f32.mrf.mxu0
      %v5369 = vadd.f32 %v4948, %v5368
      %v5370 = vpop.f32.mrf.mxu0
      %v5371 = vadd.f32 %v4950, %v5370
      %5372 = vmatmul.bf16.gmra.mxu0 %v5151
      %v5373 = vpop.f32.mrf.mxu0
      %v5374 = vadd.f32 %v4953, %v5373
      %v5375 = vpop.f32.mrf.mxu0
      %v5376 = vadd.f32 %v4955, %v5375
      %5377 = vmatmul.bf16.gmra.mxu0 %v5153
      %v5378 = vpop.f32.mrf.mxu0
      %v5379 = vadd.f32 %v4958, %v5378
      %v5380 = vpop.f32.mrf.mxu0
      %v5381 = vadd.f32 %v4960, %v5380
      %5382 = vmatmul.bf16.gmra.mxu0 %v5155
      %v5383 = vpop.f32.mrf.mxu0
      %v5384 = vadd.f32 %v4963, %v5383
      %v5385 = vpop.f32.mrf.mxu0
      %v5386 = vadd.f32 %v4965, %v5385
      %5387 = vmatmul.bf16.gmra.mxu0 %v5157
      %v5388 = vpop.f32.mrf.mxu0
      %v5389 = vadd.f32 %v4968, %v5388
      %v5390 = vpop.f32.mrf.mxu0
      %v5391 = vadd.f32 %v4970, %v5390
      %5392 = vmatmul.bf16.gmra.mxu0 %v5159
      %v5393 = vpop.f32.mrf.mxu0
      %v5394 = vadd.f32 %v4973, %v5393
      %v5395 = vpop.f32.mrf.mxu0
      %v5396 = vadd.f32 %v4975, %v5395
      %5397 = vmatmul.bf16.gmra.mxu0 %v5161
      %v5398 = vpop.f32.mrf.mxu0
      %v5399 = vadd.f32 %v4978, %v5398
      %v5400 = vpop.f32.mrf.mxu0
      %v5401 = vadd.f32 %v4980, %v5400
      %5402 = vmatmul.bf16.gmra.mxu0 %v5163
      %v5403 = vpop.f32.mrf.mxu0
      %v5404 = vadd.f32 %v4983, %v5403
      %v5405 = vpop.f32.mrf.mxu0
      %v5406 = vadd.f32 %v4985, %v5405
      %5407 = vmatmul.bf16.gmra.mxu0 %v5165
      %v5408 = vpop.f32.mrf.mxu0
      %v5409 = vadd.f32 %v4988, %v5408
      %v5410 = vpop.f32.mrf.mxu0
      %v5411 = vadd.f32 %v4990, %v5410
      %5412 = vmatmul.bf16.gmra.mxu0 %v5167
      %v5413 = vpop.f32.mrf.mxu0
      %v5414 = vadd.f32 %v4993, %v5413
      %v5415 = vpop.f32.mrf.mxu0
      %v5416 = vadd.f32 %v4995, %v5415
      %5417 = vmatmul.bf16.gmra.mxu0 %v5169
      %v5418 = vpop.f32.mrf.mxu0
      %v5419 = vadd.f32 %v4998, %v5418
      %v5420 = vpop.f32.mrf.mxu0
      %v5421 = vadd.f32 %v5000, %v5420
      %5422 = vmatmul.bf16.gmra.mxu0 %v5171
      %v5423 = vpop.f32.mrf.mxu0
      %v5424 = vadd.f32 %v5003, %v5423
      %v5425 = vpop.f32.mrf.mxu0
      %v5426 = vadd.f32 %v5005, %v5425
      %5427 = vmatmul.bf16.gmra.mxu0 %v5173
      %v5428 = vpop.f32.mrf.mxu0
      %v5429 = vadd.f32 %v5008, %v5428
      %v5430 = vpop.f32.mrf.mxu0
      %v5431 = vadd.f32 %v5010, %v5430
      %5432 = vmatmul.bf16.gmra.mxu0 %v5175
      %v5433 = vpop.f32.mrf.mxu0
      %v5434 = vadd.f32 %v5013, %v5433
      %v5435 = vpop.f32.mrf.mxu0
      %v5436 = vadd.f32 %v5015, %v5435
      %5437 = vdwg.mxu0
      %5438 = vmatpush.bf16.msra.mxu0 0
      %5439 = vmatpush.bf16.msra.mxu0 0
      %5440 = vmatpush.bf16.msra.mxu0 0
      %5441 = vmatpush.bf16.msra.mxu0 0
      %5442 = vmatpush.bf16.msra.mxu0 %v5256
      %5443 = vmatpush.bf16.msra.mxu0 %v5255
      %5444 = vmatpush.bf16.msra.mxu0 %v5254
      %5445 = vmatpush.bf16.msra.mxu0 %v5253
      %5446 = vmatmul.bf16.gmra.mxu0 %v5270
      %v5447 = vpop.f32.mrf.mxu0
      %v5448 = vadd.f32 %v5339, %v5447
      %v5449 = vpop.f32.mrf.mxu0
      %v5450 = vadd.f32 %v5341, %v5449
      %5451 = vmatmul.bf16.gmra.mxu0 %v5273
      %v5452 = vpop.f32.mrf.mxu0
      %v5453 = vadd.f32 %v5344, %v5452
      %v5454 = vpop.f32.mrf.mxu0
      %v5455 = vadd.f32 %v5346, %v5454
      %5456 = vmatmul.bf16.gmra.mxu0 %v5276
      %v5457 = vpop.f32.mrf.mxu0
      %v5458 = vadd.f32 %v5349, %v5457
      %v5459 = vpop.f32.mrf.mxu0
      %v5460 = vadd.f32 %v5351, %v5459
      %5461 = vmatmul.bf16.gmra.mxu0 %v5279
      %v5462 = vpop.f32.mrf.mxu0
      %v5463 = vadd.f32 %v5354, %v5462
      %v5464 = vpop.f32.mrf.mxu0
      %v5465 = vadd.f32 %v5356, %v5464
      %5466 = vmatmul.bf16.gmra.mxu0 %v5282
      %v5467 = vpop.f32.mrf.mxu0
      %v5468 = vadd.f32 %v5359, %v5467
      %v5469 = vpop.f32.mrf.mxu0
      %v5470 = vadd.f32 %v5361, %v5469
      %5471 = vmatmul.bf16.gmra.mxu0 %v5285
      %v5472 = vpop.f32.mrf.mxu0
      %v5473 = vadd.f32 %v5364, %v5472
      %v5474 = vpop.f32.mrf.mxu0
      %v5475 = vadd.f32 %v5366, %v5474
      %5476 = vmatmul.bf16.gmra.mxu0 %v5288
      %v5477 = vpop.f32.mrf.mxu0
      %v5478 = vadd.f32 %v5369, %v5477
      %v5479 = vpop.f32.mrf.mxu0
      %v5480 = vadd.f32 %v5371, %v5479
      %5481 = vmatmul.bf16.gmra.mxu0 %v5291
      %v5482 = vpop.f32.mrf.mxu0
      %v5483 = vadd.f32 %v5374, %v5482
      %v5484 = vpop.f32.mrf.mxu0
      %v5485 = vadd.f32 %v5376, %v5484
      %5486 = vmatmul.bf16.gmra.mxu0 %v5294
      %v5487 = vpop.f32.mrf.mxu0
      %v5488 = vadd.f32 %v5379, %v5487
      %v5489 = vpop.f32.mrf.mxu0
      %v5490 = vadd.f32 %v5381, %v5489
      %5491 = vmatmul.bf16.gmra.mxu0 %v5297
      %v5492 = vpop.f32.mrf.mxu0
      %v5493 = vadd.f32 %v5384, %v5492
      %v5494 = vpop.f32.mrf.mxu0
      %v5495 = vadd.f32 %v5386, %v5494
      %5496 = vmatmul.bf16.gmra.mxu0 %v5300
      %v5497 = vpop.f32.mrf.mxu0
      %v5498 = vadd.f32 %v5389, %v5497
      %v5499 = vpop.f32.mrf.mxu0
      %v5500 = vadd.f32 %v5391, %v5499
      %5501 = vmatmul.bf16.gmra.mxu0 %v5303
      %v5502 = vpop.f32.mrf.mxu0
      %v5503 = vadd.f32 %v5394, %v5502
      %v5504 = vpop.f32.mrf.mxu0
      %v5505 = vadd.f32 %v5396, %v5504
      %5506 = vmatmul.bf16.gmra.mxu0 %v5306
      %v5507 = vpop.f32.mrf.mxu0
      %v5508 = vadd.f32 %v5399, %v5507
      %v5509 = vpop.f32.mrf.mxu0
      %v5510 = vadd.f32 %v5401, %v5509
      %5511 = vmatmul.bf16.gmra.mxu0 %v5309
      %v5512 = vpop.f32.mrf.mxu0
      %v5513 = vadd.f32 %v5404, %v5512
      %v5514 = vpop.f32.mrf.mxu0
      %v5515 = vadd.f32 %v5406, %v5514
      %5516 = vmatmul.bf16.gmra.mxu0 %v5312
      %v5517 = vpop.f32.mrf.mxu0
      %v5518 = vadd.f32 %v5409, %v5517
      %v5519 = vpop.f32.mrf.mxu0
      %v5520 = vadd.f32 %v5411, %v5519
      %5521 = vmatmul.bf16.gmra.mxu0 %v5315
      %v5522 = vpop.f32.mrf.mxu0
      %v5523 = vadd.f32 %v5414, %v5522
      %v5524 = vpop.f32.mrf.mxu0
      %v5525 = vadd.f32 %v5416, %v5524
      %5526 = vmatmul.bf16.gmra.mxu0 %v5318
      %v5527 = vpop.f32.mrf.mxu0
      %v5528 = vadd.f32 %v5419, %v5527
      %v5529 = vpop.f32.mrf.mxu0
      %v5530 = vadd.f32 %v5421, %v5529
      %5531 = vmatmul.bf16.gmra.mxu0 %v5321
      %v5532 = vpop.f32.mrf.mxu0
      %v5533 = vadd.f32 %v5424, %v5532
      %v5534 = vpop.f32.mrf.mxu0
      %v5535 = vadd.f32 %v5426, %v5534
      %5536 = vmatmul.bf16.gmra.mxu0 %v5324
      %v5537 = vpop.f32.mrf.mxu0
      %v5538 = vadd.f32 %v5429, %v5537
      %v5539 = vpop.f32.mrf.mxu0
      %v5540 = vadd.f32 %v5431, %v5539
      %5541 = vmatmul.bf16.gmra.mxu0 %v5327
      %v5542 = vpop.f32.mrf.mxu0
      %v5543 = vadd.f32 %v5434, %v5542
      %v5544 = vpop.f32.mrf.mxu0
      %v5545 = vadd.f32 %v5436, %v5544
      %5546 = vdwg.mxu0
      %s5547 = scalar_lea.vmem [#allocation3], 80
      %v5548 = vld [vmem:[%s5547] sm:$0xff]
      %v5549 = vld [vmem:[%s5547 + $0x8] sm:$0xff]
      %v5550 = vld [vmem:[%s5547 + $0x10] sm:$0xff]
      %v5551 = vld [vmem:[%s5547 + $0x18] sm:$0xff]
      %v5552 = vld [vmem:[%s5547 + $0x20] sm:$0xff]
      %v5553 = vld [vmem:[%s5547 + $0x28] sm:$0xff]
      %v5554 = vld [vmem:[%s5547 + $0x30] sm:$0xff]
      %v5555 = vld [vmem:[%s5547 + $0x38] sm:$0xff]
      %v5556 = vld [vmem:[%s5547 + $0x40] sm:$0xff]
      %v5557 = vld [vmem:[%s5547 + $0x48] sm:$0xff]
      %v5558 = vld [vmem:[%s5547 + $0x50] sm:$0xff]
      %v5559 = vld [vmem:[%s5547 + $0x58] sm:$0xff]
      %v5560 = vld [vmem:[%s5547 + $0x60] sm:$0xff]
      %v5561 = vld [vmem:[%s5547 + $0x68] sm:$0xff]
      %v5562 = vld [vmem:[%s5547 + $0x70] sm:$0xff]
      %v5563 = vld [vmem:[%s5547 + $0x78] sm:$0xff]
      %v5564 = vld [vmem:[%s5547 + $0x80] sm:$0xff]
      %v5565 = vld [vmem:[%s5547 + $0x88] sm:$0xff]
      %v5566 = vld [vmem:[%s5547 + $0x90] sm:$0xff]
      %v5567 = vld [vmem:[%s5547 + $0x98] sm:$0xff]
      %v5568 = vld [vmem:[%s5547 + $0xa0] sm:$0xff]
      %v5569 = vld [vmem:[%s5547 + $0xa8] sm:$0xff]
      %v5570 = vld [vmem:[%s5547 + $0xb0] sm:$0xff]
      %v5571 = vld [vmem:[%s5547 + $0xb8] sm:$0xff]
      %v5572 = vld [vmem:[%s5547 + $0xc0] sm:$0xff]
      %v5573 = vld [vmem:[%s5547 + $0xc8] sm:$0xff]
      %v5574 = vld [vmem:[%s5547 + $0xd0] sm:$0xff]
      %v5575 = vld [vmem:[%s5547 + $0xd8] sm:$0xff]
      %v5576 = vld [vmem:[%s5547 + $0xe0] sm:$0xff]
      %v5577 = vld [vmem:[%s5547 + $0xe8] sm:$0xff]
      %v5578 = vld [vmem:[%s5547 + $0xf0] sm:$0xff]
      %v5579 = vld [vmem:[%s5547 + $0xf8] sm:$0xff]
      %v5580 = vld [vmem:[%s5547 + $0x100] sm:$0xff]
      %v5581 = vld [vmem:[%s5547 + $0x108] sm:$0xff]
      %v5582 = vld [vmem:[%s5547 + $0x110] sm:$0xff]
      %v5583 = vld [vmem:[%s5547 + $0x118] sm:$0xff]
      %v5584 = vld [vmem:[%s5547 + $0x120] sm:$0xff]
      %v5585 = vld [vmem:[%s5547 + $0x128] sm:$0xff]
      %v5586 = vld [vmem:[%s5547 + $0x130] sm:$0xff]
      %v5587 = vld [vmem:[%s5547 + $0x138] sm:$0xff]
      %s5588 = scalar_lea.vmem %s3, 192
      %v5589 = vld [vmem:[%s5588] sm:$0xf]
      %v5590 = vld [vmem:[%s5588 + $0x4] sm:$0xf]
      %v5591 = vld [vmem:[%s5588 + $0x8] sm:$0xf]
      %v5592 = vld [vmem:[%s5588 + $0xc] sm:$0xf]
      %v5593 = vld [vmem:[%s5588 + $0x10] sm:$0xf]
      %v5594 = vld [vmem:[%s5588 + $0x14] sm:$0xf]
      %v5595 = vld [vmem:[%s5588 + $0x18] sm:$0xf]
      %v5596 = vld [vmem:[%s5588 + $0x1c] sm:$0xf]
      %v5597 = vld [vmem:[%s5588 + $0x20] sm:$0xf]
      %v5598 = vld [vmem:[%s5588 + $0x24] sm:$0xf]
      %v5599 = vld [vmem:[%s5588 + $0x28] sm:$0xf]
      %v5600 = vld [vmem:[%s5588 + $0x2c] sm:$0xf]
      %v5601 = vld [vmem:[%s5588 + $0x30] sm:$0xf]
      %v5602 = vld [vmem:[%s5588 + $0x34] sm:$0xf]
      %v5603 = vld [vmem:[%s5588 + $0x38] sm:$0xf]
      %v5604 = vld [vmem:[%s5588 + $0x3c] sm:$0xf]
      %v5605 = vld [vmem:[%s5588 + $0x40] sm:$0xf]
      %v5606 = vld [vmem:[%s5588 + $0x44] sm:$0xf]
      %v5607 = vld [vmem:[%s5588 + $0x48] sm:$0xf]
      %v5608 = vld [vmem:[%s5588 + $0x4c] sm:$0xf]
      %v5609 = vld [vmem:[%s5588 + $0x50] sm:$0xf]
      %v5610 = vld [vmem:[%s5588 + $0x54] sm:$0xf]
      %v5611 = vld [vmem:[%s5588 + $0x58] sm:$0xf]
      %v5612 = vld [vmem:[%s5588 + $0x5c] sm:$0xf]
      %v5653 = vunpack.c.l.b16 %v5548
      %v5654 = vunpack.c.h.b16 %v5548
      %v5655 = vunpack.c.l.b16 %v5549
      %v5656 = vunpack.c.h.b16 %v5549
      %v5657 = vunpack.c.l.b16 %v5550
      %v5658 = vunpack.c.h.b16 %v5550
      %v5659 = vunpack.c.l.b16 %v5551
      %v5660 = vunpack.c.h.b16 %v5551
      %v5661 = vunpack.c.l.b16 %v5552
      %v5662 = vunpack.c.h.b16 %v5552
      %v5663 = vunpack.c.l.b16 %v5553
      %v5664 = vunpack.c.h.b16 %v5553
      %v5665 = vunpack.c.l.b16 %v5554
      %v5666 = vunpack.c.h.b16 %v5554
      %v5667 = vunpack.c.l.b16 %v5555
      %v5668 = vunpack.c.h.b16 %v5555
      %v5669 = vunpack.c.l.b16 %v5556
      %v5670 = vunpack.c.h.b16 %v5556
      %v5671 = vunpack.c.l.b16 %v5557
      %v5672 = vunpack.c.h.b16 %v5557
      %v5673 = vunpack.c.l.b16 %v5558
      %v5674 = vunpack.c.h.b16 %v5558
      %v5675 = vunpack.c.l.b16 %v5559
      %v5676 = vunpack.c.h.b16 %v5559
      %v5677 = vunpack.c.l.b16 %v5560
      %v5678 = vunpack.c.h.b16 %v5560
      %v5679 = vunpack.c.l.b16 %v5561
      %v5680 = vunpack.c.h.b16 %v5561
      %v5681 = vunpack.c.l.b16 %v5562
      %v5682 = vunpack.c.h.b16 %v5562
      %v5683 = vunpack.c.l.b16 %v5563
      %v5684 = vunpack.c.h.b16 %v5563
      %v5685 = vunpack.c.l.b16 %v5564
      %v5686 = vunpack.c.h.b16 %v5564
      %v5687 = vunpack.c.l.b16 %v5565
      %v5688 = vunpack.c.h.b16 %v5565
      %v5689 = vunpack.c.l.b16 %v5566
      %v5690 = vunpack.c.h.b16 %v5566
      %v5691 = vunpack.c.l.b16 %v5567
      %v5692 = vunpack.c.h.b16 %v5567
      %v5693 = vunpack.c.l.b16 %v5568
      %v5694 = vunpack.c.h.b16 %v5568
      %v5695 = vunpack.c.l.b16 %v5569
      %v5696 = vunpack.c.h.b16 %v5569
      %v5697 = vunpack.c.l.b16 %v5570
      %v5698 = vunpack.c.h.b16 %v5570
      %v5699 = vunpack.c.l.b16 %v5571
      %v5700 = vunpack.c.h.b16 %v5571
      %v5701 = vunpack.c.l.b16 %v5572
      %v5702 = vunpack.c.h.b16 %v5572
      %v5703 = vunpack.c.l.b16 %v5573
      %v5704 = vunpack.c.h.b16 %v5573
      %v5705 = vunpack.c.l.b16 %v5574
      %v5706 = vunpack.c.h.b16 %v5574
      %v5707 = vunpack.c.l.b16 %v5575
      %v5708 = vunpack.c.h.b16 %v5575
      %v5709 = vunpack.c.l.b16 %v5576
      %v5710 = vunpack.c.h.b16 %v5576
      %v5711 = vunpack.c.l.b16 %v5577
      %v5712 = vunpack.c.h.b16 %v5577
      %v5713 = vunpack.c.l.b16 %v5578
      %v5714 = vunpack.c.h.b16 %v5578
      %v5715 = vunpack.c.l.b16 %v5579
      %v5716 = vunpack.c.h.b16 %v5579
      %v5717 = vunpack.c.l.b16 %v5580
      %v5718 = vunpack.c.h.b16 %v5580
      %v5719 = vunpack.c.l.b16 %v5581
      %v5720 = vunpack.c.h.b16 %v5581
      %v5721 = vunpack.c.l.b16 %v5582
      %v5722 = vunpack.c.h.b16 %v5582
      %v5723 = vunpack.c.l.b16 %v5583
      %v5724 = vunpack.c.h.b16 %v5583
      %v5725 = vunpack.c.l.b16 %v5584
      %v5726 = vunpack.c.h.b16 %v5584
      %v5727 = vunpack.c.l.b16 %v5585
      %v5728 = vunpack.c.h.b16 %v5585
      %v5729 = vunpack.c.l.b16 %v5586
      %v5730 = vunpack.c.h.b16 %v5586
      %v5731 = vunpack.c.l.b16 %v5587
      %v5732 = vunpack.c.h.b16 %v5587
      %v5733 = vpack.c.b16 %v5655, %v5653
      %v5734 = vpack.c.b16 %v5656, %v5654
      %v5735 = vpack.c.b16 %v5659, %v5657
      %v5736 = vpack.c.b16 %v5660, %v5658
      %v5737 = vpack.c.b16 %v5663, %v5661
      %v5738 = vpack.c.b16 %v5664, %v5662
      %v5739 = vpack.c.b16 %v5667, %v5665
      %v5740 = vpack.c.b16 %v5668, %v5666
      %v5741 = vpack.c.b16 %v5671, %v5669
      %v5742 = vpack.c.b16 %v5672, %v5670
      %v5743 = vpack.c.b16 %v5675, %v5673
      %v5744 = vpack.c.b16 %v5676, %v5674
      %v5745 = vpack.c.b16 %v5679, %v5677
      %v5746 = vpack.c.b16 %v5680, %v5678
      %v5747 = vpack.c.b16 %v5683, %v5681
      %v5748 = vpack.c.b16 %v5684, %v5682
      %v5749 = vpack.c.b16 %v5687, %v5685
      %v5750 = vpack.c.b16 %v5688, %v5686
      %v5751 = vpack.c.b16 %v5691, %v5689
      %v5752 = vpack.c.b16 %v5692, %v5690
      %v5753 = vpack.c.b16 %v5695, %v5693
      %v5754 = vpack.c.b16 %v5696, %v5694
      %v5755 = vpack.c.b16 %v5699, %v5697
      %v5756 = vpack.c.b16 %v5700, %v5698
      %v5757 = vpack.c.b16 %v5703, %v5701
      %v5758 = vpack.c.b16 %v5704, %v5702
      %v5759 = vpack.c.b16 %v5707, %v5705
      %v5760 = vpack.c.b16 %v5708, %v5706
      %v5761 = vpack.c.b16 %v5711, %v5709
      %v5762 = vpack.c.b16 %v5712, %v5710
      %v5763 = vpack.c.b16 %v5715, %v5713
      %v5764 = vpack.c.b16 %v5716, %v5714
      %v5765 = vpack.c.b16 %v5719, %v5717
      %v5766 = vpack.c.b16 %v5720, %v5718
      %v5767 = vpack.c.b16 %v5723, %v5721
      %v5768 = vpack.c.b16 %v5724, %v5722
      %v5769 = vpack.c.b16 %v5727, %v5725
      %v5770 = vpack.c.b16 %v5728, %v5726
      %v5771 = vpack.c.b16 %v5731, %v5729
      %v5772 = vpack.c.b16 %v5732, %v5730
      %v5817 = vunpack.c.l.b16 %v5589
      %v5818 = vunpack.c.l.b16 %v5590
      %v5819 = vunpack.c.l.b16 %v5591
      %v5820 = vunpack.c.l.b16 %v5592
      %v5821 = vunpack.c.l.b16 %v5593
      %v5822 = vunpack.c.l.b16 %v5594
      %v5823 = vunpack.c.l.b16 %v5595
      %v5824 = vunpack.c.l.b16 %v5596
      %v5825 = vunpack.c.l.b16 %v5597
      %v5826 = vunpack.c.l.b16 %v5598
      %v5827 = vunpack.c.l.b16 %v5599
      %v5828 = vunpack.c.l.b16 %v5600
      %v5829 = vunpack.c.l.b16 %v5601
      %v5830 = vunpack.c.l.b16 %v5602
      %v5831 = vunpack.c.l.b16 %v5603
      %v5832 = vunpack.c.l.b16 %v5604
      %v5833 = vunpack.c.l.b16 %v5605
      %v5834 = vunpack.c.l.b16 %v5606
      %v5835 = vunpack.c.l.b16 %v5607
      %v5836 = vunpack.c.l.b16 %v5608
      %v5837 = vunpack.c.l.b16 %v5609
      %v5838 = vunpack.c.l.b16 %v5610
      %v5839 = vunpack.c.l.b16 %v5611
      %v5840 = vunpack.c.l.b16 %v5612
      %v5841 = vpack.c.b16 %v5818, %v5817
      %v5842 = vpack.c.b16 %v5820, %v5819
      %v5843 = vpack.c.b16 %v5822, %v5821
      %v5844 = vpack.c.b16 %v5824, %v5823
      %v5845 = vpack.c.b16 %v5826, %v5825
      %v5846 = vpack.c.b16 %v5828, %v5827
      %v5847 = vpack.c.b16 %v5830, %v5829
      %v5848 = vpack.c.b16 %v5832, %v5831
      %v5849 = vpack.c.b16 %v5834, %v5833
      %v5850 = vpack.c.b16 %v5836, %v5835
      %v5851 = vpack.c.b16 %v5838, %v5837
      %v5852 = vpack.c.b16 %v5840, %v5839
      %v5866 = vsel %vm4738, %v5734, 0
      %v5869 = vsel %vm4738, %v5736, 0
      %v5872 = vsel %vm4738, %v5738, 0
      %v5875 = vsel %vm4738, %v5740, 0
      %v5878 = vsel %vm4738, %v5742, 0
      %v5881 = vsel %vm4738, %v5744, 0
      %v5884 = vsel %vm4738, %v5746, 0
      %v5887 = vsel %vm4738, %v5748, 0
      %v5890 = vsel %vm4738, %v5750, 0
      %v5893 = vsel %vm4738, %v5752, 0
      %v5896 = vsel %vm4738, %v5754, 0
      %v5899 = vsel %vm4738, %v5756, 0
      %v5902 = vsel %vm4738, %v5758, 0
      %v5905 = vsel %vm4738, %v5760, 0
      %v5908 = vsel %vm4738, %v5762, 0
      %v5911 = vsel %vm4738, %v5764, 0
      %v5914 = vsel %vm4738, %v5766, 0
      %v5917 = vsel %vm4738, %v5768, 0
      %v5920 = vsel %vm4738, %v5770, 0
      %v5923 = vsel %vm4738, %v5772, 0
      %5925 = vmatpush.bf16.msra.mxu0 %v5848
      %5926 = vmatpush.bf16.msra.mxu0 %v5847
      %5927 = vmatpush.bf16.msra.mxu0 %v5846
      %5928 = vmatpush.bf16.msra.mxu0 %v5845
      %5929 = vmatpush.bf16.msra.mxu0 %v5844
      %5930 = vmatpush.bf16.msra.mxu0 %v5843
      %5931 = vmatpush.bf16.msra.mxu0 %v5842
      %5932 = vmatpush.bf16.msra.mxu0 %v5841
      %5933 = vmatmul.bf16.gmra.mxu0 %v5733
      %v5934 = vpop.f32.mrf.mxu0
      %v5935 = vadd.f32 0.0, %v5934
      %v5936 = vpop.f32.mrf.mxu0
      %v5937 = vadd.f32 0.0, %v5936
      %5938 = vmatmul.bf16.gmra.mxu0 %v5735
      %v5939 = vpop.f32.mrf.mxu0
      %v5940 = vadd.f32 0.0, %v5939
      %v5941 = vpop.f32.mrf.mxu0
      %v5942 = vadd.f32 0.0, %v5941
      %5943 = vmatmul.bf16.gmra.mxu0 %v5737
      %v5944 = vpop.f32.mrf.mxu0
      %v5945 = vadd.f32 0.0, %v5944
      %v5946 = vpop.f32.mrf.mxu0
      %v5947 = vadd.f32 0.0, %v5946
      %5948 = vmatmul.bf16.gmra.mxu0 %v5739
      %v5949 = vpop.f32.mrf.mxu0
      %v5950 = vadd.f32 0.0, %v5949
      %v5951 = vpop.f32.mrf.mxu0
      %v5952 = vadd.f32 0.0, %v5951
      %5953 = vmatmul.bf16.gmra.mxu0 %v5741
      %v5954 = vpop.f32.mrf.mxu0
      %v5955 = vadd.f32 0.0, %v5954
      %v5956 = vpop.f32.mrf.mxu0
      %v5957 = vadd.f32 0.0, %v5956
      %5958 = vmatmul.bf16.gmra.mxu0 %v5743
      %v5959 = vpop.f32.mrf.mxu0
      %v5960 = vadd.f32 0.0, %v5959
      %v5961 = vpop.f32.mrf.mxu0
      %v5962 = vadd.f32 0.0, %v5961
      %5963 = vmatmul.bf16.gmra.mxu0 %v5745
      %v5964 = vpop.f32.mrf.mxu0
      %v5965 = vadd.f32 0.0, %v5964
      %v5966 = vpop.f32.mrf.mxu0
      %v5967 = vadd.f32 0.0, %v5966
      %5968 = vmatmul.bf16.gmra.mxu0 %v5747
      %v5969 = vpop.f32.mrf.mxu0
      %v5970 = vadd.f32 0.0, %v5969
      %v5971 = vpop.f32.mrf.mxu0
      %v5972 = vadd.f32 0.0, %v5971
      %5973 = vmatmul.bf16.gmra.mxu0 %v5749
      %v5974 = vpop.f32.mrf.mxu0
      %v5975 = vadd.f32 0.0, %v5974
      %v5976 = vpop.f32.mrf.mxu0
      %v5977 = vadd.f32 0.0, %v5976
      %5978 = vmatmul.bf16.gmra.mxu0 %v5751
      %v5979 = vpop.f32.mrf.mxu0
      %v5980 = vadd.f32 0.0, %v5979
      %v5981 = vpop.f32.mrf.mxu0
      %v5982 = vadd.f32 0.0, %v5981
      %5983 = vmatmul.bf16.gmra.mxu0 %v5753
      %v5984 = vpop.f32.mrf.mxu0
      %v5985 = vadd.f32 0.0, %v5984
      %v5986 = vpop.f32.mrf.mxu0
      %v5987 = vadd.f32 0.0, %v5986
      %5988 = vmatmul.bf16.gmra.mxu0 %v5755
      %v5989 = vpop.f32.mrf.mxu0
      %v5990 = vadd.f32 0.0, %v5989
      %v5991 = vpop.f32.mrf.mxu0
      %v5992 = vadd.f32 0.0, %v5991
      %5993 = vmatmul.bf16.gmra.mxu0 %v5757
      %v5994 = vpop.f32.mrf.mxu0
      %v5995 = vadd.f32 0.0, %v5994
      %v5996 = vpop.f32.mrf.mxu0
      %v5997 = vadd.f32 0.0, %v5996
      %5998 = vmatmul.bf16.gmra.mxu0 %v5759
      %v5999 = vpop.f32.mrf.mxu0
      %v6000 = vadd.f32 0.0, %v5999
      %v6001 = vpop.f32.mrf.mxu0
      %v6002 = vadd.f32 0.0, %v6001
      %6003 = vmatmul.bf16.gmra.mxu0 %v5761
      %v6004 = vpop.f32.mrf.mxu0
      %v6005 = vadd.f32 0.0, %v6004
      %v6006 = vpop.f32.mrf.mxu0
      %v6007 = vadd.f32 0.0, %v6006
      %6008 = vmatmul.bf16.gmra.mxu0 %v5763
      %v6009 = vpop.f32.mrf.mxu0
      %v6010 = vadd.f32 0.0, %v6009
      %v6011 = vpop.f32.mrf.mxu0
      %v6012 = vadd.f32 0.0, %v6011
      %6013 = vmatmul.bf16.gmra.mxu0 %v5765
      %v6014 = vpop.f32.mrf.mxu0
      %v6015 = vadd.f32 0.0, %v6014
      %v6016 = vpop.f32.mrf.mxu0
      %v6017 = vadd.f32 0.0, %v6016
      %6018 = vmatmul.bf16.gmra.mxu0 %v5767
      %v6019 = vpop.f32.mrf.mxu0
      %v6020 = vadd.f32 0.0, %v6019
      %v6021 = vpop.f32.mrf.mxu0
      %v6022 = vadd.f32 0.0, %v6021
      %6023 = vmatmul.bf16.gmra.mxu0 %v5769
      %v6024 = vpop.f32.mrf.mxu0
      %v6025 = vadd.f32 0.0, %v6024
      %v6026 = vpop.f32.mrf.mxu0
      %v6027 = vadd.f32 0.0, %v6026
      %6028 = vmatmul.bf16.gmra.mxu0 %v5771
      %v6029 = vpop.f32.mrf.mxu0
      %v6030 = vadd.f32 0.0, %v6029
      %v6031 = vpop.f32.mrf.mxu0
      %v6032 = vadd.f32 0.0, %v6031
      %6033 = vdwg.mxu0
      %6034 = vmatpush.bf16.msra.mxu0 0
      %6035 = vmatpush.bf16.msra.mxu0 0
      %6036 = vmatpush.bf16.msra.mxu0 0
      %6037 = vmatpush.bf16.msra.mxu0 0
      %6038 = vmatpush.bf16.msra.mxu0 %v5852
      %6039 = vmatpush.bf16.msra.mxu0 %v5851
      %6040 = vmatpush.bf16.msra.mxu0 %v5850
      %6041 = vmatpush.bf16.msra.mxu0 %v5849
      %6042 = vmatmul.bf16.gmra.mxu0 %v5866
      %v6043 = vpop.f32.mrf.mxu0
      %v6044 = vadd.f32 %v5935, %v6043
      %v6045 = vpop.f32.mrf.mxu0
      %v6046 = vadd.f32 %v5937, %v6045
      %6047 = vmatmul.bf16.gmra.mxu0 %v5869
      %v6048 = vpop.f32.mrf.mxu0
      %v6049 = vadd.f32 %v5940, %v6048
      %v6050 = vpop.f32.mrf.mxu0
      %v6051 = vadd.f32 %v5942, %v6050
      %6052 = vmatmul.bf16.gmra.mxu0 %v5872
      %v6053 = vpop.f32.mrf.mxu0
      %v6054 = vadd.f32 %v5945, %v6053
      %v6055 = vpop.f32.mrf.mxu0
      %v6056 = vadd.f32 %v5947, %v6055
      %6057 = vmatmul.bf16.gmra.mxu0 %v5875
      %v6058 = vpop.f32.mrf.mxu0
      %v6059 = vadd.f32 %v5950, %v6058
      %v6060 = vpop.f32.mrf.mxu0
      %v6061 = vadd.f32 %v5952, %v6060
      %6062 = vmatmul.bf16.gmra.mxu0 %v5878
      %v6063 = vpop.f32.mrf.mxu0
      %v6064 = vadd.f32 %v5955, %v6063
      %v6065 = vpop.f32.mrf.mxu0
      %v6066 = vadd.f32 %v5957, %v6065
      %6067 = vmatmul.bf16.gmra.mxu0 %v5881
      %v6068 = vpop.f32.mrf.mxu0
      %v6069 = vadd.f32 %v5960, %v6068
      %v6070 = vpop.f32.mrf.mxu0
      %v6071 = vadd.f32 %v5962, %v6070
      %6072 = vmatmul.bf16.gmra.mxu0 %v5884
      %v6073 = vpop.f32.mrf.mxu0
      %v6074 = vadd.f32 %v5965, %v6073
      %v6075 = vpop.f32.mrf.mxu0
      %v6076 = vadd.f32 %v5967, %v6075
      %6077 = vmatmul.bf16.gmra.mxu0 %v5887
      %v6078 = vpop.f32.mrf.mxu0
      %v6079 = vadd.f32 %v5970, %v6078
      %v6080 = vpop.f32.mrf.mxu0
      %v6081 = vadd.f32 %v5972, %v6080
      %6082 = vmatmul.bf16.gmra.mxu0 %v5890
      %v6083 = vpop.f32.mrf.mxu0
      %v6084 = vadd.f32 %v5975, %v6083
      %v6085 = vpop.f32.mrf.mxu0
      %v6086 = vadd.f32 %v5977, %v6085
      %6087 = vmatmul.bf16.gmra.mxu0 %v5893
      %v6088 = vpop.f32.mrf.mxu0
      %v6089 = vadd.f32 %v5980, %v6088
      %v6090 = vpop.f32.mrf.mxu0
      %v6091 = vadd.f32 %v5982, %v6090
      %6092 = vmatmul.bf16.gmra.mxu0 %v5896
      %v6093 = vpop.f32.mrf.mxu0
      %v6094 = vadd.f32 %v5985, %v6093
      %v6095 = vpop.f32.mrf.mxu0
      %v6096 = vadd.f32 %v5987, %v6095
      %6097 = vmatmul.bf16.gmra.mxu0 %v5899
      %v6098 = vpop.f32.mrf.mxu0
      %v6099 = vadd.f32 %v5990, %v6098
      %v6100 = vpop.f32.mrf.mxu0
      %v6101 = vadd.f32 %v5992, %v6100
      %6102 = vmatmul.bf16.gmra.mxu0 %v5902
      %v6103 = vpop.f32.mrf.mxu0
      %v6104 = vadd.f32 %v5995, %v6103
      %v6105 = vpop.f32.mrf.mxu0
      %v6106 = vadd.f32 %v5997, %v6105
      %6107 = vmatmul.bf16.gmra.mxu0 %v5905
      %v6108 = vpop.f32.mrf.mxu0
      %v6109 = vadd.f32 %v6000, %v6108
      %v6110 = vpop.f32.mrf.mxu0
      %v6111 = vadd.f32 %v6002, %v6110
      %6112 = vmatmul.bf16.gmra.mxu0 %v5908
      %v6113 = vpop.f32.mrf.mxu0
      %v6114 = vadd.f32 %v6005, %v6113
      %v6115 = vpop.f32.mrf.mxu0
      %v6116 = vadd.f32 %v6007, %v6115
      %6117 = vmatmul.bf16.gmra.mxu0 %v5911
      %v6118 = vpop.f32.mrf.mxu0
      %v6119 = vadd.f32 %v6010, %v6118
      %v6120 = vpop.f32.mrf.mxu0
      %v6121 = vadd.f32 %v6012, %v6120
      %6122 = vmatmul.bf16.gmra.mxu0 %v5914
      %v6123 = vpop.f32.mrf.mxu0
      %v6124 = vadd.f32 %v6015, %v6123
      %v6125 = vpop.f32.mrf.mxu0
      %v6126 = vadd.f32 %v6017, %v6125
      %6127 = vmatmul.bf16.gmra.mxu0 %v5917
      %v6128 = vpop.f32.mrf.mxu0
      %v6129 = vadd.f32 %v6020, %v6128
      %v6130 = vpop.f32.mrf.mxu0
      %v6131 = vadd.f32 %v6022, %v6130
      %6132 = vmatmul.bf16.gmra.mxu0 %v5920
      %v6133 = vpop.f32.mrf.mxu0
      %v6134 = vadd.f32 %v6025, %v6133
      %v6135 = vpop.f32.mrf.mxu0
      %v6136 = vadd.f32 %v6027, %v6135
      %6137 = vmatmul.bf16.gmra.mxu0 %v5923
      %v6138 = vpop.f32.mrf.mxu0
      %v6139 = vadd.f32 %v6030, %v6138
      %v6140 = vpop.f32.mrf.mxu0
      %v6141 = vadd.f32 %v6032, %v6140
      %6142 = vdwg.mxu0
      %v6143 = vadd.f32 %v5448, %v6044
      %v6144 = vadd.f32 %v5450, %v6046
      %v6145 = vadd.f32 %v5453, %v6049
      %v6146 = vadd.f32 %v5455, %v6051
      %v6147 = vadd.f32 %v5458, %v6054
      %v6148 = vadd.f32 %v5460, %v6056
      %v6149 = vadd.f32 %v5463, %v6059
      %v6150 = vadd.f32 %v5465, %v6061
      %v6151 = vadd.f32 %v5468, %v6064
      %v6152 = vadd.f32 %v5470, %v6066
      %v6153 = vadd.f32 %v5473, %v6069
      %v6154 = vadd.f32 %v5475, %v6071
      %v6155 = vadd.f32 %v5478, %v6074
      %v6156 = vadd.f32 %v5480, %v6076
      %v6157 = vadd.f32 %v5483, %v6079
      %v6158 = vadd.f32 %v5485, %v6081
      %v6159 = vadd.f32 %v5488, %v6084
      %v6160 = vadd.f32 %v5490, %v6086
      %v6161 = vadd.f32 %v5493, %v6089
      %v6162 = vadd.f32 %v5495, %v6091
      %v6163 = vadd.f32 %v5498, %v6094
      %v6164 = vadd.f32 %v5500, %v6096
      %v6165 = vadd.f32 %v5503, %v6099
      %v6166 = vadd.f32 %v5505, %v6101
      %v6167 = vadd.f32 %v5508, %v6104
      %v6168 = vadd.f32 %v5510, %v6106
      %v6169 = vadd.f32 %v5513, %v6109
      %v6170 = vadd.f32 %v5515, %v6111
      %v6171 = vadd.f32 %v5518, %v6114
      %v6172 = vadd.f32 %v5520, %v6116
      %v6173 = vadd.f32 %v5523, %v6119
      %v6174 = vadd.f32 %v5525, %v6121
      %v6175 = vadd.f32 %v5528, %v6124
      %v6176 = vadd.f32 %v5530, %v6126
      %v6177 = vadd.f32 %v5533, %v6129
      %v6178 = vadd.f32 %v5535, %v6131
      %v6179 = vadd.f32 %v5538, %v6134
      %v6180 = vadd.f32 %v5540, %v6136
      %v6181 = vadd.f32 %v5543, %v6139
      %v6182 = vadd.f32 %v5545, %v6141
      %v6183 = vld [vmem:[%s4] sm:$0x1]
      %v6185 = vperm.slane %v6183, 0
      %v6187 = vadd.f32 %v6143, %v6185
      %v6188 = vadd.f32 %v6144, %v6185
      %v6189 = vadd.f32 %v6145, %v6185
      %v6190 = vadd.f32 %v6146, %v6185
      %v6191 = vadd.f32 %v6147, %v6185
      %v6192 = vadd.f32 %v6148, %v6185
      %v6193 = vadd.f32 %v6149, %v6185
      %v6194 = vadd.f32 %v6150, %v6185
      %v6195 = vadd.f32 %v6151, %v6185
      %v6196 = vadd.f32 %v6152, %v6185
      %v6197 = vadd.f32 %v6153, %v6185
      %v6198 = vadd.f32 %v6154, %v6185
      %v6199 = vadd.f32 %v6155, %v6185
      %v6200 = vadd.f32 %v6156, %v6185
      %v6201 = vadd.f32 %v6157, %v6185
      %v6202 = vadd.f32 %v6158, %v6185
      %v6203 = vadd.f32 %v6159, %v6185
      %v6204 = vadd.f32 %v6160, %v6185
      %v6205 = vadd.f32 %v6161, %v6185
      %v6206 = vadd.f32 %v6162, %v6185
      %v6207 = vadd.f32 %v6163, %v6185
      %v6208 = vadd.f32 %v6164, %v6185
      %v6209 = vadd.f32 %v6165, %v6185
      %v6210 = vadd.f32 %v6166, %v6185
      %v6211 = vadd.f32 %v6167, %v6185
      %v6212 = vadd.f32 %v6168, %v6185
      %v6213 = vadd.f32 %v6169, %v6185
      %v6214 = vadd.f32 %v6170, %v6185
      %v6215 = vadd.f32 %v6171, %v6185
      %v6216 = vadd.f32 %v6172, %v6185
      %v6217 = vadd.f32 %v6173, %v6185
      %v6218 = vadd.f32 %v6174, %v6185
      %v6219 = vadd.f32 %v6175, %v6185
      %v6220 = vadd.f32 %v6176, %v6185
      %v6221 = vadd.f32 %v6177, %v6185
      %v6222 = vadd.f32 %v6178, %v6185
      %v6223 = vadd.f32 %v6179, %v6185
      %v6224 = vadd.f32 %v6180, %v6185
      %v6225 = vadd.f32 %v6181, %v6185
      %v6226 = vadd.f32 %v6182, %v6185
      %v6227 = vmax.f32 %v6187, 0.0
      %v6228 = vmax.f32 %v6188, 0.0
      %v6229 = vmax.f32 %v6189, 0.0
      %v6230 = vmax.f32 %v6190, 0.0
      %v6231 = vmax.f32 %v6191, 0.0
      %v6232 = vmax.f32 %v6192, 0.0
      %v6233 = vmax.f32 %v6193, 0.0
      %v6234 = vmax.f32 %v6194, 0.0
      %v6235 = vmax.f32 %v6195, 0.0
      %v6236 = vmax.f32 %v6196, 0.0
      %v6237 = vmax.f32 %v6197, 0.0
      %v6238 = vmax.f32 %v6198, 0.0
      %v6239 = vmax.f32 %v6199, 0.0
      %v6240 = vmax.f32 %v6200, 0.0
      %v6241 = vmax.f32 %v6201, 0.0
      %v6242 = vmax.f32 %v6202, 0.0
      %v6243 = vmax.f32 %v6203, 0.0
      %v6244 = vmax.f32 %v6204, 0.0
      %v6245 = vmax.f32 %v6205, 0.0
      %v6246 = vmax.f32 %v6206, 0.0
      %v6247 = vmax.f32 %v6207, 0.0
      %v6248 = vmax.f32 %v6208, 0.0
      %v6249 = vmax.f32 %v6209, 0.0
      %v6250 = vmax.f32 %v6210, 0.0
      %v6251 = vmax.f32 %v6211, 0.0
      %v6252 = vmax.f32 %v6212, 0.0
      %v6253 = vmax.f32 %v6213, 0.0
      %v6254 = vmax.f32 %v6214, 0.0
      %v6255 = vmax.f32 %v6215, 0.0
      %v6256 = vmax.f32 %v6216, 0.0
      %v6257 = vmax.f32 %v6217, 0.0
      %v6258 = vmax.f32 %v6218, 0.0
      %v6259 = vmax.f32 %v6219, 0.0
      %v6260 = vmax.f32 %v6220, 0.0
      %v6261 = vmax.f32 %v6221, 0.0
      %v6262 = vmax.f32 %v6222, 0.0
      %v6263 = vmax.f32 %v6223, 0.0
      %v6264 = vmax.f32 %v6224, 0.0
      %v6265 = vmax.f32 %v6225, 0.0
      %v6266 = vmax.f32 %v6226, 0.0
      %v6267 = vmax.f32 %v6227, %v6232
      %v6268 = vmax.f32 %v6228, %v6233
      %v6269 = vmax.f32 %v6229, %v6234
      %v6270 = vmax.f32 %v6230, %v6235
      %v6271 = vmax.f32 %v6231, %v6236
      %v6272 = vmax.f32 %v6237, %v6242
      %v6273 = vmax.f32 %v6238, %v6243
      %v6274 = vmax.f32 %v6239, %v6244
      %v6275 = vmax.f32 %v6240, %v6245
      %v6276 = vmax.f32 %v6241, %v6246
      %v6277 = vmax.f32 %v6247, %v6252
      %v6278 = vmax.f32 %v6248, %v6253
      %v6279 = vmax.f32 %v6249, %v6254
      %v6280 = vmax.f32 %v6250, %v6255
      %v6281 = vmax.f32 %v6251, %v6256
      %v6282 = vmax.f32 %v6257, %v6262
      %v6283 = vmax.f32 %v6258, %v6263
      %v6284 = vmax.f32 %v6259, %v6264
      %v6285 = vmax.f32 %v6260, %v6265
      %v6286 = vmax.f32 %v6261, %v6266
      %v6291 = vrot.slane %v6267, 1
      %v6292 = vrot.slane %v6272, 1
      %v6293 = vrot.slane %v6277, 1
      %v6294 = vrot.slane %v6282, 1
      %v6299 = vmax.f32 %v6267, %v6291
      %v6300 = vmax.f32 %v6272, %v6292
      %v6301 = vmax.f32 %v6277, %v6293
      %v6302 = vmax.f32 %v6282, %v6294
      %v6307 = vrot.slane %v6268, 1
      %v6308 = vrot.slane %v6273, 1
      %v6309 = vrot.slane %v6278, 1
      %v6310 = vrot.slane %v6283, 1
      %v6315 = vmax.f32 %v6268, %v6307
      %v6316 = vmax.f32 %v6273, %v6308
      %v6317 = vmax.f32 %v6278, %v6309
      %v6318 = vmax.f32 %v6283, %v6310
      %v6323 = vrot.slane %v6269, 1
      %v6324 = vrot.slane %v6274, 1
      %v6325 = vrot.slane %v6279, 1
      %v6326 = vrot.slane %v6284, 1
      %v6331 = vmax.f32 %v6269, %v6323
      %v6332 = vmax.f32 %v6274, %v6324
      %v6333 = vmax.f32 %v6279, %v6325
      %v6334 = vmax.f32 %v6284, %v6326
      %v6339 = vrot.slane %v6270, 1
      %v6340 = vrot.slane %v6275, 1
      %v6341 = vrot.slane %v6280, 1
      %v6342 = vrot.slane %v6285, 1
      %v6347 = vmax.f32 %v6270, %v6339
      %v6348 = vmax.f32 %v6275, %v6340
      %v6349 = vmax.f32 %v6280, %v6341
      %v6350 = vmax.f32 %v6285, %v6342
      %v6355 = vrot.slane %v6271, 1
      %v6356 = vrot.slane %v6276, 1
      %v6357 = vrot.slane %v6281, 1
      %v6358 = vrot.slane %v6286, 1
      %v6363 = vmax.f32 %v6271, %v6355
      %v6364 = vmax.f32 %v6276, %v6356
      %v6365 = vmax.f32 %v6281, %v6357
      %v6366 = vmax.f32 %v6286, %v6358
      %v6371 = vrot.slane %v6299, 1
      %v6372 = vrot.slane %v6300, 1
      %v6373 = vrot.slane %v6301, 1
      %v6374 = vrot.slane %v6302, 1
      %v6379 = vrot.slane %v6299, 2
      %v6380 = vrot.slane %v6300, 2
      %v6381 = vrot.slane %v6301, 2
      %v6382 = vrot.slane %v6302, 2
      %v6387 = vrot.slane %v6299, 3
      %v6388 = vrot.slane %v6300, 3
      %v6389 = vrot.slane %v6301, 3
      %v6390 = vrot.slane %v6302, 3
      %v6399 = vrot.slane %v6315, 4
      %v6400 = vrot.slane %v6316, 4
      %v6401 = vrot.slane %v6317, 4
      %v6402 = vrot.slane %v6318, 4
      %v6407 = vrot.slane %v6315, 5
      %v6408 = vrot.slane %v6316, 5
      %v6409 = vrot.slane %v6317, 5
      %v6410 = vrot.slane %v6318, 5
      %v6415 = vrot.slane %v6315, 6
      %v6416 = vrot.slane %v6316, 6
      %v6417 = vrot.slane %v6317, 6
      %v6418 = vrot.slane %v6318, 6
      %v6423 = vrot.slane %v6315, 7
      %v6424 = vrot.slane %v6316, 7
      %v6425 = vrot.slane %v6317, 7
      %v6426 = vrot.slane %v6318, 7
      %v6435 = vrot.slane %v6331, 1
      %v6436 = vrot.slane %v6332, 1
      %v6437 = vrot.slane %v6333, 1
      %v6438 = vrot.slane %v6334, 1
      %v6443 = vrot.slane %v6331, 2
      %v6444 = vrot.slane %v6332, 2
      %v6445 = vrot.slane %v6333, 2
      %v6446 = vrot.slane %v6334, 2
      %v6451 = vrot.slane %v6331, 3
      %v6452 = vrot.slane %v6332, 3
      %v6453 = vrot.slane %v6333, 3
      %v6454 = vrot.slane %v6334, 3
      %v6463 = vrot.slane %v6347, 4
      %v6464 = vrot.slane %v6348, 4
      %v6465 = vrot.slane %v6349, 4
      %v6466 = vrot.slane %v6350, 4
      %v6471 = vrot.slane %v6347, 5
      %v6472 = vrot.slane %v6348, 5
      %v6473 = vrot.slane %v6349, 5
      %v6474 = vrot.slane %v6350, 5
      %v6479 = vrot.slane %v6347, 6
      %v6480 = vrot.slane %v6348, 6
      %v6481 = vrot.slane %v6349, 6
      %v6482 = vrot.slane %v6350, 6
      %v6487 = vrot.slane %v6347, 7
      %v6488 = vrot.slane %v6348, 7
      %v6489 = vrot.slane %v6349, 7
      %v6490 = vrot.slane %v6350, 7
      %vm6495 = vcmask 1040384
      %v6496 = vsel %vm6495, %v6299, %v6371
      %v6497 = vsel %vm6495, %v6300, %v6372
      %v6498 = vsel %vm6495, %v6301, %v6373
      %v6499 = vsel %vm6495, %v6302, %v6374
      %vm6500 = vcmask 1041408
      %v6501 = vsel %vm6500, %v6496, %v6379
      %v6502 = vsel %vm6500, %v6497, %v6380
      %v6503 = vsel %vm6500, %v6498, %v6381
      %v6504 = vsel %vm6500, %v6499, %v6382
      %vm6505 = vcmask 1042432
      %v6506 = vsel %vm6505, %v6501, %v6387
      %v6507 = vsel %vm6505, %v6502, %v6388
      %v6508 = vsel %vm6505, %v6503, %v6389
      %v6509 = vsel %vm6505, %v6504, %v6390
      %v6510 = vsel %vm3349, %v6506, %v6399
      %v6511 = vsel %vm3349, %v6507, %v6400
      %v6512 = vsel %vm3349, %v6508, %v6401
      %v6513 = vsel %vm3349, %v6509, %v6402
      %vm6514 = vcmask 1044480
      %v6515 = vsel %vm6514, %v6510, %v6407
      %v6516 = vsel %vm6514, %v6511, %v6408
      %v6517 = vsel %vm6514, %v6512, %v6409
      %v6518 = vsel %vm6514, %v6513, %v6410
      %vm6519 = vcmask 1045504
      %v6520 = vsel %vm6519, %v6515, %v6415
      %v6521 = vsel %vm6519, %v6516, %v6416
      %v6522 = vsel %vm6519, %v6517, %v6417
      %v6523 = vsel %vm6519, %v6518, %v6418
      %vm6524 = vcmask 1046528
      %v6525 = vsel %vm6524, %v6520, %v6423
      %v6526 = vsel %vm6524, %v6521, %v6424
      %v6527 = vsel %vm6524, %v6522, %v6425
      %v6528 = vsel %vm6524, %v6523, %v6426
      %v6529 = vsel %vm6495, %v6331, %v6435
      %v6530 = vsel %vm6495, %v6332, %v6436
      %v6531 = vsel %vm6495, %v6333, %v6437
      %v6532 = vsel %vm6495, %v6334, %v6438
      %v6533 = vsel %vm6500, %v6529, %v6443
      %v6534 = vsel %vm6500, %v6530, %v6444
      %v6535 = vsel %vm6500, %v6531, %v6445
      %v6536 = vsel %vm6500, %v6532, %v6446
      %v6537 = vsel %vm6505, %v6533, %v6451
      %v6538 = vsel %vm6505, %v6534, %v6452
      %v6539 = vsel %vm6505, %v6535, %v6453
      %v6540 = vsel %vm6505, %v6536, %v6454
      %v6541 = vsel %vm3349, %v6537, %v6463
      %v6542 = vsel %vm3349, %v6538, %v6464
      %v6543 = vsel %vm3349, %v6539, %v6465
      %v6544 = vsel %vm3349, %v6540, %v6466
      %v6545 = vsel %vm6514, %v6541, %v6471
      %v6546 = vsel %vm6514, %v6542, %v6472
      %v6547 = vsel %vm6514, %v6543, %v6473
      %v6548 = vsel %vm6514, %v6544, %v6474
      %v6549 = vsel %vm6519, %v6545, %v6479
      %v6550 = vsel %vm6519, %v6546, %v6480
      %v6551 = vsel %vm6519, %v6547, %v6481
      %v6552 = vsel %vm6519, %v6548, %v6482
      %v6553 = vsel %vm6524, %v6549, %v6487
      %v6554 = vsel %vm6524, %v6550, %v6488
      %v6555 = vsel %vm6524, %v6551, %v6489
      %v6556 = vsel %vm6524, %v6552, %v6490
      %v6561 = vrot.slane %v6363, 1
      %v6562 = vrot.slane %v6364, 1
      %v6563 = vrot.slane %v6365, 1
      %v6564 = vrot.slane %v6366, 1
      %v6569 = vrot.slane %v6363, 2
      %v6570 = vrot.slane %v6364, 2
      %v6571 = vrot.slane %v6365, 2
      %v6572 = vrot.slane %v6366, 2
      %v6577 = vrot.slane %v6363, 3
      %v6578 = vrot.slane %v6364, 3
      %v6579 = vrot.slane %v6365, 3
      %v6580 = vrot.slane %v6366, 3
      %v6585 = vsel %vm6495, %v6363, %v6561
      %v6586 = vsel %vm6495, %v6364, %v6562
      %v6587 = vsel %vm6495, %v6365, %v6563
      %v6588 = vsel %vm6495, %v6366, %v6564
      %v6589 = vsel %vm6500, %v6585, %v6569
      %v6590 = vsel %vm6500, %v6586, %v6570
      %v6591 = vsel %vm6500, %v6587, %v6571
      %v6592 = vsel %vm6500, %v6588, %v6572
      %v6593 = vsel %vm6505, %v6589, %v6577
      %v6594 = vsel %vm6505, %v6590, %v6578
      %v6595 = vsel %vm6505, %v6591, %v6579
      %v6596 = vsel %vm6505, %v6592, %v6580
      %v6597 = vpack.c.bf16 %v6525, %v6525
      %v6598 = vpack.c.bf16 %v6553, %v6553
      %v6599 = vpack.c.bf16 %v6593, %v6593
      %v6600 = vpack.c.bf16 %v6526, %v6526
      %v6601 = vpack.c.bf16 %v6554, %v6554
      %v6602 = vpack.c.bf16 %v6594, %v6594
      %v6603 = vpack.c.bf16 %v6527, %v6527
      %v6604 = vpack.c.bf16 %v6555, %v6555
      %v6605 = vpack.c.bf16 %v6595, %v6595
      %v6606 = vpack.c.bf16 %v6528, %v6528
      %v6607 = vpack.c.bf16 %v6556, %v6556
      %v6608 = vpack.c.bf16 %v6596, %v6596
      %6609 = vst.msk [vmem:[#allocation4] sm:$0xff] %vm3351, 0
      %6610 = vst.msk [vmem:[#allocation4 + $0x8] sm:$0xff] %vm3351, 0
      %vm6611 = vcmask 521220
      %vm6612 = vmor %vm6611, %vm6500
      %6613 = vst.msk [vmem:[#allocation4 + $0x10] sm:$0x33] %vm6612, 0
      %s6614 = scalar_lea.vmem [#allocation4], 120
      %6615 = vst.msk [vmem:[%s6614] sm:$0xff] %vm3351, 0
      %6616 = vst.msk [vmem:[%s6614 + $0x8] sm:$0xff] %vm3351, 0
      %6617 = vst.msk [vmem:[%s6614 + $0x10] sm:$0x33] %vm6612, 0
      %v6619 = vshrl.u32 %v6597, 16
      %v6621 = vrot.slane %v6619, 7
      %v6622 = vshll.u32 %v6597, 16
      %v6624 = vor.u32 %v6621, %v6622
      %v6625 = vrot.slane %v6621, 4
      %v6627 = vshrl.u32 %v6598, 16
      %v6629 = vrot.slane %v6627, 7
      %v6630 = vshll.u32 %v6598, 16
      %v6632 = vor.u32 %v6629, %v6630
      %v6633 = vsel %vm3365, %v6625, %v6632
      %v6634 = vrot.slane %v6629, 4
      %v6636 = vshrl.u32 %v6599, 16
      %v6638 = vrot.slane %v6636, 7
      %v6639 = vshll.u32 %v6599, 16
      %v6641 = vor.u32 %v6638, %v6639
      %v6642 = vsel %vm3365, %v6634, %v6641
      %v6644 = vshrl.u32 %v6600, 16
      %v6646 = vrot.slane %v6644, 7
      %v6647 = vshll.u32 %v6600, 16
      %v6649 = vor.u32 %v6646, %v6647
      %v6650 = vrot.slane %v6646, 4
      %v6652 = vshrl.u32 %v6601, 16
      %v6654 = vrot.slane %v6652, 7
      %v6655 = vshll.u32 %v6601, 16
      %v6657 = vor.u32 %v6654, %v6655
      %v6658 = vsel %vm3365, %v6650, %v6657
      %v6659 = vrot.slane %v6654, 4
      %v6661 = vshrl.u32 %v6602, 16
      %v6663 = vrot.slane %v6661, 7
      %v6664 = vshll.u32 %v6602, 16
      %v6666 = vor.u32 %v6663, %v6664
      %v6667 = vsel %vm3365, %v6659, %v6666
      %v6669 = vshrl.u32 %v6603, 16
      %v6671 = vrot.slane %v6669, 7
      %v6672 = vshll.u32 %v6603, 16
      %v6674 = vor.u32 %v6671, %v6672
      %v6675 = vrot.slane %v6671, 4
      %v6677 = vshrl.u32 %v6604, 16
      %v6679 = vrot.slane %v6677, 7
      %v6680 = vshll.u32 %v6604, 16
      %v6682 = vor.u32 %v6679, %v6680
      %v6683 = vsel %vm3365, %v6675, %v6682
      %v6684 = vrot.slane %v6679, 4
      %v6686 = vshrl.u32 %v6605, 16
      %v6688 = vrot.slane %v6686, 7
      %v6689 = vshll.u32 %v6605, 16
      %v6691 = vor.u32 %v6688, %v6689
      %v6692 = vsel %vm3365, %v6684, %v6691
      %v6694 = vshrl.u32 %v6606, 16
      %v6696 = vrot.slane %v6694, 7
      %v6697 = vshll.u32 %v6606, 16
      %v6699 = vor.u32 %v6696, %v6697
      %v6700 = vrot.slane %v6696, 4
      %v6702 = vshrl.u32 %v6607, 16
      %v6704 = vrot.slane %v6702, 7
      %v6705 = vshll.u32 %v6607, 16
      %v6707 = vor.u32 %v6704, %v6705
      %v6708 = vsel %vm3365, %v6700, %v6707
      %v6709 = vrot.slane %v6704, 4
      %v6711 = vshrl.u32 %v6608, 16
      %v6713 = vrot.slane %v6711, 7
      %v6714 = vshll.u32 %v6608, 16
      %v6716 = vor.u32 %v6713, %v6714
      %v6717 = vsel %vm3365, %v6709, %v6716
      %s6730 = scalar_lea.vmem [#allocation4], 24
      %v6731 = vld [vmem:[%s6730] sm:$0xf]
      %v6732 = vsel %vm3753, %v6624, %v6731
      %6733 = vst [vmem:[%s6730] sm:$0xf] %v6732
      %6734 = vst.msk [vmem:[%s6730 + $0x8] sm:$0xf] %vm3757, %v6633
      %vm6735 = vcmask 517120
      %6736 = vst.msk [vmem:[%s6730 + $0x10] sm:$0x3] %vm6735, %v6642
      %v6737 = vld [vmem:[%s6730 + $0x18] sm:$0xf]
      %v6738 = vsel %vm3753, %v6649, %v6737
      %6739 = vst [vmem:[%s6730 + $0x18] sm:$0xf] %v6738
      %6740 = vst.msk [vmem:[%s6730 + $0x20] sm:$0xf] %vm3757, %v6658
      %6741 = vst.msk [vmem:[%s6730 + $0x28] sm:$0x3] %vm6735, %v6667
      %v6742 = vld [vmem:[%s6730 + $0x30] sm:$0xf]
      %v6743 = vsel %vm3753, %v6674, %v6742
      %6744 = vst [vmem:[%s6730 + $0x30] sm:$0xf] %v6743
      %6745 = vst.msk [vmem:[%s6730 + $0x38] sm:$0xf] %vm3757, %v6683
      %6746 = vst.msk [vmem:[%s6730 + $0x40] sm:$0x3] %vm6735, %v6692
      %v6747 = vld [vmem:[%s6730 + $0x48] sm:$0xf]
      %v6748 = vsel %vm3753, %v6699, %v6747
      %6749 = vst [vmem:[%s6730 + $0x48] sm:$0xf] %v6748
      %6750 = vst.msk [vmem:[%s6730 + $0x50] sm:$0xf] %vm3757, %v6708
      %6751 = vst.msk [vmem:[%s6730 + $0x58] sm:$0x3] %vm6735, %v6717
      %v6752 = vld [vmem:[%s6730] sm:$0x1]
      %v6753 = vsel %vm3812, 0, %v6752
      %6754 = vst [vmem:[%s6730] sm:$0x1] %v6753
      %v6755 = vld [vmem:[%s6730 + $0x18] sm:$0x1]
      %v6756 = vsel %vm3812, 0, %v6755
      %6757 = vst [vmem:[%s6730 + $0x18] sm:$0x1] %v6756
      %v6758 = vld [vmem:[%s6730 + $0x30] sm:$0x1]
      %v6759 = vsel %vm3812, 0, %v6758
      %6760 = vst [vmem:[%s6730 + $0x30] sm:$0x1] %v6759
      %v6761 = vld [vmem:[%s6730 + $0x48] sm:$0x1]
      %v6762 = vsel %vm3812, 0, %v6761
      %6763 = vst [vmem:[%s6730 + $0x48] sm:$0x1] %v6762
      %6776 = vrot.lane.b32.xlu0 %v6597, 64
      %v6777 = vpop.permute.xlu0 %6776
      %6778 = vrot.lane.b32.xlu0 %v6598, 64
      %v6779 = vpop.permute.xlu0 %6778
      %6780 = vrot.lane.b32.xlu0 %v6599, 64
      %v6781 = vpop.permute.xlu0 %6780
      %6782 = vrot.lane.b32.xlu0 %v6600, 64
      %v6783 = vpop.permute.xlu0 %6782
      %6784 = vrot.lane.b32.xlu0 %v6601, 64
      %v6785 = vpop.permute.xlu0 %6784
      %6786 = vrot.lane.b32.xlu0 %v6602, 64
      %v6787 = vpop.permute.xlu0 %6786
      %6788 = vrot.lane.b32.xlu0 %v6603, 64
      %v6789 = vpop.permute.xlu0 %6788
      %6790 = vrot.lane.b32.xlu0 %v6604, 64
      %v6791 = vpop.permute.xlu0 %6790
      %6792 = vrot.lane.b32.xlu0 %v6605, 64
      %v6793 = vpop.permute.xlu0 %6792
      %6794 = vrot.lane.b32.xlu0 %v6606, 64
      %v6795 = vpop.permute.xlu0 %6794
      %6796 = vrot.lane.b32.xlu0 %v6607, 64
      %v6797 = vpop.permute.xlu0 %6796
      %6798 = vrot.lane.b32.xlu0 %v6608, 64
      %v6799 = vpop.permute.xlu0 %6798
      %6812 = vst.msk [vmem:[%s6730] sm:$0xf] %vm3997, %v6777
      %6813 = vst.msk [vmem:[%s6730 + $0x8] sm:$0xf] %vm3997, %v6779
      %vm6814 = vcmask 1041920
      %6815 = vst.msk [vmem:[%s6730 + $0x10] sm:$0x3] %vm6814, %v6781
      %6816 = vst.msk [vmem:[%s6730 + $0x18] sm:$0xf] %vm3997, %v6783
      %6817 = vst.msk [vmem:[%s6730 + $0x20] sm:$0xf] %vm3997, %v6785
      %6818 = vst.msk [vmem:[%s6730 + $0x28] sm:$0x3] %vm6814, %v6787
      %6819 = vst.msk [vmem:[%s6730 + $0x30] sm:$0xf] %vm3997, %v6789
      %6820 = vst.msk [vmem:[%s6730 + $0x38] sm:$0xf] %vm3997, %v6791
      %6821 = vst.msk [vmem:[%s6730 + $0x40] sm:$0x3] %vm6814, %v6793
      %6822 = vst.msk [vmem:[%s6730 + $0x48] sm:$0xf] %vm3997, %v6795
      %6823 = vst.msk [vmem:[%s6730 + $0x50] sm:$0xf] %vm3997, %v6797
      %6824 = vst.msk [vmem:[%s6730 + $0x58] sm:$0x3] %vm6814, %v6799
      %v6825 = vrot.slane %v6619, 4
      %v6826 = vrot.slane %v6622, 5
      %v6827 = vor.u32 %v6825, %v6826
      %v6828 = vrot.slane %v6827, 4
      %v6829 = vrot.slane %v6630, 5
      %v6830 = vsel %vm4040, %v6828, %v6829
      %v6831 = vrot.slane %v6627, 4
      %v6832 = vor.u32 %v6831, %v6829
      %v6833 = vrot.slane %v6832, 4
      %v6834 = vrot.slane %v6639, 5
      %v6835 = vsel %vm4040, %v6833, %v6834
      %v6836 = vrot.slane %v6636, 4
      %v6837 = vor.u32 %v6836, %v6834
      %v6838 = vrot.slane %v6837, 4
      %v6839 = vrot.slane %v6644, 4
      %v6840 = vrot.slane %v6647, 5
      %v6841 = vor.u32 %v6839, %v6840
      %v6842 = vrot.slane %v6841, 4
      %v6843 = vrot.slane %v6655, 5
      %v6844 = vsel %vm4040, %v6842, %v6843
      %v6845 = vrot.slane %v6652, 4
      %v6846 = vor.u32 %v6845, %v6843
      %v6847 = vrot.slane %v6846, 4
      %v6848 = vrot.slane %v6664, 5
      %v6849 = vsel %vm4040, %v6847, %v6848
      %v6850 = vrot.slane %v6661, 4
      %v6851 = vor.u32 %v6850, %v6848
      %v6852 = vrot.slane %v6851, 4
      %v6853 = vrot.slane %v6669, 4
      %v6854 = vrot.slane %v6672, 5
      %v6855 = vor.u32 %v6853, %v6854
      %v6856 = vrot.slane %v6855, 4
      %v6857 = vrot.slane %v6680, 5
      %v6858 = vsel %vm4040, %v6856, %v6857
      %v6859 = vrot.slane %v6677, 4
      %v6860 = vor.u32 %v6859, %v6857
      %v6861 = vrot.slane %v6860, 4
      %v6862 = vrot.slane %v6689, 5
      %v6863 = vsel %vm4040, %v6861, %v6862
      %v6864 = vrot.slane %v6686, 4
      %v6865 = vor.u32 %v6864, %v6862
      %v6866 = vrot.slane %v6865, 4
      %v6867 = vrot.slane %v6694, 4
      %v6868 = vrot.slane %v6697, 5
      %v6869 = vor.u32 %v6867, %v6868
      %v6870 = vrot.slane %v6869, 4
      %v6871 = vrot.slane %v6705, 5
      %v6872 = vsel %vm4040, %v6870, %v6871
      %v6873 = vrot.slane %v6702, 4
      %v6874 = vor.u32 %v6873, %v6871
      %v6875 = vrot.slane %v6874, 4
      %v6876 = vrot.slane %v6714, 5
      %v6877 = vsel %vm4040, %v6875, %v6876
      %v6878 = vrot.slane %v6711, 4
      %v6879 = vor.u32 %v6878, %v6876
      %v6880 = vrot.slane %v6879, 4
      %6893 = vst.msk [vmem:[%s6730 + $0x4] sm:$0xf] %vm3757, %v6830
      %6894 = vst.msk [vmem:[%s6730 + $0xc] sm:$0xf] %vm3757, %v6835
      %vm6895 = vcmask 517120
      %vm6896 = vsmask.f32 1280
      %vm6897 = vmand %vm6895, %vm6896
      %v6898 = vld [vmem:[%s6730 + $0x14] sm:$0x3]
      %v6899 = vsel %vm6897, %v6838, %v6898
      %6900 = vst [vmem:[%s6730 + $0x14] sm:$0x3] %v6899
      %6901 = vst.msk [vmem:[%s6730 + $0x1c] sm:$0xf] %vm3757, %v6844
      %6902 = vst.msk [vmem:[%s6730 + $0x24] sm:$0xf] %vm3757, %v6849
      %v6903 = vld [vmem:[%s6730 + $0x2c] sm:$0x3]
      %v6904 = vsel %vm6897, %v6852, %v6903
      %6905 = vst [vmem:[%s6730 + $0x2c] sm:$0x3] %v6904
      %6906 = vst.msk [vmem:[%s6730 + $0x34] sm:$0xf] %vm3757, %v6858
      %6907 = vst.msk [vmem:[%s6730 + $0x3c] sm:$0xf] %vm3757, %v6863
      %v6908 = vld [vmem:[%s6730 + $0x44] sm:$0x3]
      %v6909 = vsel %vm6897, %v6866, %v6908
      %6910 = vst [vmem:[%s6730 + $0x44] sm:$0x3] %v6909
      %6911 = vst.msk [vmem:[%s6730 + $0x4c] sm:$0xf] %vm3757, %v6872
      %6912 = vst.msk [vmem:[%s6730 + $0x54] sm:$0xf] %vm3757, %v6877
      %v6913 = vld [vmem:[%s6730 + $0x5c] sm:$0x3]
      %v6914 = vsel %vm6897, %v6880, %v6913
      %6915 = vst [vmem:[%s6730 + $0x5c] sm:$0x3] %v6914
      %vm6916 = vcmask 517121
      %vm6917 = vsmask.f32 7942
      %vm6918 = vmand %vm6916, %vm6917
      %v6919 = vld [vmem:[%s6730 + $0x14] sm:$0x2]
      %v6920 = vsel %vm6918, 0, %v6919
      %6921 = vst [vmem:[%s6730 + $0x14] sm:$0x2] %v6920
      %v6922 = vld [vmem:[%s6730 + $0x2c] sm:$0x2]
      %v6923 = vsel %vm6918, 0, %v6922
      %6924 = vst [vmem:[%s6730 + $0x2c] sm:$0x2] %v6923
      %v6925 = vld [vmem:[%s6730 + $0x44] sm:$0x2]
      %v6926 = vsel %vm6918, 0, %v6925
      %6927 = vst [vmem:[%s6730 + $0x44] sm:$0x2] %v6926
      %v6928 = vld [vmem:[%s6730 + $0x5c] sm:$0x2]
      %v6929 = vsel %vm6918, 0, %v6928
      %6930 = vst [vmem:[%s6730 + $0x5c] sm:$0x2] %v6929
      %v6931 = vld [vmem:[#allocation4] sm:$0xff]
      %v6932 = vld [vmem:[#allocation4 + $0x8] sm:$0xff]
      %v6933 = vld [vmem:[#allocation4 + $0x10] sm:$0x33]
      %v6934 = vld [vmem:[#allocation4 + $0x18] sm:$0xff]
      %v6935 = vld [vmem:[#allocation4 + $0x20] sm:$0xff]
      %v6936 = vld [vmem:[#allocation4 + $0x28] sm:$0x33]
      %v6937 = vld [vmem:[#allocation4 + $0x30] sm:$0xff]
      %v6938 = vld [vmem:[#allocation4 + $0x38] sm:$0xff]
      %v6939 = vld [vmem:[#allocation4 + $0x40] sm:$0x33]
      %v6940 = vld [vmem:[#allocation4 + $0x48] sm:$0xff]
      %v6941 = vld [vmem:[#allocation4 + $0x50] sm:$0xff]
      %v6942 = vld [vmem:[#allocation4 + $0x58] sm:$0x33]
      %v6943 = vld [vmem:[%s5] sm:$0xf]
      %v6944 = vld [vmem:[%s5 + $0x4] sm:$0xf]
      %v6945 = vld [vmem:[%s5 + $0x8] sm:$0xf]
      %v6946 = vld [vmem:[%s5 + $0xc] sm:$0xf]
      %v6947 = vld [vmem:[%s5 + $0x10] sm:$0xf]
      %v6948 = vld [vmem:[%s5 + $0x14] sm:$0xf]
      %v6949 = vld [vmem:[%s5 + $0x18] sm:$0xf]
      %v6950 = vld [vmem:[%s5 + $0x1c] sm:$0xf]
      %v6951 = vld [vmem:[%s5 + $0x20] sm:$0xf]
      %v6952 = vld [vmem:[%s5 + $0x24] sm:$0xf]
      %v6953 = vld [vmem:[%s5 + $0x28] sm:$0xf]
      %v6954 = vld [vmem:[%s5 + $0x2c] sm:$0xf]
      %v6955 = vld [vmem:[%s5 + $0x30] sm:$0xf]
      %v6956 = vld [vmem:[%s5 + $0x34] sm:$0xf]
      %v6957 = vld [vmem:[%s5 + $0x38] sm:$0xf]
      %v6958 = vld [vmem:[%s5 + $0x3c] sm:$0xf]
      %v6959 = vld [vmem:[%s5 + $0x40] sm:$0xf]
      %v6960 = vld [vmem:[%s5 + $0x44] sm:$0xf]
      %v6961 = vld [vmem:[%s5 + $0x48] sm:$0xf]
      %v6962 = vld [vmem:[%s5 + $0x4c] sm:$0xf]
      %v6963 = vld [vmem:[%s5 + $0x50] sm:$0xf]
      %v6964 = vld [vmem:[%s5 + $0x54] sm:$0xf]
      %v6965 = vld [vmem:[%s5 + $0x58] sm:$0xf]
      %v6966 = vld [vmem:[%s5 + $0x5c] sm:$0xf]
      %v6967 = vld [vmem:[%s6730] sm:$0xff]
      %v6968 = vld [vmem:[%s6730 + $0x8] sm:$0xff]
      %v6969 = vld [vmem:[%s6730 + $0x10] sm:$0x33]
      %v6970 = vld [vmem:[%s6730 + $0x18] sm:$0xff]
      %v6971 = vld [vmem:[%s6730 + $0x20] sm:$0xff]
      %v6972 = vld [vmem:[%s6730 + $0x28] sm:$0x33]
      %v6973 = vld [vmem:[%s6730 + $0x30] sm:$0xff]
      %v6974 = vld [vmem:[%s6730 + $0x38] sm:$0xff]
      %v6975 = vld [vmem:[%s6730 + $0x40] sm:$0x33]
      %v6976 = vld [vmem:[%s6730 + $0x48] sm:$0xff]
      %v6977 = vld [vmem:[%s6730 + $0x50] sm:$0xff]
      %v6978 = vld [vmem:[%s6730 + $0x58] sm:$0x33]
      %s6979 = scalar_lea.vmem %s5, 96
      %v6980 = vld [vmem:[%s6979] sm:$0xf]
      %v6981 = vld [vmem:[%s6979 + $0x4] sm:$0xf]
      %v6982 = vld [vmem:[%s6979 + $0x8] sm:$0xf]
      %v6983 = vld [vmem:[%s6979 + $0xc] sm:$0xf]
      %v6984 = vld [vmem:[%s6979 + $0x10] sm:$0xf]
      %v6985 = vld [vmem:[%s6979 + $0x14] sm:$0xf]
      %v6986 = vld [vmem:[%s6979 + $0x18] sm:$0xf]
      %v6987 = vld [vmem:[%s6979 + $0x1c] sm:$0xf]
      %v6988 = vld [vmem:[%s6979 + $0x20] sm:$0xf]
      %v6989 = vld [vmem:[%s6979 + $0x24] sm:$0xf]
      %v6990 = vld [vmem:[%s6979 + $0x28] sm:$0xf]
      %v6991 = vld [vmem:[%s6979 + $0x2c] sm:$0xf]
      %v6992 = vld [vmem:[%s6979 + $0x30] sm:$0xf]
      %v6993 = vld [vmem:[%s6979 + $0x34] sm:$0xf]
      %v6994 = vld [vmem:[%s6979 + $0x38] sm:$0xf]
      %v6995 = vld [vmem:[%s6979 + $0x3c] sm:$0xf]
      %v6996 = vld [vmem:[%s6979 + $0x40] sm:$0xf]
      %v6997 = vld [vmem:[%s6979 + $0x44] sm:$0xf]
      %v6998 = vld [vmem:[%s6979 + $0x48] sm:$0xf]
      %v6999 = vld [vmem:[%s6979 + $0x4c] sm:$0xf]
      %v7000 = vld [vmem:[%s6979 + $0x50] sm:$0xf]
      %v7001 = vld [vmem:[%s6979 + $0x54] sm:$0xf]
      %v7002 = vld [vmem:[%s6979 + $0x58] sm:$0xf]
      %v7003 = vld [vmem:[%s6979 + $0x5c] sm:$0xf]
      %v7016 = vrot.slane %v6967, 2
      %v7017 = vrot.slane %v6968, 2
      %v7018 = vrot.slane %v6969, 2
      %v7019 = vrot.slane %v6970, 2
      %v7020 = vrot.slane %v6971, 2
      %v7021 = vrot.slane %v6972, 2
      %v7022 = vrot.slane %v6973, 2
      %v7023 = vrot.slane %v6974, 2
      %v7024 = vrot.slane %v6975, 2
      %v7025 = vrot.slane %v6976, 2
      %v7026 = vrot.slane %v6977, 2
      %v7027 = vrot.slane %v6978, 2
      %v7030 = vsel %vm6500, %v6967, %v7016
      %vm7031 = vcmask 1043458
      %v7032 = vsel %vm7031, %v6967, %v7016
      %v7034 = vrot.slane %v7032, 2
      %v7037 = vsel %vm6500, %v6968, %v7017
      %v7038 = vsel %vm7031, %v6968, %v7017
      %v7040 = vrot.slane %v7038, 2
      %v7043 = vsel %vm6500, %v6969, %v7018
      %v7046 = vsel %vm6500, %v6970, %v7019
      %v7047 = vsel %vm7031, %v6970, %v7019
      %v7049 = vrot.slane %v7047, 2
      %v7052 = vsel %vm6500, %v6971, %v7020
      %v7053 = vsel %vm7031, %v6971, %v7020
      %v7055 = vrot.slane %v7053, 2
      %v7058 = vsel %vm6500, %v6972, %v7021
      %v7061 = vsel %vm6500, %v6973, %v7022
      %v7062 = vsel %vm7031, %v6973, %v7022
      %v7064 = vrot.slane %v7062, 2
      %v7067 = vsel %vm6500, %v6974, %v7023
      %v7068 = vsel %vm7031, %v6974, %v7023
      %v7070 = vrot.slane %v7068, 2
      %v7073 = vsel %vm6500, %v6975, %v7024
      %v7076 = vsel %vm6500, %v6976, %v7025
      %v7077 = vsel %vm7031, %v6976, %v7025
      %v7079 = vrot.slane %v7077, 2
      %v7082 = vsel %vm6500, %v6977, %v7026
      %v7083 = vsel %vm7031, %v6977, %v7026
      %v7085 = vrot.slane %v7083, 2
      %v7088 = vsel %vm6500, %v6978, %v7027
      %7089 = vst [vmem:[#allocation1] ss:$4 sm:$0xff] %v7030
      %s7091 = scalar_lea.vmem [#allocation1], 1
      %7092 = vst [vmem:[%s7091] ss:$4 sm:$0xff] %v7034
      %s7093 = scalar_lea.vmem [#allocation1], 2
      %7094 = vst [vmem:[%s7093] ss:$4 sm:$0xff] %v7037
      %s7096 = scalar_lea.vmem [#allocation1], 3
      %7097 = vst [vmem:[%s7096] ss:$4 sm:$0xff] %v7040
      %s7098 = scalar_lea.vmem [#allocation1], 32
      %7099 = vst [vmem:[%s7098] ss:$4 sm:$0xff] %v7043
      %s7100 = scalar_lea.vmem [#allocation1], 33
      %7101 = vst [vmem:[%s7100] ss:$4 sm:$0xff] %v7046
      %s7103 = scalar_lea.vmem [#allocation1], 34
      %7104 = vst [vmem:[%s7103] ss:$4 sm:$0xff] %v7049
      %s7105 = scalar_lea.vmem [#allocation1], 35
      %7106 = vst [vmem:[%s7105] ss:$4 sm:$0xff] %v7052
      %v7107 = vld.sshfl [vmem:[#allocation1] sm:$0xff pattern:$0x73625140]
      %v7108 = vld.sshfl [vmem:[#allocation1 + $0x8] sm:$0xff pattern:$0x73625140]
      %v7109 = vld.sshfl [vmem:[#allocation1 + $0x20] sm:$0xff pattern:$0x73625140]
      %v7110 = vld.sshfl [vmem:[#allocation1 + $0x28] sm:$0xff pattern:$0x73625140]
      %7112 = vst [vmem:[#allocation1] ss:$4 sm:$0xff] %v7055
      %7113 = vst [vmem:[%s7091] ss:$4 sm:$0xff] %v7058
      %7114 = vst [vmem:[%s7093] ss:$4 sm:$0xff] %v7061
      %7116 = vst [vmem:[%s7096] ss:$4 sm:$0xff] %v7064
      %7117 = vst [vmem:[%s7098] ss:$4 sm:$0xff] %v7067
      %7119 = vst [vmem:[%s7100] ss:$4 sm:$0xff] %v7070
      %7120 = vst [vmem:[%s7103] ss:$4 sm:$0xff] %v7073
      %7121 = vst [vmem:[%s7105] ss:$4 sm:$0xff] %v7076
      %v7122 = vld.sshfl [vmem:[#allocation1] sm:$0xff pattern:$0x73625140]
      %v7123 = vld.sshfl [vmem:[#allocation1 + $0x8] sm:$0xff pattern:$0x73625140]
      %v7124 = vld.sshfl [vmem:[#allocation1 + $0x20] sm:$0xff pattern:$0x73625140]
      %v7125 = vld.sshfl [vmem:[#allocation1 + $0x28] sm:$0xff pattern:$0x73625140]
      %7127 = vst [vmem:[#allocation1] ss:$4 sm:$0xff] %v7079
      %7128 = vst [vmem:[%s7091] ss:$4 sm:$0xff] %v7082
      %7130 = vst [vmem:[%s7093] ss:$4 sm:$0xff] %v7085
      %7131 = vst [vmem:[%s7096] ss:$4 sm:$0xff] %v7088
      %v7132 = vld.sshfl [vmem:[#allocation1] sm:$0xff pattern:$0x73625140]
      %v7133 = vld.sshfl [vmem:[#allocation1 + $0x8] sm:$0xff pattern:$0x73625140]
      %v7163 = vunpack.c.l.b16 %v6980
      %v7164 = vunpack.c.l.b16 %v6981
      %v7165 = vunpack.c.l.b16 %v6982
      %v7166 = vunpack.c.l.b16 %v6983
      %v7167 = vunpack.c.l.b16 %v6984
      %v7168 = vunpack.c.l.b16 %v6985
      %v7169 = vunpack.c.l.b16 %v6986
      %v7170 = vunpack.c.l.b16 %v6987
      %v7171 = vunpack.c.l.b16 %v6988
      %v7172 = vunpack.c.l.b16 %v6989
      %v7173 = vunpack.c.l.b16 %v6990
      %v7174 = vunpack.c.l.b16 %v6991
      %v7175 = vunpack.c.l.b16 %v6992
      %v7176 = vunpack.c.l.b16 %v6993
      %v7177 = vunpack.c.l.b16 %v6994
      %v7178 = vunpack.c.l.b16 %v6995
      %v7179 = vunpack.c.l.b16 %v6996
      %v7180 = vunpack.c.l.b16 %v6997
      %v7181 = vunpack.c.l.b16 %v6998
      %v7182 = vunpack.c.l.b16 %v6999
      %v7183 = vunpack.c.l.b16 %v7000
      %v7184 = vunpack.c.l.b16 %v7001
      %v7185 = vunpack.c.l.b16 %v7002
      %v7186 = vunpack.c.l.b16 %v7003
      %v7187 = vpack.c.b16 %v7164, %v7163
      %v7188 = vpack.c.b16 %v7166, %v7165
      %v7189 = vpack.c.b16 %v7168, %v7167
      %v7190 = vpack.c.b16 %v7170, %v7169
      %v7191 = vpack.c.b16 %v7172, %v7171
      %v7192 = vpack.c.b16 %v7174, %v7173
      %v7193 = vpack.c.b16 %v7176, %v7175
      %v7194 = vpack.c.b16 %v7178, %v7177
      %v7195 = vpack.c.b16 %v7180, %v7179
      %v7196 = vpack.c.b16 %v7182, %v7181
      %v7197 = vpack.c.b16 %v7184, %v7183
      %v7198 = vpack.c.b16 %v7186, %v7185
      %v7211 = vsel %vm4738, %v7108, 0
      %v7213 = vsel %vm4738, %v7110, 0
      %v7215 = vsel %vm4738, %v7123, 0
      %v7217 = vsel %vm4738, %v7125, 0
      %v7219 = vsel %vm4738, %v7133, 0
      %7221 = vmatpush.bf16.msra.mxu0 %v7194
      %7222 = vmatpush.bf16.msra.mxu0 %v7193
      %7223 = vmatpush.bf16.msra.mxu0 %v7192
      %7224 = vmatpush.bf16.msra.mxu0 %v7191
      %7225 = vmatpush.bf16.msra.mxu0 %v7190
      %7226 = vmatpush.bf16.msra.mxu0 %v7189
      %7227 = vmatpush.bf16.msra.mxu0 %v7188
      %7228 = vmatpush.bf16.msra.mxu0 %v7187
      %7229 = vmatmul.bf16.gmra.mxu0 %v7107
      %v7230 = vpop.f32.mrf.mxu0
      %v7231 = vadd.f32 0.0, %v7230
      %v7232 = vpop.f32.mrf.mxu0
      %v7233 = vadd.f32 0.0, %v7232
      %7234 = vmatmul.bf16.gmra.mxu0 %v7109
      %v7235 = vpop.f32.mrf.mxu0
      %v7236 = vadd.f32 0.0, %v7235
      %v7237 = vpop.f32.mrf.mxu0
      %v7238 = vadd.f32 0.0, %v7237
      %7239 = vmatmul.bf16.gmra.mxu0 %v7122
      %v7240 = vpop.f32.mrf.mxu0
      %v7241 = vadd.f32 0.0, %v7240
      %v7242 = vpop.f32.mrf.mxu0
      %v7243 = vadd.f32 0.0, %v7242
      %7244 = vmatmul.bf16.gmra.mxu0 %v7124
      %v7245 = vpop.f32.mrf.mxu0
      %v7246 = vadd.f32 0.0, %v7245
      %v7247 = vpop.f32.mrf.mxu0
      %v7248 = vadd.f32 0.0, %v7247
      %7249 = vmatmul.bf16.gmra.mxu0 %v7132
      %v7250 = vpop.f32.mrf.mxu0
      %v7251 = vadd.f32 0.0, %v7250
      %v7252 = vpop.f32.mrf.mxu0
      %v7253 = vadd.f32 0.0, %v7252
      %7254 = vdwg.mxu0
      %7255 = vmatpush.bf16.msra.mxu0 0
      %7256 = vmatpush.bf16.msra.mxu0 0
      %7257 = vmatpush.bf16.msra.mxu0 0
      %7258 = vmatpush.bf16.msra.mxu0 0
      %7259 = vmatpush.bf16.msra.mxu0 %v7198
      %7260 = vmatpush.bf16.msra.mxu0 %v7197
      %7261 = vmatpush.bf16.msra.mxu0 %v7196
      %7262 = vmatpush.bf16.msra.mxu0 %v7195
      %7263 = vmatmul.bf16.gmra.mxu0 %v7211
      %v7264 = vpop.f32.mrf.mxu0
      %v7265 = vadd.f32 %v7231, %v7264
      %v7266 = vpop.f32.mrf.mxu0
      %v7267 = vadd.f32 %v7233, %v7266
      %7268 = vmatmul.bf16.gmra.mxu0 %v7213
      %v7269 = vpop.f32.mrf.mxu0
      %v7270 = vadd.f32 %v7236, %v7269
      %v7271 = vpop.f32.mrf.mxu0
      %v7272 = vadd.f32 %v7238, %v7271
      %7273 = vmatmul.bf16.gmra.mxu0 %v7215
      %v7274 = vpop.f32.mrf.mxu0
      %v7275 = vadd.f32 %v7241, %v7274
      %v7276 = vpop.f32.mrf.mxu0
      %v7277 = vadd.f32 %v7243, %v7276
      %7278 = vmatmul.bf16.gmra.mxu0 %v7217
      %v7279 = vpop.f32.mrf.mxu0
      %v7280 = vadd.f32 %v7246, %v7279
      %v7281 = vpop.f32.mrf.mxu0
      %v7282 = vadd.f32 %v7248, %v7281
      %7283 = vmatmul.bf16.gmra.mxu0 %v7219
      %v7284 = vpop.f32.mrf.mxu0
      %v7285 = vadd.f32 %v7251, %v7284
      %v7286 = vpop.f32.mrf.mxu0
      %v7287 = vadd.f32 %v7253, %v7286
      %7288 = vdwg.mxu0
      %v7301 = vrot.slane %v6931, 2
      %v7302 = vrot.slane %v6932, 2
      %v7303 = vrot.slane %v6933, 2
      %v7304 = vrot.slane %v6934, 2
      %v7305 = vrot.slane %v6935, 2
      %v7306 = vrot.slane %v6936, 2
      %v7307 = vrot.slane %v6937, 2
      %v7308 = vrot.slane %v6938, 2
      %v7309 = vrot.slane %v6939, 2
      %v7310 = vrot.slane %v6940, 2
      %v7311 = vrot.slane %v6941, 2
      %v7312 = vrot.slane %v6942, 2
      %v7315 = vsel %vm6500, %v6931, %v7301
      %v7316 = vsel %vm7031, %v6931, %v7301
      %v7318 = vrot.slane %v7316, 2
      %v7321 = vsel %vm6500, %v6932, %v7302
      %v7322 = vsel %vm7031, %v6932, %v7302
      %v7324 = vrot.slane %v7322, 2
      %v7327 = vsel %vm6500, %v6933, %v7303
      %v7330 = vsel %vm6500, %v6934, %v7304
      %v7331 = vsel %vm7031, %v6934, %v7304
      %v7333 = vrot.slane %v7331, 2
      %v7336 = vsel %vm6500, %v6935, %v7305
      %v7337 = vsel %vm7031, %v6935, %v7305
      %v7339 = vrot.slane %v7337, 2
      %v7342 = vsel %vm6500, %v6936, %v7306
      %v7345 = vsel %vm6500, %v6937, %v7307
      %v7346 = vsel %vm7031, %v6937, %v7307
      %v7348 = vrot.slane %v7346, 2
      %v7351 = vsel %vm6500, %v6938, %v7308
      %v7352 = vsel %vm7031, %v6938, %v7308
      %v7354 = vrot.slane %v7352, 2
      %v7357 = vsel %vm6500, %v6939, %v7309
      %v7360 = vsel %vm6500, %v6940, %v7310
      %v7361 = vsel %vm7031, %v6940, %v7310
      %v7363 = vrot.slane %v7361, 2
      %v7366 = vsel %vm6500, %v6941, %v7311
      %v7367 = vsel %vm7031, %v6941, %v7311
      %v7369 = vrot.slane %v7367, 2
      %v7372 = vsel %vm6500, %v6942, %v7312
      %7373 = vst [vmem:[#allocation1] ss:$4 sm:$0xff] %v7315
      %s7375 = scalar_lea.vmem [#allocation1], 1
      %7376 = vst [vmem:[%s7375] ss:$4 sm:$0xff] %v7318
      %s7377 = scalar_lea.vmem [#allocation1], 2
      %7378 = vst [vmem:[%s7377] ss:$4 sm:$0xff] %v7321
      %s7380 = scalar_lea.vmem [#allocation1], 3
      %7381 = vst [vmem:[%s7380] ss:$4 sm:$0xff] %v7324
      %s7382 = scalar_lea.vmem [#allocation1], 32
      %7383 = vst [vmem:[%s7382] ss:$4 sm:$0xff] %v7327
      %s7384 = scalar_lea.vmem [#allocation1], 33
      %7385 = vst [vmem:[%s7384] ss:$4 sm:$0xff] %v7330
      %s7387 = scalar_lea.vmem [#allocation1], 34
      %7388 = vst [vmem:[%s7387] ss:$4 sm:$0xff] %v7333
      %s7389 = scalar_lea.vmem [#allocation1], 35
      %7390 = vst [vmem:[%s7389] ss:$4 sm:$0xff] %v7336
      %v7391 = vld.sshfl [vmem:[#allocation1] sm:$0xff pattern:$0x73625140]
      %v7392 = vld.sshfl [vmem:[#allocation1 + $0x8] sm:$0xff pattern:$0x73625140]
      %v7393 = vld.sshfl [vmem:[#allocation1 + $0x20] sm:$0xff pattern:$0x73625140]
      %v7394 = vld.sshfl [vmem:[#allocation1 + $0x28] sm:$0xff pattern:$0x73625140]
      %7396 = vst [vmem:[#allocation1] ss:$4 sm:$0xff] %v7339
      %7397 = vst [vmem:[%s7375] ss:$4 sm:$0xff] %v7342
      %7398 = vst [vmem:[%s7377] ss:$4 sm:$0xff] %v7345
      %7400 = vst [vmem:[%s7380] ss:$4 sm:$0xff] %v7348
      %7401 = vst [vmem:[%s7382] ss:$4 sm:$0xff] %v7351
      %7403 = vst [vmem:[%s7384] ss:$4 sm:$0xff] %v7354
      %7404 = vst [vmem:[%s7387] ss:$4 sm:$0xff] %v7357
      %7405 = vst [vmem:[%s7389] ss:$4 sm:$0xff] %v7360
      %v7406 = vld.sshfl [vmem:[#allocation1] sm:$0xff pattern:$0x73625140]
      %v7407 = vld.sshfl [vmem:[#allocation1 + $0x8] sm:$0xff pattern:$0x73625140]
      %v7408 = vld.sshfl [vmem:[#allocation1 + $0x20] sm:$0xff pattern:$0x73625140]
      %v7409 = vld.sshfl [vmem:[#allocation1 + $0x28] sm:$0xff pattern:$0x73625140]
      %7411 = vst [vmem:[#allocation1] ss:$4 sm:$0xff] %v7363
      %7412 = vst [vmem:[%s7375] ss:$4 sm:$0xff] %v7366
      %7414 = vst [vmem:[%s7377] ss:$4 sm:$0xff] %v7369
      %7415 = vst [vmem:[%s7380] ss:$4 sm:$0xff] %v7372
      %v7416 = vld.sshfl [vmem:[#allocation1] sm:$0xff pattern:$0x73625140]
      %v7417 = vld.sshfl [vmem:[#allocation1 + $0x8] sm:$0xff pattern:$0x73625140]
      %v7447 = vunpack.c.l.b16 %v6943
      %v7448 = vunpack.c.l.b16 %v6944
      %v7449 = vunpack.c.l.b16 %v6945
      %v7450 = vunpack.c.l.b16 %v6946
      %v7451 = vunpack.c.l.b16 %v6947
      %v7452 = vunpack.c.l.b16 %v6948
      %v7453 = vunpack.c.l.b16 %v6949
      %v7454 = vunpack.c.l.b16 %v6950
      %v7455 = vunpack.c.l.b16 %v6951
      %v7456 = vunpack.c.l.b16 %v6952
      %v7457 = vunpack.c.l.b16 %v6953
      %v7458 = vunpack.c.l.b16 %v6954
      %v7459 = vunpack.c.l.b16 %v6955
      %v7460 = vunpack.c.l.b16 %v6956
      %v7461 = vunpack.c.l.b16 %v6957
      %v7462 = vunpack.c.l.b16 %v6958
      %v7463 = vunpack.c.l.b16 %v6959
      %v7464 = vunpack.c.l.b16 %v6960
      %v7465 = vunpack.c.l.b16 %v6961
      %v7466 = vunpack.c.l.b16 %v6962
      %v7467 = vunpack.c.l.b16 %v6963
      %v7468 = vunpack.c.l.b16 %v6964
      %v7469 = vunpack.c.l.b16 %v6965
      %v7470 = vunpack.c.l.b16 %v6966
      %v7471 = vpack.c.b16 %v7448, %v7447
      %v7472 = vpack.c.b16 %v7450, %v7449
      %v7473 = vpack.c.b16 %v7452, %v7451
      %v7474 = vpack.c.b16 %v7454, %v7453
      %v7475 = vpack.c.b16 %v7456, %v7455
      %v7476 = vpack.c.b16 %v7458, %v7457
      %v7477 = vpack.c.b16 %v7460, %v7459
      %v7478 = vpack.c.b16 %v7462, %v7461
      %v7479 = vpack.c.b16 %v7464, %v7463
      %v7480 = vpack.c.b16 %v7466, %v7465
      %v7481 = vpack.c.b16 %v7468, %v7467
      %v7482 = vpack.c.b16 %v7470, %v7469
      %v7495 = vsel %vm4738, %v7392, 0
      %v7497 = vsel %vm4738, %v7394, 0
      %v7499 = vsel %vm4738, %v7407, 0
      %v7501 = vsel %vm4738, %v7409, 0
      %v7503 = vsel %vm4738, %v7417, 0
      %7505 = vmatpush.bf16.msra.mxu0 %v7478
      %7506 = vmatpush.bf16.msra.mxu0 %v7477
      %7507 = vmatpush.bf16.msra.mxu0 %v7476
      %7508 = vmatpush.bf16.msra.mxu0 %v7475
      %7509 = vmatpush.bf16.msra.mxu0 %v7474
      %7510 = vmatpush.bf16.msra.mxu0 %v7473
      %7511 = vmatpush.bf16.msra.mxu0 %v7472
      %7512 = vmatpush.bf16.msra.mxu0 %v7471
      %7513 = vmatmul.bf16.gmra.mxu0 %v7391
      %v7514 = vpop.f32.mrf.mxu0
      %v7515 = vadd.f32 %v7265, %v7514
      %v7516 = vpop.f32.mrf.mxu0
      %v7517 = vadd.f32 %v7267, %v7516
      %7518 = vmatmul.bf16.gmra.mxu0 %v7393
      %v7519 = vpop.f32.mrf.mxu0
      %v7520 = vadd.f32 %v7270, %v7519
      %v7521 = vpop.f32.mrf.mxu0
      %v7522 = vadd.f32 %v7272, %v7521
      %7523 = vmatmul.bf16.gmra.mxu0 %v7406
      %v7524 = vpop.f32.mrf.mxu0
      %v7525 = vadd.f32 %v7275, %v7524
      %v7526 = vpop.f32.mrf.mxu0
      %v7527 = vadd.f32 %v7277, %v7526
      %7528 = vmatmul.bf16.gmra.mxu0 %v7408
      %v7529 = vpop.f32.mrf.mxu0
      %v7530 = vadd.f32 %v7280, %v7529
      %v7531 = vpop.f32.mrf.mxu0
      %v7532 = vadd.f32 %v7282, %v7531
      %7533 = vmatmul.bf16.gmra.mxu0 %v7416
      %v7534 = vpop.f32.mrf.mxu0
      %v7535 = vadd.f32 %v7285, %v7534
      %v7536 = vpop.f32.mrf.mxu0
      %v7537 = vadd.f32 %v7287, %v7536
      %7538 = vdwg.mxu0
      %7539 = vmatpush.bf16.msra.mxu0 0
      %7540 = vmatpush.bf16.msra.mxu0 0
      %7541 = vmatpush.bf16.msra.mxu0 0
      %7542 = vmatpush.bf16.msra.mxu0 0
      %7543 = vmatpush.bf16.msra.mxu0 %v7482
      %7544 = vmatpush.bf16.msra.mxu0 %v7481
      %7545 = vmatpush.bf16.msra.mxu0 %v7480
      %7546 = vmatpush.bf16.msra.mxu0 %v7479
      %7547 = vmatmul.bf16.gmra.mxu0 %v7495
      %v7548 = vpop.f32.mrf.mxu0
      %v7549 = vadd.f32 %v7515, %v7548
      %v7550 = vpop.f32.mrf.mxu0
      %v7551 = vadd.f32 %v7517, %v7550
      %7552 = vmatmul.bf16.gmra.mxu0 %v7497
      %v7553 = vpop.f32.mrf.mxu0
      %v7554 = vadd.f32 %v7520, %v7553
      %v7555 = vpop.f32.mrf.mxu0
      %v7556 = vadd.f32 %v7522, %v7555
      %7557 = vmatmul.bf16.gmra.mxu0 %v7499
      %v7558 = vpop.f32.mrf.mxu0
      %v7559 = vadd.f32 %v7525, %v7558
      %v7560 = vpop.f32.mrf.mxu0
      %v7561 = vadd.f32 %v7527, %v7560
      %7562 = vmatmul.bf16.gmra.mxu0 %v7501
      %v7563 = vpop.f32.mrf.mxu0
      %v7564 = vadd.f32 %v7530, %v7563
      %v7565 = vpop.f32.mrf.mxu0
      %v7566 = vadd.f32 %v7532, %v7565
      %7567 = vmatmul.bf16.gmra.mxu0 %v7503
      %v7568 = vpop.f32.mrf.mxu0
      %v7569 = vadd.f32 %v7535, %v7568
      %v7570 = vpop.f32.mrf.mxu0
      %v7571 = vadd.f32 %v7537, %v7570
      %7572 = vdwg.mxu0
      %v7583 = vrot.slane %v7549, 4
      %v7584 = vrot.slane %v7551, 4
      %v7585 = vrot.slane %v7554, 4
      %v7586 = vrot.slane %v7556, 4
      %v7587 = vrot.slane %v7559, 4
      %v7588 = vrot.slane %v7561, 4
      %v7589 = vrot.slane %v7564, 4
      %v7590 = vrot.slane %v7566, 4
      %v7591 = vrot.slane %v7569, 4
      %v7592 = vrot.slane %v7571, 4
      %s7603 = scalar_lea.vmem [#allocation4], 48
      %v7604 = vld [vmem:[%s7603] sm:$0xff]
      %v7605 = vld [vmem:[%s7603 + $0x8] sm:$0xff]
      %v7606 = vld [vmem:[%s7603 + $0x10] sm:$0x33]
      %v7607 = vld [vmem:[%s7603 + $0x18] sm:$0xff]
      %v7608 = vld [vmem:[%s7603 + $0x20] sm:$0xff]
      %v7609 = vld [vmem:[%s7603 + $0x28] sm:$0x33]
      %v7610 = vld [vmem:[%s7603 + $0x30] sm:$0xff]
      %v7611 = vld [vmem:[%s7603 + $0x38] sm:$0xff]
      %v7612 = vld [vmem:[%s7603 + $0x40] sm:$0x33]
      %v7613 = vld [vmem:[%s7603 + $0x48] sm:$0xff]
      %v7614 = vld [vmem:[%s7603 + $0x50] sm:$0xff]
      %v7615 = vld [vmem:[%s7603 + $0x58] sm:$0x33]
      %s7616 = scalar_lea.vmem %s5, 192
      %v7617 = vld [vmem:[%s7616] sm:$0xf]
      %v7618 = vld [vmem:[%s7616 + $0x4] sm:$0xf]
      %v7619 = vld [vmem:[%s7616 + $0x8] sm:$0xf]
      %v7620 = vld [vmem:[%s7616 + $0xc] sm:$0xf]
      %v7621 = vld [vmem:[%s7616 + $0x10] sm:$0xf]
      %v7622 = vld [vmem:[%s7616 + $0x14] sm:$0xf]
      %v7623 = vld [vmem:[%s7616 + $0x18] sm:$0xf]
      %v7624 = vld [vmem:[%s7616 + $0x1c] sm:$0xf]
      %v7625 = vld [vmem:[%s7616 + $0x20] sm:$0xf]
      %v7626 = vld [vmem:[%s7616 + $0x24] sm:$0xf]
      %v7627 = vld [vmem:[%s7616 + $0x28] sm:$0xf]
      %v7628 = vld [vmem:[%s7616 + $0x2c] sm:$0xf]
      %v7629 = vld [vmem:[%s7616 + $0x30] sm:$0xf]
      %v7630 = vld [vmem:[%s7616 + $0x34] sm:$0xf]
      %v7631 = vld [vmem:[%s7616 + $0x38] sm:$0xf]
      %v7632 = vld [vmem:[%s7616 + $0x3c] sm:$0xf]
      %v7633 = vld [vmem:[%s7616 + $0x40] sm:$0xf]
      %v7634 = vld [vmem:[%s7616 + $0x44] sm:$0xf]
      %v7635 = vld [vmem:[%s7616 + $0x48] sm:$0xf]
      %v7636 = vld [vmem:[%s7616 + $0x4c] sm:$0xf]
      %v7637 = vld [vmem:[%s7616 + $0x50] sm:$0xf]
      %v7638 = vld [vmem:[%s7616 + $0x54] sm:$0xf]
      %v7639 = vld [vmem:[%s7616 + $0x58] sm:$0xf]
      %v7640 = vld [vmem:[%s7616 + $0x5c] sm:$0xf]
      %v7653 = vrot.slane %v7604, 2
      %v7654 = vrot.slane %v7605, 2
      %v7655 = vrot.slane %v7606, 2
      %v7656 = vrot.slane %v7607, 2
      %v7657 = vrot.slane %v7608, 2
      %v7658 = vrot.slane %v7609, 2
      %v7659 = vrot.slane %v7610, 2
      %v7660 = vrot.slane %v7611, 2
      %v7661 = vrot.slane %v7612, 2
      %v7662 = vrot.slane %v7613, 2
      %v7663 = vrot.slane %v7614, 2
      %v7664 = vrot.slane %v7615, 2
      %v7667 = vsel %vm6500, %v7604, %v7653
      %v7668 = vsel %vm7031, %v7604, %v7653
      %v7670 = vrot.slane %v7668, 2
      %v7673 = vsel %vm6500, %v7605, %v7654
      %v7674 = vsel %vm7031, %v7605, %v7654
      %v7676 = vrot.slane %v7674, 2
      %v7679 = vsel %vm6500, %v7606, %v7655
      %v7682 = vsel %vm6500, %v7607, %v7656
      %v7683 = vsel %vm7031, %v7607, %v7656
      %v7685 = vrot.slane %v7683, 2
      %v7688 = vsel %vm6500, %v7608, %v7657
      %v7689 = vsel %vm7031, %v7608, %v7657
      %v7691 = vrot.slane %v7689, 2
      %v7694 = vsel %vm6500, %v7609, %v7658
      %v7697 = vsel %vm6500, %v7610, %v7659
      %v7698 = vsel %vm7031, %v7610, %v7659
      %v7700 = vrot.slane %v7698, 2
      %v7703 = vsel %vm6500, %v7611, %v7660
      %v7704 = vsel %vm7031, %v7611, %v7660
      %v7706 = vrot.slane %v7704, 2
      %v7709 = vsel %vm6500, %v7612, %v7661
      %v7712 = vsel %vm6500, %v7613, %v7662
      %v7713 = vsel %vm7031, %v7613, %v7662
      %v7715 = vrot.slane %v7713, 2
      %v7718 = vsel %vm6500, %v7614, %v7663
      %v7719 = vsel %vm7031, %v7614, %v7663
      %v7721 = vrot.slane %v7719, 2
      %v7724 = vsel %vm6500, %v7615, %v7664
      %7725 = vst [vmem:[#allocation1] ss:$4 sm:$0xff] %v7667
      %s7727 = scalar_lea.vmem [#allocation1], 1
      %7728 = vst [vmem:[%s7727] ss:$4 sm:$0xff] %v7670
      %s7729 = scalar_lea.vmem [#allocation1], 2
      %7730 = vst [vmem:[%s7729] ss:$4 sm:$0xff] %v7673
      %s7732 = scalar_lea.vmem [#allocation1], 3
      %7733 = vst [vmem:[%s7732] ss:$4 sm:$0xff] %v7676
      %s7734 = scalar_lea.vmem [#allocation1], 32
      %7735 = vst [vmem:[%s7734] ss:$4 sm:$0xff] %v7679
      %s7736 = scalar_lea.vmem [#allocation1], 33
      %7737 = vst [vmem:[%s7736] ss:$4 sm:$0xff] %v7682
      %s7739 = scalar_lea.vmem [#allocation1], 34
      %7740 = vst [vmem:[%s7739] ss:$4 sm:$0xff] %v7685
      %s7741 = scalar_lea.vmem [#allocation1], 35
      %7742 = vst [vmem:[%s7741] ss:$4 sm:$0xff] %v7688
      %v7743 = vld.sshfl [vmem:[#allocation1] sm:$0xff pattern:$0x73625140]
      %v7744 = vld.sshfl [vmem:[#allocation1 + $0x8] sm:$0xff pattern:$0x73625140]
      %v7745 = vld.sshfl [vmem:[#allocation1 + $0x20] sm:$0xff pattern:$0x73625140]
      %v7746 = vld.sshfl [vmem:[#allocation1 + $0x28] sm:$0xff pattern:$0x73625140]
      %7748 = vst [vmem:[#allocation1] ss:$4 sm:$0xff] %v7691
      %7749 = vst [vmem:[%s7727] ss:$4 sm:$0xff] %v7694
      %7750 = vst [vmem:[%s7729] ss:$4 sm:$0xff] %v7697
      %7752 = vst [vmem:[%s7732] ss:$4 sm:$0xff] %v7700
      %7753 = vst [vmem:[%s7734] ss:$4 sm:$0xff] %v7703
      %7755 = vst [vmem:[%s7736] ss:$4 sm:$0xff] %v7706
      %7756 = vst [vmem:[%s7739] ss:$4 sm:$0xff] %v7709
      %7757 = vst [vmem:[%s7741] ss:$4 sm:$0xff] %v7712
      %v7758 = vld.sshfl [vmem:[#allocation1] sm:$0xff pattern:$0x73625140]
      %v7759 = vld.sshfl [vmem:[#allocation1 + $0x8] sm:$0xff pattern:$0x73625140]
      %v7760 = vld.sshfl [vmem:[#allocation1 + $0x20] sm:$0xff pattern:$0x73625140]
      %v7761 = vld.sshfl [vmem:[#allocation1 + $0x28] sm:$0xff pattern:$0x73625140]
      %7763 = vst [vmem:[#allocation1] ss:$4 sm:$0xff] %v7715
      %7764 = vst [vmem:[%s7727] ss:$4 sm:$0xff] %v7718
      %7766 = vst [vmem:[%s7729] ss:$4 sm:$0xff] %v7721
      %7767 = vst [vmem:[%s7732] ss:$4 sm:$0xff] %v7724
      %v7768 = vld.sshfl [vmem:[#allocation1] sm:$0xff pattern:$0x73625140]
      %v7769 = vld.sshfl [vmem:[#allocation1 + $0x8] sm:$0xff pattern:$0x73625140]
      %v7799 = vunpack.c.l.b16 %v7617
      %v7800 = vunpack.c.l.b16 %v7618
      %v7801 = vunpack.c.l.b16 %v7619
      %v7802 = vunpack.c.l.b16 %v7620
      %v7803 = vunpack.c.l.b16 %v7621
      %v7804 = vunpack.c.l.b16 %v7622
      %v7805 = vunpack.c.l.b16 %v7623
      %v7806 = vunpack.c.l.b16 %v7624
      %v7807 = vunpack.c.l.b16 %v7625
      %v7808 = vunpack.c.l.b16 %v7626
      %v7809 = vunpack.c.l.b16 %v7627
      %v7810 = vunpack.c.l.b16 %v7628
      %v7811 = vunpack.c.l.b16 %v7629
      %v7812 = vunpack.c.l.b16 %v7630
      %v7813 = vunpack.c.l.b16 %v7631
      %v7814 = vunpack.c.l.b16 %v7632
      %v7815 = vunpack.c.l.b16 %v7633
      %v7816 = vunpack.c.l.b16 %v7634
      %v7817 = vunpack.c.l.b16 %v7635
      %v7818 = vunpack.c.l.b16 %v7636
      %v7819 = vunpack.c.l.b16 %v7637
      %v7820 = vunpack.c.l.b16 %v7638
      %v7821 = vunpack.c.l.b16 %v7639
      %v7822 = vunpack.c.l.b16 %v7640
      %v7823 = vpack.c.b16 %v7800, %v7799
      %v7824 = vpack.c.b16 %v7802, %v7801
      %v7825 = vpack.c.b16 %v7804, %v7803
      %v7826 = vpack.c.b16 %v7806, %v7805
      %v7827 = vpack.c.b16 %v7808, %v7807
      %v7828 = vpack.c.b16 %v7810, %v7809
      %v7829 = vpack.c.b16 %v7812, %v7811
      %v7830 = vpack.c.b16 %v7814, %v7813
      %v7831 = vpack.c.b16 %v7816, %v7815
      %v7832 = vpack.c.b16 %v7818, %v7817
      %v7833 = vpack.c.b16 %v7820, %v7819
      %v7834 = vpack.c.b16 %v7822, %v7821
      %v7847 = vsel %vm4738, %v7744, 0
      %v7849 = vsel %vm4738, %v7746, 0
      %v7851 = vsel %vm4738, %v7759, 0
      %v7853 = vsel %vm4738, %v7761, 0
      %v7855 = vsel %vm4738, %v7769, 0
      %7857 = vmatpush.bf16.msra.mxu0 %v7830
      %7858 = vmatpush.bf16.msra.mxu0 %v7829
      %7859 = vmatpush.bf16.msra.mxu0 %v7828
      %7860 = vmatpush.bf16.msra.mxu0 %v7827
      %7861 = vmatpush.bf16.msra.mxu0 %v7826
      %7862 = vmatpush.bf16.msra.mxu0 %v7825
      %7863 = vmatpush.bf16.msra.mxu0 %v7824
      %7864 = vmatpush.bf16.msra.mxu0 %v7823
      %7865 = vmatmul.bf16.gmra.mxu0 %v7743
      %v7866 = vpop.f32.mrf.mxu0
      %v7867 = vadd.f32 0.0, %v7866
      %v7868 = vpop.f32.mrf.mxu0
      %v7869 = vadd.f32 0.0, %v7868
      %7870 = vmatmul.bf16.gmra.mxu0 %v7745
      %v7871 = vpop.f32.mrf.mxu0
      %v7872 = vadd.f32 0.0, %v7871
      %v7873 = vpop.f32.mrf.mxu0
      %v7874 = vadd.f32 0.0, %v7873
      %7875 = vmatmul.bf16.gmra.mxu0 %v7758
      %v7876 = vpop.f32.mrf.mxu0
      %v7877 = vadd.f32 0.0, %v7876
      %v7878 = vpop.f32.mrf.mxu0
      %v7879 = vadd.f32 0.0, %v7878
      %7880 = vmatmul.bf16.gmra.mxu0 %v7760
      %v7881 = vpop.f32.mrf.mxu0
      %v7882 = vadd.f32 0.0, %v7881
      %v7883 = vpop.f32.mrf.mxu0
      %v7884 = vadd.f32 0.0, %v7883
      %7885 = vmatmul.bf16.gmra.mxu0 %v7768
      %v7886 = vpop.f32.mrf.mxu0
      %v7887 = vadd.f32 0.0, %v7886
      %v7888 = vpop.f32.mrf.mxu0
      %v7889 = vadd.f32 0.0, %v7888
      %7890 = vdwg.mxu0
      %7891 = vmatpush.bf16.msra.mxu0 0
      %7892 = vmatpush.bf16.msra.mxu0 0
      %7893 = vmatpush.bf16.msra.mxu0 0
      %7894 = vmatpush.bf16.msra.mxu0 0
      %7895 = vmatpush.bf16.msra.mxu0 %v7834
      %7896 = vmatpush.bf16.msra.mxu0 %v7833
      %7897 = vmatpush.bf16.msra.mxu0 %v7832
      %7898 = vmatpush.bf16.msra.mxu0 %v7831
      %7899 = vmatmul.bf16.gmra.mxu0 %v7847
      %v7900 = vpop.f32.mrf.mxu0
      %v7901 = vadd.f32 %v7867, %v7900
      %v7902 = vpop.f32.mrf.mxu0
      %v7903 = vadd.f32 %v7869, %v7902
      %7904 = vmatmul.bf16.gmra.mxu0 %v7849
      %v7905 = vpop.f32.mrf.mxu0
      %v7906 = vadd.f32 %v7872, %v7905
      %v7907 = vpop.f32.mrf.mxu0
      %v7908 = vadd.f32 %v7874, %v7907
      %7909 = vmatmul.bf16.gmra.mxu0 %v7851
      %v7910 = vpop.f32.mrf.mxu0
      %v7911 = vadd.f32 %v7877, %v7910
      %v7912 = vpop.f32.mrf.mxu0
      %v7913 = vadd.f32 %v7879, %v7912
      %7914 = vmatmul.bf16.gmra.mxu0 %v7853
      %v7915 = vpop.f32.mrf.mxu0
      %v7916 = vadd.f32 %v7882, %v7915
      %v7917 = vpop.f32.mrf.mxu0
      %v7918 = vadd.f32 %v7884, %v7917
      %7919 = vmatmul.bf16.gmra.mxu0 %v7855
      %v7920 = vpop.f32.mrf.mxu0
      %v7921 = vadd.f32 %v7887, %v7920
      %v7922 = vpop.f32.mrf.mxu0
      %v7923 = vadd.f32 %v7889, %v7922
      %7924 = vdwg.mxu0
      %v7935 = vrot.slane %v7901, 4
      %v7936 = vrot.slane %v7903, 4
      %v7937 = vrot.slane %v7906, 4
      %v7938 = vrot.slane %v7908, 4
      %v7939 = vrot.slane %v7911, 4
      %v7940 = vrot.slane %v7913, 4
      %v7941 = vrot.slane %v7916, 4
      %v7942 = vrot.slane %v7918, 4
      %v7943 = vrot.slane %v7921, 4
      %v7944 = vrot.slane %v7923, 4
      %v7955 = vadd.f32 %v7549, %v7901
      %v7956 = vadd.f32 %v7583, %v7935
      %v7957 = vadd.f32 %v7551, %v7903
      %v7958 = vadd.f32 %v7584, %v7936
      %v7959 = vadd.f32 %v7554, %v7906
      %v7960 = vadd.f32 %v7585, %v7937
      %v7961 = vadd.f32 %v7556, %v7908
      %v7962 = vadd.f32 %v7586, %v7938
      %v7963 = vadd.f32 %v7559, %v7911
      %v7964 = vadd.f32 %v7587, %v7939
      %v7965 = vadd.f32 %v7561, %v7913
      %v7966 = vadd.f32 %v7588, %v7940
      %v7967 = vadd.f32 %v7564, %v7916
      %v7968 = vadd.f32 %v7589, %v7941
      %v7969 = vadd.f32 %v7566, %v7918
      %v7970 = vadd.f32 %v7590, %v7942
      %v7971 = vadd.f32 %v7569, %v7921
      %v7972 = vadd.f32 %v7591, %v7943
      %v7973 = vadd.f32 %v7571, %v7923
      %v7974 = vadd.f32 %v7592, %v7944
      %v7975 = vld [vmem:[%s6] sm:$0x1]
      %v7977 = vperm.slane %v7975, 0
      %v7979 = vrot.slane %v7977, 4
      %v7981 = vadd.f32 %v7955, %v7977
      %v7982 = vadd.f32 %v7956, %v7979
      %v7983 = vadd.f32 %v7957, %v7977
      %v7984 = vadd.f32 %v7958, %v7979
      %v7985 = vadd.f32 %v7959, %v7977
      %v7986 = vadd.f32 %v7960, %v7977
      %v7987 = vadd.f32 %v7961, %v7979
      %v7988 = vadd.f32 %v7962, %v7977
      %v7989 = vadd.f32 %v7963, %v7979
      %v7990 = vadd.f32 %v7964, %v7977
      %v7991 = vadd.f32 %v7965, %v7977
      %v7992 = vadd.f32 %v7966, %v7979
      %v7993 = vadd.f32 %v7967, %v7977
      %v7994 = vadd.f32 %v7968, %v7979
      %v7995 = vadd.f32 %v7969, %v7977
      %v7996 = vadd.f32 %v7970, %v7977
      %v7997 = vadd.f32 %v7971, %v7979
      %v7998 = vadd.f32 %v7972, %v7977
      %v7999 = vadd.f32 %v7973, %v7979
      %v8000 = vadd.f32 %v7974, %v7977
      %v8001 = vmax.f32 %v7981, 0.0
      %v8002 = vmax.f32 %v7982, 0.0
      %v8003 = vmax.f32 %v7983, 0.0
      %v8004 = vmax.f32 %v7984, 0.0
      %v8005 = vmax.f32 %v7985, 0.0
      %v8006 = vmax.f32 %v7986, 0.0
      %v8007 = vmax.f32 %v7987, 0.0
      %v8008 = vmax.f32 %v7988, 0.0
      %v8009 = vmax.f32 %v7989, 0.0
      %v8010 = vmax.f32 %v7990, 0.0
      %v8011 = vmax.f32 %v7991, 0.0
      %v8012 = vmax.f32 %v7992, 0.0
      %v8013 = vmax.f32 %v7993, 0.0
      %v8014 = vmax.f32 %v7994, 0.0
      %v8015 = vmax.f32 %v7995, 0.0
      %v8016 = vmax.f32 %v7996, 0.0
      %v8017 = vmax.f32 %v7997, 0.0
      %v8018 = vmax.f32 %v7998, 0.0
      %v8019 = vmax.f32 %v7999, 0.0
      %v8020 = vmax.f32 %v8000, 0.0
      %8041 = vst [vmem:[#allocation1] ss:$2 sm:$0xff] %v8001
      %s8042 = scalar_lea.vmem [#allocation1], 1
      %8043 = vst [vmem:[%s8042] ss:$2 sm:$0xff] %v8002
      %s8044 = scalar_lea.vmem [#allocation1], 16
      %8045 = vst [vmem:[%s8044] ss:$2 sm:$0xff] %v8003
      %s8046 = scalar_lea.vmem [#allocation1], 17
      %8047 = vst [vmem:[%s8046] ss:$2 sm:$0xff] %v8004
      %s8048 = scalar_lea.vmem [#allocation1], 32
      %8049 = vst [vmem:[%s8048] ss:$2 sm:$0xff] %v8005
      %v8050 = vld.sshfl [vmem:[#allocation1] sm:$0xff pattern:$0x75316420]
      %v8051 = vld.sshfl [vmem:[#allocation1 + $0x10] sm:$0xff pattern:$0x75316420]
      %v8052 = vld.sshfl [vmem:[#allocation1 + $0x20] sm:$0xff pattern:$0x75316420]
      %s8053 = scalar_lea.vmem [#allocation1], 48
      %8054 = vst [vmem:[%s8053] ss:$2 sm:$0xff] %v8006
      %s8055 = scalar_lea.vmem [#allocation1], 49
      %8056 = vst [vmem:[%s8055] ss:$2 sm:$0xff] %v8007
      %v8057 = vld.sshfl [vmem:[#allocation1 + $0x30] sm:$0xff pattern:$0x75316420]
      %8058 = vst [vmem:[#allocation1] ss:$2 sm:$0xff] %v8008
      %8059 = vst [vmem:[%s8042] ss:$2 sm:$0xff] %v8009
      %8060 = vst [vmem:[%s8044] ss:$2 sm:$0xff] %v8010
      %v8061 = vld.sshfl [vmem:[#allocation1] sm:$0xff pattern:$0x75316420]
      %v8062 = vld.sshfl [vmem:[#allocation1 + $0x10] sm:$0xff pattern:$0x75316420]
      %8063 = vst [vmem:[%s8048] ss:$2 sm:$0xff] %v8011
      %s8064 = scalar_lea.vmem [#allocation1], 33
      %8065 = vst [vmem:[%s8064] ss:$2 sm:$0xff] %v8012
      %8066 = vst [vmem:[%s8053] ss:$2 sm:$0xff] %v8013
      %8067 = vst [vmem:[%s8055] ss:$2 sm:$0xff] %v8014
      %v8068 = vld.sshfl [vmem:[#allocation1 + $0x20] sm:$0xff pattern:$0x75316420]
      %v8069 = vld.sshfl [vmem:[#allocation1 + $0x30] sm:$0xff pattern:$0x75316420]
      %8070 = vst [vmem:[#allocation1] ss:$2 sm:$0xff] %v8015
      %v8071 = vld.sshfl [vmem:[#allocation1] sm:$0xff pattern:$0x75316420]
      %8072 = vst [vmem:[%s8044] ss:$2 sm:$0xff] %v8016
      %8073 = vst [vmem:[%s8046] ss:$2 sm:$0xff] %v8017
      %8074 = vst [vmem:[%s8048] ss:$2 sm:$0xff] %v8018
      %8075 = vst [vmem:[%s8064] ss:$2 sm:$0xff] %v8019
      %8076 = vst [vmem:[%s8053] ss:$2 sm:$0xff] %v8020
      %v8077 = vld.sshfl [vmem:[#allocation1 + $0x10] sm:$0xff pattern:$0x75316420]
      %v8078 = vld.sshfl [vmem:[#allocation1 + $0x20] sm:$0xff pattern:$0x75316420]
      %v8079 = vld.sshfl [vmem:[#allocation1 + $0x30] sm:$0xff pattern:$0x75316420]
      %v8092 = vpack.c.bf16 %v8050, %v8050
      %v8093 = vpack.c.bf16 %v8051, %v8051
      %v8094 = vpack.c.bf16 %v8052, %v8052
      %v8095 = vpack.c.bf16 %v8057, %v8057
      %v8096 = vpack.c.bf16 %v8061, %v8061
      %v8097 = vpack.c.bf16 %v8062, %v8062
      %v8098 = vpack.c.bf16 %v8068, %v8068
      %v8099 = vpack.c.bf16 %v8069, %v8069
      %v8100 = vpack.c.bf16 %v8071, %v8071
      %v8101 = vpack.c.bf16 %v8077, %v8077
      %v8102 = vpack.c.bf16 %v8078, %v8078
      %v8103 = vpack.c.bf16 %v8079, %v8079
      %8104 = vst [vmem:[#allocation5] sm:$0xff] 0
      %8105 = vst [vmem:[#allocation5 + $0x8] sm:$0xf] 0
      %8106 = vst [vmem:[#allocation5 + $0xc] sm:$0xff] 0
      %8107 = vst [vmem:[#allocation5 + $0x14] sm:$0xf] 0
      %8108 = vst [vmem:[#allocation5 + $0x18] sm:$0x33] 0
      %8109 = vst [vmem:[#allocation5 + $0x20] sm:$0x3] 0
      %s8110 = scalar_lea.vmem [#allocation5], 180
      %8111 = vst [vmem:[%s8110] sm:$0xff] 0
      %8112 = vst [vmem:[%s8110 + $0x8] sm:$0xf] 0
      %8113 = vst [vmem:[%s8110 + $0xc] sm:$0xff] 0
      %8114 = vst [vmem:[%s8110 + $0x14] sm:$0xf] 0
      %8115 = vst [vmem:[%s8110 + $0x18] sm:$0x33] 0
      %8116 = vst [vmem:[%s8110 + $0x20] sm:$0x3] 0
      %v8118 = vshrl.u32 %v8092, 16
      %v8120 = vrot.slane %v8118, 7
      %v8121 = vshll.u32 %v8092, 16
      %v8123 = vor.u32 %v8120, %v8121
      %v8124 = vrot.slane %v8120, 4
      %v8126 = vshrl.u32 %v8093, 16
      %v8128 = vrot.slane %v8126, 7
      %v8129 = vshll.u32 %v8093, 16
      %v8131 = vor.u32 %v8128, %v8129
      %v8132 = vsel %vm3365, %v8124, %v8131
      %v8133 = vrot.slane %v8128, 4
      %v8135 = vshrl.u32 %v8094, 16
      %v8137 = vrot.slane %v8135, 7
      %v8138 = vshll.u32 %v8094, 16
      %v8140 = vor.u32 %v8137, %v8138
      %v8141 = vsel %vm3365, %v8133, %v8140
      %v8143 = vshrl.u32 %v8095, 16
      %v8145 = vrot.slane %v8143, 7
      %v8146 = vshll.u32 %v8095, 16
      %v8148 = vor.u32 %v8145, %v8146
      %v8149 = vrot.slane %v8145, 4
      %v8151 = vshrl.u32 %v8096, 16
      %v8153 = vrot.slane %v8151, 7
      %v8154 = vshll.u32 %v8096, 16
      %v8156 = vor.u32 %v8153, %v8154
      %v8157 = vsel %vm3365, %v8149, %v8156
      %v8158 = vrot.slane %v8153, 4
      %v8160 = vshrl.u32 %v8097, 16
      %v8162 = vrot.slane %v8160, 7
      %v8163 = vshll.u32 %v8097, 16
      %v8165 = vor.u32 %v8162, %v8163
      %v8166 = vsel %vm3365, %v8158, %v8165
      %v8168 = vshrl.u32 %v8098, 16
      %v8170 = vrot.slane %v8168, 7
      %v8171 = vshll.u32 %v8098, 16
      %v8173 = vor.u32 %v8170, %v8171
      %v8174 = vrot.slane %v8170, 4
      %v8176 = vshrl.u32 %v8099, 16
      %v8178 = vrot.slane %v8176, 7
      %v8179 = vshll.u32 %v8099, 16
      %v8181 = vor.u32 %v8178, %v8179
      %v8182 = vsel %vm3365, %v8174, %v8181
      %v8183 = vrot.slane %v8178, 4
      %v8185 = vshrl.u32 %v8100, 16
      %v8187 = vrot.slane %v8185, 7
      %v8188 = vshll.u32 %v8100, 16
      %v8190 = vor.u32 %v8187, %v8188
      %v8191 = vsel %vm3365, %v8183, %v8190
      %v8193 = vshrl.u32 %v8101, 16
      %v8195 = vrot.slane %v8193, 7
      %v8196 = vshll.u32 %v8101, 16
      %v8198 = vor.u32 %v8195, %v8196
      %v8199 = vrot.slane %v8195, 4
      %v8201 = vshrl.u32 %v8102, 16
      %v8203 = vrot.slane %v8201, 7
      %v8204 = vshll.u32 %v8102, 16
      %v8206 = vor.u32 %v8203, %v8204
      %v8207 = vsel %vm3365, %v8199, %v8206
      %v8208 = vrot.slane %v8203, 4
      %v8210 = vshrl.u32 %v8103, 16
      %v8212 = vrot.slane %v8210, 7
      %v8213 = vshll.u32 %v8103, 16
      %v8215 = vor.u32 %v8212, %v8213
      %v8216 = vsel %vm3365, %v8208, %v8215
      %s8229 = scalar_lea.vmem [#allocation5], 36
      %vm8230 = vcmask 1043456
      %vm8231 = vmand %vm8230, %vm3752
      %v8232 = vld [vmem:[%s8229] sm:$0xf]
      %v8233 = vsel %vm8231, %v8123, %v8232
      %8234 = vst [vmem:[%s8229] sm:$0xf] %v8233
      %8235 = vst [vmem:[%s8229 + $0xc] sm:$0xf] %v8132
      %8236 = vst [vmem:[%s8229 + $0x18] sm:$0x3] %v8141
      %v8237 = vld [vmem:[%s8229 + $0x24] sm:$0xf]
      %v8238 = vsel %vm8231, %v8148, %v8237
      %8239 = vst [vmem:[%s8229 + $0x24] sm:$0xf] %v8238
      %8240 = vst [vmem:[%s8229 + $0x30] sm:$0xf] %v8157
      %8241 = vst [vmem:[%s8229 + $0x3c] sm:$0x3] %v8166
      %v8242 = vld [vmem:[%s8229 + $0x48] sm:$0xf]
      %v8243 = vsel %vm8231, %v8173, %v8242
      %8244 = vst [vmem:[%s8229 + $0x48] sm:$0xf] %v8243
      %8245 = vst [vmem:[%s8229 + $0x54] sm:$0xf] %v8182
      %8246 = vst [vmem:[%s8229 + $0x60] sm:$0x3] %v8191
      %v8247 = vld [vmem:[%s8229 + $0x6c] sm:$0xf]
      %v8248 = vsel %vm8231, %v8198, %v8247
      %8249 = vst [vmem:[%s8229 + $0x6c] sm:$0xf] %v8248
      %8250 = vst [vmem:[%s8229 + $0x78] sm:$0xf] %v8207
      %8251 = vst [vmem:[%s8229 + $0x84] sm:$0x3] %v8216
      %vm8252 = vcmask 1040384
      %vm8253 = vmand %vm8252, %vm3363
      %v8254 = vld [vmem:[%s8229] sm:$0x1]
      %v8255 = vsel %vm8253, 0, %v8254
      %8256 = vst [vmem:[%s8229] sm:$0x1] %v8255
      %v8257 = vld [vmem:[%s8229 + $0x24] sm:$0x1]
      %v8258 = vsel %vm8253, 0, %v8257
      %8259 = vst [vmem:[%s8229 + $0x24] sm:$0x1] %v8258
      %v8260 = vld [vmem:[%s8229 + $0x48] sm:$0x1]
      %v8261 = vsel %vm8253, 0, %v8260
      %8262 = vst [vmem:[%s8229 + $0x48] sm:$0x1] %v8261
      %v8263 = vld [vmem:[%s8229 + $0x6c] sm:$0x1]
      %v8264 = vsel %vm8253, 0, %v8263
      %8265 = vst [vmem:[%s8229 + $0x6c] sm:$0x1] %v8264
      %8266 = vst [vmem:[%s8229 + $0x4] sm:$0xf] %v8092
      %8267 = vst [vmem:[%s8229 + $0x10] sm:$0xf] %v8093
      %8268 = vst [vmem:[%s8229 + $0x1c] sm:$0x3] %v8094
      %8269 = vst [vmem:[%s8229 + $0x28] sm:$0xf] %v8095
      %8270 = vst [vmem:[%s8229 + $0x34] sm:$0xf] %v8096
      %8271 = vst [vmem:[%s8229 + $0x40] sm:$0x3] %v8097
      %8272 = vst [vmem:[%s8229 + $0x4c] sm:$0xf] %v8098
      %8273 = vst [vmem:[%s8229 + $0x58] sm:$0xf] %v8099
      %8274 = vst [vmem:[%s8229 + $0x64] sm:$0x3] %v8100
      %8275 = vst [vmem:[%s8229 + $0x70] sm:$0xf] %v8101
      %8276 = vst [vmem:[%s8229 + $0x7c] sm:$0xf] %v8102
      %8277 = vst [vmem:[%s8229 + $0x88] sm:$0x3] %v8103
      %v8278 = vrot.slane %v8118, 4
      %v8279 = vrot.slane %v8121, 5
      %v8280 = vor.u32 %v8278, %v8279
      %v8281 = vrot.slane %v8280, 4
      %v8282 = vrot.slane %v8129, 5
      %v8283 = vsel %vm4040, %v8281, %v8282
      %v8284 = vrot.slane %v8126, 4
      %v8285 = vor.u32 %v8284, %v8282
      %v8286 = vrot.slane %v8285, 4
      %v8287 = vrot.slane %v8138, 5
      %v8288 = vsel %vm4040, %v8286, %v8287
      %v8289 = vrot.slane %v8135, 4
      %v8290 = vor.u32 %v8289, %v8287
      %v8291 = vrot.slane %v8290, 4
      %v8292 = vrot.slane %v8143, 4
      %v8293 = vrot.slane %v8146, 5
      %v8294 = vor.u32 %v8292, %v8293
      %v8295 = vrot.slane %v8294, 4
      %v8296 = vrot.slane %v8154, 5
      %v8297 = vsel %vm4040, %v8295, %v8296
      %v8298 = vrot.slane %v8151, 4
      %v8299 = vor.u32 %v8298, %v8296
      %v8300 = vrot.slane %v8299, 4
      %v8301 = vrot.slane %v8163, 5
      %v8302 = vsel %vm4040, %v8300, %v8301
      %v8303 = vrot.slane %v8160, 4
      %v8304 = vor.u32 %v8303, %v8301
      %v8305 = vrot.slane %v8304, 4
      %v8306 = vrot.slane %v8168, 4
      %v8307 = vrot.slane %v8171, 5
      %v8308 = vor.u32 %v8306, %v8307
      %v8309 = vrot.slane %v8308, 4
      %v8310 = vrot.slane %v8179, 5
      %v8311 = vsel %vm4040, %v8309, %v8310
      %v8312 = vrot.slane %v8176, 4
      %v8313 = vor.u32 %v8312, %v8310
      %v8314 = vrot.slane %v8313, 4
      %v8315 = vrot.slane %v8188, 5
      %v8316 = vsel %vm4040, %v8314, %v8315
      %v8317 = vrot.slane %v8185, 4
      %v8318 = vor.u32 %v8317, %v8315
      %v8319 = vrot.slane %v8318, 4
      %v8320 = vrot.slane %v8193, 4
      %v8321 = vrot.slane %v8196, 5
      %v8322 = vor.u32 %v8320, %v8321
      %v8323 = vrot.slane %v8322, 4
      %v8324 = vrot.slane %v8204, 5
      %v8325 = vsel %vm4040, %v8323, %v8324
      %v8326 = vrot.slane %v8201, 4
      %v8327 = vor.u32 %v8326, %v8324
      %v8328 = vrot.slane %v8327, 4
      %v8329 = vrot.slane %v8213, 5
      %v8330 = vsel %vm4040, %v8328, %v8329
      %v8331 = vrot.slane %v8210, 4
      %v8332 = vor.u32 %v8331, %v8329
      %v8333 = vrot.slane %v8332, 4
      %8346 = vst [vmem:[%s8229 + $0x8] sm:$0xf] %v8283
      %8347 = vst [vmem:[%s8229 + $0x14] sm:$0xf] %v8288
      %vm8348 = vcmask 1041408
      %vm8349 = vmand %vm8348, %vm6896
      %v8350 = vld [vmem:[%s8229 + $0x20] sm:$0x3]
      %v8351 = vsel %vm8349, %v8291, %v8350
      %8352 = vst [vmem:[%s8229 + $0x20] sm:$0x3] %v8351
      %8353 = vst [vmem:[%s8229 + $0x2c] sm:$0xf] %v8297
      %8354 = vst [vmem:[%s8229 + $0x38] sm:$0xf] %v8302
      %v8355 = vld [vmem:[%s8229 + $0x44] sm:$0x3]
      %v8356 = vsel %vm8349, %v8305, %v8355
      %8357 = vst [vmem:[%s8229 + $0x44] sm:$0x3] %v8356
      %8358 = vst [vmem:[%s8229 + $0x50] sm:$0xf] %v8311
      %8359 = vst [vmem:[%s8229 + $0x5c] sm:$0xf] %v8316
      %v8360 = vld [vmem:[%s8229 + $0x68] sm:$0x3]
      %v8361 = vsel %vm8349, %v8319, %v8360
      %8362 = vst [vmem:[%s8229 + $0x68] sm:$0x3] %v8361
      %8363 = vst [vmem:[%s8229 + $0x74] sm:$0xf] %v8325
      %8364 = vst [vmem:[%s8229 + $0x80] sm:$0xf] %v8330
      %v8365 = vld [vmem:[%s8229 + $0x8c] sm:$0x3]
      %v8366 = vsel %vm8349, %v8333, %v8365
      %8367 = vst [vmem:[%s8229 + $0x8c] sm:$0x3] %v8366
      %vm8368 = vcmask 1041409
      %vm8369 = vmand %vm8368, %vm6917
      %v8370 = vld [vmem:[%s8229 + $0x20] sm:$0x2]
      %v8371 = vsel %vm8369, 0, %v8370
      %8372 = vst [vmem:[%s8229 + $0x20] sm:$0x2] %v8371
      %v8373 = vld [vmem:[%s8229 + $0x44] sm:$0x2]
      %v8374 = vsel %vm8369, 0, %v8373
      %8375 = vst [vmem:[%s8229 + $0x44] sm:$0x2] %v8374
      %v8376 = vld [vmem:[%s8229 + $0x68] sm:$0x2]
      %v8377 = vsel %vm8369, 0, %v8376
      %8378 = vst [vmem:[%s8229 + $0x68] sm:$0x2] %v8377
      %v8379 = vld [vmem:[%s8229 + $0x8c] sm:$0x2]
      %v8380 = vsel %vm8369, 0, %v8379
      %8381 = vst [vmem:[%s8229 + $0x8c] sm:$0x2] %v8380
      %v8382 = vld [vmem:[#allocation5] sm:$0xff]
      %v8383 = vld [vmem:[#allocation5 + $0x8] sm:$0xf]
      %v8384 = vld [vmem:[#allocation5 + $0xc] sm:$0xff]
      %v8385 = vld [vmem:[#allocation5 + $0x14] sm:$0xf]
      %v8386 = vld [vmem:[#allocation5 + $0x18] sm:$0x33]
      %v8387 = vld [vmem:[#allocation5 + $0x20] sm:$0x3]
      %v8388 = vld [vmem:[#allocation5 + $0x24] sm:$0xff]
      %v8389 = vld [vmem:[#allocation5 + $0x2c] sm:$0xf]
      %v8390 = vld [vmem:[#allocation5 + $0x30] sm:$0xff]
      %v8391 = vld [vmem:[#allocation5 + $0x38] sm:$0xf]
      %v8392 = vld [vmem:[#allocation5 + $0x3c] sm:$0x33]
      %v8393 = vld [vmem:[#allocation5 + $0x44] sm:$0x3]
      %v8394 = vld [vmem:[#allocation5 + $0x48] sm:$0xff]
      %v8395 = vld [vmem:[#allocation5 + $0x50] sm:$0xf]
      %v8396 = vld [vmem:[#allocation5 + $0x54] sm:$0xff]
      %v8397 = vld [vmem:[#allocation5 + $0x5c] sm:$0xf]
      %v8398 = vld [vmem:[#allocation5 + $0x60] sm:$0x33]
      %v8399 = vld [vmem:[#allocation5 + $0x68] sm:$0x3]
      %v8400 = vld [vmem:[#allocation5 + $0x6c] sm:$0xff]
      %v8401 = vld [vmem:[#allocation5 + $0x74] sm:$0xf]
      %v8402 = vld [vmem:[#allocation5 + $0x78] sm:$0xff]
      %v8403 = vld [vmem:[#allocation5 + $0x80] sm:$0xf]
      %v8404 = vld [vmem:[#allocation5 + $0x84] sm:$0x33]
      %v8405 = vld [vmem:[#allocation5 + $0x8c] sm:$0x3]
      %v8406 = vld [vmem:[%s7] sm:$0xf]
      %v8407 = vld [vmem:[%s7 + $0x4] sm:$0xf]
      %v8408 = vld [vmem:[%s7 + $0x8] sm:$0xf]
      %v8409 = vld [vmem:[%s7 + $0xc] sm:$0xf]
      %v8410 = vld [vmem:[%s7 + $0x10] sm:$0xf]
      %v8411 = vld [vmem:[%s7 + $0x14] sm:$0xf]
      %v8412 = vld [vmem:[%s7 + $0x18] sm:$0xf]
      %v8413 = vld [vmem:[%s7 + $0x1c] sm:$0xf]
      %v8414 = vld [vmem:[%s7 + $0x20] sm:$0xf]
      %v8415 = vld [vmem:[%s7 + $0x24] sm:$0xf]
      %v8416 = vld [vmem:[%s7 + $0x28] sm:$0xf]
      %v8417 = vld [vmem:[%s7 + $0x2c] sm:$0xf]
      %v8418 = vld [vmem:[%s7 + $0x30] sm:$0xf]
      %v8419 = vld [vmem:[%s7 + $0x34] sm:$0xf]
      %v8420 = vld [vmem:[%s7 + $0x38] sm:$0xf]
      %v8421 = vld [vmem:[%s7 + $0x3c] sm:$0xf]
      %v8422 = vld [vmem:[%s7 + $0x40] sm:$0xf]
      %v8423 = vld [vmem:[%s7 + $0x44] sm:$0xf]
      %v8424 = vld [vmem:[%s7 + $0x48] sm:$0xf]
      %v8425 = vld [vmem:[%s7 + $0x4c] sm:$0xf]
      %v8426 = vld [vmem:[%s7 + $0x50] sm:$0xf]
      %v8427 = vld [vmem:[%s7 + $0x54] sm:$0xf]
      %v8428 = vld [vmem:[%s7 + $0x58] sm:$0xf]
      %v8429 = vld [vmem:[%s7 + $0x5c] sm:$0xf]
      %v8430 = vld [vmem:[%s7 + $0x60] sm:$0xf]
      %v8431 = vld [vmem:[%s7 + $0x64] sm:$0xf]
      %v8432 = vld [vmem:[%s7 + $0x68] sm:$0xf]
      %v8433 = vld [vmem:[%s7 + $0x6c] sm:$0xf]
      %v8434 = vld [vmem:[%s7 + $0x70] sm:$0xf]
      %v8435 = vld [vmem:[%s7 + $0x74] sm:$0xf]
      %v8436 = vld [vmem:[%s7 + $0x78] sm:$0xf]
      %v8437 = vld [vmem:[%s7 + $0x7c] sm:$0xf]
      %v8438 = vld [vmem:[%s7 + $0x80] sm:$0xf]
      %v8439 = vld [vmem:[%s7 + $0x84] sm:$0xf]
      %v8440 = vld [vmem:[%s7 + $0x88] sm:$0xf]
      %v8441 = vld [vmem:[%s7 + $0x8c] sm:$0xf]
      %v8442 = vld [vmem:[%s7 + $0x90] sm:$0xf]
      %v8443 = vld [vmem:[%s7 + $0x94] sm:$0xf]
      %v8444 = vld [vmem:[%s7 + $0x98] sm:$0xf]
      %v8445 = vld [vmem:[%s7 + $0x9c] sm:$0xf]
      %v8446 = vld [vmem:[%s7 + $0xa0] sm:$0xf]
      %v8447 = vld [vmem:[%s7 + $0xa4] sm:$0xf]
      %v8448 = vld [vmem:[%s7 + $0xa8] sm:$0xf]
      %v8449 = vld [vmem:[%s7 + $0xac] sm:$0xf]
      %v8450 = vld [vmem:[%s7 + $0xb0] sm:$0xf]
      %v8451 = vld [vmem:[%s7 + $0xb4] sm:$0xf]
      %v8452 = vld [vmem:[%s7 + $0xb8] sm:$0xf]
      %v8453 = vld [vmem:[%s7 + $0xbc] sm:$0xf]
      %v8454 = vld [vmem:[%s8229] sm:$0xff]
      %v8455 = vld [vmem:[%s8229 + $0x8] sm:$0xf]
      %v8456 = vld [vmem:[%s8229 + $0xc] sm:$0xff]
      %v8457 = vld [vmem:[%s8229 + $0x14] sm:$0xf]
      %v8458 = vld [vmem:[%s8229 + $0x18] sm:$0x33]
      %v8459 = vld [vmem:[%s8229 + $0x20] sm:$0x3]
      %v8460 = vld [vmem:[%s8229 + $0x24] sm:$0xff]
      %v8461 = vld [vmem:[%s8229 + $0x2c] sm:$0xf]
      %v8462 = vld [vmem:[%s8229 + $0x30] sm:$0xff]
      %v8463 = vld [vmem:[%s8229 + $0x38] sm:$0xf]
      %v8464 = vld [vmem:[%s8229 + $0x3c] sm:$0x33]
      %v8465 = vld [vmem:[%s8229 + $0x44] sm:$0x3]
      %v8466 = vld [vmem:[%s8229 + $0x48] sm:$0xff]
      %v8467 = vld [vmem:[%s8229 + $0x50] sm:$0xf]
      %v8468 = vld [vmem:[%s8229 + $0x54] sm:$0xff]
      %v8469 = vld [vmem:[%s8229 + $0x5c] sm:$0xf]
      %v8470 = vld [vmem:[%s8229 + $0x60] sm:$0x33]
      %v8471 = vld [vmem:[%s8229 + $0x68] sm:$0x3]
      %v8472 = vld [vmem:[%s8229 + $0x6c] sm:$0xff]
      %v8473 = vld [vmem:[%s8229 + $0x74] sm:$0xf]
      %v8474 = vld [vmem:[%s8229 + $0x78] sm:$0xff]
      %v8475 = vld [vmem:[%s8229 + $0x80] sm:$0xf]
      %v8476 = vld [vmem:[%s8229 + $0x84] sm:$0x33]
      %v8477 = vld [vmem:[%s8229 + $0x8c] sm:$0x3]
      %s8478 = scalar_lea.vmem %s7, 192
      %v8479 = vld [vmem:[%s8478] sm:$0xf]
      %v8480 = vld [vmem:[%s8478 + $0x4] sm:$0xf]
      %v8481 = vld [vmem:[%s8478 + $0x8] sm:$0xf]
      %v8482 = vld [vmem:[%s8478 + $0xc] sm:$0xf]
      %v8483 = vld [vmem:[%s8478 + $0x10] sm:$0xf]
      %v8484 = vld [vmem:[%s8478 + $0x14] sm:$0xf]
      %v8485 = vld [vmem:[%s8478 + $0x18] sm:$0xf]
      %v8486 = vld [vmem:[%s8478 + $0x1c] sm:$0xf]
      %v8487 = vld [vmem:[%s8478 + $0x20] sm:$0xf]
      %v8488 = vld [vmem:[%s8478 + $0x24] sm:$0xf]
      %v8489 = vld [vmem:[%s8478 + $0x28] sm:$0xf]
      %v8490 = vld [vmem:[%s8478 + $0x2c] sm:$0xf]
      %v8491 = vld [vmem:[%s8478 + $0x30] sm:$0xf]
      %v8492 = vld [vmem:[%s8478 + $0x34] sm:$0xf]
      %v8493 = vld [vmem:[%s8478 + $0x38] sm:$0xf]
      %v8494 = vld [vmem:[%s8478 + $0x3c] sm:$0xf]
      %v8495 = vld [vmem:[%s8478 + $0x40] sm:$0xf]
      %v8496 = vld [vmem:[%s8478 + $0x44] sm:$0xf]
      %v8497 = vld [vmem:[%s8478 + $0x48] sm:$0xf]
      %v8498 = vld [vmem:[%s8478 + $0x4c] sm:$0xf]
      %v8499 = vld [vmem:[%s8478 + $0x50] sm:$0xf]
      %v8500 = vld [vmem:[%s8478 + $0x54] sm:$0xf]
      %v8501 = vld [vmem:[%s8478 + $0x58] sm:$0xf]
      %v8502 = vld [vmem:[%s8478 + $0x5c] sm:$0xf]
      %v8503 = vld [vmem:[%s8478 + $0x60] sm:$0xf]
      %v8504 = vld [vmem:[%s8478 + $0x64] sm:$0xf]
      %v8505 = vld [vmem:[%s8478 + $0x68] sm:$0xf]
      %v8506 = vld [vmem:[%s8478 + $0x6c] sm:$0xf]
      %v8507 = vld [vmem:[%s8478 + $0x70] sm:$0xf]
      %v8508 = vld [vmem:[%s8478 + $0x74] sm:$0xf]
      %v8509 = vld [vmem:[%s8478 + $0x78] sm:$0xf]
      %v8510 = vld [vmem:[%s8478 + $0x7c] sm:$0xf]
      %v8511 = vld [vmem:[%s8478 + $0x80] sm:$0xf]
      %v8512 = vld [vmem:[%s8478 + $0x84] sm:$0xf]
      %v8513 = vld [vmem:[%s8478 + $0x88] sm:$0xf]
      %v8514 = vld [vmem:[%s8478 + $0x8c] sm:$0xf]
      %v8515 = vld [vmem:[%s8478 + $0x90] sm:$0xf]
      %v8516 = vld [vmem:[%s8478 + $0x94] sm:$0xf]
      %v8517 = vld [vmem:[%s8478 + $0x98] sm:$0xf]
      %v8518 = vld [vmem:[%s8478 + $0x9c] sm:$0xf]
      %v8519 = vld [vmem:[%s8478 + $0xa0] sm:$0xf]
      %v8520 = vld [vmem:[%s8478 + $0xa4] sm:$0xf]
      %v8521 = vld [vmem:[%s8478 + $0xa8] sm:$0xf]
      %v8522 = vld [vmem:[%s8478 + $0xac] sm:$0xf]
      %v8523 = vld [vmem:[%s8478 + $0xb0] sm:$0xf]
      %v8524 = vld [vmem:[%s8478 + $0xb4] sm:$0xf]
      %v8525 = vld [vmem:[%s8478 + $0xb8] sm:$0xf]
      %v8526 = vld [vmem:[%s8478 + $0xbc] sm:$0xf]
      %v8551 = vrot.slane %v8454, 2
      %v8552 = vrot.slane %v8455, 4
      %v8553 = vrot.slane %v8455, 6
      %v8554 = vrot.slane %v8456, 2
      %v8555 = vrot.slane %v8457, 4
      %v8556 = vrot.slane %v8457, 6
      %v8557 = vrot.slane %v8458, 2
      %v8558 = vrot.slane %v8459, 4
      %v8559 = vrot.slane %v8459, 6
      %v8560 = vrot.slane %v8460, 2
      %v8561 = vrot.slane %v8461, 4
      %v8562 = vrot.slane %v8461, 6
      %v8563 = vrot.slane %v8462, 2
      %v8564 = vrot.slane %v8463, 4
      %v8565 = vrot.slane %v8463, 6
      %v8566 = vrot.slane %v8464, 2
      %v8567 = vrot.slane %v8465, 4
      %v8568 = vrot.slane %v8465, 6
      %v8569 = vrot.slane %v8466, 2
      %v8570 = vrot.slane %v8467, 4
      %v8571 = vrot.slane %v8467, 6
      %v8572 = vrot.slane %v8468, 2
      %v8573 = vrot.slane %v8469, 4
      %v8574 = vrot.slane %v8469, 6
      %v8575 = vrot.slane %v8470, 2
      %v8576 = vrot.slane %v8471, 4
      %v8577 = vrot.slane %v8471, 6
      %v8578 = vrot.slane %v8472, 2
      %v8579 = vrot.slane %v8473, 4
      %v8580 = vrot.slane %v8473, 6
      %v8581 = vrot.slane %v8474, 2
      %v8582 = vrot.slane %v8475, 4
      %v8583 = vrot.slane %v8475, 6
      %v8584 = vrot.slane %v8476, 2
      %v8585 = vrot.slane %v8477, 4
      %v8586 = vrot.slane %v8477, 6
      %v8589 = vsel %vm6500, %v8454, %v8551
      %vm8590 = vcmask 1045508
      %v8593 = vsel %vm8590, %v8552, %v8553
      %v8594 = vsel %vm3349, %v8589, %v8593
      %v8595 = vsel %vm7031, %v8454, %v8551
      %v8596 = vsel %vm6519, %v8553, %v8552
      %vm8597 = vcmask 1045506
      %v8598 = vsel %vm8597, %v8595, %v8596
      %v8600 = vrot.slane %v8598, 2
      %v8603 = vsel %vm6500, %v8456, %v8554
      %v8606 = vsel %vm8590, %v8555, %v8556
      %v8607 = vsel %vm3349, %v8603, %v8606
      %v8608 = vsel %vm7031, %v8456, %v8554
      %v8609 = vsel %vm6519, %v8556, %v8555
      %v8610 = vsel %vm8597, %v8608, %v8609
      %v8612 = vrot.slane %v8610, 2
      %v8615 = vsel %vm6500, %v8458, %v8557
      %v8618 = vsel %vm8590, %v8558, %v8559
      %v8619 = vsel %vm3349, %v8615, %v8618
      %v8622 = vsel %vm6500, %v8460, %v8560
      %v8625 = vsel %vm8590, %v8561, %v8562
      %v8626 = vsel %vm3349, %v8622, %v8625
      %v8627 = vsel %vm7031, %v8460, %v8560
      %v8628 = vsel %vm6519, %v8562, %v8561
      %v8629 = vsel %vm8597, %v8627, %v8628
      %v8631 = vrot.slane %v8629, 2
      %v8634 = vsel %vm6500, %v8462, %v8563
      %v8637 = vsel %vm8590, %v8564, %v8565
      %v8638 = vsel %vm3349, %v8634, %v8637
      %v8639 = vsel %vm7031, %v8462, %v8563
      %v8640 = vsel %vm6519, %v8565, %v8564
      %v8641 = vsel %vm8597, %v8639, %v8640
      %v8643 = vrot.slane %v8641, 2
      %v8646 = vsel %vm6500, %v8464, %v8566
      %v8649 = vsel %vm8590, %v8567, %v8568
      %v8650 = vsel %vm3349, %v8646, %v8649
      %v8653 = vsel %vm6500, %v8466, %v8569
      %v8656 = vsel %vm8590, %v8570, %v8571
      %v8657 = vsel %vm3349, %v8653, %v8656
      %v8658 = vsel %vm7031, %v8466, %v8569
      %v8659 = vsel %vm6519, %v8571, %v8570
      %v8660 = vsel %vm8597, %v8658, %v8659
      %v8662 = vrot.slane %v8660, 2
      %v8665 = vsel %vm6500, %v8468, %v8572
      %v8668 = vsel %vm8590, %v8573, %v8574
      %v8669 = vsel %vm3349, %v8665, %v8668
      %v8670 = vsel %vm7031, %v8468, %v8572
      %v8671 = vsel %vm6519, %v8574, %v8573
      %v8672 = vsel %vm8597, %v8670, %v8671
      %v8674 = vrot.slane %v8672, 2
      %v8677 = vsel %vm6500, %v8470, %v8575
      %v8680 = vsel %vm8590, %v8576, %v8577
      %v8681 = vsel %vm3349, %v8677, %v8680
      %v8684 = vsel %vm6500, %v8472, %v8578
      %v8687 = vsel %vm8590, %v8579, %v8580
      %v8688 = vsel %vm3349, %v8684, %v8687
      %v8689 = vsel %vm7031, %v8472, %v8578
      %v8690 = vsel %vm6519, %v8580, %v8579
      %v8691 = vsel %vm8597, %v8689, %v8690
      %v8693 = vrot.slane %v8691, 2
      %v8696 = vsel %vm6500, %v8474, %v8581
      %v8699 = vsel %vm8590, %v8582, %v8583
      %v8700 = vsel %vm3349, %v8696, %v8699
      %v8701 = vsel %vm7031, %v8474, %v8581
      %v8702 = vsel %vm6519, %v8583, %v8582
      %v8703 = vsel %vm8597, %v8701, %v8702
      %v8705 = vrot.slane %v8703, 2
      %v8708 = vsel %vm6500, %v8476, %v8584
      %v8711 = vsel %vm8590, %v8585, %v8586
      %v8712 = vsel %vm3349, %v8708, %v8711
      %8713 = vst [vmem:[#allocation1] ss:$4 sm:$0xff] %v8594
      %s8715 = scalar_lea.vmem [#allocation1], 1
      %8716 = vst [vmem:[%s8715] ss:$4 sm:$0xff] %v8600
      %s8717 = scalar_lea.vmem [#allocation1], 2
      %8718 = vst [vmem:[%s8717] ss:$4 sm:$0xff] %v8607
      %s8720 = scalar_lea.vmem [#allocation1], 3
      %8721 = vst [vmem:[%s8720] ss:$4 sm:$0xff] %v8612
      %s8722 = scalar_lea.vmem [#allocation1], 32
      %8723 = vst [vmem:[%s8722] ss:$4 sm:$0xff] %v8619
      %s8724 = scalar_lea.vmem [#allocation1], 33
      %8725 = vst [vmem:[%s8724] ss:$4 sm:$0xff] %v8626
      %s8727 = scalar_lea.vmem [#allocation1], 34
      %8728 = vst [vmem:[%s8727] ss:$4 sm:$0xff] %v8631
      %s8729 = scalar_lea.vmem [#allocation1], 35
      %8730 = vst [vmem:[%s8729] ss:$4 sm:$0xff] %v8638
      %v8731 = vld.sshfl [vmem:[#allocation1] sm:$0xff pattern:$0x73625140]
      %v8732 = vld.sshfl [vmem:[#allocation1 + $0x8] sm:$0xff pattern:$0x73625140]
      %v8733 = vld.sshfl [vmem:[#allocation1 + $0x10] sm:$0xff pattern:$0x73625140]
      %v8734 = vld.sshfl [vmem:[#allocation1 + $0x20] sm:$0xff pattern:$0x73625140]
      %v8735 = vld.sshfl [vmem:[#allocation1 + $0x28] sm:$0xff pattern:$0x73625140]
      %v8736 = vld.sshfl [vmem:[#allocation1 + $0x30] sm:$0xff pattern:$0x73625140]
      %8738 = vst [vmem:[#allocation1] ss:$4 sm:$0xff] %v8643
      %8739 = vst [vmem:[%s8715] ss:$4 sm:$0xff] %v8650
      %8740 = vst [vmem:[%s8717] ss:$4 sm:$0xff] %v8657
      %8742 = vst [vmem:[%s8720] ss:$4 sm:$0xff] %v8662
      %8743 = vst [vmem:[%s8722] ss:$4 sm:$0xff] %v8669
      %8745 = vst [vmem:[%s8724] ss:$4 sm:$0xff] %v8674
      %8746 = vst [vmem:[%s8727] ss:$4 sm:$0xff] %v8681
      %8747 = vst [vmem:[%s8729] ss:$4 sm:$0xff] %v8688
      %v8748 = vld.sshfl [vmem:[#allocation1] sm:$0xff pattern:$0x73625140]
      %v8749 = vld.sshfl [vmem:[#allocation1 + $0x8] sm:$0xff pattern:$0x73625140]
      %v8750 = vld.sshfl [vmem:[#allocation1 + $0x10] sm:$0xff pattern:$0x73625140]
      %v8751 = vld.sshfl [vmem:[#allocation1 + $0x20] sm:$0xff pattern:$0x73625140]
      %v8752 = vld.sshfl [vmem:[#allocation1 + $0x28] sm:$0xff pattern:$0x73625140]
      %v8753 = vld.sshfl [vmem:[#allocation1 + $0x30] sm:$0xff pattern:$0x73625140]
      %8755 = vst [vmem:[#allocation1] ss:$4 sm:$0xff] %v8693
      %8756 = vst [vmem:[%s8715] ss:$4 sm:$0xff] %v8700
      %8758 = vst [vmem:[%s8717] ss:$4 sm:$0xff] %v8705
      %8759 = vst [vmem:[%s8720] ss:$4 sm:$0xff] %v8712
      %v8760 = vld.sshfl [vmem:[#allocation1] sm:$0xff pattern:$0x73625140]
      %v8761 = vld.sshfl [vmem:[#allocation1 + $0x8] sm:$0xff pattern:$0x73625140]
      %v8762 = vld.sshfl [vmem:[#allocation1 + $0x10] sm:$0xff pattern:$0x73625140]
      %v8826 = vunpack.c.l.b16 %v8479
      %v8827 = vunpack.c.l.b16 %v8480
      %v8828 = vunpack.c.l.b16 %v8481
      %v8829 = vunpack.c.l.b16 %v8482
      %v8830 = vunpack.c.l.b16 %v8483
      %v8831 = vunpack.c.l.b16 %v8484
      %v8832 = vunpack.c.l.b16 %v8485
      %v8833 = vunpack.c.l.b16 %v8486
      %v8834 = vunpack.c.l.b16 %v8487
      %v8835 = vunpack.c.l.b16 %v8488
      %v8836 = vunpack.c.l.b16 %v8489
      %v8837 = vunpack.c.l.b16 %v8490
      %v8838 = vunpack.c.l.b16 %v8491
      %v8839 = vunpack.c.l.b16 %v8492
      %v8840 = vunpack.c.l.b16 %v8493
      %v8841 = vunpack.c.l.b16 %v8494
      %v8842 = vunpack.c.l.b16 %v8495
      %v8843 = vunpack.c.l.b16 %v8496
      %v8844 = vunpack.c.l.b16 %v8497
      %v8845 = vunpack.c.l.b16 %v8498
      %v8846 = vunpack.c.l.b16 %v8499
      %v8847 = vunpack.c.l.b16 %v8500
      %v8848 = vunpack.c.l.b16 %v8501
      %v8849 = vunpack.c.l.b16 %v8502
      %v8850 = vunpack.c.l.b16 %v8503
      %v8851 = vunpack.c.l.b16 %v8504
      %v8852 = vunpack.c.l.b16 %v8505
      %v8853 = vunpack.c.l.b16 %v8506
      %v8854 = vunpack.c.l.b16 %v8507
      %v8855 = vunpack.c.l.b16 %v8508
      %v8856 = vunpack.c.l.b16 %v8509
      %v8857 = vunpack.c.l.b16 %v8510
      %v8858 = vunpack.c.l.b16 %v8511
      %v8859 = vunpack.c.l.b16 %v8512
      %v8860 = vunpack.c.l.b16 %v8513
      %v8861 = vunpack.c.l.b16 %v8514
      %v8862 = vunpack.c.l.b16 %v8515
      %v8863 = vunpack.c.l.b16 %v8516
      %v8864 = vunpack.c.l.b16 %v8517
      %v8865 = vunpack.c.l.b16 %v8518
      %v8866 = vunpack.c.l.b16 %v8519
      %v8867 = vunpack.c.l.b16 %v8520
      %v8868 = vunpack.c.l.b16 %v8521
      %v8869 = vunpack.c.l.b16 %v8522
      %v8870 = vunpack.c.l.b16 %v8523
      %v8871 = vunpack.c.l.b16 %v8524
      %v8872 = vunpack.c.l.b16 %v8525
      %v8873 = vunpack.c.l.b16 %v8526
      %v8874 = vpack.c.b16 %v8827, %v8826
      %v8875 = vpack.c.b16 %v8829, %v8828
      %v8876 = vpack.c.b16 %v8831, %v8830
      %v8877 = vpack.c.b16 %v8833, %v8832
      %v8878 = vpack.c.b16 %v8835, %v8834
      %v8879 = vpack.c.b16 %v8837, %v8836
      %v8880 = vpack.c.b16 %v8839, %v8838
      %v8881 = vpack.c.b16 %v8841, %v8840
      %v8882 = vpack.c.b16 %v8843, %v8842
      %v8883 = vpack.c.b16 %v8845, %v8844
      %v8884 = vpack.c.b16 %v8847, %v8846
      %v8885 = vpack.c.b16 %v8849, %v8848
      %v8886 = vpack.c.b16 %v8851, %v8850
      %v8887 = vpack.c.b16 %v8853, %v8852
      %v8888 = vpack.c.b16 %v8855, %v8854
      %v8889 = vpack.c.b16 %v8857, %v8856
      %v8890 = vpack.c.b16 %v8859, %v8858
      %v8891 = vpack.c.b16 %v8861, %v8860
      %v8892 = vpack.c.b16 %v8863, %v8862
      %v8893 = vpack.c.b16 %v8865, %v8864
      %v8894 = vpack.c.b16 %v8867, %v8866
      %v8895 = vpack.c.b16 %v8869, %v8868
      %v8896 = vpack.c.b16 %v8871, %v8870
      %v8897 = vpack.c.b16 %v8873, %v8872
      %8922 = vmatpush.bf16.msra.mxu0 %v8881
      %8923 = vmatpush.bf16.msra.mxu0 %v8880
      %8924 = vmatpush.bf16.msra.mxu0 %v8879
      %8925 = vmatpush.bf16.msra.mxu0 %v8878
      %8926 = vmatpush.bf16.msra.mxu0 %v8877
      %8927 = vmatpush.bf16.msra.mxu0 %v8876
      %8928 = vmatpush.bf16.msra.mxu0 %v8875
      %8929 = vmatpush.bf16.msra.mxu0 %v8874
      %8930 = vmatmul.bf16.gmra.mxu0 %v8731
      %v8931 = vpop.f32.mrf.mxu0
      %v8932 = vadd.f32 0.0, %v8931
      %v8933 = vpop.f32.mrf.mxu0
      %v8934 = vadd.f32 0.0, %v8933
      %8935 = vmatmul.bf16.gmra.mxu0 %v8734
      %v8936 = vpop.f32.mrf.mxu0
      %v8937 = vadd.f32 0.0, %v8936
      %v8938 = vpop.f32.mrf.mxu0
      %v8939 = vadd.f32 0.0, %v8938
      %8940 = vmatmul.bf16.gmra.mxu0 %v8748
      %v8941 = vpop.f32.mrf.mxu0
      %v8942 = vadd.f32 0.0, %v8941
      %v8943 = vpop.f32.mrf.mxu0
      %v8944 = vadd.f32 0.0, %v8943
      %8945 = vmatmul.bf16.gmra.mxu0 %v8751
      %v8946 = vpop.f32.mrf.mxu0
      %v8947 = vadd.f32 0.0, %v8946
      %v8948 = vpop.f32.mrf.mxu0
      %v8949 = vadd.f32 0.0, %v8948
      %8950 = vmatmul.bf16.gmra.mxu0 %v8760
      %v8951 = vpop.f32.mrf.mxu0
      %v8952 = vadd.f32 0.0, %v8951
      %v8953 = vpop.f32.mrf.mxu0
      %v8954 = vadd.f32 0.0, %v8953
      %8955 = vdwg.mxu0
      %8956 = vmatpush.bf16.msra.mxu0 %v8889
      %8957 = vmatpush.bf16.msra.mxu0 %v8888
      %8958 = vmatpush.bf16.msra.mxu0 %v8887
      %8959 = vmatpush.bf16.msra.mxu0 %v8886
      %8960 = vmatpush.bf16.msra.mxu0 %v8885
      %8961 = vmatpush.bf16.msra.mxu0 %v8884
      %8962 = vmatpush.bf16.msra.mxu0 %v8883
      %8963 = vmatpush.bf16.msra.mxu0 %v8882
      %8964 = vmatmul.bf16.gmra.mxu0 %v8732
      %v8965 = vpop.f32.mrf.mxu0
      %v8966 = vadd.f32 %v8932, %v8965
      %v8967 = vpop.f32.mrf.mxu0
      %v8968 = vadd.f32 %v8934, %v8967
      %8969 = vmatmul.bf16.gmra.mxu0 %v8735
      %v8970 = vpop.f32.mrf.mxu0
      %v8971 = vadd.f32 %v8937, %v8970
      %v8972 = vpop.f32.mrf.mxu0
      %v8973 = vadd.f32 %v8939, %v8972
      %8974 = vmatmul.bf16.gmra.mxu0 %v8749
      %v8975 = vpop.f32.mrf.mxu0
      %v8976 = vadd.f32 %v8942, %v8975
      %v8977 = vpop.f32.mrf.mxu0
      %v8978 = vadd.f32 %v8944, %v8977
      %8979 = vmatmul.bf16.gmra.mxu0 %v8752
      %v8980 = vpop.f32.mrf.mxu0
      %v8981 = vadd.f32 %v8947, %v8980
      %v8982 = vpop.f32.mrf.mxu0
      %v8983 = vadd.f32 %v8949, %v8982
      %8984 = vmatmul.bf16.gmra.mxu0 %v8761
      %v8985 = vpop.f32.mrf.mxu0
      %v8986 = vadd.f32 %v8952, %v8985
      %v8987 = vpop.f32.mrf.mxu0
      %v8988 = vadd.f32 %v8954, %v8987
      %8989 = vdwg.mxu0
      %8990 = vmatpush.bf16.msra.mxu0 %v8897
      %8991 = vmatpush.bf16.msra.mxu0 %v8896
      %8992 = vmatpush.bf16.msra.mxu0 %v8895
      %8993 = vmatpush.bf16.msra.mxu0 %v8894
      %8994 = vmatpush.bf16.msra.mxu0 %v8893
      %8995 = vmatpush.bf16.msra.mxu0 %v8892
      %8996 = vmatpush.bf16.msra.mxu0 %v8891
      %8997 = vmatpush.bf16.msra.mxu0 %v8890
      %8998 = vmatmul.bf16.gmra.mxu0 %v8733
      %v8999 = vpop.f32.mrf.mxu0
      %v9000 = vadd.f32 %v8966, %v8999
      %v9001 = vpop.f32.mrf.mxu0
      %v9002 = vadd.f32 %v8968, %v9001
      %9003 = vmatmul.bf16.gmra.mxu0 %v8736
      %v9004 = vpop.f32.mrf.mxu0
      %v9005 = vadd.f32 %v8971, %v9004
      %v9006 = vpop.f32.mrf.mxu0
      %v9007 = vadd.f32 %v8973, %v9006
      %9008 = vmatmul.bf16.gmra.mxu0 %v8750
      %v9009 = vpop.f32.mrf.mxu0
      %v9010 = vadd.f32 %v8976, %v9009
      %v9011 = vpop.f32.mrf.mxu0
      %v9012 = vadd.f32 %v8978, %v9011
      %9013 = vmatmul.bf16.gmra.mxu0 %v8753
      %v9014 = vpop.f32.mrf.mxu0
      %v9015 = vadd.f32 %v8981, %v9014
      %v9016 = vpop.f32.mrf.mxu0
      %v9017 = vadd.f32 %v8983, %v9016
      %9018 = vmatmul.bf16.gmra.mxu0 %v8762
      %v9019 = vpop.f32.mrf.mxu0
      %v9020 = vadd.f32 %v8986, %v9019
      %v9021 = vpop.f32.mrf.mxu0
      %v9022 = vadd.f32 %v8988, %v9021
      %9023 = vdwg.mxu0
      %v9048 = vrot.slane %v8382, 2
      %v9049 = vrot.slane %v8383, 4
      %v9050 = vrot.slane %v8383, 6
      %v9051 = vrot.slane %v8384, 2
      %v9052 = vrot.slane %v8385, 4
      %v9053 = vrot.slane %v8385, 6
      %v9054 = vrot.slane %v8386, 2
      %v9055 = vrot.slane %v8387, 4
      %v9056 = vrot.slane %v8387, 6
      %v9057 = vrot.slane %v8388, 2
      %v9058 = vrot.slane %v8389, 4
      %v9059 = vrot.slane %v8389, 6
      %v9060 = vrot.slane %v8390, 2
      %v9061 = vrot.slane %v8391, 4
      %v9062 = vrot.slane %v8391, 6
      %v9063 = vrot.slane %v8392, 2
      %v9064 = vrot.slane %v8393, 4
      %v9065 = vrot.slane %v8393, 6
      %v9066 = vrot.slane %v8394, 2
      %v9067 = vrot.slane %v8395, 4
      %v9068 = vrot.slane %v8395, 6
      %v9069 = vrot.slane %v8396, 2
      %v9070 = vrot.slane %v8397, 4
      %v9071 = vrot.slane %v8397, 6
      %v9072 = vrot.slane %v8398, 2
      %v9073 = vrot.slane %v8399, 4
      %v9074 = vrot.slane %v8399, 6
      %v9075 = vrot.slane %v8400, 2
      %v9076 = vrot.slane %v8401, 4
      %v9077 = vrot.slane %v8401, 6
      %v9078 = vrot.slane %v8402, 2
      %v9079 = vrot.slane %v8403, 4
      %v9080 = vrot.slane %v8403, 6
      %v9081 = vrot.slane %v8404, 2
      %v9082 = vrot.slane %v8405, 4
      %v9083 = vrot.slane %v8405, 6
      %v9086 = vsel %vm6500, %v8382, %v9048
      %v9089 = vsel %vm8590, %v9049, %v9050
      %v9090 = vsel %vm3349, %v9086, %v9089
      %v9091 = vsel %vm7031, %v8382, %v9048
      %v9092 = vsel %vm6519, %v9050, %v9049
      %v9093 = vsel %vm8597, %v9091, %v9092
      %v9095 = vrot.slane %v9093, 2
      %v9098 = vsel %vm6500, %v8384, %v9051
      %v9101 = vsel %vm8590, %v9052, %v9053
      %v9102 = vsel %vm3349, %v9098, %v9101
      %v9103 = vsel %vm7031, %v8384, %v9051
      %v9104 = vsel %vm6519, %v9053, %v9052
      %v9105 = vsel %vm8597, %v9103, %v9104
      %v9107 = vrot.slane %v9105, 2
      %v9110 = vsel %vm6500, %v8386, %v9054
      %v9113 = vsel %vm8590, %v9055, %v9056
      %v9114 = vsel %vm3349, %v9110, %v9113
      %v9117 = vsel %vm6500, %v8388, %v9057
      %v9120 = vsel %vm8590, %v9058, %v9059
      %v9121 = vsel %vm3349, %v9117, %v9120
      %v9122 = vsel %vm7031, %v8388, %v9057
      %v9123 = vsel %vm6519, %v9059, %v9058
      %v9124 = vsel %vm8597, %v9122, %v9123
      %v9126 = vrot.slane %v9124, 2
      %v9129 = vsel %vm6500, %v8390, %v9060
      %v9132 = vsel %vm8590, %v9061, %v9062
      %v9133 = vsel %vm3349, %v9129, %v9132
      %v9134 = vsel %vm7031, %v8390, %v9060
      %v9135 = vsel %vm6519, %v9062, %v9061
      %v9136 = vsel %vm8597, %v9134, %v9135
      %v9138 = vrot.slane %v9136, 2
      %v9141 = vsel %vm6500, %v8392, %v9063
      %v9144 = vsel %vm8590, %v9064, %v9065
      %v9145 = vsel %vm3349, %v9141, %v9144
      %v9148 = vsel %vm6500, %v8394, %v9066
      %v9151 = vsel %vm8590, %v9067, %v9068
      %v9152 = vsel %vm3349, %v9148, %v9151
      %v9153 = vsel %vm7031, %v8394, %v9066
      %v9154 = vsel %vm6519, %v9068, %v9067
      %v9155 = vsel %vm8597, %v9153, %v9154
      %v9157 = vrot.slane %v9155, 2
      %v9160 = vsel %vm6500, %v8396, %v9069
      %v9163 = vsel %vm8590, %v9070, %v9071
      %v9164 = vsel %vm3349, %v9160, %v9163
      %v9165 = vsel %vm7031, %v8396, %v9069
      %v9166 = vsel %vm6519, %v9071, %v9070
      %v9167 = vsel %vm8597, %v9165, %v9166
      %v9169 = vrot.slane %v9167, 2
      %v9172 = vsel %vm6500, %v8398, %v9072
      %v9175 = vsel %vm8590, %v9073, %v9074
      %v9176 = vsel %vm3349, %v9172, %v9175
      %v9179 = vsel %vm6500, %v8400, %v9075
      %v9182 = vsel %vm8590, %v9076, %v9077
      %v9183 = vsel %vm3349, %v9179, %v9182
      %v9184 = vsel %vm7031, %v8400, %v9075
      %v9185 = vsel %vm6519, %v9077, %v9076
      %v9186 = vsel %vm8597, %v9184, %v9185
      %v9188 = vrot.slane %v9186, 2
      %v9191 = vsel %vm6500, %v8402, %v9078
      %v9194 = vsel %vm8590, %v9079, %v9080
      %v9195 = vsel %vm3349, %v9191, %v9194
      %v9196 = vsel %vm7031, %v8402, %v9078
      %v9197 = vsel %vm6519, %v9080, %v9079
      %v9198 = vsel %vm8597, %v9196, %v9197
      %v9200 = vrot.slane %v9198, 2
      %v9203 = vsel %vm6500, %v8404, %v9081
      %v9206 = vsel %vm8590, %v9082, %v9083
      %v9207 = vsel %vm3349, %v9203, %v9206
      %9208 = vst [vmem:[#allocation1] ss:$4 sm:$0xff] %v9090
      %s9210 = scalar_lea.vmem [#allocation1], 1
      %9211 = vst [vmem:[%s9210] ss:$4 sm:$0xff] %v9095
      %s9212 = scalar_lea.vmem [#allocation1], 2
      %9213 = vst [vmem:[%s9212] ss:$4 sm:$0xff] %v9102
      %s9215 = scalar_lea.vmem [#allocation1], 3
      %9216 = vst [vmem:[%s9215] ss:$4 sm:$0xff] %v9107
      %s9217 = scalar_lea.vmem [#allocation1], 32
      %9218 = vst [vmem:[%s9217] ss:$4 sm:$0xff] %v9114
      %s9219 = scalar_lea.vmem [#allocation1], 33
      %9220 = vst [vmem:[%s9219] ss:$4 sm:$0xff] %v9121
      %s9222 = scalar_lea.vmem [#allocation1], 34
      %9223 = vst [vmem:[%s9222] ss:$4 sm:$0xff] %v9126
      %s9224 = scalar_lea.vmem [#allocation1], 35
      %9225 = vst [vmem:[%s9224] ss:$4 sm:$0xff] %v9133
      %v9226 = vld.sshfl [vmem:[#allocation1] sm:$0xff pattern:$0x73625140]
      %v9227 = vld.sshfl [vmem:[#allocation1 + $0x8] sm:$0xff pattern:$0x73625140]
      %v9228 = vld.sshfl [vmem:[#allocation1 + $0x10] sm:$0xff pattern:$0x73625140]
      %v9229 = vld.sshfl [vmem:[#allocation1 + $0x20] sm:$0xff pattern:$0x73625140]
      %v9230 = vld.sshfl [vmem:[#allocation1 + $0x28] sm:$0xff pattern:$0x73625140]
      %v9231 = vld.sshfl [vmem:[#allocation1 + $0x30] sm:$0xff pattern:$0x73625140]
      %9233 = vst [vmem:[#allocation1] ss:$4 sm:$0xff] %v9138
      %9234 = vst [vmem:[%s9210] ss:$4 sm:$0xff] %v9145
      %9235 = vst [vmem:[%s9212] ss:$4 sm:$0xff] %v9152
      %9237 = vst [vmem:[%s9215] ss:$4 sm:$0xff] %v9157
      %9238 = vst [vmem:[%s9217] ss:$4 sm:$0xff] %v9164
      %9240 = vst [vmem:[%s9219] ss:$4 sm:$0xff] %v9169
      %9241 = vst [vmem:[%s9222] ss:$4 sm:$0xff] %v9176
      %9242 = vst [vmem:[%s9224] ss:$4 sm:$0xff] %v9183
      %v9243 = vld.sshfl [vmem:[#allocation1] sm:$0xff pattern:$0x73625140]
      %v9244 = vld.sshfl [vmem:[#allocation1 + $0x8] sm:$0xff pattern:$0x73625140]
      %v9245 = vld.sshfl [vmem:[#allocation1 + $0x10] sm:$0xff pattern:$0x73625140]
      %v9246 = vld.sshfl [vmem:[#allocation1 + $0x20] sm:$0xff pattern:$0x73625140]
      %v9247 = vld.sshfl [vmem:[#allocation1 + $0x28] sm:$0xff pattern:$0x73625140]
      %v9248 = vld.sshfl [vmem:[#allocation1 + $0x30] sm:$0xff pattern:$0x73625140]
      %9250 = vst [vmem:[#allocation1] ss:$4 sm:$0xff] %v9188
      %9251 = vst [vmem:[%s9210] ss:$4 sm:$0xff] %v9195
      %9253 = vst [vmem:[%s9212] ss:$4 sm:$0xff] %v9200
      %9254 = vst [vmem:[%s9215] ss:$4 sm:$0xff] %v9207
      %v9255 = vld.sshfl [vmem:[#allocation1] sm:$0xff pattern:$0x73625140]
      %v9256 = vld.sshfl [vmem:[#allocation1 + $0x8] sm:$0xff pattern:$0x73625140]
      %v9257 = vld.sshfl [vmem:[#allocation1 + $0x10] sm:$0xff pattern:$0x73625140]
      %v9321 = vunpack.c.l.b16 %v8406
      %v9322 = vunpack.c.l.b16 %v8407
      %v9323 = vunpack.c.l.b16 %v8408
      %v9324 = vunpack.c.l.b16 %v8409
      %v9325 = vunpack.c.l.b16 %v8410
      %v9326 = vunpack.c.l.b16 %v8411
      %v9327 = vunpack.c.l.b16 %v8412
      %v9328 = vunpack.c.l.b16 %v8413
      %v9329 = vunpack.c.l.b16 %v8414
      %v9330 = vunpack.c.l.b16 %v8415
      %v9331 = vunpack.c.l.b16 %v8416
      %v9332 = vunpack.c.l.b16 %v8417
      %v9333 = vunpack.c.l.b16 %v8418
      %v9334 = vunpack.c.l.b16 %v8419
      %v9335 = vunpack.c.l.b16 %v8420
      %v9336 = vunpack.c.l.b16 %v8421
      %v9337 = vunpack.c.l.b16 %v8422
      %v9338 = vunpack.c.l.b16 %v8423
      %v9339 = vunpack.c.l.b16 %v8424
      %v9340 = vunpack.c.l.b16 %v8425
      %v9341 = vunpack.c.l.b16 %v8426
      %v9342 = vunpack.c.l.b16 %v8427
      %v9343 = vunpack.c.l.b16 %v8428
      %v9344 = vunpack.c.l.b16 %v8429
      %v9345 = vunpack.c.l.b16 %v8430
      %v9346 = vunpack.c.l.b16 %v8431
      %v9347 = vunpack.c.l.b16 %v8432
      %v9348 = vunpack.c.l.b16 %v8433
      %v9349 = vunpack.c.l.b16 %v8434
      %v9350 = vunpack.c.l.b16 %v8435
      %v9351 = vunpack.c.l.b16 %v8436
      %v9352 = vunpack.c.l.b16 %v8437
      %v9353 = vunpack.c.l.b16 %v8438
      %v9354 = vunpack.c.l.b16 %v8439
      %v9355 = vunpack.c.l.b16 %v8440
      %v9356 = vunpack.c.l.b16 %v8441
      %v9357 = vunpack.c.l.b16 %v8442
      %v9358 = vunpack.c.l.b16 %v8443
      %v9359 = vunpack.c.l.b16 %v8444
      %v9360 = vunpack.c.l.b16 %v8445
      %v9361 = vunpack.c.l.b16 %v8446
      %v9362 = vunpack.c.l.b16 %v8447
      %v9363 = vunpack.c.l.b16 %v8448
      %v9364 = vunpack.c.l.b16 %v8449
      %v9365 = vunpack.c.l.b16 %v8450
      %v9366 = vunpack.c.l.b16 %v8451
      %v9367 = vunpack.c.l.b16 %v8452
      %v9368 = vunpack.c.l.b16 %v8453
      %v9369 = vpack.c.b16 %v9322, %v9321
      %v9370 = vpack.c.b16 %v9324, %v9323
      %v9371 = vpack.c.b16 %v9326, %v9325
      %v9372 = vpack.c.b16 %v9328, %v9327
      %v9373 = vpack.c.b16 %v9330, %v9329
      %v9374 = vpack.c.b16 %v9332, %v9331
      %v9375 = vpack.c.b16 %v9334, %v9333
      %v9376 = vpack.c.b16 %v9336, %v9335
      %v9377 = vpack.c.b16 %v9338, %v9337
      %v9378 = vpack.c.b16 %v9340, %v9339
      %v9379 = vpack.c.b16 %v9342, %v9341
      %v9380 = vpack.c.b16 %v9344, %v9343
      %v9381 = vpack.c.b16 %v9346, %v9345
      %v9382 = vpack.c.b16 %v9348, %v9347
      %v9383 = vpack.c.b16 %v9350, %v9349
      %v9384 = vpack.c.b16 %v9352, %v9351
      %v9385 = vpack.c.b16 %v9354, %v9353
      %v9386 = vpack.c.b16 %v9356, %v9355
      %v9387 = vpack.c.b16 %v9358, %v9357
      %v9388 = vpack.c.b16 %v9360, %v9359
      %v9389 = vpack.c.b16 %v9362, %v9361
      %v9390 = vpack.c.b16 %v9364, %v9363
      %v9391 = vpack.c.b16 %v9366, %v9365
      %v9392 = vpack.c.b16 %v9368, %v9367
      %9417 = vmatpush.bf16.msra.mxu0 %v9376
      %9418 = vmatpush.bf16.msra.mxu0 %v9375
      %9419 = vmatpush.bf16.msra.mxu0 %v9374
      %9420 = vmatpush.bf16.msra.mxu0 %v9373
      %9421 = vmatpush.bf16.msra.mxu0 %v9372
      %9422 = vmatpush.bf16.msra.mxu0 %v9371
      %9423 = vmatpush.bf16.msra.mxu0 %v9370
      %9424 = vmatpush.bf16.msra.mxu0 %v9369
      %9425 = vmatmul.bf16.gmra.mxu0 %v9226
      %v9426 = vpop.f32.mrf.mxu0
      %v9427 = vadd.f32 %v9000, %v9426
      %v9428 = vpop.f32.mrf.mxu0
      %v9429 = vadd.f32 %v9002, %v9428
      %9430 = vmatmul.bf16.gmra.mxu0 %v9229
      %v9431 = vpop.f32.mrf.mxu0
      %v9432 = vadd.f32 %v9005, %v9431
      %v9433 = vpop.f32.mrf.mxu0
      %v9434 = vadd.f32 %v9007, %v9433
      %9435 = vmatmul.bf16.gmra.mxu0 %v9243
      %v9436 = vpop.f32.mrf.mxu0
      %v9437 = vadd.f32 %v9010, %v9436
      %v9438 = vpop.f32.mrf.mxu0
      %v9439 = vadd.f32 %v9012, %v9438
      %9440 = vmatmul.bf16.gmra.mxu0 %v9246
      %v9441 = vpop.f32.mrf.mxu0
      %v9442 = vadd.f32 %v9015, %v9441
      %v9443 = vpop.f32.mrf.mxu0
      %v9444 = vadd.f32 %v9017, %v9443
      %9445 = vmatmul.bf16.gmra.mxu0 %v9255
      %v9446 = vpop.f32.mrf.mxu0
      %v9447 = vadd.f32 %v9020, %v9446
      %v9448 = vpop.f32.mrf.mxu0
      %v9449 = vadd.f32 %v9022, %v9448
      %9450 = vdwg.mxu0
      %9451 = vmatpush.bf16.msra.mxu0 %v9384
      %9452 = vmatpush.bf16.msra.mxu0 %v9383
      %9453 = vmatpush.bf16.msra.mxu0 %v9382
      %9454 = vmatpush.bf16.msra.mxu0 %v9381
      %9455 = vmatpush.bf16.msra.mxu0 %v9380
      %9456 = vmatpush.bf16.msra.mxu0 %v9379
      %9457 = vmatpush.bf16.msra.mxu0 %v9378
      %9458 = vmatpush.bf16.msra.mxu0 %v9377
      %9459 = vmatmul.bf16.gmra.mxu0 %v9227
      %v9460 = vpop.f32.mrf.mxu0
      %v9461 = vadd.f32 %v9427, %v9460
      %v9462 = vpop.f32.mrf.mxu0
      %v9463 = vadd.f32 %v9429, %v9462
      %9464 = vmatmul.bf16.gmra.mxu0 %v9230
      %v9465 = vpop.f32.mrf.mxu0
      %v9466 = vadd.f32 %v9432, %v9465
      %v9467 = vpop.f32.mrf.mxu0
      %v9468 = vadd.f32 %v9434, %v9467
      %9469 = vmatmul.bf16.gmra.mxu0 %v9244
      %v9470 = vpop.f32.mrf.mxu0
      %v9471 = vadd.f32 %v9437, %v9470
      %v9472 = vpop.f32.mrf.mxu0
      %v9473 = vadd.f32 %v9439, %v9472
      %9474 = vmatmul.bf16.gmra.mxu0 %v9247
      %v9475 = vpop.f32.mrf.mxu0
      %v9476 = vadd.f32 %v9442, %v9475
      %v9477 = vpop.f32.mrf.mxu0
      %v9478 = vadd.f32 %v9444, %v9477
      %9479 = vmatmul.bf16.gmra.mxu0 %v9256
      %v9480 = vpop.f32.mrf.mxu0
      %v9481 = vadd.f32 %v9447, %v9480
      %v9482 = vpop.f32.mrf.mxu0
      %v9483 = vadd.f32 %v9449, %v9482
      %9484 = vdwg.mxu0
      %9485 = vmatpush.bf16.msra.mxu0 %v9392
      %9486 = vmatpush.bf16.msra.mxu0 %v9391
      %9487 = vmatpush.bf16.msra.mxu0 %v9390
      %9488 = vmatpush.bf16.msra.mxu0 %v9389
      %9489 = vmatpush.bf16.msra.mxu0 %v9388
      %9490 = vmatpush.bf16.msra.mxu0 %v9387
      %9491 = vmatpush.bf16.msra.mxu0 %v9386
      %9492 = vmatpush.bf16.msra.mxu0 %v9385
      %9493 = vmatmul.bf16.gmra.mxu0 %v9228
      %v9494 = vpop.f32.mrf.mxu0
      %v9495 = vadd.f32 %v9461, %v9494
      %v9496 = vpop.f32.mrf.mxu0
      %v9497 = vadd.f32 %v9463, %v9496
      %9498 = vmatmul.bf16.gmra.mxu0 %v9231
      %v9499 = vpop.f32.mrf.mxu0
      %v9500 = vadd.f32 %v9466, %v9499
      %v9501 = vpop.f32.mrf.mxu0
      %v9502 = vadd.f32 %v9468, %v9501
      %9503 = vmatmul.bf16.gmra.mxu0 %v9245
      %v9504 = vpop.f32.mrf.mxu0
      %v9505 = vadd.f32 %v9471, %v9504
      %v9506 = vpop.f32.mrf.mxu0
      %v9507 = vadd.f32 %v9473, %v9506
      %9508 = vmatmul.bf16.gmra.mxu0 %v9248
      %v9509 = vpop.f32.mrf.mxu0
      %v9510 = vadd.f32 %v9476, %v9509
      %v9511 = vpop.f32.mrf.mxu0
      %v9512 = vadd.f32 %v9478, %v9511
      %9513 = vmatmul.bf16.gmra.mxu0 %v9257
      %v9514 = vpop.f32.mrf.mxu0
      %v9515 = vadd.f32 %v9481, %v9514
      %v9516 = vpop.f32.mrf.mxu0
      %v9517 = vadd.f32 %v9483, %v9516
      %9518 = vdwg.mxu0
      %v9529 = vrot.slane %v9495, 4
      %v9530 = vrot.slane %v9497, 4
      %v9531 = vrot.slane %v9500, 4
      %v9532 = vrot.slane %v9502, 4
      %v9533 = vrot.slane %v9505, 4
      %v9534 = vrot.slane %v9507, 4
      %v9535 = vrot.slane %v9510, 4
      %v9536 = vrot.slane %v9512, 4
      %v9537 = vrot.slane %v9515, 4
      %v9538 = vrot.slane %v9517, 4
      %s9549 = scalar_lea.vmem [#allocation5], 72
      %v9550 = vld [vmem:[%s9549] sm:$0xff]
      %v9551 = vld [vmem:[%s9549 + $0x8] sm:$0xf]
      %v9552 = vld [vmem:[%s9549 + $0xc] sm:$0xff]
      %v9553 = vld [vmem:[%s9549 + $0x14] sm:$0xf]
      %v9554 = vld [vmem:[%s9549 + $0x18] sm:$0x33]
      %v9555 = vld [vmem:[%s9549 + $0x20] sm:$0x3]
      %v9556 = vld [vmem:[%s9549 + $0x24] sm:$0xff]
      %v9557 = vld [vmem:[%s9549 + $0x2c] sm:$0xf]
      %v9558 = vld [vmem:[%s9549 + $0x30] sm:$0xff]
      %v9559 = vld [vmem:[%s9549 + $0x38] sm:$0xf]
      %v9560 = vld [vmem:[%s9549 + $0x3c] sm:$0x33]
      %v9561 = vld [vmem:[%s9549 + $0x44] sm:$0x3]
      %v9562 = vld [vmem:[%s9549 + $0x48] sm:$0xff]
      %v9563 = vld [vmem:[%s9549 + $0x50] sm:$0xf]
      %v9564 = vld [vmem:[%s9549 + $0x54] sm:$0xff]
      %v9565 = vld [vmem:[%s9549 + $0x5c] sm:$0xf]
      %v9566 = vld [vmem:[%s9549 + $0x60] sm:$0x33]
      %v9567 = vld [vmem:[%s9549 + $0x68] sm:$0x3]
      %v9568 = vld [vmem:[%s9549 + $0x6c] sm:$0xff]
      %v9569 = vld [vmem:[%s9549 + $0x74] sm:$0xf]
      %v9570 = vld [vmem:[%s9549 + $0x78] sm:$0xff]
      %v9571 = vld [vmem:[%s9549 + $0x80] sm:$0xf]
      %v9572 = vld [vmem:[%s9549 + $0x84] sm:$0x33]
      %v9573 = vld [vmem:[%s9549 + $0x8c] sm:$0x3]
      %s9574 = scalar_lea.vmem %s7, 384
      %v9575 = vld [vmem:[%s9574] sm:$0xf]
      %v9576 = vld [vmem:[%s9574 + $0x4] sm:$0xf]
      %v9577 = vld [vmem:[%s9574 + $0x8] sm:$0xf]
      %v9578 = vld [vmem:[%s9574 + $0xc] sm:$0xf]
      %v9579 = vld [vmem:[%s9574 + $0x10] sm:$0xf]
      %v9580 = vld [vmem:[%s9574 + $0x14] sm:$0xf]
      %v9581 = vld [vmem:[%s9574 + $0x18] sm:$0xf]
      %v9582 = vld [vmem:[%s9574 + $0x1c] sm:$0xf]
      %v9583 = vld [vmem:[%s9574 + $0x20] sm:$0xf]
      %v9584 = vld [vmem:[%s9574 + $0x24] sm:$0xf]
      %v9585 = vld [vmem:[%s9574 + $0x28] sm:$0xf]
      %v9586 = vld [vmem:[%s9574 + $0x2c] sm:$0xf]
      %v9587 = vld [vmem:[%s9574 + $0x30] sm:$0xf]
      %v9588 = vld [vmem:[%s9574 + $0x34] sm:$0xf]
      %v9589 = vld [vmem:[%s9574 + $0x38] sm:$0xf]
      %v9590 = vld [vmem:[%s9574 + $0x3c] sm:$0xf]
      %v9591 = vld [vmem:[%s9574 + $0x40] sm:$0xf]
      %v9592 = vld [vmem:[%s9574 + $0x44] sm:$0xf]
      %v9593 = vld [vmem:[%s9574 + $0x48] sm:$0xf]
      %v9594 = vld [vmem:[%s9574 + $0x4c] sm:$0xf]
      %v9595 = vld [vmem:[%s9574 + $0x50] sm:$0xf]
      %v9596 = vld [vmem:[%s9574 + $0x54] sm:$0xf]
      %v9597 = vld [vmem:[%s9574 + $0x58] sm:$0xf]
      %v9598 = vld [vmem:[%s9574 + $0x5c] sm:$0xf]
      %v9599 = vld [vmem:[%s9574 + $0x60] sm:$0xf]
      %v9600 = vld [vmem:[%s9574 + $0x64] sm:$0xf]
      %v9601 = vld [vmem:[%s9574 + $0x68] sm:$0xf]
      %v9602 = vld [vmem:[%s9574 + $0x6c] sm:$0xf]
      %v9603 = vld [vmem:[%s9574 + $0x70] sm:$0xf]
      %v9604 = vld [vmem:[%s9574 + $0x74] sm:$0xf]
      %v9605 = vld [vmem:[%s9574 + $0x78] sm:$0xf]
      %v9606 = vld [vmem:[%s9574 + $0x7c] sm:$0xf]
      %v9607 = vld [vmem:[%s9574 + $0x80] sm:$0xf]
      %v9608 = vld [vmem:[%s9574 + $0x84] sm:$0xf]
      %v9609 = vld [vmem:[%s9574 + $0x88] sm:$0xf]
      %v9610 = vld [vmem:[%s9574 + $0x8c] sm:$0xf]
      %v9611 = vld [vmem:[%s9574 + $0x90] sm:$0xf]
      %v9612 = vld [vmem:[%s9574 + $0x94] sm:$0xf]
      %v9613 = vld [vmem:[%s9574 + $0x98] sm:$0xf]
      %v9614 = vld [vmem:[%s9574 + $0x9c] sm:$0xf]
      %v9615 = vld [vmem:[%s9574 + $0xa0] sm:$0xf]
      %v9616 = vld [vmem:[%s9574 + $0xa4] sm:$0xf]
      %v9617 = vld [vmem:[%s9574 + $0xa8] sm:$0xf]
      %v9618 = vld [vmem:[%s9574 + $0xac] sm:$0xf]
      %v9619 = vld [vmem:[%s9574 + $0xb0] sm:$0xf]
      %v9620 = vld [vmem:[%s9574 + $0xb4] sm:$0xf]
      %v9621 = vld [vmem:[%s9574 + $0xb8] sm:$0xf]
      %v9622 = vld [vmem:[%s9574 + $0xbc] sm:$0xf]
      %v9647 = vrot.slane %v9550, 2
      %v9648 = vrot.slane %v9551, 4
      %v9649 = vrot.slane %v9551, 6
      %v9650 = vrot.slane %v9552, 2
      %v9651 = vrot.slane %v9553, 4
      %v9652 = vrot.slane %v9553, 6
      %v9653 = vrot.slane %v9554, 2
      %v9654 = vrot.slane %v9555, 4
      %v9655 = vrot.slane %v9555, 6
      %v9656 = vrot.slane %v9556, 2
      %v9657 = vrot.slane %v9557, 4
      %v9658 = vrot.slane %v9557, 6
      %v9659 = vrot.slane %v9558, 2
      %v9660 = vrot.slane %v9559, 4
      %v9661 = vrot.slane %v9559, 6
      %v9662 = vrot.slane %v9560, 2
      %v9663 = vrot.slane %v9561, 4
      %v9664 = vrot.slane %v9561, 6
      %v9665 = vrot.slane %v9562, 2
      %v9666 = vrot.slane %v9563, 4
      %v9667 = vrot.slane %v9563, 6
      %v9668 = vrot.slane %v9564, 2
      %v9669 = vrot.slane %v9565, 4
      %v9670 = vrot.slane %v9565, 6
      %v9671 = vrot.slane %v9566, 2
      %v9672 = vrot.slane %v9567, 4
      %v9673 = vrot.slane %v9567, 6
      %v9674 = vrot.slane %v9568, 2
      %v9675 = vrot.slane %v9569, 4
      %v9676 = vrot.slane %v9569, 6
      %v9677 = vrot.slane %v9570, 2
      %v9678 = vrot.slane %v9571, 4
      %v9679 = vrot.slane %v9571, 6
      %v9680 = vrot.slane %v9572, 2
      %v9681 = vrot.slane %v9573, 4
      %v9682 = vrot.slane %v9573, 6
      %v9685 = vsel %vm6500, %v9550, %v9647
      %v9688 = vsel %vm8590, %v9648, %v9649
      %v9689 = vsel %vm3349, %v9685, %v9688
      %v9690 = vsel %vm7031, %v9550, %v9647
      %v9691 = vsel %vm6519, %v9649, %v9648
      %v9692 = vsel %vm8597, %v9690, %v9691
      %v9694 = vrot.slane %v9692, 2
      %v9697 = vsel %vm6500, %v9552, %v9650
      %v9700 = vsel %vm8590, %v9651, %v9652
      %v9701 = vsel %vm3349, %v9697, %v9700
      %v9702 = vsel %vm7031, %v9552, %v9650
      %v9703 = vsel %vm6519, %v9652, %v9651
      %v9704 = vsel %vm8597, %v9702, %v9703
      %v9706 = vrot.slane %v9704, 2
      %v9709 = vsel %vm6500, %v9554, %v9653
      %v9712 = vsel %vm8590, %v9654, %v9655
      %v9713 = vsel %vm3349, %v9709, %v9712
      %v9716 = vsel %vm6500, %v9556, %v9656
      %v9719 = vsel %vm8590, %v9657, %v9658
      %v9720 = vsel %vm3349, %v9716, %v9719
      %v9721 = vsel %vm7031, %v9556, %v9656
      %v9722 = vsel %vm6519, %v9658, %v9657
      %v9723 = vsel %vm8597, %v9721, %v9722
      %v9725 = vrot.slane %v9723, 2
      %v9728 = vsel %vm6500, %v9558, %v9659
      %v9731 = vsel %vm8590, %v9660, %v9661
      %v9732 = vsel %vm3349, %v9728, %v9731
      %v9733 = vsel %vm7031, %v9558, %v9659
      %v9734 = vsel %vm6519, %v9661, %v9660
      %v9735 = vsel %vm8597, %v9733, %v9734
      %v9737 = vrot.slane %v9735, 2
      %v9740 = vsel %vm6500, %v9560, %v9662
      %v9743 = vsel %vm8590, %v9663, %v9664
      %v9744 = vsel %vm3349, %v9740, %v9743
      %v9747 = vsel %vm6500, %v9562, %v9665
      %v9750 = vsel %vm8590, %v9666, %v9667
      %v9751 = vsel %vm3349, %v9747, %v9750
      %v9752 = vsel %vm7031, %v9562, %v9665
      %v9753 = vsel %vm6519, %v9667, %v9666
      %v9754 = vsel %vm8597, %v9752, %v9753
      %v9756 = vrot.slane %v9754, 2
      %v9759 = vsel %vm6500, %v9564, %v9668
      %v9762 = vsel %vm8590, %v9669, %v9670
      %v9763 = vsel %vm3349, %v9759, %v9762
      %v9764 = vsel %vm7031, %v9564, %v9668
      %v9765 = vsel %vm6519, %v9670, %v9669
      %v9766 = vsel %vm8597, %v9764, %v9765
      %v9768 = vrot.slane %v9766, 2
      %v9771 = vsel %vm6500, %v9566, %v9671
      %v9774 = vsel %vm8590, %v9672, %v9673
      %v9775 = vsel %vm3349, %v9771, %v9774
      %v9778 = vsel %vm6500, %v9568, %v9674
      %v9781 = vsel %vm8590, %v9675, %v9676
      %v9782 = vsel %vm3349, %v9778, %v9781
      %v9783 = vsel %vm7031, %v9568, %v9674
      %v9784 = vsel %vm6519, %v9676, %v9675
      %v9785 = vsel %vm8597, %v9783, %v9784
      %v9787 = vrot.slane %v9785, 2
      %v9790 = vsel %vm6500, %v9570, %v9677
      %v9793 = vsel %vm8590, %v9678, %v9679
      %v9794 = vsel %vm3349, %v9790, %v9793
      %v9795 = vsel %vm7031, %v9570, %v9677
      %v9796 = vsel %vm6519, %v9679, %v9678
      %v9797 = vsel %vm8597, %v9795, %v9796
      %v9799 = vrot.slane %v9797, 2
      %v9802 = vsel %vm6500, %v9572, %v9680
      %v9805 = vsel %vm8590, %v9681, %v9682
      %v9806 = vsel %vm3349, %v9802, %v9805
      %9807 = vst [vmem:[#allocation1] ss:$4 sm:$0xff] %v9689
      %s9809 = scalar_lea.vmem [#allocation1], 1
      %9810 = vst [vmem:[%s9809] ss:$4 sm:$0xff] %v9694
      %s9811 = scalar_lea.vmem [#allocation1], 2
      %9812 = vst [vmem:[%s9811] ss:$4 sm:$0xff] %v9701
      %s9814 = scalar_lea.vmem [#allocation1], 3
      %9815 = vst [vmem:[%s9814] ss:$4 sm:$0xff] %v9706
      %s9816 = scalar_lea.vmem [#allocation1], 32
      %9817 = vst [vmem:[%s9816] ss:$4 sm:$0xff] %v9713
      %s9818 = scalar_lea.vmem [#allocation1], 33
      %9819 = vst [vmem:[%s9818] ss:$4 sm:$0xff] %v9720
      %s9821 = scalar_lea.vmem [#allocation1], 34
      %9822 = vst [vmem:[%s9821] ss:$4 sm:$0xff] %v9725
      %s9823 = scalar_lea.vmem [#allocation1], 35
      %9824 = vst [vmem:[%s9823] ss:$4 sm:$0xff] %v9732
      %v9825 = vld.sshfl [vmem:[#allocation1] sm:$0xff pattern:$0x73625140]
      %v9826 = vld.sshfl [vmem:[#allocation1 + $0x8] sm:$0xff pattern:$0x73625140]
      %v9827 = vld.sshfl [vmem:[#allocation1 + $0x10] sm:$0xff pattern:$0x73625140]
      %v9828 = vld.sshfl [vmem:[#allocation1 + $0x20] sm:$0xff pattern:$0x73625140]
      %v9829 = vld.sshfl [vmem:[#allocation1 + $0x28] sm:$0xff pattern:$0x73625140]
      %v9830 = vld.sshfl [vmem:[#allocation1 + $0x30] sm:$0xff pattern:$0x73625140]
      %9832 = vst [vmem:[#allocation1] ss:$4 sm:$0xff] %v9737
      %9833 = vst [vmem:[%s9809] ss:$4 sm:$0xff] %v9744
      %9834 = vst [vmem:[%s9811] ss:$4 sm:$0xff] %v9751
      %9836 = vst [vmem:[%s9814] ss:$4 sm:$0xff] %v9756
      %9837 = vst [vmem:[%s9816] ss:$4 sm:$0xff] %v9763
      %9839 = vst [vmem:[%s9818] ss:$4 sm:$0xff] %v9768
      %9840 = vst [vmem:[%s9821] ss:$4 sm:$0xff] %v9775
      %9841 = vst [vmem:[%s9823] ss:$4 sm:$0xff] %v9782
      %v9842 = vld.sshfl [vmem:[#allocation1] sm:$0xff pattern:$0x73625140]
      %v9843 = vld.sshfl [vmem:[#allocation1 + $0x8] sm:$0xff pattern:$0x73625140]
      %v9844 = vld.sshfl [vmem:[#allocation1 + $0x10] sm:$0xff pattern:$0x73625140]
      %v9845 = vld.sshfl [vmem:[#allocation1 + $0x20] sm:$0xff pattern:$0x73625140]
      %v9846 = vld.sshfl [vmem:[#allocation1 + $0x28] sm:$0xff pattern:$0x73625140]
      %v9847 = vld.sshfl [vmem:[#allocation1 + $0x30] sm:$0xff pattern:$0x73625140]
      %9849 = vst [vmem:[#allocation1] ss:$4 sm:$0xff] %v9787
      %9850 = vst [vmem:[%s9809] ss:$4 sm:$0xff] %v9794
      %9852 = vst [vmem:[%s9811] ss:$4 sm:$0xff] %v9799
      %9853 = vst [vmem:[%s9814] ss:$4 sm:$0xff] %v9806
      %v9854 = vld.sshfl [vmem:[#allocation1] sm:$0xff pattern:$0x73625140]
      %v9855 = vld.sshfl [vmem:[#allocation1 + $0x8] sm:$0xff pattern:$0x73625140]
      %v9856 = vld.sshfl [vmem:[#allocation1 + $0x10] sm:$0xff pattern:$0x73625140]
      %v9920 = vunpack.c.l.b16 %v9575
      %v9921 = vunpack.c.l.b16 %v9576
      %v9922 = vunpack.c.l.b16 %v9577
      %v9923 = vunpack.c.l.b16 %v9578
      %v9924 = vunpack.c.l.b16 %v9579
      %v9925 = vunpack.c.l.b16 %v9580
      %v9926 = vunpack.c.l.b16 %v9581
      %v9927 = vunpack.c.l.b16 %v9582
      %v9928 = vunpack.c.l.b16 %v9583
      %v9929 = vunpack.c.l.b16 %v9584
      %v9930 = vunpack.c.l.b16 %v9585
      %v9931 = vunpack.c.l.b16 %v9586
      %v9932 = vunpack.c.l.b16 %v9587
      %v9933 = vunpack.c.l.b16 %v9588
      %v9934 = vunpack.c.l.b16 %v9589
      %v9935 = vunpack.c.l.b16 %v9590
      %v9936 = vunpack.c.l.b16 %v9591
      %v9937 = vunpack.c.l.b16 %v9592
      %v9938 = vunpack.c.l.b16 %v9593
      %v9939 = vunpack.c.l.b16 %v9594
      %v9940 = vunpack.c.l.b16 %v9595
      %v9941 = vunpack.c.l.b16 %v9596
      %v9942 = vunpack.c.l.b16 %v9597
      %v9943 = vunpack.c.l.b16 %v9598
      %v9944 = vunpack.c.l.b16 %v9599
      %v9945 = vunpack.c.l.b16 %v9600
      %v9946 = vunpack.c.l.b16 %v9601
      %v9947 = vunpack.c.l.b16 %v9602
      %v9948 = vunpack.c.l.b16 %v9603
      %v9949 = vunpack.c.l.b16 %v9604
      %v9950 = vunpack.c.l.b16 %v9605
      %v9951 = vunpack.c.l.b16 %v9606
      %v9952 = vunpack.c.l.b16 %v9607
      %v9953 = vunpack.c.l.b16 %v9608
      %v9954 = vunpack.c.l.b16 %v9609
      %v9955 = vunpack.c.l.b16 %v9610
      %v9956 = vunpack.c.l.b16 %v9611
      %v9957 = vunpack.c.l.b16 %v9612
      %v9958 = vunpack.c.l.b16 %v9613
      %v9959 = vunpack.c.l.b16 %v9614
      %v9960 = vunpack.c.l.b16 %v9615
      %v9961 = vunpack.c.l.b16 %v9616
      %v9962 = vunpack.c.l.b16 %v9617
      %v9963 = vunpack.c.l.b16 %v9618
      %v9964 = vunpack.c.l.b16 %v9619
      %v9965 = vunpack.c.l.b16 %v9620
      %v9966 = vunpack.c.l.b16 %v9621
      %v9967 = vunpack.c.l.b16 %v9622
      %v9968 = vpack.c.b16 %v9921, %v9920
      %v9969 = vpack.c.b16 %v9923, %v9922
      %v9970 = vpack.c.b16 %v9925, %v9924
      %v9971 = vpack.c.b16 %v9927, %v9926
      %v9972 = vpack.c.b16 %v9929, %v9928
      %v9973 = vpack.c.b16 %v9931, %v9930
      %v9974 = vpack.c.b16 %v9933, %v9932
      %v9975 = vpack.c.b16 %v9935, %v9934
      %v9976 = vpack.c.b16 %v9937, %v9936
      %v9977 = vpack.c.b16 %v9939, %v9938
      %v9978 = vpack.c.b16 %v9941, %v9940
      %v9979 = vpack.c.b16 %v9943, %v9942
      %v9980 = vpack.c.b16 %v9945, %v9944
      %v9981 = vpack.c.b16 %v9947, %v9946
      %v9982 = vpack.c.b16 %v9949, %v9948
      %v9983 = vpack.c.b16 %v9951, %v9950
      %v9984 = vpack.c.b16 %v9953, %v9952
      %v9985 = vpack.c.b16 %v9955, %v9954
      %v9986 = vpack.c.b16 %v9957, %v9956
      %v9987 = vpack.c.b16 %v9959, %v9958
      %v9988 = vpack.c.b16 %v9961, %v9960
      %v9989 = vpack.c.b16 %v9963, %v9962
      %v9990 = vpack.c.b16 %v9965, %v9964
      %v9991 = vpack.c.b16 %v9967, %v9966
      %10016 = vmatpush.bf16.msra.mxu0 %v9975
      %10017 = vmatpush.bf16.msra.mxu0 %v9974
      %10018 = vmatpush.bf16.msra.mxu0 %v9973
      %10019 = vmatpush.bf16.msra.mxu0 %v9972
      %10020 = vmatpush.bf16.msra.mxu0 %v9971
      %10021 = vmatpush.bf16.msra.mxu0 %v9970
      %10022 = vmatpush.bf16.msra.mxu0 %v9969
      %10023 = vmatpush.bf16.msra.mxu0 %v9968
      %10024 = vmatmul.bf16.gmra.mxu0 %v9825
      %v10025 = vpop.f32.mrf.mxu0
      %v10026 = vadd.f32 0.0, %v10025
      %v10027 = vpop.f32.mrf.mxu0
      %v10028 = vadd.f32 0.0, %v10027
      %10029 = vmatmul.bf16.gmra.mxu0 %v9828
      %v10030 = vpop.f32.mrf.mxu0
      %v10031 = vadd.f32 0.0, %v10030
      %v10032 = vpop.f32.mrf.mxu0
      %v10033 = vadd.f32 0.0, %v10032
      %10034 = vmatmul.bf16.gmra.mxu0 %v9842
      %v10035 = vpop.f32.mrf.mxu0
      %v10036 = vadd.f32 0.0, %v10035
      %v10037 = vpop.f32.mrf.mxu0
      %v10038 = vadd.f32 0.0, %v10037
      %10039 = vmatmul.bf16.gmra.mxu0 %v9845
      %v10040 = vpop.f32.mrf.mxu0
      %v10041 = vadd.f32 0.0, %v10040
      %v10042 = vpop.f32.mrf.mxu0
      %v10043 = vadd.f32 0.0, %v10042
      %10044 = vmatmul.bf16.gmra.mxu0 %v9854
      %v10045 = vpop.f32.mrf.mxu0
      %v10046 = vadd.f32 0.0, %v10045
      %v10047 = vpop.f32.mrf.mxu0
      %v10048 = vadd.f32 0.0, %v10047
      %10049 = vdwg.mxu0
      %10050 = vmatpush.bf16.msra.mxu0 %v9983
      %10051 = vmatpush.bf16.msra.mxu0 %v9982
      %10052 = vmatpush.bf16.msra.mxu0 %v9981
      %10053 = vmatpush.bf16.msra.mxu0 %v9980
      %10054 = vmatpush.bf16.msra.mxu0 %v9979
      %10055 = vmatpush.bf16.msra.mxu0 %v9978
      %10056 = vmatpush.bf16.msra.mxu0 %v9977
      %10057 = vmatpush.bf16.msra.mxu0 %v9976
      %10058 = vmatmul.bf16.gmra.mxu0 %v9826
      %v10059 = vpop.f32.mrf.mxu0
      %v10060 = vadd.f32 %v10026, %v10059
      %v10061 = vpop.f32.mrf.mxu0
      %v10062 = vadd.f32 %v10028, %v10061
      %10063 = vmatmul.bf16.gmra.mxu0 %v9829
      %v10064 = vpop.f32.mrf.mxu0
      %v10065 = vadd.f32 %v10031, %v10064
      %v10066 = vpop.f32.mrf.mxu0
      %v10067 = vadd.f32 %v10033, %v10066
      %10068 = vmatmul.bf16.gmra.mxu0 %v9843
      %v10069 = vpop.f32.mrf.mxu0
      %v10070 = vadd.f32 %v10036, %v10069
      %v10071 = vpop.f32.mrf.mxu0
      %v10072 = vadd.f32 %v10038, %v10071
      %10073 = vmatmul.bf16.gmra.mxu0 %v9846
      %v10074 = vpop.f32.mrf.mxu0
      %v10075 = vadd.f32 %v10041, %v10074
      %v10076 = vpop.f32.mrf.mxu0
      %v10077 = vadd.f32 %v10043, %v10076
      %10078 = vmatmul.bf16.gmra.mxu0 %v9855
      %v10079 = vpop.f32.mrf.mxu0
      %v10080 = vadd.f32 %v10046, %v10079
      %v10081 = vpop.f32.mrf.mxu0
      %v10082 = vadd.f32 %v10048, %v10081
      %10083 = vdwg.mxu0
      %10084 = vmatpush.bf16.msra.mxu0 %v9991
      %10085 = vmatpush.bf16.msra.mxu0 %v9990
      %10086 = vmatpush.bf16.msra.mxu0 %v9989
      %10087 = vmatpush.bf16.msra.mxu0 %v9988
      %10088 = vmatpush.bf16.msra.mxu0 %v9987
      %10089 = vmatpush.bf16.msra.mxu0 %v9986
      %10090 = vmatpush.bf16.msra.mxu0 %v9985
      %10091 = vmatpush.bf16.msra.mxu0 %v9984
      %10092 = vmatmul.bf16.gmra.mxu0 %v9827
      %v10093 = vpop.f32.mrf.mxu0
      %v10094 = vadd.f32 %v10060, %v10093
      %v10095 = vpop.f32.mrf.mxu0
      %v10096 = vadd.f32 %v10062, %v10095
      %10097 = vmatmul.bf16.gmra.mxu0 %v9830
      %v10098 = vpop.f32.mrf.mxu0
      %v10099 = vadd.f32 %v10065, %v10098
      %v10100 = vpop.f32.mrf.mxu0
      %v10101 = vadd.f32 %v10067, %v10100
      %10102 = vmatmul.bf16.gmra.mxu0 %v9844
      %v10103 = vpop.f32.mrf.mxu0
      %v10104 = vadd.f32 %v10070, %v10103
      %v10105 = vpop.f32.mrf.mxu0
      %v10106 = vadd.f32 %v10072, %v10105
      %10107 = vmatmul.bf16.gmra.mxu0 %v9847
      %v10108 = vpop.f32.mrf.mxu0
      %v10109 = vadd.f32 %v10075, %v10108
      %v10110 = vpop.f32.mrf.mxu0
      %v10111 = vadd.f32 %v10077, %v10110
      %10112 = vmatmul.bf16.gmra.mxu0 %v9856
      %v10113 = vpop.f32.mrf.mxu0
      %v10114 = vadd.f32 %v10080, %v10113
      %v10115 = vpop.f32.mrf.mxu0
      %v10116 = vadd.f32 %v10082, %v10115
      %10117 = vdwg.mxu0
      %v10128 = vrot.slane %v10094, 4
      %v10129 = vrot.slane %v10096, 4
      %v10130 = vrot.slane %v10099, 4
      %v10131 = vrot.slane %v10101, 4
      %v10132 = vrot.slane %v10104, 4
      %v10133 = vrot.slane %v10106, 4
      %v10134 = vrot.slane %v10109, 4
      %v10135 = vrot.slane %v10111, 4
      %v10136 = vrot.slane %v10114, 4
      %v10137 = vrot.slane %v10116, 4
      %v10148 = vadd.f32 %v9495, %v10094
      %v10149 = vadd.f32 %v9529, %v10128
      %v10150 = vadd.f32 %v9497, %v10096
      %v10151 = vadd.f32 %v9530, %v10129
      %v10152 = vadd.f32 %v9500, %v10099
      %v10153 = vadd.f32 %v9531, %v10130
      %v10154 = vadd.f32 %v9502, %v10101
      %v10155 = vadd.f32 %v9532, %v10131
      %v10156 = vadd.f32 %v9505, %v10104
      %v10157 = vadd.f32 %v9533, %v10132
      %v10158 = vadd.f32 %v9507, %v10106
      %v10159 = vadd.f32 %v9534, %v10133
      %v10160 = vadd.f32 %v9510, %v10109
      %v10161 = vadd.f32 %v9535, %v10134
      %v10162 = vadd.f32 %v9512, %v10111
      %v10163 = vadd.f32 %v9536, %v10135
      %v10164 = vadd.f32 %v9515, %v10114
      %v10165 = vadd.f32 %v9537, %v10136
      %v10166 = vadd.f32 %v9517, %v10116
      %v10167 = vadd.f32 %v9538, %v10137
      %v10168 = vld [vmem:[%s8] sm:$0x1]
      %v10170 = vperm.slane %v10168, 0
      %v10172 = vrot.slane %v10170, 4
      %v10174 = vadd.f32 %v10148, %v10170
      %v10175 = vadd.f32 %v10149, %v10172
      %v10176 = vadd.f32 %v10150, %v10170
      %v10177 = vadd.f32 %v10151, %v10172
      %v10178 = vadd.f32 %v10152, %v10170
      %v10179 = vadd.f32 %v10153, %v10170
      %v10180 = vadd.f32 %v10154, %v10172
      %v10181 = vadd.f32 %v10155, %v10170
      %v10182 = vadd.f32 %v10156, %v10172
      %v10183 = vadd.f32 %v10157, %v10170
      %v10184 = vadd.f32 %v10158, %v10170
      %v10185 = vadd.f32 %v10159, %v10172
      %v10186 = vadd.f32 %v10160, %v10170
      %v10187 = vadd.f32 %v10161, %v10172
      %v10188 = vadd.f32 %v10162, %v10170
      %v10189 = vadd.f32 %v10163, %v10170
      %v10190 = vadd.f32 %v10164, %v10172
      %v10191 = vadd.f32 %v10165, %v10170
      %v10192 = vadd.f32 %v10166, %v10172
      %v10193 = vadd.f32 %v10167, %v10170
      %v10194 = vmax.f32 %v10174, 0.0
      %v10195 = vmax.f32 %v10175, 0.0
      %v10196 = vmax.f32 %v10176, 0.0
      %v10197 = vmax.f32 %v10177, 0.0
      %v10198 = vmax.f32 %v10178, 0.0
      %v10199 = vmax.f32 %v10179, 0.0
      %v10200 = vmax.f32 %v10180, 0.0
      %v10201 = vmax.f32 %v10181, 0.0
      %v10202 = vmax.f32 %v10182, 0.0
      %v10203 = vmax.f32 %v10183, 0.0
      %v10204 = vmax.f32 %v10184, 0.0
      %v10205 = vmax.f32 %v10185, 0.0
      %v10206 = vmax.f32 %v10186, 0.0
      %v10207 = vmax.f32 %v10187, 0.0
      %v10208 = vmax.f32 %v10188, 0.0
      %v10209 = vmax.f32 %v10189, 0.0
      %v10210 = vmax.f32 %v10190, 0.0
      %v10211 = vmax.f32 %v10191, 0.0
      %v10212 = vmax.f32 %v10192, 0.0
      %v10213 = vmax.f32 %v10193, 0.0
      %v10214 = vmax.f32 %v10194, %v10199
      %v10215 = vmax.f32 %v10195, %v10200
      %v10216 = vmax.f32 %v10196, %v10201
      %v10217 = vmax.f32 %v10197, %v10202
      %v10218 = vmax.f32 %v10198, %v10203
      %v10219 = vmax.f32 %v10204, %v10209
      %v10220 = vmax.f32 %v10205, %v10210
      %v10221 = vmax.f32 %v10206, %v10211
      %v10222 = vmax.f32 %v10207, %v10212
      %v10223 = vmax.f32 %v10208, %v10213
      %v10226 = vrot.slane %v10214, 5
      %v10227 = vrot.slane %v10226, 4
      %v10228 = vrot.slane %v10219, 5
      %v10229 = vrot.slane %v10228, 4
      %v10232 = vmax.f32 %v10214, %v10227
      %v10233 = vmax.f32 %v10219, %v10229
      %v10236 = vrot.slane %v10215, 5
      %v10237 = vrot.slane %v10236, 4
      %v10238 = vrot.slane %v10220, 5
      %v10239 = vrot.slane %v10238, 4
      %v10242 = vmax.f32 %v10215, %v10237
      %v10243 = vmax.f32 %v10220, %v10239
      %v10246 = vrot.slane %v10216, 5
      %v10247 = vrot.slane %v10246, 4
      %v10248 = vrot.slane %v10221, 5
      %v10249 = vrot.slane %v10248, 4
      %v10252 = vmax.f32 %v10216, %v10247
      %v10253 = vmax.f32 %v10221, %v10249
      %v10256 = vrot.slane %v10217, 5
      %v10257 = vrot.slane %v10256, 4
      %v10258 = vrot.slane %v10222, 5
      %v10259 = vrot.slane %v10258, 4
      %v10262 = vmax.f32 %v10217, %v10257
      %v10263 = vmax.f32 %v10222, %v10259
      %v10266 = vrot.slane %v10218, 5
      %v10267 = vrot.slane %v10266, 4
      %v10268 = vrot.slane %v10223, 5
      %v10269 = vrot.slane %v10268, 4
      %v10272 = vmax.f32 %v10218, %v10267
      %v10273 = vmax.f32 %v10223, %v10269
      %v10276 = vperm.slane %v10232, 2
      %v10277 = vperm.slane %v10233, 2
      %v10282 = vperm.slane %v10242, 0
      %v10283 = vperm.slane %v10243, 0
      %v10286 = vperm.slane %v10242, 2
      %v10287 = vperm.slane %v10243, 2
      %v10292 = vperm.slane %v10252, 0
      %v10293 = vperm.slane %v10253, 0
      %v10296 = vperm.slane %v10252, 2
      %v10297 = vperm.slane %v10253, 2
      %v10302 = vperm.slane %v10262, 0
      %v10303 = vperm.slane %v10263, 0
      %v10306 = vperm.slane %v10262, 2
      %v10307 = vperm.slane %v10263, 2
      %v10312 = vperm.slane %v10272, 2
      %v10313 = vperm.slane %v10273, 2
      %v10316 = vsel %vm6495, %v10232, %v10276
      %v10317 = vsel %vm6495, %v10233, %v10277
      %v10318 = vsel %vm6500, %v10316, %v10282
      %v10319 = vsel %vm6500, %v10317, %v10283
      %v10320 = vsel %vm6505, %v10318, %v10286
      %v10321 = vsel %vm6505, %v10319, %v10287
      %v10322 = vsel %vm3349, %v10320, %v10292
      %v10323 = vsel %vm3349, %v10321, %v10293
      %v10324 = vsel %vm6514, %v10322, %v10296
      %v10325 = vsel %vm6514, %v10323, %v10297
      %v10326 = vsel %vm6519, %v10324, %v10302
      %v10327 = vsel %vm6519, %v10325, %v10303
      %v10328 = vsel %vm6524, %v10326, %v10306
      %v10329 = vsel %vm6524, %v10327, %v10307
      %v10330 = vsel %vm6495, %v10272, %v10312
      %v10331 = vsel %vm6495, %v10273, %v10313
      %10332 = vst [vmem:[%s332] sm:$0xff] %v10328
      %10333 = vst [vmem:[%s332 + $0x8] sm:$0x3] %v10330
      %10334 = vst [vmem:[%s332 + $0x10] sm:$0xff] %v10329
      %10335 = vst [vmem:[%s332 + $0x18] sm:$0x3] %v10331
      %p10336 = scmp.lt.s32.totalorder %s20, 1
      %s10337 = scalar_select %p10336, %s20, 1
      %s10338 = smul.addr %s10337, 4
      %s10339 = smul.addr %s10338, 8
      %s10340 = scalar_lea.vmem %s9, %s10339
      // Predicated region
      $region57: #{vgg_extractor_forward.1} parent=55 // pred_check
        %p10341 = pneg %p232
      $region58: #{vgg_extractor_forward.1} parent=55 // pred_check_branch
        %10343 = sbr.rel (%p10341) target = $region60
      $region59: #{vgg_extractor_forward.1} parent=55 // pred_region
        _
      $region60: #{vgg_extractor_forward.1} parent=55 // pred_fallthru
        _
    $region56: #{vgg_extractor_forward.1} parent=5 // pred_fallthru
      _
    %p10344 = scmp.le.s32.totalorder 2, %s15
    // Predicated region
    $region61: #{vgg_extractor_forward.1} parent=5 // pred_check
      %p10345 = pneg %p10344
    $region62: #{vgg_extractor_forward.1} parent=5 // pred_check_branch
      %10347 = sbr.rel (%p10345) target = $region64
    $region63: #{vgg_extractor_forward.1} parent=5 // pred_region
      %s10348 = ssub.s32 %s15, 2
      // Predicated region
      $region65: #{vgg_extractor_forward.1} parent=63 // pred_check
        %p10349 = pneg %p238
      $region66: #{vgg_extractor_forward.1} parent=63 // pred_check_branch
        %10351 = sbr.rel (%p10349) target = $region68
      $region67: #{vgg_extractor_forward.1} parent=63 // pred_region
        %p10352 = scmp.lt.s32.totalorder %s21, 1
        %s10353 = scalar_select %p10352, %s21, 1
        %s10354 = smul.addr %s10353, 4
        %s10355 = smul.addr %s10354, 8
        %s10356 = scalar_lea.vmem %s9, %s10355
      $region68: #{vgg_extractor_forward.1} parent=63 // pred_fallthru
        _
    $region64: #{vgg_extractor_forward.1} parent=5 // pred_fallthru
      _
  $region6: #{vgg_extractor_forward.1} parent=0 // loop_footer
    %s19 = sadd.s32 1, %s15
  $region7: #{vgg_extractor_forward.1} parent=0 // loop_footer_branch
    %14 = sbr.rel target = $region3
  $region8: #{vgg_extractor_forward.1} parent=0 // loop_exit
    _

</llo_original>
